<compile_context>
chip_gen: v5e
topology: v5e:2x2
jax: 0.10.0
libtpu: 0.0.40
codegen_flags: <defaults>
</compile_context>

<pallas_src>
import functools

import jax
import jax.numpy as jnp
from jax import lax
from jax.experimental import pallas as pl
from jax.experimental.pallas import tpu as pltpu

LANES = 128
SUBLANES = 8


def _round_up(x, m):
    return ((x + m - 1) // m) * m


def _pick_row_strip(ho):
    """Output-row strip height: bounds the f32 accumulator to ~RS*Wo*128 f32."""
    for rs in (8, 4, 2):
        if ho % rs == 0:
            return rs
    return 1


# ------------------------------ fused Pallas kernel ------------------------------ #

def _residual_block_kernel(x_ref, w1_ref, b1_ref, w2_ref, b2_ref, *rest,
                           stride, has_projection, row_strip):
    """Fully fused ResidualBlock forward for one batch element (NHWC, lane-padded C).

    x_ref    : (H, W, Cp)   bf16 input tile
    w1_ref   : (9, Cp, Kp)  conv1 taps with BN1 scale folded in (bf16)
    b1_ref   : (1, Kp)      folded BN1 bias (f32)
    w2_ref   : (9, Kp, Kp)  conv2 taps with BN2 scale folded in (bf16)
    b2_ref   : (1, Kp)      folded BN2 bias (f32)
    [ws_ref  : (Cp, Kp)     shortcut 1x1 weights (bf16)  -- projection only]
    [bs_ref  : (1, Kp)      folded shortcut BN bias (f32) -- projection only]
    out_ref  : (Ho, Wo, Kp) block output (bf16)
    xpad_ref : VMEM (H+2,  W+2,  Cp) bf16   haloed input staging (never hits HBM)
    midpad_ref: VMEM (Ho+2, Wo+2, Kp) bf16  haloed intermediate (never hits HBM)
    """
    if has_projection:
        ws_ref, bs_ref, out_ref, xpad_ref, midpad_ref = rest
    else:
        out_ref, xpad_ref, midpad_ref = rest
        ws_ref = bs_ref = None

    H, W, Cp = x_ref.shape
    Ho, Wo, Kp = out_ref.shape
    RS = row_strip
    n_strips = Ho // RS
    dt = xpad_ref.dtype

    # ---- refresh only the 1-pixel zero border of both haloed scratches -------------
    # (interiors are fully overwritten below; correct under any grid partitioning)
    Hp, Wp = H + 2, W + 2
    xpad_ref[pl.ds(0, 1), :, :] = jnp.zeros((1, Wp, Cp), dt)
    xpad_ref[pl.ds(Hp - 1, 1), :, :] = jnp.zeros((1, Wp, Cp), dt)
    xpad_ref[:, pl.ds(0, 1), :] = jnp.zeros((Hp, 1, Cp), dt)
    xpad_ref[:, pl.ds(Wp - 1, 1), :] = jnp.zeros((Hp, 1, Cp), dt)

    Hmp, Wmp = Ho + 2, Wo + 2
    midpad_ref[pl.ds(0, 1), :, :] = jnp.zeros((1, Wmp, Kp), dt)
    midpad_ref[pl.ds(Hmp - 1, 1), :, :] = jnp.zeros((1, Wmp, Kp), dt)
    midpad_ref[:, pl.ds(0, 1), :] = jnp.zeros((Hmp, 1, Kp), dt)
    midpad_ref[:, pl.ds(Wmp - 1, 1), :] = jnp.zeros((Hmp, 1, Kp), dt)

    # ---- stage the input tile into the haloed scratch (single VMEM copy) -----------
    xpad_ref[pl.ds(1, H), pl.ds(1, W), :] = x_ref[...]

    b1 = b1_ref[...]                      # (1, Kp) f32
    b2 = b2_ref[...]

    # ---- conv1: 3x3 / stride, + BN1 bias + ReLU, one output-row strip at a time ----
    def conv1_strip(r, carry):
        r0 = pl.multiple_of(r * RS, RS)
        acc = jnp.zeros((RS * Wo, Kp), jnp.float32)
        for t in range(9):
            ky, kx = divmod(t, 3)
            if stride == 1:
                patch = xpad_ref[pl.ds(r0 + ky, RS), pl.ds(kx, Wo), :]
            else:
                patch = xpad_ref[pl.ds(stride * r0 + ky, RS, stride),
                                 pl.ds(kx, Wo, stride), :]
            # flatten is layout-preserving when Wo % 8 == 0 and Cp % 128 == 0
            acc = acc + jnp.dot(patch.reshape(RS * Wo, Cp), w1_ref[t],
                                preferred_element_type=jnp.float32)
        strip = jnp.maximum(acc + b1, 0.0)
        midpad_ref[pl.ds(1 + r0, RS), pl.ds(1, Wo), :] = (
            strip.reshape(RS, Wo, Kp).astype(midpad_ref.dtype))
        return carry

    lax.fori_loop(0, n_strips, conv1_strip, 0, unroll=True)

    # ---- conv2 (3x3 / 1) + BN2 bias + shortcut + ReLU epilogue, strip-wise ----------
    def conv2_strip(r, carry):
        r0 = pl.multiple_of(r * RS, RS)
        acc = jnp.zeros((RS * Wo, Kp), jnp.float32)
        for t in range(9):
            ky, kx = divmod(t, 3)
            patch = midpad_ref[pl.ds(r0 + ky, RS), pl.ds(kx, Wo), :]
            acc = acc + jnp.dot(patch.reshape(RS * Wo, Kp), w2_ref[t],
                                preferred_element_type=jnp.float32)
        acc = acc + b2

        # shortcut is read straight from the already-staged xpad interior
        if stride == 1:
            xs = xpad_ref[pl.ds(1 + r0, RS), pl.ds(1, Wo), :]
        else:
            xs = xpad_ref[pl.ds(1 + stride * r0, RS, stride),
                          pl.ds(1, Wo, stride), :]
        xs = xs.reshape(RS * Wo, Cp)
        if has_projection:
            sc = jnp.dot(xs, ws_ref[...],
                         preferred_element_type=jnp.float32) + bs_ref[...]
        else:
            sc = xs.astype(jnp.float32)   # identity shortcut: direct add, no matmul

        y = jnp.maximum(acc + sc, 0.0)
        out_ref[pl.ds(r0, RS), :, :] = y.reshape(RS, Wo, Kp).astype(out_ref.dtype)
        return carry

    lax.fori_loop(0, n_strips, conv2_strip, 0, unroll=True)


# --------------------------------- pallas_call glue -------------------------------- #

def _vmem_limit_bytes(H, W, Ho, Wo, Cp, Kp):
    b = 2  # bf16
    est = (2 * H * W * Cp * b                      # double-buffered input tile
           + 2 * Ho * Wo * Kp * b                  # double-buffered output tile
           + 2 * (9 * Cp * Kp + 9 * Kp * Kp + Cp * Kp) * b + 3 * 4 * Kp  # weights+bias
           + (H + 2) * (W + 2) * Cp * b            # xpad scratch
           + (Ho + 2) * (Wo + 2) * Kp * b)         # midpad scratch
    return int(min(64 * 2**20, max(16 * 2**20, 2 * est)))


def residual_block_pallas(x_nhwc, fp, *, stride=1):
    """Fused ResidualBlock forward.

    x_nhwc: (N, H, W, Cp) bf16, channels already lane-padded (done once at model entry).
    Returns (N, Ho, Wo, Kp) bf16 with lane-padded channels (sliced once at model exit).
    """
    N, H, W, Cp = x_nhwc.shape
    Kp = fp["w1"].shape[-1]
    assert Cp == fp["w1"].shape[1], (Cp, fp["w1"].shape)
    Ho = (H - 1) // stride + 1
    Wo = (W - 1) // stride + 1
    rs = _pick_row_strip(Ho)
    has_projection = fp["has_projection"]

    kernel = functools.partial(_residual_block_kernel, stride=stride,
                               has_projection=has_projection, row_strip=rs)

    in_specs = [
        pl.BlockSpec((None, H, W, Cp), lambda n: (n, 0, 0, 0)),
        pl.BlockSpec((9, Cp, Kp), lambda n: (0, 0, 0)),
        pl.BlockSpec((1, Kp), lambda n: (0, 0)),
        pl.BlockSpec((9, Kp, Kp), lambda n: (0, 0, 0)),
        pl.BlockSpec((1, Kp), lambda n: (0, 0)),
    ]
    args = [x_nhwc, fp["w1"], fp["b1"], fp["w2"], fp["b2"]]
    if has_projection:
        in_specs += [pl.BlockSpec((Cp, Kp), lambda n: (0, 0)),
                     pl.BlockSpec((1, Kp), lambda n: (0, 0))]
        args += [fp["ws"], fp["bs"]]

    return pl.pallas_call(
        kernel,
        out_shape=jax.ShapeDtypeStruct((N, Ho, Wo, Kp), x_nhwc.dtype),
        grid=(N,),
        in_specs=in_specs,
        out_specs=pl.BlockSpec((None, Ho, Wo, Kp), lambda n: (n, 0, 0, 0)),
        scratch_shapes=[
            pltpu.VMEM((H + 2, W + 2, Cp), jnp.bfloat16),
            pltpu.VMEM((Ho + 2, Wo + 2, Kp), jnp.bfloat16),
        ],
        compiler_params=pltpu.CompilerParams(
            dimension_semantics=("parallel",),
            vmem_limit_bytes=_vmem_limit_bytes(H, W, Ho, Wo, Cp, Kp),
        ),
    )(*args)


# --------------------------- reference (plain JAX / XLA, NHWC) ---------------------- #

def residual_block_ref_nhwc(x, params, stride=1):
    cin = x.shape[-1]
    cout = params["w1"].shape[-1]

    def conv(inp, w, s, pad):
        return lax.conv_general_dilated(
            inp, w, (s, s), pad,
            dimension_numbers=("NHWC", "HWIO", "NHWC"),
            precision=lax.Precision.HIGHEST)

    o = conv(x, params["w1"], stride, ((1, 1), (1, 1))) * params["s1"] + params["b1"]
    o = jnp.maximum(o, 0.0)
    o = conv(o, params["w2"], 1, ((1, 1), (1, 1))) * params["s2"] + params["b2"]
    if stride != 1 or cin != cout:
        sc = conv(x, params["ws"], stride, "VALID") * params["ss"] + params["bs"]
    else:
        sc = x
    return jnp.maximum(o + sc, 0.0)


# --------------------------------- parameter setup --------------------------------- #

def _bn_affine(key, cout, eps=1e-5):
    k1, k2, k3, k4 = jax.random.split(key, 4)
    gamma = 1.0 + 0.1 * jax.random.normal(k1, (cout,), jnp.float32)
    beta = 0.1 * jax.random.normal(k2, (cout,), jnp.float32)
    mean = 0.1 * jax.random.normal(k3, (cout,), jnp.float32)
    var = jax.random.uniform(k4, (cout,), jnp.float32, 0.5, 1.5)
    scale = gamma / jnp.sqrt(var + eps)
    bias = beta - mean * scale
    return scale, bias


def init_params(key, cin, cout):
    k1, k2, k3, k4, k5, k6 = jax.random.split(key, 6)
    p = {
        "w1": 0.1 * jax.random.normal(k1, (3, 3, cin, cout), jnp.float32),
        "w2": 0.1 * jax.random.normal(k2, (3, 3, cout, cout), jnp.float32),
        "ws": 0.1 * jax.random.normal(k3, (1, 1, cin, cout), jnp.float32),
    }
    p["s1"], p["b1"] = _bn_affine(k4, cout)
    p["s2"], p["b2"] = _bn_affine(k5, cout)
    p["ss"], p["bs"] = _bn_affine(k6, cout)
    return p


def fold_params(p, cin, cout, stride):
    """Fold BN scales into conv weights, lane-pad channels, cast weights to bf16 (once)."""
    cp, kp = _round_up(cin, LANES), _round_up(cout, LANES)
    has_projection = (stride != 1) or (cin != cout)

    w1 = p["w1"] * p["s1"][None, None, None, :]
    w1 = jnp.pad(w1, ((0, 0), (0, 0), (0, cp - cin), (0, kp - cout)))
    w2 = p["w2"] * p["s2"][None, None, None, :]
    w2 = jnp.pad(w2, ((0, 0), (0, 0), (0, kp - cout), (0, kp - cout)))
    b1 = jnp.pad(p["b1"], (0, kp - cout)).reshape(1, kp)
    b2 = jnp.pad(p["b2"], (0, kp - cout)).reshape(1, kp)

    fp = {
        "w1": w1.reshape(9, cp, kp).astype(jnp.bfloat16),
        "b1": b1.astype(jnp.float32),
        "w2": w2.reshape(9, kp, kp).astype(jnp.bfloat16),
        "b2": b2.astype(jnp.float32),
        "has_projection": has_projection,
    }
    if has_projection:
        ws = p["ws"].reshape(cin, cout) * p["ss"][None, :]
        ws = jnp.pad(ws, ((0, cp - cin), (0, kp - cout)))
        bs = jnp.pad(p["bs"], (0, kp - cout)).reshape(1, kp)
        fp["ws"] = ws.astype(jnp.bfloat16)
        fp["bs"] = bs.astype(jnp.float32)
    return fp


# -------------------------------------- main --------------------------------------- #

if __name__ == "__main__":
    key = jax.random.PRNGKey(0)
    kx, kp = jax.random.split(key)

    N, Cin, H, W = 2, 4, 16, 16
    Cout = 8
    stride = 1  # Cin != Cout -> the projection shortcut (1x1 conv + BN) path is exercised

    x_nchw = jax.random.normal(kx, (N, Cin, H, W), jnp.float32)
    params = init_params(kp, Cin, Cout)
    folded = fold_params(params, Cin, Cout, stride)

    # One-time model-entry layout prep (NOT per block): NCHW -> NHWC, lane-pad C, bf16.
    Cp = _round_up(Cin, LANES)
    Kp = _round_up(Cout, LANES)
    x_nhwc = jnp.transpose(x_nchw, (0, 2, 3, 1))
    x_in = jnp.pad(x_nhwc, ((0, 0), (0, 0), (0, 0), (0, Cp - Cin))).astype(jnp.bfloat16)

    out_pad = jax.block_until_ready(residual_block_pallas(x_in, folded, stride=stride))

    Ho = (H - 1) // stride + 1
    Wo = (W - 1) // stride + 1
    assert out_pad.shape == (N, Ho, Wo, Kp), out_pad.shape

    out = out_pad[..., :Cout].astype(jnp.float32)            # model-exit un-pad

    # Reference: f32 math (HIGHEST precision) on the same bf16-quantized activation,
    # using the original (un-folded, un-padded) parameters.
    x_ref = x_in[..., :Cin].astype(jnp.float32)
    ref = jax.block_until_ready(residual_block_ref_nhwc(x_ref, params, stride=stride))

    max_err = float(jnp.max(jnp.abs(out - ref)))
    assert jnp.allclose(out, ref, rtol=2.5e-2, atol=2.5e-2), max_err
    if Kp > Cout:  # lane-padding channels must stay exactly zero
        assert float(jnp.max(jnp.abs(out_pad[..., Cout:].astype(jnp.float32)))) == 0.0

    print("KERNEL_OK")
</pallas_src>

<mosaic_0001>
module attributes {stable_mosaic.version = 11 : i64} {
  func.func @_residual_block_kernel(%arg0: i32, %arg1: memref<1x16x16x128xbf16, #tpu.memory_space<vmem>>, %arg2: memref<9x128x128xbf16, #tpu.memory_space<vmem>>, %arg3: memref<1x128xf32, #tpu.memory_space<vmem>>, %arg4: memref<9x128x128xbf16, #tpu.memory_space<vmem>>, %arg5: memref<1x128xf32, #tpu.memory_space<vmem>>, %arg6: memref<128x128xbf16, #tpu.memory_space<vmem>>, %arg7: memref<1x128xf32, #tpu.memory_space<vmem>>, %arg8: memref<1x16x16x128xbf16, #tpu.memory_space<vmem>>, %arg9: memref<18x18x128xbf16, #tpu.memory_space<vmem>>, %arg10: memref<18x18x128xbf16, #tpu.memory_space<vmem>>) attributes {dimension_semantics = [#tpu.dimension_semantics<parallel>], iteration_bounds = array<i64: 2>, scalar_prefetch = 0 : i64, scratch_operands = 2 : i64, tpu.core_type = #tpu.core_type<tc>, window_params = [{transform_indices = @transform_0, window_bounds = array<i64: 1, 16, 16, 128>}, {pipeline_mode = #tpu.pipeline_mode<synchronous>, transform_indices = @transform_1, window_bounds = array<i64: 9, 128, 128>}, {pipeline_mode = #tpu.pipeline_mode<synchronous>, transform_indices = @transform_2, window_bounds = array<i64: 1, 128>}, {pipeline_mode = #tpu.pipeline_mode<synchronous>, transform_indices = @transform_3, window_bounds = array<i64: 9, 128, 128>}, {pipeline_mode = #tpu.pipeline_mode<synchronous>, transform_indices = @transform_4, window_bounds = array<i64: 1, 128>}, {pipeline_mode = #tpu.pipeline_mode<synchronous>, transform_indices = @transform_5, window_bounds = array<i64: 128, 128>}, {pipeline_mode = #tpu.pipeline_mode<synchronous>, transform_indices = @transform_6, window_bounds = array<i64: 1, 128>}, {transform_indices = @transform_7, window_bounds = array<i64: 1, 16, 16, 128>}]} {
    %cst = arith.constant 0.000000e+00 : bf16
    %0 = vector.broadcast %cst : bf16 to vector<1x18x128xbf16>
    %c0 = arith.constant 0 : index
    %c0_0 = arith.constant 0 : index
    %c0_1 = arith.constant 0 : index
    %1 = vector.load %arg9[%c0, %c0_0, %c0_1] : memref<18x18x128xbf16, #tpu.memory_space<vmem>>, vector<1x18x128xbf16>
    tpu.vector_store %arg9[%c0, %c0_0, %c0_1], %0 {strides = array<i32>} : memref<18x18x128xbf16, #tpu.memory_space<vmem>>, vector<1x18x128xbf16>,
    %cst_2 = arith.constant 0.000000e+00 : bf16
    %2 = vector.broadcast %cst_2 : bf16 to vector<1x18x128xbf16>
    %c17 = arith.constant 17 : index
    %c0_3 = arith.constant 0 : index
    %c0_4 = arith.constant 0 : index
    %3 = vector.load %arg9[%c17, %c0_3, %c0_4] : memref<18x18x128xbf16, #tpu.memory_space<vmem>>, vector<1x18x128xbf16>
    tpu.vector_store %arg9[%c17, %c0_3, %c0_4], %2 {strides = array<i32>} : memref<18x18x128xbf16, #tpu.memory_space<vmem>>, vector<1x18x128xbf16>,
    %cst_5 = arith.constant 0.000000e+00 : bf16
    %4 = vector.broadcast %cst_5 : bf16 to vector<18x1x128xbf16>
    %c0_6 = arith.constant 0 : index
    %c0_7 = arith.constant 0 : index
    %c0_8 = arith.constant 0 : index
    %5 = vector.load %arg9[%c0_6, %c0_7, %c0_8] : memref<18x18x128xbf16, #tpu.memory_space<vmem>>, vector<18x1x128xbf16>
    tpu.vector_store %arg9[%c0_6, %c0_7, %c0_8], %4 {strides = array<i32>} : memref<18x18x128xbf16, #tpu.memory_space<vmem>>, vector<18x1x128xbf16>,
    %cst_9 = arith.constant 0.000000e+00 : bf16
    %6 = vector.broadcast %cst_9 : bf16 to vector<18x1x128xbf16>
    %c0_10 = arith.constant 0 : index
    %c17_11 = arith.constant 17 : index
    %c0_12 = arith.constant 0 : index
    %7 = vector.load %arg9[%c0_10, %c17_11, %c0_12] : memref<18x18x128xbf16, #tpu.memory_space<vmem>>, vector<18x1x128xbf16>
    tpu.vector_store %arg9[%c0_10, %c17_11, %c0_12], %6 {strides = array<i32>} : memref<18x18x128xbf16, #tpu.memory_space<vmem>>, vector<18x1x128xbf16>,
    %cst_13 = arith.constant 0.000000e+00 : bf16
    %8 = vector.broadcast %cst_13 : bf16 to vector<1x18x128xbf16>
    %c0_14 = arith.constant 0 : index
    %c0_15 = arith.constant 0 : index
    %c0_16 = arith.constant 0 : index
    %9 = vector.load %arg10[%c0_14, %c0_15, %c0_16] : memref<18x18x128xbf16, #tpu.memory_space<vmem>>, vector<1x18x128xbf16>
    tpu.vector_store %arg10[%c0_14, %c0_15, %c0_16], %8 {strides = array<i32>} : memref<18x18x128xbf16, #tpu.memory_space<vmem>>, vector<1x18x128xbf16>,
    %cst_17 = arith.constant 0.000000e+00 : bf16
    %10 = vector.broadcast %cst_17 : bf16 to vector<1x18x128xbf16>
    %c17_18 = arith.constant 17 : index
    %c0_19 = arith.constant 0 : index
    %c0_20 = arith.constant 0 : index
    %11 = vector.load %arg10[%c17_18, %c0_19, %c0_20] : memref<18x18x128xbf16, #tpu.memory_space<vmem>>, vector<1x18x128xbf16>
    tpu.vector_store %arg10[%c17_18, %c0_19, %c0_20], %10 {strides = array<i32>} : memref<18x18x128xbf16, #tpu.memory_space<vmem>>, vector<1x18x128xbf16>,
    %cst_21 = arith.constant 0.000000e+00 : bf16
    %12 = vector.broadcast %cst_21 : bf16 to vector<18x1x128xbf16>
    %c0_22 = arith.constant 0 : index
    %c0_23 = arith.constant 0 : index
    %c0_24 = arith.constant 0 : index
    %13 = vector.load %arg10[%c0_22, %c0_23, %c0_24] : memref<18x18x128xbf16, #tpu.memory_space<vmem>>, vector<18x1x128xbf16>
    tpu.vector_store %arg10[%c0_22, %c0_23, %c0_24], %12 {strides = array<i32>} : memref<18x18x128xbf16, #tpu.memory_space<vmem>>, vector<18x1x128xbf16>,
    %cst_25 = arith.constant 0.000000e+00 : bf16
    %14 = vector.broadcast %cst_25 : bf16 to vector<18x1x128xbf16>
    %c0_26 = arith.constant 0 : index
    %c17_27 = arith.constant 17 : index
    %c0_28 = arith.constant 0 : index
    %15 = vector.load %arg10[%c0_26, %c17_27, %c0_28] : memref<18x18x128xbf16, #tpu.memory_space<vmem>>, vector<18x1x128xbf16>
    tpu.vector_store %arg10[%c0_26, %c17_27, %c0_28], %14 {strides = array<i32>} : memref<18x18x128xbf16, #tpu.memory_space<vmem>>, vector<18x1x128xbf16>,
    %c0_29 = arith.constant 0 : index
    %c0_30 = arith.constant 0 : index
    %c0_31 = arith.constant 0 : index
    %c0_32 = arith.constant 0 : index
    %16 = vector.load %arg1[%c0_29, %c0_30, %c0_31, %c0_32] : memref<1x16x16x128xbf16, #tpu.memory_space<vmem>>, vector<1x16x16x128xbf16>
    %17 = vector.shape_cast %16 : vector<1x16x16x128xbf16> to vector<16x16x128xbf16>
    %c1 = arith.constant 1 : index
    %c1_33 = arith.constant 1 : index
    %c0_34 = arith.constant 0 : index
    %18 = vector.load %arg9[%c1, %c1_33, %c0_34] : memref<18x18x128xbf16, #tpu.memory_space<vmem>>, vector<16x16x128xbf16>
    tpu.vector_store %arg9[%c1, %c1_33, %c0_34], %17 {strides = array<i32>} : memref<18x18x128xbf16, #tpu.memory_space<vmem>>, vector<16x16x128xbf16>,
    %c0_35 = arith.constant 0 : index
    %c0_36 = arith.constant 0 : index
    %19 = vector.load %arg3[%c0_35, %c0_36] : memref<1x128xf32, #tpu.memory_space<vmem>>, vector<1x128xf32>
    %c0_37 = arith.constant 0 : index
    %c0_38 = arith.constant 0 : index
    %20 = vector.load %arg5[%c0_37, %c0_38] : memref<1x128xf32, #tpu.memory_space<vmem>>, vector<1x128xf32>
    %c0_i32 = arith.constant 0 : i32
    %c8_i32 = arith.constant 8 : i32
    %21 = arith.muli %c0_i32, %c8_i32 : i32
    %22 = tpu.assume_multiple %21, 8 : i32
    %cst_39 = arith.constant 0.000000e+00 : f32
    %23 = vector.broadcast %cst_39 : f32 to vector<128x128xf32>
    %c0_i32_40 = arith.constant 0 : i32
    %24 = arith.addi %22, %c0_i32_40 : i32
    %25 = arith.index_cast %24 : i32 to index
    %c0_41 = arith.constant 0 : index
    %c0_42 = arith.constant 0 : index
    %26 = vector.load %arg9[%25, %c0_41, %c0_42] : memref<18x18x128xbf16, #tpu.memory_space<vmem>>, vector<8x16x128xbf16>
    %27 = vector.shape_cast %26 : vector<8x16x128xbf16> to vector<128x128xbf16>
    %c0_43 = arith.constant 0 : index
    %c0_44 = arith.constant 0 : index
    %c0_45 = arith.constant 0 : index
    %28 = vector.load %arg2[%c0_43, %c0_44, %c0_45] : memref<9x128x128xbf16, #tpu.memory_space<vmem>>, vector<1x128x128xbf16>
    %29 = vector.shape_cast %28 : vector<1x128x128xbf16> to vector<128x128xbf16>
    %cst_46 = arith.constant dense<0.000000e+00> : vector<128x128xf32>
    %30 = tpu.matmul %27, %29, %cst_46 {dimension_numbers = #tpu.dot_dimension_numbers<[1], [0], [0], [1], [0, 0, 1, 1], [], []>} : vector<128x128xbf16>, vector<128x128xbf16>, vector<128x128xf32> -> vector<128x128xf32>
    %31 = arith.addf %23, %30 : vector<128x128xf32>
    %c0_i32_47 = arith.constant 0 : i32
    %32 = arith.addi %22, %c0_i32_47 : i32
    %33 = arith.index_cast %32 : i32 to index
    %c1_48 = arith.constant 1 : index
    %c0_49 = arith.constant 0 : index
    %34 = vector.load %arg9[%33, %c1_48, %c0_49] : memref<18x18x128xbf16, #tpu.memory_space<vmem>>, vector<8x16x128xbf16>
    %35 = vector.shape_cast %34 : vector<8x16x128xbf16> to vector<128x128xbf16>
    %c1_50 = arith.constant 1 : index
    %c0_51 = arith.constant 0 : index
    %c0_52 = arith.constant 0 : index
    %36 = vector.load %arg2[%c1_50, %c0_51, %c0_52] : memref<9x128x128xbf16, #tpu.memory_space<vmem>>, vector<1x128x128xbf16>
    %37 = vector.shape_cast %36 : vector<1x128x128xbf16> to vector<128x128xbf16>
    %cst_53 = arith.constant dense<0.000000e+00> : vector<128x128xf32>
    %38 = tpu.matmul %35, %37, %cst_53 {dimension_numbers = #tpu.dot_dimension_numbers<[1], [0], [0], [1], [0, 0, 1, 1], [], []>} : vector<128x128xbf16>, vector<128x128xbf16>, vector<128x128xf32> -> vector<128x128xf32>
    %39 = arith.addf %31, %38 : vector<128x128xf32>
    %c0_i32_54 = arith.constant 0 : i32
    %40 = arith.addi %22, %c0_i32_54 : i32
    %41 = arith.index_cast %40 : i32 to index
    %c2 = arith.constant 2 : index
    %c0_55 = arith.constant 0 : index
    %42 = vector.load %arg9[%41, %c2, %c0_55] : memref<18x18x128xbf16, #tpu.memory_space<vmem>>, vector<8x16x128xbf16>
    %43 = vector.shape_cast %42 : vector<8x16x128xbf16> to vector<128x128xbf16>
    %c2_56 = arith.constant 2 : index
    %c0_57 = arith.constant 0 : index
    %c0_58 = arith.constant 0 : index
    %44 = vector.load %arg2[%c2_56, %c0_57, %c0_58] : memref<9x128x128xbf16, #tpu.memory_space<vmem>>, vector<1x128x128xbf16>
    %45 = vector.shape_cast %44 : vector<1x128x128xbf16> to vector<128x128xbf16>
    %cst_59 = arith.constant dense<0.000000e+00> : vector<128x128xf32>
    %46 = tpu.matmul %43, %45, %cst_59 {dimension_numbers = #tpu.dot_dimension_numbers<[1], [0], [0], [1], [0, 0, 1, 1], [], []>} : vector<128x128xbf16>, vector<128x128xbf16>, vector<128x128xf32> -> vector<128x128xf32>
    %47 = arith.addf %39, %46 : vector<128x128xf32>
    %c1_i32 = arith.constant 1 : i32
    %48 = arith.addi %22, %c1_i32 : i32
    %49 = arith.index_cast %48 : i32 to index
    %c0_60 = arith.constant 0 : index
    %c0_61 = arith.constant 0 : index
    %50 = vector.load %arg9[%49, %c0_60, %c0_61] : memref<18x18x128xbf16, #tpu.memory_space<vmem>>, vector<8x16x128xbf16>
    %51 = vector.shape_cast %50 : vector<8x16x128xbf16> to vector<128x128xbf16>
    %c3 = arith.constant 3 : index
    %c0_62 = arith.constant 0 : index
    %c0_63 = arith.constant 0 : index
    %52 = vector.load %arg2[%c3, %c0_62, %c0_63] : memref<9x128x128xbf16, #tpu.memory_space<vmem>>, vector<1x128x128xbf16>
    %53 = vector.shape_cast %52 : vector<1x128x128xbf16> to vector<128x128xbf16>
    %cst_64 = arith.constant dense<0.000000e+00> : vector<128x128xf32>
    %54 = tpu.matmul %51, %53, %cst_64 {dimension_numbers = #tpu.dot_dimension_numbers<[1], [0], [0], [1], [0, 0, 1, 1], [], []>} : vector<128x128xbf16>, vector<128x128xbf16>, vector<128x128xf32> -> vector<128x128xf32>
    %55 = arith.addf %47, %54 : vector<128x128xf32>
    %c1_i32_65 = arith.constant 1 : i32
    %56 = arith.addi %22, %c1_i32_65 : i32
    %57 = arith.index_cast %56 : i32 to index
    %c1_66 = arith.constant 1 : index
    %c0_67 = arith.constant 0 : index
    %58 = vector.load %arg9[%57, %c1_66, %c0_67] : memref<18x18x128xbf16, #tpu.memory_space<vmem>>, vector<8x16x128xbf16>
    %59 = vector.shape_cast %58 : vector<8x16x128xbf16> to vector<128x128xbf16>
    %c4 = arith.constant 4 : index
    %c0_68 = arith.constant 0 : index
    %c0_69 = arith.constant 0 : index
    %60 = vector.load %arg2[%c4, %c0_68, %c0_69] : memref<9x128x128xbf16, #tpu.memory_space<vmem>>, vector<1x128x128xbf16>
    %61 = vector.shape_cast %60 : vector<1x128x128xbf16> to vector<128x128xbf16>
    %cst_70 = arith.constant dense<0.000000e+00> : vector<128x128xf32>
    %62 = tpu.matmul %59, %61, %cst_70 {dimension_numbers = #tpu.dot_dimension_numbers<[1], [0], [0], [1], [0, 0, 1, 1], [], []>} : vector<128x128xbf16>, vector<128x128xbf16>, vector<128x128xf32> -> vector<128x128xf32>
    %63 = arith.addf %55, %62 : vector<128x128xf32>
    %c1_i32_71 = arith.constant 1 : i32
    %64 = arith.addi %22, %c1_i32_71 : i32
    %65 = arith.index_cast %64 : i32 to index
    %c2_72 = arith.constant 2 : index
    %c0_73 = arith.constant 0 : index
    %66 = vector.load %arg9[%65, %c2_72, %c0_73] : memref<18x18x128xbf16, #tpu.memory_space<vmem>>, vector<8x16x128xbf16>
    %67 = vector.shape_cast %66 : vector<8x16x128xbf16> to vector<128x128xbf16>
    %c5 = arith.constant 5 : index
    %c0_74 = arith.constant 0 : index
    %c0_75 = arith.constant 0 : index
    %68 = vector.load %arg2[%c5, %c0_74, %c0_75] : memref<9x128x128xbf16, #tpu.memory_space<vmem>>, vector<1x128x128xbf16>
    %69 = vector.shape_cast %68 : vector<1x128x128xbf16> to vector<128x128xbf16>
    %cst_76 = arith.constant dense<0.000000e+00> : vector<128x128xf32>
    %70 = tpu.matmul %67, %69, %cst_76 {dimension_numbers = #tpu.dot_dimension_numbers<[1], [0], [0], [1], [0, 0, 1, 1], [], []>} : vector<128x128xbf16>, vector<128x128xbf16>, vector<128x128xf32> -> vector<128x128xf32>
    %71 = arith.addf %63, %70 : vector<128x128xf32>
    %c2_i32 = arith.constant 2 : i32
    %72 = arith.addi %22, %c2_i32 : i32
    %73 = arith.index_cast %72 : i32 to index
    %c0_77 = arith.constant 0 : index
    %c0_78 = arith.constant 0 : index
    %74 = vector.load %arg9[%73, %c0_77, %c0_78] : memref<18x18x128xbf16, #tpu.memory_space<vmem>>, vector<8x16x128xbf16>
    %75 = vector.shape_cast %74 : vector<8x16x128xbf16> to vector<128x128xbf16>
    %c6 = arith.constant 6 : index
    %c0_79 = arith.constant 0 : index
    %c0_80 = arith.constant 0 : index
    %76 = vector.load %arg2[%c6, %c0_79, %c0_80] : memref<9x128x128xbf16, #tpu.memory_space<vmem>>, vector<1x128x128xbf16>
    %77 = vector.shape_cast %76 : vector<1x128x128xbf16> to vector<128x128xbf16>
    %cst_81 = arith.constant dense<0.000000e+00> : vector<128x128xf32>
    %78 = tpu.matmul %75, %77, %cst_81 {dimension_numbers = #tpu.dot_dimension_numbers<[1], [0], [0], [1], [0, 0, 1, 1], [], []>} : vector<128x128xbf16>, vector<128x128xbf16>, vector<128x128xf32> -> vector<128x128xf32>
    %79 = arith.addf %71, %78 : vector<128x128xf32>
    %c2_i32_82 = arith.constant 2 : i32
    %80 = arith.addi %22, %c2_i32_82 : i32
    %81 = arith.index_cast %80 : i32 to index
    %c1_83 = arith.constant 1 : index
    %c0_84 = arith.constant 0 : index
    %82 = vector.load %arg9[%81, %c1_83, %c0_84] : memref<18x18x128xbf16, #tpu.memory_space<vmem>>, vector<8x16x128xbf16>
    %83 = vector.shape_cast %82 : vector<8x16x128xbf16> to vector<128x128xbf16>
    %c7 = arith.constant 7 : index
    %c0_85 = arith.constant 0 : index
    %c0_86 = arith.constant 0 : index
    %84 = vector.load %arg2[%c7, %c0_85, %c0_86] : memref<9x128x128xbf16, #tpu.memory_space<vmem>>, vector<1x128x128xbf16>
    %85 = vector.shape_cast %84 : vector<1x128x128xbf16> to vector<128x128xbf16>
    %cst_87 = arith.constant dense<0.000000e+00> : vector<128x128xf32>
    %86 = tpu.matmul %83, %85, %cst_87 {dimension_numbers = #tpu.dot_dimension_numbers<[1], [0], [0], [1], [0, 0, 1, 1], [], []>} : vector<128x128xbf16>, vector<128x128xbf16>, vector<128x128xf32> -> vector<128x128xf32>
    %87 = arith.addf %79, %86 : vector<128x128xf32>
    %c2_i32_88 = arith.constant 2 : i32
    %88 = arith.addi %22, %c2_i32_88 : i32
    %89 = arith.index_cast %88 : i32 to index
    %c2_89 = arith.constant 2 : index
    %c0_90 = arith.constant 0 : index
    %90 = vector.load %arg9[%89, %c2_89, %c0_90] : memref<18x18x128xbf16, #tpu.memory_space<vmem>>, vector<8x16x128xbf16>
    %91 = vector.shape_cast %90 : vector<8x16x128xbf16> to vector<128x128xbf16>
    %c8 = arith.constant 8 : index
    %c0_91 = arith.constant 0 : index
    %c0_92 = arith.constant 0 : index
    %92 = vector.load %arg2[%c8, %c0_91, %c0_92] : memref<9x128x128xbf16, #tpu.memory_space<vmem>>, vector<1x128x128xbf16>
    %93 = vector.shape_cast %92 : vector<1x128x128xbf16> to vector<128x128xbf16>
    %cst_93 = arith.constant dense<0.000000e+00> : vector<128x128xf32>
    %94 = tpu.matmul %91, %93, %cst_93 {dimension_numbers = #tpu.dot_dimension_numbers<[1], [0], [0], [1], [0, 0, 1, 1], [], []>} : vector<128x128xbf16>, vector<128x128xbf16>, vector<128x128xf32> -> vector<128x128xf32>
    %95 = arith.addf %87, %94 : vector<128x128xf32>
    %96 = vector.broadcast %19 : vector<1x128xf32> to vector<128x128xf32>
    %97 = arith.addf %95, %96 : vector<128x128xf32>
    %cst_94 = arith.constant 0.000000e+00 : f32
    %98 = vector.broadcast %cst_94 : f32 to vector<128x128xf32>
    %99 = arith.maximumf %97, %98 : vector<128x128xf32>
    %100 = vector.shape_cast %99 : vector<128x128xf32> to vector<8x16x128xf32>
    %101 = arith.truncf %100 : vector<8x16x128xf32> to vector<8x16x128xbf16>
    %c1_i32_95 = arith.constant 1 : i32
    %102 = arith.addi %c1_i32_95, %22 : i32
    %103 = arith.index_cast %102 : i32 to index
    %c1_96 = arith.constant 1 : index
    %c0_97 = arith.constant 0 : index
    %104 = vector.load %arg10[%103, %c1_96, %c0_97] : memref<18x18x128xbf16, #tpu.memory_space<vmem>>, vector<8x16x128xbf16>
    tpu.vector_store %arg10[%103, %c1_96, %c0_97], %101 {strides = array<i32>} : memref<18x18x128xbf16, #tpu.memory_space<vmem>>, vector<8x16x128xbf16>,
    %c1_i32_98 = arith.constant 1 : i32
    %c8_i32_99 = arith.constant 8 : i32
    %105 = arith.muli %c1_i32_98, %c8_i32_99 : i32
    %106 = tpu.assume_multiple %105, 8 : i32
    %cst_100 = arith.constant 0.000000e+00 : f32
    %107 = vector.broadcast %cst_100 : f32 to vector<128x128xf32>
    %c0_i32_101 = arith.constant 0 : i32
    %108 = arith.addi %106, %c0_i32_101 : i32
    %109 = arith.index_cast %108 : i32 to index
    %c0_102 = arith.constant 0 : index
    %c0_103 = arith.constant 0 : index
    %110 = vector.load %arg9[%109, %c0_102, %c0_103] : memref<18x18x128xbf16, #tpu.memory_space<vmem>>, vector<8x16x128xbf16>
    %111 = vector.shape_cast %110 : vector<8x16x128xbf16> to vector<128x128xbf16>
    %c0_104 = arith.constant 0 : index
    %c0_105 = arith.constant 0 : index
    %c0_106 = arith.constant 0 : index
    %112 = vector.load %arg2[%c0_104, %c0_105, %c0_106] : memref<9x128x128xbf16, #tpu.memory_space<vmem>>, vector<1x128x128xbf16>
    %113 = vector.shape_cast %112 : vector<1x128x128xbf16> to vector<128x128xbf16>
    %cst_107 = arith.constant dense<0.000000e+00> : vector<128x128xf32>
    %114 = tpu.matmul %111, %113, %cst_107 {dimension_numbers = #tpu.dot_dimension_numbers<[1], [0], [0], [1], [0, 0, 1, 1], [], []>} : vector<128x128xbf16>, vector<128x128xbf16>, vector<128x128xf32> -> vector<128x128xf32>
    %115 = arith.addf %107, %114 : vector<128x128xf32>
    %c0_i32_108 = arith.constant 0 : i32
    %116 = arith.addi %106, %c0_i32_108 : i32
    %117 = arith.index_cast %116 : i32 to index
    %c1_109 = arith.constant 1 : index
    %c0_110 = arith.constant 0 : index
    %118 = vector.load %arg9[%117, %c1_109, %c0_110] : memref<18x18x128xbf16, #tpu.memory_space<vmem>>, vector<8x16x128xbf16>
    %119 = vector.shape_cast %118 : vector<8x16x128xbf16> to vector<128x128xbf16>
    %c1_111 = arith.constant 1 : index
    %c0_112 = arith.constant 0 : index
    %c0_113 = arith.constant 0 : index
    %120 = vector.load %arg2[%c1_111, %c0_112, %c0_113] : memref<9x128x128xbf16, #tpu.memory_space<vmem>>, vector<1x128x128xbf16>
    %121 = vector.shape_cast %120 : vector<1x128x128xbf16> to vector<128x128xbf16>
    %cst_114 = arith.constant dense<0.000000e+00> : vector<128x128xf32>
    %122 = tpu.matmul %119, %121, %cst_114 {dimension_numbers = #tpu.dot_dimension_numbers<[1], [0], [0], [1], [0, 0, 1, 1], [], []>} : vector<128x128xbf16>, vector<128x128xbf16>, vector<128x128xf32> -> vector<128x128xf32>
    %123 = arith.addf %115, %122 : vector<128x128xf32>
    %c0_i32_115 = arith.constant 0 : i32
    %124 = arith.addi %106, %c0_i32_115 : i32
    %125 = arith.index_cast %124 : i32 to index
    %c2_116 = arith.constant 2 : index
    %c0_117 = arith.constant 0 : index
    %126 = vector.load %arg9[%125, %c2_116, %c0_117] : memref<18x18x128xbf16, #tpu.memory_space<vmem>>, vector<8x16x128xbf16>
    %127 = vector.shape_cast %126 : vector<8x16x128xbf16> to vector<128x128xbf16>
    %c2_118 = arith.constant 2 : index
    %c0_119 = arith.constant 0 : index
    %c0_120 = arith.constant 0 : index
    %128 = vector.load %arg2[%c2_118, %c0_119, %c0_120] : memref<9x128x128xbf16, #tpu.memory_space<vmem>>, vector<1x128x128xbf16>
    %129 = vector.shape_cast %128 : vector<1x128x128xbf16> to vector<128x128xbf16>
    %cst_121 = arith.constant dense<0.000000e+00> : vector<128x128xf32>
    %130 = tpu.matmul %127, %129, %cst_121 {dimension_numbers = #tpu.dot_dimension_numbers<[1], [0], [0], [1], [0, 0, 1, 1], [], []>} : vector<128x128xbf16>, vector<128x128xbf16>, vector<128x128xf32> -> vector<128x128xf32>
    %131 = arith.addf %123, %130 : vector<128x128xf32>
    %c1_i32_122 = arith.constant 1 : i32
    %132 = arith.addi %106, %c1_i32_122 : i32
    %133 = arith.index_cast %132 : i32 to index
    %c0_123 = arith.constant 0 : index
    %c0_124 = arith.constant 0 : index
    %134 = vector.load %arg9[%133, %c0_123, %c0_124] : memref<18x18x128xbf16, #tpu.memory_space<vmem>>, vector<8x16x128xbf16>
    %135 = vector.shape_cast %134 : vector<8x16x128xbf16> to vector<128x128xbf16>
    %c3_125 = arith.constant 3 : index
    %c0_126 = arith.constant 0 : index
    %c0_127 = arith.constant 0 : index
    %136 = vector.load %arg2[%c3_125, %c0_126, %c0_127] : memref<9x128x128xbf16, #tpu.memory_space<vmem>>, vector<1x128x128xbf16>
    %137 = vector.shape_cast %136 : vector<1x128x128xbf16> to vector<128x128xbf16>
    %cst_128 = arith.constant dense<0.000000e+00> : vector<128x128xf32>
    %138 = tpu.matmul %135, %137, %cst_128 {dimension_numbers = #tpu.dot_dimension_numbers<[1], [0], [0], [1], [0, 0, 1, 1], [], []>} : vector<128x128xbf16>, vector<128x128xbf16>, vector<128x128xf32> -> vector<128x128xf32>
    %139 = arith.addf %131, %138 : vector<128x128xf32>
    %c1_i32_129 = arith.constant 1 : i32
    %140 = arith.addi %106, %c1_i32_129 : i32
    %141 = arith.index_cast %140 : i32 to index
    %c1_130 = arith.constant 1 : index
    %c0_131 = arith.constant 0 : index
    %142 = vector.load %arg9[%141, %c1_130, %c0_131] : memref<18x18x128xbf16, #tpu.memory_space<vmem>>, vector<8x16x128xbf16>
    %143 = vector.shape_cast %142 : vector<8x16x128xbf16> to vector<128x128xbf16>
    %c4_132 = arith.constant 4 : index
    %c0_133 = arith.constant 0 : index
    %c0_134 = arith.constant 0 : index
    %144 = vector.load %arg2[%c4_132, %c0_133, %c0_134] : memref<9x128x128xbf16, #tpu.memory_space<vmem>>, vector<1x128x128xbf16>
    %145 = vector.shape_cast %144 : vector<1x128x128xbf16> to vector<128x128xbf16>
    %cst_135 = arith.constant dense<0.000000e+00> : vector<128x128xf32>
    %146 = tpu.matmul %143, %145, %cst_135 {dimension_numbers = #tpu.dot_dimension_numbers<[1], [0], [0], [1], [0, 0, 1, 1], [], []>} : vector<128x128xbf16>, vector<128x128xbf16>, vector<128x128xf32> -> vector<128x128xf32>
    %147 = arith.addf %139, %146 : vector<128x128xf32>
    %c1_i32_136 = arith.constant 1 : i32
    %148 = arith.addi %106, %c1_i32_136 : i32
    %149 = arith.index_cast %148 : i32 to index
    %c2_137 = arith.constant 2 : index
    %c0_138 = arith.constant 0 : index
    %150 = vector.load %arg9[%149, %c2_137, %c0_138] : memref<18x18x128xbf16, #tpu.memory_space<vmem>>, vector<8x16x128xbf16>
    %151 = vector.shape_cast %150 : vector<8x16x128xbf16> to vector<128x128xbf16>
    %c5_139 = arith.constant 5 : index
    %c0_140 = arith.constant 0 : index
    %c0_141 = arith.constant 0 : index
    %152 = vector.load %arg2[%c5_139, %c0_140, %c0_141] : memref<9x128x128xbf16, #tpu.memory_space<vmem>>, vector<1x128x128xbf16>
    %153 = vector.shape_cast %152 : vector<1x128x128xbf16> to vector<128x128xbf16>
    %cst_142 = arith.constant dense<0.000000e+00> : vector<128x128xf32>
    %154 = tpu.matmul %151, %153, %cst_142 {dimension_numbers = #tpu.dot_dimension_numbers<[1], [0], [0], [1], [0, 0, 1, 1], [], []>} : vector<128x128xbf16>, vector<128x128xbf16>, vector<128x128xf32> -> vector<128x128xf32>
    %155 = arith.addf %147, %154 : vector<128x128xf32>
    %c2_i32_143 = arith.constant 2 : i32
    %156 = arith.addi %106, %c2_i32_143 : i32
    %157 = arith.index_cast %156 : i32 to index
    %c0_144 = arith.constant 0 : index
    %c0_145 = arith.constant 0 : index
    %158 = vector.load %arg9[%157, %c0_144, %c0_145] : memref<18x18x128xbf16, #tpu.memory_space<vmem>>, vector<8x16x128xbf16>
    %159 = vector.shape_cast %158 : vector<8x16x128xbf16> to vector<128x128xbf16>
    %c6_146 = arith.constant 6 : index
    %c0_147 = arith.constant 0 : index
    %c0_148 = arith.constant 0 : index
    %160 = vector.load %arg2[%c6_146, %c0_147, %c0_148] : memref<9x128x128xbf16, #tpu.memory_space<vmem>>, vector<1x128x128xbf16>
    %161 = vector.shape_cast %160 : vector<1x128x128xbf16> to vector<128x128xbf16>
    %cst_149 = arith.constant dense<0.000000e+00> : vector<128x128xf32>
    %162 = tpu.matmul %159, %161, %cst_149 {dimension_numbers = #tpu.dot_dimension_numbers<[1], [0], [0], [1], [0, 0, 1, 1], [], []>} : vector<128x128xbf16>, vector<128x128xbf16>, vector<128x128xf32> -> vector<128x128xf32>
    %163 = arith.addf %155, %162 : vector<128x128xf32>
    %c2_i32_150 = arith.constant 2 : i32
    %164 = arith.addi %106, %c2_i32_150 : i32
    %165 = arith.index_cast %164 : i32 to index
    %c1_151 = arith.constant 1 : index
    %c0_152 = arith.constant 0 : index
    %166 = vector.load %arg9[%165, %c1_151, %c0_152] : memref<18x18x128xbf16, #tpu.memory_space<vmem>>, vector<8x16x128xbf16>
    %167 = vector.shape_cast %166 : vector<8x16x128xbf16> to vector<128x128xbf16>
    %c7_153 = arith.constant 7 : index
    %c0_154 = arith.constant 0 : index
    %c0_155 = arith.constant 0 : index
    %168 = vector.load %arg2[%c7_153, %c0_154, %c0_155] : memref<9x128x128xbf16, #tpu.memory_space<vmem>>, vector<1x128x128xbf16>
    %169 = vector.shape_cast %168 : vector<1x128x128xbf16> to vector<128x128xbf16>
    %cst_156 = arith.constant dense<0.000000e+00> : vector<128x128xf32>
    %170 = tpu.matmul %167, %169, %cst_156 {dimension_numbers = #tpu.dot_dimension_numbers<[1], [0], [0], [1], [0, 0, 1, 1], [], []>} : vector<128x128xbf16>, vector<128x128xbf16>, vector<128x128xf32> -> vector<128x128xf32>
    %171 = arith.addf %163, %170 : vector<128x128xf32>
    %c2_i32_157 = arith.constant 2 : i32
    %172 = arith.addi %106, %c2_i32_157 : i32
    %173 = arith.index_cast %172 : i32 to index
    %c2_158 = arith.constant 2 : index
    %c0_159 = arith.constant 0 : index
    %174 = vector.load %arg9[%173, %c2_158, %c0_159] : memref<18x18x128xbf16, #tpu.memory_space<vmem>>, vector<8x16x128xbf16>
    %175 = vector.shape_cast %174 : vector<8x16x128xbf16> to vector<128x128xbf16>
    %c8_160 = arith.constant 8 : index
    %c0_161 = arith.constant 0 : index
    %c0_162 = arith.constant 0 : index
    %176 = vector.load %arg2[%c8_160, %c0_161, %c0_162] : memref<9x128x128xbf16, #tpu.memory_space<vmem>>, vector<1x128x128xbf16>
    %177 = vector.shape_cast %176 : vector<1x128x128xbf16> to vector<128x128xbf16>
    %cst_163 = arith.constant dense<0.000000e+00> : vector<128x128xf32>
    %178 = tpu.matmul %175, %177, %cst_163 {dimension_numbers = #tpu.dot_dimension_numbers<[1], [0], [0], [1], [0, 0, 1, 1], [], []>} : vector<128x128xbf16>, vector<128x128xbf16>, vector<128x128xf32> -> vector<128x128xf32>
    %179 = arith.addf %171, %178 : vector<128x128xf32>
    %180 = vector.broadcast %19 : vector<1x128xf32> to vector<128x128xf32>
    %181 = arith.addf %179, %180 : vector<128x128xf32>
    %cst_164 = arith.constant 0.000000e+00 : f32
    %182 = vector.broadcast %cst_164 : f32 to vector<128x128xf32>
    %183 = arith.maximumf %181, %182 : vector<128x128xf32>
    %184 = vector.shape_cast %183 : vector<128x128xf32> to vector<8x16x128xf32>
    %185 = arith.truncf %184 : vector<8x16x128xf32> to vector<8x16x128xbf16>
    %c1_i32_165 = arith.constant 1 : i32
    %186 = arith.addi %c1_i32_165, %106 : i32
    %187 = arith.index_cast %186 : i32 to index
    %c1_166 = arith.constant 1 : index
    %c0_167 = arith.constant 0 : index
    %188 = vector.load %arg10[%187, %c1_166, %c0_167] : memref<18x18x128xbf16, #tpu.memory_space<vmem>>, vector<8x16x128xbf16>
    tpu.vector_store %arg10[%187, %c1_166, %c0_167], %185 {strides = array<i32>} : memref<18x18x128xbf16, #tpu.memory_space<vmem>>, vector<8x16x128xbf16>,
    %c2_i32_168 = arith.constant 2 : i32
    %c0_i32_169 = arith.constant 0 : i32
    %c8_i32_170 = arith.constant 8 : i32
    %189 = arith.muli %c0_i32_169, %c8_i32_170 : i32
    %190 = tpu.assume_multiple %189, 8 : i32
    %cst_171 = arith.constant 0.000000e+00 : f32
    %191 = vector.broadcast %cst_171 : f32 to vector<128x128xf32>
    %c0_i32_172 = arith.constant 0 : i32
    %192 = arith.addi %190, %c0_i32_172 : i32
    %193 = arith.index_cast %192 : i32 to index
    %c0_173 = arith.constant 0 : index
    %c0_174 = arith.constant 0 : index
    %194 = vector.load %arg10[%193, %c0_173, %c0_174] : memref<18x18x128xbf16, #tpu.memory_space<vmem>>, vector<8x16x128xbf16>
    %195 = vector.shape_cast %194 : vector<8x16x128xbf16> to vector<128x128xbf16>
    %c0_175 = arith.constant 0 : index
    %c0_176 = arith.constant 0 : index
    %c0_177 = arith.constant 0 : index
    %196 = vector.load %arg4[%c0_175, %c0_176, %c0_177] : memref<9x128x128xbf16, #tpu.memory_space<vmem>>, vector<1x128x128xbf16>
    %197 = vector.shape_cast %196 : vector<1x128x128xbf16> to vector<128x128xbf16>
    %cst_178 = arith.constant dense<0.000000e+00> : vector<128x128xf32>
    %198 = tpu.matmul %195, %197, %cst_178 {dimension_numbers = #tpu.dot_dimension_numbers<[1], [0], [0], [1], [0, 0, 1, 1], [], []>} : vector<128x128xbf16>, vector<128x128xbf16>, vector<128x128xf32> -> vector<128x128xf32>
    %199 = arith.addf %191, %198 : vector<128x128xf32>
    %c0_i32_179 = arith.constant 0 : i32
    %200 = arith.addi %190, %c0_i32_179 : i32
    %201 = arith.index_cast %200 : i32 to index
    %c1_180 = arith.constant 1 : index
    %c0_181 = arith.constant 0 : index
    %202 = vector.load %arg10[%201, %c1_180, %c0_181] : memref<18x18x128xbf16, #tpu.memory_space<vmem>>, vector<8x16x128xbf16>
    %203 = vector.shape_cast %202 : vector<8x16x128xbf16> to vector<128x128xbf16>
    %c1_182 = arith.constant 1 : index
    %c0_183 = arith.constant 0 : index
    %c0_184 = arith.constant 0 : index
    %204 = vector.load %arg4[%c1_182, %c0_183, %c0_184] : memref<9x128x128xbf16, #tpu.memory_space<vmem>>, vector<1x128x128xbf16>
    %205 = vector.shape_cast %204 : vector<1x128x128xbf16> to vector<128x128xbf16>
    %cst_185 = arith.constant dense<0.000000e+00> : vector<128x128xf32>
    %206 = tpu.matmul %203, %205, %cst_185 {dimension_numbers = #tpu.dot_dimension_numbers<[1], [0], [0], [1], [0, 0, 1, 1], [], []>} : vector<128x128xbf16>, vector<128x128xbf16>, vector<128x128xf32> -> vector<128x128xf32>
    %207 = arith.addf %199, %206 : vector<128x128xf32>
    %c0_i32_186 = arith.constant 0 : i32
    %208 = arith.addi %190, %c0_i32_186 : i32
    %209 = arith.index_cast %208 : i32 to index
    %c2_187 = arith.constant 2 : index
    %c0_188 = arith.constant 0 : index
    %210 = vector.load %arg10[%209, %c2_187, %c0_188] : memref<18x18x128xbf16, #tpu.memory_space<vmem>>, vector<8x16x128xbf16>
    %211 = vector.shape_cast %210 : vector<8x16x128xbf16> to vector<128x128xbf16>
    %c2_189 = arith.constant 2 : index
    %c0_190 = arith.constant 0 : index
    %c0_191 = arith.constant 0 : index
    %212 = vector.load %arg4[%c2_189, %c0_190, %c0_191] : memref<9x128x128xbf16, #tpu.memory_space<vmem>>, vector<1x128x128xbf16>
    %213 = vector.shape_cast %212 : vector<1x128x128xbf16> to vector<128x128xbf16>
    %cst_192 = arith.constant dense<0.000000e+00> : vector<128x128xf32>
    %214 = tpu.matmul %211, %213, %cst_192 {dimension_numbers = #tpu.dot_dimension_numbers<[1], [0], [0], [1], [0, 0, 1, 1], [], []>} : vector<128x128xbf16>, vector<128x128xbf16>, vector<128x128xf32> -> vector<128x128xf32>
    %215 = arith.addf %207, %214 : vector<128x128xf32>
    %c1_i32_193 = arith.constant 1 : i32
    %216 = arith.addi %190, %c1_i32_193 : i32
    %217 = arith.index_cast %216 : i32 to index
    %c0_194 = arith.constant 0 : index
    %c0_195 = arith.constant 0 : index
    %218 = vector.load %arg10[%217, %c0_194, %c0_195] : memref<18x18x128xbf16, #tpu.memory_space<vmem>>, vector<8x16x128xbf16>
    %219 = vector.shape_cast %218 : vector<8x16x128xbf16> to vector<128x128xbf16>
    %c3_196 = arith.constant 3 : index
    %c0_197 = arith.constant 0 : index
    %c0_198 = arith.constant 0 : index
    %220 = vector.load %arg4[%c3_196, %c0_197, %c0_198] : memref<9x128x128xbf16, #tpu.memory_space<vmem>>, vector<1x128x128xbf16>
    %221 = vector.shape_cast %220 : vector<1x128x128xbf16> to vector<128x128xbf16>
    %cst_199 = arith.constant dense<0.000000e+00> : vector<128x128xf32>
    %222 = tpu.matmul %219, %221, %cst_199 {dimension_numbers = #tpu.dot_dimension_numbers<[1], [0], [0], [1], [0, 0, 1, 1], [], []>} : vector<128x128xbf16>, vector<128x128xbf16>, vector<128x128xf32> -> vector<128x128xf32>
    %223 = arith.addf %215, %222 : vector<128x128xf32>
    %c1_i32_200 = arith.constant 1 : i32
    %224 = arith.addi %190, %c1_i32_200 : i32
    %225 = arith.index_cast %224 : i32 to index
    %c1_201 = arith.constant 1 : index
    %c0_202 = arith.constant 0 : index
    %226 = vector.load %arg10[%225, %c1_201, %c0_202] : memref<18x18x128xbf16, #tpu.memory_space<vmem>>, vector<8x16x128xbf16>
    %227 = vector.shape_cast %226 : vector<8x16x128xbf16> to vector<128x128xbf16>
    %c4_203 = arith.constant 4 : index
    %c0_204 = arith.constant 0 : index
    %c0_205 = arith.constant 0 : index
    %228 = vector.load %arg4[%c4_203, %c0_204, %c0_205] : memref<9x128x128xbf16, #tpu.memory_space<vmem>>, vector<1x128x128xbf16>
    %229 = vector.shape_cast %228 : vector<1x128x128xbf16> to vector<128x128xbf16>
    %cst_206 = arith.constant dense<0.000000e+00> : vector<128x128xf32>
    %230 = tpu.matmul %227, %229, %cst_206 {dimension_numbers = #tpu.dot_dimension_numbers<[1], [0], [0], [1], [0, 0, 1, 1], [], []>} : vector<128x128xbf16>, vector<128x128xbf16>, vector<128x128xf32> -> vector<128x128xf32>
    %231 = arith.addf %223, %230 : vector<128x128xf32>
    %c1_i32_207 = arith.constant 1 : i32
    %232 = arith.addi %190, %c1_i32_207 : i32
    %233 = arith.index_cast %232 : i32 to index
    %c2_208 = arith.constant 2 : index
    %c0_209 = arith.constant 0 : index
    %234 = vector.load %arg10[%233, %c2_208, %c0_209] : memref<18x18x128xbf16, #tpu.memory_space<vmem>>, vector<8x16x128xbf16>
    %235 = vector.shape_cast %234 : vector<8x16x128xbf16> to vector<128x128xbf16>
    %c5_210 = arith.constant 5 : index
    %c0_211 = arith.constant 0 : index
    %c0_212 = arith.constant 0 : index
    %236 = vector.load %arg4[%c5_210, %c0_211, %c0_212] : memref<9x128x128xbf16, #tpu.memory_space<vmem>>, vector<1x128x128xbf16>
    %237 = vector.shape_cast %236 : vector<1x128x128xbf16> to vector<128x128xbf16>
    %cst_213 = arith.constant dense<0.000000e+00> : vector<128x128xf32>
    %238 = tpu.matmul %235, %237, %cst_213 {dimension_numbers = #tpu.dot_dimension_numbers<[1], [0], [0], [1], [0, 0, 1, 1], [], []>} : vector<128x128xbf16>, vector<128x128xbf16>, vector<128x128xf32> -> vector<128x128xf32>
    %239 = arith.addf %231, %238 : vector<128x128xf32>
    %c2_i32_214 = arith.constant 2 : i32
    %240 = arith.addi %190, %c2_i32_214 : i32
    %241 = arith.index_cast %240 : i32 to index
    %c0_215 = arith.constant 0 : index
    %c0_216 = arith.constant 0 : index
    %242 = vector.load %arg10[%241, %c0_215, %c0_216] : memref<18x18x128xbf16, #tpu.memory_space<vmem>>, vector<8x16x128xbf16>
    %243 = vector.shape_cast %242 : vector<8x16x128xbf16> to vector<128x128xbf16>
    %c6_217 = arith.constant 6 : index
    %c0_218 = arith.constant 0 : index
    %c0_219 = arith.constant 0 : index
    %244 = vector.load %arg4[%c6_217, %c0_218, %c0_219] : memref<9x128x128xbf16, #tpu.memory_space<vmem>>, vector<1x128x128xbf16>
    %245 = vector.shape_cast %244 : vector<1x128x128xbf16> to vector<128x128xbf16>
    %cst_220 = arith.constant dense<0.000000e+00> : vector<128x128xf32>
    %246 = tpu.matmul %243, %245, %cst_220 {dimension_numbers = #tpu.dot_dimension_numbers<[1], [0], [0], [1], [0, 0, 1, 1], [], []>} : vector<128x128xbf16>, vector<128x128xbf16>, vector<128x128xf32> -> vector<128x128xf32>
    %247 = arith.addf %239, %246 : vector<128x128xf32>
    %c2_i32_221 = arith.constant 2 : i32
    %248 = arith.addi %190, %c2_i32_221 : i32
    %249 = arith.index_cast %248 : i32 to index
    %c1_222 = arith.constant 1 : index
    %c0_223 = arith.constant 0 : index
    %250 = vector.load %arg10[%249, %c1_222, %c0_223] : memref<18x18x128xbf16, #tpu.memory_space<vmem>>, vector<8x16x128xbf16>
    %251 = vector.shape_cast %250 : vector<8x16x128xbf16> to vector<128x128xbf16>
    %c7_224 = arith.constant 7 : index
    %c0_225 = arith.constant 0 : index
    %c0_226 = arith.constant 0 : index
    %252 = vector.load %arg4[%c7_224, %c0_225, %c0_226] : memref<9x128x128xbf16, #tpu.memory_space<vmem>>, vector<1x128x128xbf16>
    %253 = vector.shape_cast %252 : vector<1x128x128xbf16> to vector<128x128xbf16>
    %cst_227 = arith.constant dense<0.000000e+00> : vector<128x128xf32>
    %254 = tpu.matmul %251, %253, %cst_227 {dimension_numbers = #tpu.dot_dimension_numbers<[1], [0], [0], [1], [0, 0, 1, 1], [], []>} : vector<128x128xbf16>, vector<128x128xbf16>, vector<128x128xf32> -> vector<128x128xf32>
    %255 = arith.addf %247, %254 : vector<128x128xf32>
    %c2_i32_228 = arith.constant 2 : i32
    %256 = arith.addi %190, %c2_i32_228 : i32
    %257 = arith.index_cast %256 : i32 to index
    %c2_229 = arith.constant 2 : index
    %c0_230 = arith.constant 0 : index
    %258 = vector.load %arg10[%257, %c2_229, %c0_230] : memref<18x18x128xbf16, #tpu.memory_space<vmem>>, vector<8x16x128xbf16>
    %259 = vector.shape_cast %258 : vector<8x16x128xbf16> to vector<128x128xbf16>
    %c8_231 = arith.constant 8 : index
    %c0_232 = arith.constant 0 : index
    %c0_233 = arith.constant 0 : index
    %260 = vector.load %arg4[%c8_231, %c0_232, %c0_233] : memref<9x128x128xbf16, #tpu.memory_space<vmem>>, vector<1x128x128xbf16>
    %261 = vector.shape_cast %260 : vector<1x128x128xbf16> to vector<128x128xbf16>
    %cst_234 = arith.constant dense<0.000000e+00> : vector<128x128xf32>
    %262 = tpu.matmul %259, %261, %cst_234 {dimension_numbers = #tpu.dot_dimension_numbers<[1], [0], [0], [1], [0, 0, 1, 1], [], []>} : vector<128x128xbf16>, vector<128x128xbf16>, vector<128x128xf32> -> vector<128x128xf32>
    %263 = arith.addf %255, %262 : vector<128x128xf32>
    %264 = vector.broadcast %20 : vector<1x128xf32> to vector<128x128xf32>
    %265 = arith.addf %263, %264 : vector<128x128xf32>
    %c1_i32_235 = arith.constant 1 : i32
    %266 = arith.addi %c1_i32_235, %190 : i32
    %267 = arith.index_cast %266 : i32 to index
    %c1_236 = arith.constant 1 : index
    %c0_237 = arith.constant 0 : index
    %268 = vector.load %arg9[%267, %c1_236, %c0_237] : memref<18x18x128xbf16, #tpu.memory_space<vmem>>, vector<8x16x128xbf16>
    %269 = vector.shape_cast %268 : vector<8x16x128xbf16> to vector<128x128xbf16>
    %c0_238 = arith.constant 0 : index
    %c0_239 = arith.constant 0 : index
    %270 = vector.load %arg6[%c0_238, %c0_239] : memref<128x128xbf16, #tpu.memory_space<vmem>>, vector<128x128xbf16>
    %cst_240 = arith.constant dense<0.000000e+00> : vector<128x128xf32>
    %271 = tpu.matmul %269, %270, %cst_240 {dimension_numbers = #tpu.dot_dimension_numbers<[1], [0], [0], [1], [0, 0, 1, 1], [], []>} : vector<128x128xbf16>, vector<128x128xbf16>, vector<128x128xf32> -> vector<128x128xf32>
    %c0_241 = arith.constant 0 : index
    %c0_242 = arith.constant 0 : index
    %272 = vector.load %arg7[%c0_241, %c0_242] : memref<1x128xf32, #tpu.memory_space<vmem>>, vector<1x128xf32>
    %273 = vector.broadcast %272 : vector<1x128xf32> to vector<128x128xf32>
    %274 = arith.addf %271, %273 : vector<128x128xf32>
    %275 = arith.addf %265, %274 : vector<128x128xf32>
    %cst_243 = arith.constant 0.000000e+00 : f32
    %276 = vector.broadcast %cst_243 : f32 to vector<128x128xf32>
    %277 = arith.maximumf %275, %276 : vector<128x128xf32>
    %278 = vector.shape_cast %277 : vector<128x128xf32> to vector<8x16x128xf32>
    %279 = arith.truncf %278 : vector<8x16x128xf32> to vector<8x16x128xbf16>
    %c0_244 = arith.constant 0 : index
    %280 = arith.index_cast %190 : i32 to index
    %c0_245 = arith.constant 0 : index
    %c0_246 = arith.constant 0 : index
    %281 = vector.load %arg8[%c0_244, %280, %c0_245, %c0_246] : memref<1x16x16x128xbf16, #tpu.memory_space<vmem>>, vector<1x8x16x128xbf16>
    %282 = vector.shape_cast %281 : vector<1x8x16x128xbf16> to vector<8x16x128xbf16>
    %283 = vector.shape_cast %279 : vector<8x16x128xbf16> to vector<1x8x16x128xbf16>
    tpu.vector_store %arg8[%c0_244, %280, %c0_245, %c0_246], %283 {strides = array<i32>} : memref<1x16x16x128xbf16, #tpu.memory_space<vmem>>, vector<1x8x16x128xbf16>,
    %c1_i32_247 = arith.constant 1 : i32
    %c8_i32_248 = arith.constant 8 : i32
    %284 = arith.muli %c1_i32_247, %c8_i32_248 : i32
    %285 = tpu.assume_multiple %284, 8 : i32
    %cst_249 = arith.constant 0.000000e+00 : f32
    %286 = vector.broadcast %cst_249 : f32 to vector<128x128xf32>
    %c0_i32_250 = arith.constant 0 : i32
    %287 = arith.addi %285, %c0_i32_250 : i32
    %288 = arith.index_cast %287 : i32 to index
    %c0_251 = arith.constant 0 : index
    %c0_252 = arith.constant 0 : index
    %289 = vector.load %arg10[%288, %c0_251, %c0_252] : memref<18x18x128xbf16, #tpu.memory_space<vmem>>, vector<8x16x128xbf16>
    %290 = vector.shape_cast %289 : vector<8x16x128xbf16> to vector<128x128xbf16>
    %c0_253 = arith.constant 0 : index
    %c0_254 = arith.constant 0 : index
    %c0_255 = arith.constant 0 : index
    %291 = vector.load %arg4[%c0_253, %c0_254, %c0_255] : memref<9x128x128xbf16, #tpu.memory_space<vmem>>, vector<1x128x128xbf16>
    %292 = vector.shape_cast %291 : vector<1x128x128xbf16> to vector<128x128xbf16>
    %cst_256 = arith.constant dense<0.000000e+00> : vector<128x128xf32>
    %293 = tpu.matmul %290, %292, %cst_256 {dimension_numbers = #tpu.dot_dimension_numbers<[1], [0], [0], [1], [0, 0, 1, 1], [], []>} : vector<128x128xbf16>, vector<128x128xbf16>, vector<128x128xf32> -> vector<128x128xf32>
    %294 = arith.addf %286, %293 : vector<128x128xf32>
    %c0_i32_257 = arith.constant 0 : i32
    %295 = arith.addi %285, %c0_i32_257 : i32
    %296 = arith.index_cast %295 : i32 to index
    %c1_258 = arith.constant 1 : index
    %c0_259 = arith.constant 0 : index
    %297 = vector.load %arg10[%296, %c1_258, %c0_259] : memref<18x18x128xbf16, #tpu.memory_space<vmem>>, vector<8x16x128xbf16>
    %298 = vector.shape_cast %297 : vector<8x16x128xbf16> to vector<128x128xbf16>
    %c1_260 = arith.constant 1 : index
    %c0_261 = arith.constant 0 : index
    %c0_262 = arith.constant 0 : index
    %299 = vector.load %arg4[%c1_260, %c0_261, %c0_262] : memref<9x128x128xbf16, #tpu.memory_space<vmem>>, vector<1x128x128xbf16>
    %300 = vector.shape_cast %299 : vector<1x128x128xbf16> to vector<128x128xbf16>
    %cst_263 = arith.constant dense<0.000000e+00> : vector<128x128xf32>
    %301 = tpu.matmul %298, %300, %cst_263 {dimension_numbers = #tpu.dot_dimension_numbers<[1], [0], [0], [1], [0, 0, 1, 1], [], []>} : vector<128x128xbf16>, vector<128x128xbf16>, vector<128x128xf32> -> vector<128x128xf32>
    %302 = arith.addf %294, %301 : vector<128x128xf32>
    %c0_i32_264 = arith.constant 0 : i32
    %303 = arith.addi %285, %c0_i32_264 : i32
    %304 = arith.index_cast %303 : i32 to index
    %c2_265 = arith.constant 2 : index
    %c0_266 = arith.constant 0 : index
    %305 = vector.load %arg10[%304, %c2_265, %c0_266] : memref<18x18x128xbf16, #tpu.memory_space<vmem>>, vector<8x16x128xbf16>
    %306 = vector.shape_cast %305 : vector<8x16x128xbf16> to vector<128x128xbf16>
    %c2_267 = arith.constant 2 : index
    %c0_268 = arith.constant 0 : index
    %c0_269 = arith.constant 0 : index
    %307 = vector.load %arg4[%c2_267, %c0_268, %c0_269] : memref<9x128x128xbf16, #tpu.memory_space<vmem>>, vector<1x128x128xbf16>
    %308 = vector.shape_cast %307 : vector<1x128x128xbf16> to vector<128x128xbf16>
    %cst_270 = arith.constant dense<0.000000e+00> : vector<128x128xf32>
    %309 = tpu.matmul %306, %308, %cst_270 {dimension_numbers = #tpu.dot_dimension_numbers<[1], [0], [0], [1], [0, 0, 1, 1], [], []>} : vector<128x128xbf16>, vector<128x128xbf16>, vector<128x128xf32> -> vector<128x128xf32>
    %310 = arith.addf %302, %309 : vector<128x128xf32>
    %c1_i32_271 = arith.constant 1 : i32
    %311 = arith.addi %285, %c1_i32_271 : i32
    %312 = arith.index_cast %311 : i32 to index
    %c0_272 = arith.constant 0 : index
    %c0_273 = arith.constant 0 : index
    %313 = vector.load %arg10[%312, %c0_272, %c0_273] : memref<18x18x128xbf16, #tpu.memory_space<vmem>>, vector<8x16x128xbf16>
    %314 = vector.shape_cast %313 : vector<8x16x128xbf16> to vector<128x128xbf16>
    %c3_274 = arith.constant 3 : index
    %c0_275 = arith.constant 0 : index
    %c0_276 = arith.constant 0 : index
    %315 = vector.load %arg4[%c3_274, %c0_275, %c0_276] : memref<9x128x128xbf16, #tpu.memory_space<vmem>>, vector<1x128x128xbf16>
    %316 = vector.shape_cast %315 : vector<1x128x128xbf16> to vector<128x128xbf16>
    %cst_277 = arith.constant dense<0.000000e+00> : vector<128x128xf32>
    %317 = tpu.matmul %314, %316, %cst_277 {dimension_numbers = #tpu.dot_dimension_numbers<[1], [0], [0], [1], [0, 0, 1, 1], [], []>} : vector<128x128xbf16>, vector<128x128xbf16>, vector<128x128xf32> -> vector<128x128xf32>
    %318 = arith.addf %310, %317 : vector<128x128xf32>
    %c1_i32_278 = arith.constant 1 : i32
    %319 = arith.addi %285, %c1_i32_278 : i32
    %320 = arith.index_cast %319 : i32 to index
    %c1_279 = arith.constant 1 : index
    %c0_280 = arith.constant 0 : index
    %321 = vector.load %arg10[%320, %c1_279, %c0_280] : memref<18x18x128xbf16, #tpu.memory_space<vmem>>, vector<8x16x128xbf16>
    %322 = vector.shape_cast %321 : vector<8x16x128xbf16> to vector<128x128xbf16>
    %c4_281 = arith.constant 4 : index
    %c0_282 = arith.constant 0 : index
    %c0_283 = arith.constant 0 : index
    %323 = vector.load %arg4[%c4_281, %c0_282, %c0_283] : memref<9x128x128xbf16, #tpu.memory_space<vmem>>, vector<1x128x128xbf16>
    %324 = vector.shape_cast %323 : vector<1x128x128xbf16> to vector<128x128xbf16>
    %cst_284 = arith.constant dense<0.000000e+00> : vector<128x128xf32>
    %325 = tpu.matmul %322, %324, %cst_284 {dimension_numbers = #tpu.dot_dimension_numbers<[1], [0], [0], [1], [0, 0, 1, 1], [], []>} : vector<128x128xbf16>, vector<128x128xbf16>, vector<128x128xf32> -> vector<128x128xf32>
    %326 = arith.addf %318, %325 : vector<128x128xf32>
    %c1_i32_285 = arith.constant 1 : i32
    %327 = arith.addi %285, %c1_i32_285 : i32
    %328 = arith.index_cast %327 : i32 to index
    %c2_286 = arith.constant 2 : index
    %c0_287 = arith.constant 0 : index
    %329 = vector.load %arg10[%328, %c2_286, %c0_287] : memref<18x18x128xbf16, #tpu.memory_space<vmem>>, vector<8x16x128xbf16>
    %330 = vector.shape_cast %329 : vector<8x16x128xbf16> to vector<128x128xbf16>
    %c5_288 = arith.constant 5 : index
    %c0_289 = arith.constant 0 : index
    %c0_290 = arith.constant 0 : index
    %331 = vector.load %arg4[%c5_288, %c0_289, %c0_290] : memref<9x128x128xbf16, #tpu.memory_space<vmem>>, vector<1x128x128xbf16>
    %332 = vector.shape_cast %331 : vector<1x128x128xbf16> to vector<128x128xbf16>
    %cst_291 = arith.constant dense<0.000000e+00> : vector<128x128xf32>
    %333 = tpu.matmul %330, %332, %cst_291 {dimension_numbers = #tpu.dot_dimension_numbers<[1], [0], [0], [1], [0, 0, 1, 1], [], []>} : vector<128x128xbf16>, vector<128x128xbf16>, vector<128x128xf32> -> vector<128x128xf32>
    %334 = arith.addf %326, %333 : vector<128x128xf32>
    %c2_i32_292 = arith.constant 2 : i32
    %335 = arith.addi %285, %c2_i32_292 : i32
    %336 = arith.index_cast %335 : i32 to index
    %c0_293 = arith.constant 0 : index
    %c0_294 = arith.constant 0 : index
    %337 = vector.load %arg10[%336, %c0_293, %c0_294] : memref<18x18x128xbf16, #tpu.memory_space<vmem>>, vector<8x16x128xbf16>
    %338 = vector.shape_cast %337 : vector<8x16x128xbf16> to vector<128x128xbf16>
    %c6_295 = arith.constant 6 : index
    %c0_296 = arith.constant 0 : index
    %c0_297 = arith.constant 0 : index
    %339 = vector.load %arg4[%c6_295, %c0_296, %c0_297] : memref<9x128x128xbf16, #tpu.memory_space<vmem>>, vector<1x128x128xbf16>
    %340 = vector.shape_cast %339 : vector<1x128x128xbf16> to vector<128x128xbf16>
    %cst_298 = arith.constant dense<0.000000e+00> : vector<128x128xf32>
    %341 = tpu.matmul %338, %340, %cst_298 {dimension_numbers = #tpu.dot_dimension_numbers<[1], [0], [0], [1], [0, 0, 1, 1], [], []>} : vector<128x128xbf16>, vector<128x128xbf16>, vector<128x128xf32> -> vector<128x128xf32>
    %342 = arith.addf %334, %341 : vector<128x128xf32>
    %c2_i32_299 = arith.constant 2 : i32
    %343 = arith.addi %285, %c2_i32_299 : i32
    %344 = arith.index_cast %343 : i32 to index
    %c1_300 = arith.constant 1 : index
    %c0_301 = arith.constant 0 : index
    %345 = vector.load %arg10[%344, %c1_300, %c0_301] : memref<18x18x128xbf16, #tpu.memory_space<vmem>>, vector<8x16x128xbf16>
    %346 = vector.shape_cast %345 : vector<8x16x128xbf16> to vector<128x128xbf16>
    %c7_302 = arith.constant 7 : index
    %c0_303 = arith.constant 0 : index
    %c0_304 = arith.constant 0 : index
    %347 = vector.load %arg4[%c7_302, %c0_303, %c0_304] : memref<9x128x128xbf16, #tpu.memory_space<vmem>>, vector<1x128x128xbf16>
    %348 = vector.shape_cast %347 : vector<1x128x128xbf16> to vector<128x128xbf16>
    %cst_305 = arith.constant dense<0.000000e+00> : vector<128x128xf32>
    %349 = tpu.matmul %346, %348, %cst_305 {dimension_numbers = #tpu.dot_dimension_numbers<[1], [0], [0], [1], [0, 0, 1, 1], [], []>} : vector<128x128xbf16>, vector<128x128xbf16>, vector<128x128xf32> -> vector<128x128xf32>
    %350 = arith.addf %342, %349 : vector<128x128xf32>
    %c2_i32_306 = arith.constant 2 : i32
    %351 = arith.addi %285, %c2_i32_306 : i32
    %352 = arith.index_cast %351 : i32 to index
    %c2_307 = arith.constant 2 : index
    %c0_308 = arith.constant 0 : index
    %353 = vector.load %arg10[%352, %c2_307, %c0_308] : memref<18x18x128xbf16, #tpu.memory_space<vmem>>, vector<8x16x128xbf16>
    %354 = vector.shape_cast %353 : vector<8x16x128xbf16> to vector<128x128xbf16>
    %c8_309 = arith.constant 8 : index
    %c0_310 = arith.constant 0 : index
    %c0_311 = arith.constant 0 : index
    %355 = vector.load %arg4[%c8_309, %c0_310, %c0_311] : memref<9x128x128xbf16, #tpu.memory_space<vmem>>, vector<1x128x128xbf16>
    %356 = vector.shape_cast %355 : vector<1x128x128xbf16> to vector<128x128xbf16>
    %cst_312 = arith.constant dense<0.000000e+00> : vector<128x128xf32>
    %357 = tpu.matmul %354, %356, %cst_312 {dimension_numbers = #tpu.dot_dimension_numbers<[1], [0], [0], [1], [0, 0, 1, 1], [], []>} : vector<128x128xbf16>, vector<128x128xbf16>, vector<128x128xf32> -> vector<128x128xf32>
    %358 = arith.addf %350, %357 : vector<128x128xf32>
    %359 = vector.broadcast %20 : vector<1x128xf32> to vector<128x128xf32>
    %360 = arith.addf %358, %359 : vector<128x128xf32>
    %c1_i32_313 = arith.constant 1 : i32
    %361 = arith.addi %c1_i32_313, %285 : i32
    %362 = arith.index_cast %361 : i32 to index
    %c1_314 = arith.constant 1 : index
    %c0_315 = arith.constant 0 : index
    %363 = vector.load %arg9[%362, %c1_314, %c0_315] : memref<18x18x128xbf16, #tpu.memory_space<vmem>>, vector<8x16x128xbf16>
    %364 = vector.shape_cast %363 : vector<8x16x128xbf16> to vector<128x128xbf16>
    %c0_316 = arith.constant 0 : index
    %c0_317 = arith.constant 0 : index
    %365 = vector.load %arg6[%c0_316, %c0_317] : memref<128x128xbf16, #tpu.memory_space<vmem>>, vector<128x128xbf16>
    %cst_318 = arith.constant dense<0.000000e+00> : vector<128x128xf32>
    %366 = tpu.matmul %364, %365, %cst_318 {dimension_numbers = #tpu.dot_dimension_numbers<[1], [0], [0], [1], [0, 0, 1, 1], [], []>} : vector<128x128xbf16>, vector<128x128xbf16>, vector<128x128xf32> -> vector<128x128xf32>
    %c0_319 = arith.constant 0 : index
    %c0_320 = arith.constant 0 : index
    %367 = vector.load %arg7[%c0_319, %c0_320] : memref<1x128xf32, #tpu.memory_space<vmem>>, vector<1x128xf32>
    %368 = vector.broadcast %367 : vector<1x128xf32> to vector<128x128xf32>
    %369 = arith.addf %366, %368 : vector<128x128xf32>
    %370 = arith.addf %360, %369 : vector<128x128xf32>
    %cst_321 = arith.constant 0.000000e+00 : f32
    %371 = vector.broadcast %cst_321 : f32 to vector<128x128xf32>
    %372 = arith.maximumf %370, %371 : vector<128x128xf32>
    %373 = vector.shape_cast %372 : vector<128x128xf32> to vector<8x16x128xf32>
    %374 = arith.truncf %373 : vector<8x16x128xf32> to vector<8x16x128xbf16>
    %c0_322 = arith.constant 0 : index
    %375 = arith.index_cast %285 : i32 to index
    %c0_323 = arith.constant 0 : index
    %c0_324 = arith.constant 0 : index
    %376 = vector.load %arg8[%c0_322, %375, %c0_323, %c0_324] : memref<1x16x16x128xbf16, #tpu.memory_space<vmem>>, vector<1x8x16x128xbf16>
    %377 = vector.shape_cast %376 : vector<1x8x16x128xbf16> to vector<8x16x128xbf16>
    %378 = vector.shape_cast %374 : vector<8x16x128xbf16> to vector<1x8x16x128xbf16>
    tpu.vector_store %arg8[%c0_322, %375, %c0_323, %c0_324], %378 {strides = array<i32>} : memref<1x16x16x128xbf16, #tpu.memory_space<vmem>>, vector<1x8x16x128xbf16>,
    %c2_i32_325 = arith.constant 2 : i32
    return
  }
  func.func @transform_0(%arg0: i32) -> (i32, i32, i32, i32) {
    %c0_i32 = arith.constant 0 : i32
    %c0_i32_0 = arith.constant 0 : i32
    %c0_i32_1 = arith.constant 0 : i32
    %c0_i32_2 = arith.constant 0 : i32
    return %arg0, %c0_i32, %c0_i32_0, %c0_i32_1 : i32, i32, i32, i32
  }
  func.func @transform_1(%arg0: i32) -> (i32, i32, i32) {
    %c0_i32 = arith.constant 0 : i32
    %c0_i32_0 = arith.constant 0 : i32
    %c0_i32_1 = arith.constant 0 : i32
    %c0_i32_2 = arith.constant 0 : i32
    return %c0_i32, %c0_i32_0, %c0_i32_1 : i32, i32, i32
  }
  func.func @transform_2(%arg0: i32) -> (i32, i32) {
    %c0_i32 = arith.constant 0 : i32
    %c0_i32_0 = arith.constant 0 : i32
    %c0_i32_1 = arith.constant 0 : i32
    return %c0_i32, %c0_i32_0 : i32, i32
  }
  func.func @transform_3(%arg0: i32) -> (i32, i32, i32) {
    %c0_i32 = arith.constant 0 : i32
    %c0_i32_0 = arith.constant 0 : i32
    %c0_i32_1 = arith.constant 0 : i32
    %c0_i32_2 = arith.constant 0 : i32
    return %c0_i32, %c0_i32_0, %c0_i32_1 : i32, i32, i32
  }
  func.func @transform_4(%arg0: i32) -> (i32, i32) {
    %c0_i32 = arith.constant 0 : i32
    %c0_i32_0 = arith.constant 0 : i32
    %c0_i32_1 = arith.constant 0 : i32
    return %c0_i32, %c0_i32_0 : i32, i32
  }
  func.func @transform_5(%arg0: i32) -> (i32, i32) {
    %c0_i32 = arith.constant 0 : i32
    %c0_i32_0 = arith.constant 0 : i32
    %c0_i32_1 = arith.constant 0 : i32
    return %c0_i32, %c0_i32_0 : i32, i32
  }
  func.func @transform_6(%arg0: i32) -> (i32, i32) {
    %c0_i32 = arith.constant 0 : i32
    %c0_i32_0 = arith.constant 0 : i32
    %c0_i32_1 = arith.constant 0 : i32
    return %c0_i32, %c0_i32_0 : i32, i32
  }
  func.func @transform_7(%arg0: i32) -> (i32, i32, i32, i32) {
    %c0_i32 = arith.constant 0 : i32
    %c0_i32_0 = arith.constant 0 : i32
    %c0_i32_1 = arith.constant 0 : i32
    %c0_i32_2 = arith.constant 0 : i32
    return %arg0, %c0_i32, %c0_i32_0, %c0_i32_1 : i32, i32, i32, i32
  }
}

</mosaic_0001>

<llo_original>
// kernel: tpu_custom_call.1
$region0: #{tpu_custom_call.1}
  #allocation0 [shape = 'u32[]', space=smem, size = 0x4, offset = 0x4, fixed_abs, tag = 'smem constant byte address 0x4 - core index']
  #allocation1 [shape = 'u32[72,128]{1,0:T(1,128)}', space=vmem, size = 0x9000, scoped, tag = 'internal scratch']
  #allocation2 [shape = 'bf16[18,18,128]{2,1,0:T(8,128)(2,1)}', space=vmem, size = 0x1b000, scoped, tag = 'scratch operand']
  #allocation3 [shape = 'bf16[18,18,128]{2,1,0:T(8,128)(2,1)}', space=vmem, size = 0x1b000, scoped, tag = 'scratch operand']
  %s0 = inlined_call_operand.hbm [shape: bf16[2,16,16,128], index: 0, kind: input, shape index: {}]
  %s1 = inlined_call_operand.hbm [shape: bf16[9,128,128], index: 1, kind: input, shape index: {}]
  %s2 = inlined_call_operand.vmem [shape: f32[1,128], index: 2, kind: input, shape index: {}]
  %s3 = inlined_call_operand.hbm [shape: bf16[9,128,128], index: 3, kind: input, shape index: {}]
  %s4 = inlined_call_operand.vmem [shape: f32[1,128], index: 4, kind: input, shape index: {}]
  %s5 = inlined_call_operand.hbm [shape: bf16[128,128], index: 5, kind: input, shape index: {}]
  %s6 = inlined_call_operand.vmem [shape: f32[1,128], index: 6, kind: input, shape index: {}]
  %s7 = inlined_call_operand.hbm [shape: bf16[2,16,16,128], index: 7, kind: output, shape index: {}]
  %s8 = sld [smem:[#allocation0]]
  $region77: #{tpu_custom_call.1} parent=0
    _
  %s10 = ssub.s32 1, %s8
  %s11 = scalar_select 0, %s10, %s8
  $region1: #{tpu_custom_call.1} parent=0
    #allocation4 [shape = 'u8[131072]{0}', space=vmem, size = 0x20000, scoped, tag = 'input window, operand 0']
    #allocation5 [shape = 's32[2]{0}', space=sflag, size = 0x8, scoped, tag = 'scoped memory for tpu_custom_call.1']
    #allocation6 [shape = 's32[2]{0}', space=sflag, size = 0x8, scoped, tag = 'scoped memory for tpu_custom_call.1']
    #allocation7 [shape = 'u8[294912]{0}', space=vmem, size = 0x48000, scoped, tag = 'input window, operand 1, single buffered']
    #allocation8 [shape = 's32[1]{0}', space=sflag, size = 0x4, scoped, tag = 'scoped memory for tpu_custom_call.1']
    #allocation9 [shape = 'u8[294912]{0}', space=vmem, size = 0x48000, scoped, tag = 'input window, operand 3, single buffered']
    #allocation10 [shape = 'u8[32768]{0}', space=vmem, size = 0x8000, scoped, tag = 'input window, operand 5, single buffered']
    #allocation11 [shape = 's32[1]{0}', space=sflag, size = 0x4, scoped, tag = 'scoped memory for tpu_custom_call.1']
    #allocation12 [shape = 'u8[131072]{0}', space=vmem, size = 0x20000, scoped, tag = 'output window, operand 0']
    %12 = vsyncpa [#allocation5], 0
    %s13 = scalar_lea.sflag [#allocation5], 1
    %14 = vsyncpa %s13, 0
    %15 = vsyncpa [#allocation8], 0
    %16 = vsyncpa [#allocation11], 0
    %17 = vsyncpa [#allocation6], 0
    %s18 = scalar_lea.sflag [#allocation6], 1
    %19 = vsyncpa %s18, 0
    loop: start=0, step=1, limit=4
    $region2: #{tpu_custom_call.1} parent=1 // loop_pre_header
      _
    $region3: #{tpu_custom_call.1} parent=1 // loop_header
      %s21 = sphi 0, %s25
      %p22 = scmp.ge.s32.totalorder %s21, 4
      %s31 = sphi 0, %s33
      %s34 = sphi 0, %s31
      %s35 = sphi 0, %s34
      %s51 = sphi 0, %s35
      %s55 = sphi 0, %s55
      %s57 = sphi 0, %s55
      %s58 = sphi 0, %s57
      %s72 = sphi 0, %s58
      %s76 = sphi 0, %s76
      %s78 = sphi 0, %s76
      %s79 = sphi 0, %s78
      %s93 = sphi 0, %s79
      %s97 = sphi 0, %s97
      %s99 = sphi 0, %s97
      %s100 = sphi 0, %s99
      %s114 = sphi 0, %s100
      %s118 = sphi 0, %s118
      %s120 = sphi 0, %s118
      %s121 = sphi 0, %s120
      %s135 = sphi 0, %s121
      %s139 = sphi 0, %s139
      %s141 = sphi 0, %s139
      %s142 = sphi 0, %s141
      %s156 = sphi 0, %s142
      %s160 = sphi 0, %s160
      %s162 = sphi 0, %s160
      %s163 = sphi 0, %s162
      %s177 = sphi 0, %s163
      %s183 = sphi 0, %s185
      %s186 = sphi 0, %s183
      %s187 = sphi 0, %s186
      %s203 = sphi 0, %s187
    $region4: #{tpu_custom_call.1} parent=1 // loop_header_branch
      %24 = sbr.rel (%p22) target = $region8
    $region5: #{tpu_custom_call.1} parent=1 // loop_body
      %s26 = ssub.s32 %s21, 1
      %s27 = ssub.s32 %s21, 2
      %s28 = sadd.s32 %s21, 1
      %s29 = ssub.s32 %s21, %s28
      %p30 = scmp.eq.s32.totalorder %s29, 0
      %s32 = sadd.s32 %s31, 1
      %s33 = scalar_select %p30, %s31, %s32
      %p36 = pneg %p30
      %p37 = scmp.eq.s32.totalorder %s21, 1
      %p38 = por %p36, %p37
      %p39 = scmp.ne.s32.totalorder %s31, %s34
      %p40 = scmp.eq.s32.totalorder %s21, 0
      %p41 = por %p39, %p40
      %p42 = scmp.ne.s32.totalorder %s31, %s34
      %p43 = scmp.eq.s32.totalorder %s26, 1
      %p44 = por %p42, %p43
      %p45 = scmp.ne.s32.totalorder %s34, %s35
      %p46 = scmp.eq.s32.totalorder %s26, 0
      %p47 = por %p45, %p46
      %p48 = scmp.ne.s32.totalorder %s34, %s35
      %p49 = scmp.eq.s32.totalorder %s27, 1
      %p50 = por %p48, %p49
      %p52 = scmp.ne.s32.totalorder %s35, %s51
      %p53 = scmp.eq.s32.totalorder %s27, 0
      %p54 = por %p52, %p53
      %s56 = sadd.s32 %s55, 1
      %p59 = scmp.eq.s32.totalorder %s21, 1
      %p60 = scmp.ne.s32.totalorder %s55, %s57
      %p61 = scmp.eq.s32.totalorder %s21, 0
      %p62 = por %p60, %p61
      %p63 = scmp.ne.s32.totalorder %s55, %s57
      %p64 = scmp.eq.s32.totalorder %s26, 1
      %p65 = por %p63, %p64
      %p66 = scmp.ne.s32.totalorder %s57, %s58
      %p67 = scmp.eq.s32.totalorder %s26, 0
      %p68 = por %p66, %p67
      %p69 = scmp.ne.s32.totalorder %s57, %s58
      %p70 = scmp.eq.s32.totalorder %s27, 1
      %p71 = por %p69, %p70
      %p73 = scmp.ne.s32.totalorder %s58, %s72
      %p74 = scmp.eq.s32.totalorder %s27, 0
      %p75 = por %p73, %p74
      %s77 = sadd.s32 %s76, 1
      %p80 = scmp.eq.s32.totalorder %s21, 1
      %p81 = scmp.ne.s32.totalorder %s76, %s78
      %p82 = scmp.eq.s32.totalorder %s21, 0
      %p83 = por %p81, %p82
      %p84 = scmp.ne.s32.totalorder %s76, %s78
      %p85 = scmp.eq.s32.totalorder %s26, 1
      %p86 = por %p84, %p85
      %p87 = scmp.ne.s32.totalorder %s78, %s79
      %p88 = scmp.eq.s32.totalorder %s26, 0
      %p89 = por %p87, %p88
      %p90 = scmp.ne.s32.totalorder %s78, %s79
      %p91 = scmp.eq.s32.totalorder %s27, 1
      %p92 = por %p90, %p91
      %p94 = scmp.ne.s32.totalorder %s79, %s93
      %p95 = scmp.eq.s32.totalorder %s27, 0
      %p96 = por %p94, %p95
      %s98 = sadd.s32 %s97, 1
      %p101 = scmp.eq.s32.totalorder %s21, 1
      %p102 = scmp.ne.s32.totalorder %s97, %s99
      %p103 = scmp.eq.s32.totalorder %s21, 0
      %p104 = por %p102, %p103
      %p105 = scmp.ne.s32.totalorder %s97, %s99
      %p106 = scmp.eq.s32.totalorder %s26, 1
      %p107 = por %p105, %p106
      %p108 = scmp.ne.s32.totalorder %s99, %s100
      %p109 = scmp.eq.s32.totalorder %s26, 0
      %p110 = por %p108, %p109
      %p111 = scmp.ne.s32.totalorder %s99, %s100
      %p112 = scmp.eq.s32.totalorder %s27, 1
      %p113 = por %p111, %p112
      %p115 = scmp.ne.s32.totalorder %s100, %s114
      %p116 = scmp.eq.s32.totalorder %s27, 0
      %p117 = por %p115, %p116
      %s119 = sadd.s32 %s118, 1
      %p122 = scmp.eq.s32.totalorder %s21, 1
      %p123 = scmp.ne.s32.totalorder %s118, %s120
      %p124 = scmp.eq.s32.totalorder %s21, 0
      %p125 = por %p123, %p124
      %p126 = scmp.ne.s32.totalorder %s118, %s120
      %p127 = scmp.eq.s32.totalorder %s26, 1
      %p128 = por %p126, %p127
      %p129 = scmp.ne.s32.totalorder %s120, %s121
      %p130 = scmp.eq.s32.totalorder %s26, 0
      %p131 = por %p129, %p130
      %p132 = scmp.ne.s32.totalorder %s120, %s121
      %p133 = scmp.eq.s32.totalorder %s27, 1
      %p134 = por %p132, %p133
      %p136 = scmp.ne.s32.totalorder %s121, %s135
      %p137 = scmp.eq.s32.totalorder %s27, 0
      %p138 = por %p136, %p137
      %s140 = sadd.s32 %s139, 1
      %p143 = scmp.eq.s32.totalorder %s21, 1
      %p144 = scmp.ne.s32.totalorder %s139, %s141
      %p145 = scmp.eq.s32.totalorder %s21, 0
      %p146 = por %p144, %p145
      %p147 = scmp.ne.s32.totalorder %s139, %s141
      %p148 = scmp.eq.s32.totalorder %s26, 1
      %p149 = por %p147, %p148
      %p150 = scmp.ne.s32.totalorder %s141, %s142
      %p151 = scmp.eq.s32.totalorder %s26, 0
      %p152 = por %p150, %p151
      %p153 = scmp.ne.s32.totalorder %s141, %s142
      %p154 = scmp.eq.s32.totalorder %s27, 1
      %p155 = por %p153, %p154
      %p157 = scmp.ne.s32.totalorder %s142, %s156
      %p158 = scmp.eq.s32.totalorder %s27, 0
      %p159 = por %p157, %p158
      %s161 = sadd.s32 %s160, 1
      %p164 = scmp.eq.s32.totalorder %s21, 1
      %p165 = scmp.ne.s32.totalorder %s160, %s162
      %p166 = scmp.eq.s32.totalorder %s21, 0
      %p167 = por %p165, %p166
      %p168 = scmp.ne.s32.totalorder %s160, %s162
      %p169 = scmp.eq.s32.totalorder %s26, 1
      %p170 = por %p168, %p169
      %p171 = scmp.ne.s32.totalorder %s162, %s163
      %p172 = scmp.eq.s32.totalorder %s26, 0
      %p173 = por %p171, %p172
      %p174 = scmp.ne.s32.totalorder %s162, %s163
      %p175 = scmp.eq.s32.totalorder %s27, 1
      %p176 = por %p174, %p175
      %p178 = scmp.ne.s32.totalorder %s163, %s177
      %p179 = scmp.eq.s32.totalorder %s27, 0
      %p180 = por %p178, %p179
      %s181 = ssub.s32 %s21, %s28
      %p182 = scmp.eq.s32.totalorder %s181, 0
      %s184 = sadd.s32 %s183, 1
      %s185 = scalar_select %p182, %s183, %s184
      %p188 = pneg %p182
      %p189 = scmp.eq.s32.totalorder %s21, 1
      %p190 = por %p188, %p189
      %p191 = scmp.ne.s32.totalorder %s183, %s186
      %p192 = scmp.eq.s32.totalorder %s21, 0
      %p193 = por %p191, %p192
      %p194 = scmp.ne.s32.totalorder %s183, %s186
      %p195 = scmp.eq.s32.totalorder %s26, 1
      %p196 = por %p194, %p195
      %p197 = scmp.ne.s32.totalorder %s186, %s187
      %p198 = scmp.eq.s32.totalorder %s26, 0
      %p199 = por %p197, %p198
      %p200 = scmp.ne.s32.totalorder %s186, %s187
      %p201 = scmp.eq.s32.totalorder %s27, 1
      %p202 = por %p200, %p201
      %p204 = scmp.ne.s32.totalorder %s187, %s203
      %p205 = scmp.eq.s32.totalorder %s27, 0
      %p206 = por %p204, %p205
      %p207 = scmp.le.s32.totalorder 1, %s21
      %p208 = scmp.lt.s32.totalorder %s21, 3
      %p209 = pnand %p207, %p208
      %p210 = pneg %p209
      // Predicated region
      $region9: #{tpu_custom_call.1} parent=5 // pred_check
        _
      $region10: #{tpu_custom_call.1} parent=5 // pred_check_branch
        %212 = sbr.rel (%p209) target = $region12
      $region11: #{tpu_custom_call.1} parent=5 // pred_region
        %s213 = ssub.s32 %s21, 1
        // Predicated region
        $region13: #{tpu_custom_call.1} parent=11 // pred_check
          %p214 = pneg %p68
        $region14: #{tpu_custom_call.1} parent=11 // pred_check_branch
          %216 = sbr.rel (%p214) target = $region16
        $region15: #{tpu_custom_call.1} parent=11 // pred_region
          %218 = vsyncadd [#allocation8], 0
          %s219 = sshll.u32 %s1, 4
          %s220 = int_to_ptr.hbm [resolvable:$true] %s219
          %s221 = sshll.u32 [#allocation7], 4
          %s222 = int_to_ptr.vmem [resolvable:$true] %s221
          %227 = dma.hbm_to_vmem [thread:$0]  %s220, 9216, %s222, [#allocation8], 64, 64, 4
        $region16: #{tpu_custom_call.1} parent=11 // pred_fallthru
          _
        // Predicated region
        $region17: #{tpu_custom_call.1} parent=11 // pred_check
          %p228 = pneg %p89
        $region18: #{tpu_custom_call.1} parent=11 // pred_check_branch
          %230 = sbr.rel (%p228) target = $region20
        $region19: #{tpu_custom_call.1} parent=11 // pred_region
          _
        $region20: #{tpu_custom_call.1} parent=11 // pred_fallthru
          _
        // Predicated region
        $region21: #{tpu_custom_call.1} parent=11 // pred_check
          %p231 = pneg %p110
        $region22: #{tpu_custom_call.1} parent=11 // pred_check_branch
          %233 = sbr.rel (%p231) target = $region24
        $region23: #{tpu_custom_call.1} parent=11 // pred_region
          %235 = vsyncadd [#allocation8], 0
          %s236 = sshll.u32 %s3, 4
          %s237 = int_to_ptr.hbm [resolvable:$true] %s236
          %s238 = sshll.u32 [#allocation9], 4
          %s239 = int_to_ptr.vmem [resolvable:$true] %s238
          %244 = dma.hbm_to_vmem [thread:$0]  %s237, 9216, %s239, [#allocation8], 64, 64, 4
        $region24: #{tpu_custom_call.1} parent=11 // pred_fallthru
          _
        // Predicated region
        $region25: #{tpu_custom_call.1} parent=11 // pred_check
          %p245 = pneg %p131
        $region26: #{tpu_custom_call.1} parent=11 // pred_check_branch
          %247 = sbr.rel (%p245) target = $region28
        $region27: #{tpu_custom_call.1} parent=11 // pred_region
          _
        $region28: #{tpu_custom_call.1} parent=11 // pred_fallthru
          _
        // Predicated region
        $region29: #{tpu_custom_call.1} parent=11 // pred_check
          %p248 = pneg %p152
        $region30: #{tpu_custom_call.1} parent=11 // pred_check_branch
          %250 = sbr.rel (%p248) target = $region32
        $region31: #{tpu_custom_call.1} parent=11 // pred_region
          %252 = vsyncadd [#allocation11], 0
          %s253 = sshll.u32 %s5, 4
          %s254 = int_to_ptr.hbm [resolvable:$true] %s253
          %s255 = sshll.u32 [#allocation10], 4
          %s256 = int_to_ptr.vmem [resolvable:$true] %s255
          %261 = dma.hbm_to_vmem [thread:$0]  %s254, 1024, %s256, [#allocation11], 64, 64, 4
        $region32: #{tpu_custom_call.1} parent=11 // pred_fallthru
          _
        // Predicated region
        $region33: #{tpu_custom_call.1} parent=11 // pred_check
          %p262 = pneg %p173
        $region34: #{tpu_custom_call.1} parent=11 // pred_check_branch
          %264 = sbr.rel (%p262) target = $region36
        $region35: #{tpu_custom_call.1} parent=11 // pred_region
          _
        $region36: #{tpu_custom_call.1} parent=11 // pred_fallthru
          _
      $region12: #{tpu_custom_call.1} parent=5 // pred_fallthru
        _
      %p265 = scmp.lt.s32.totalorder %s21, 2
      // Predicated region
      $region37: #{tpu_custom_call.1} parent=5 // pred_check
        %p266 = pneg %p265
      $region38: #{tpu_custom_call.1} parent=5 // pred_check_branch
        %268 = sbr.rel (%p266) target = $region40
      $region39: #{tpu_custom_call.1} parent=5 // pred_region
        // Predicated region
        $region41: #{tpu_custom_call.1} parent=39 // pred_check
          %p269 = pneg %p41
        $region42: #{tpu_custom_call.1} parent=39 // pred_check_branch
          %271 = sbr.rel (%p269) target = $region44
        $region43: #{tpu_custom_call.1} parent=39 // pred_region
          %s272 = sand.u32 %s31, 1
          %s273 = scalar_lea.sflag [#allocation5], %s272
          %s274 = sand.u32 %s31, 1
          %s275 = smul.addr %s274, 128
          %s276 = scalar_lea.vmem [#allocation4], %s275
          %278 = vsyncadd %s273, 0
          %s279 = smul.addr %s21, 32
          %s280 = smul.addr %s279, 4
          %s281 = scalar_lea.hbm %s0, %s280
          %s282 = sshll.u32 %s281, 4
          %s283 = int_to_ptr.hbm [resolvable:$true] %s282
          %s284 = sshll.u32 %s276, 4
          %s285 = int_to_ptr.vmem [resolvable:$true] %s284
          %290 = dma.hbm_to_vmem [thread:$0]  %s283, 2048, %s285, %s273, 64, 64, 4
        $region44: #{tpu_custom_call.1} parent=39 // pred_fallthru
          _
      $region40: #{tpu_custom_call.1} parent=5 // pred_fallthru
        _
      %p291 = scmp.le.s32.totalorder 1, %s21
      %p292 = scmp.lt.s32.totalorder %s21, 3
      %p293 = pnand %p291, %p292
      %p294 = pneg %p293
      // Predicated region
      $region45: #{tpu_custom_call.1} parent=5 // pred_check
        _
      $region46: #{tpu_custom_call.1} parent=5 // pred_check_branch
        %296 = sbr.rel (%p293) target = $region48
      $region47: #{tpu_custom_call.1} parent=5 // pred_region
        %s297 = ssub.s32 %s21, 1
        %s298 = sand.u32 %s34, 1
        %s299 = scalar_lea.sflag [#allocation5], %s298
        %s300 = sand.u32 %s34, 1
        %s301 = smul.addr %s300, 128
        %s302 = scalar_lea.vmem [#allocation4], %s301
        // Predicated region
        $region49: #{tpu_custom_call.1} parent=47 // pred_check
          %p303 = pneg %p47
        $region50: #{tpu_custom_call.1} parent=47 // pred_check_branch
          %305 = sbr.rel (%p303) target = $region52
        $region51: #{tpu_custom_call.1} parent=47 // pred_region
          %307 = dma.done %s299, 2048
        $region52: #{tpu_custom_call.1} parent=47 // pred_fallthru
          _
        // Predicated region
        $region53: #{tpu_custom_call.1} parent=47 // pred_check
          %p308 = pneg %p68
        $region54: #{tpu_custom_call.1} parent=47 // pred_check_branch
          %310 = sbr.rel (%p308) target = $region56
        $region55: #{tpu_custom_call.1} parent=47 // pred_region
          %312 = dma.done [#allocation8], 9216
        $region56: #{tpu_custom_call.1} parent=47 // pred_fallthru
          _
        // Predicated region
        $region57: #{tpu_custom_call.1} parent=47 // pred_check
          %p313 = pneg %p110
        $region58: #{tpu_custom_call.1} parent=47 // pred_check_branch
          %315 = sbr.rel (%p313) target = $region60
        $region59: #{tpu_custom_call.1} parent=47 // pred_region
          %317 = dma.done [#allocation8], 9216
        $region60: #{tpu_custom_call.1} parent=47 // pred_fallthru
          _
        // Predicated region
        $region61: #{tpu_custom_call.1} parent=47 // pred_check
          %p318 = pneg %p152
        $region62: #{tpu_custom_call.1} parent=47 // pred_check_branch
          %320 = sbr.rel (%p318) target = $region64
        $region63: #{tpu_custom_call.1} parent=47 // pred_region
          %322 = dma.done [#allocation11], 1024
        $region64: #{tpu_custom_call.1} parent=47 // pred_fallthru
          _
        %s323 = sand.u32 %s34, 1
        %s324 = scalar_lea.sflag [#allocation5], %s323
        %s325 = sand.u32 %s34, 1
        %s326 = smul.addr %s325, 128
        %s327 = scalar_lea.vmem [#allocation4], %s326
        %p328 = pneg %p47
        %p329 = pneg %p44
        %p330 = pneg %p68
        %p331 = pneg %p65
        %p332 = pneg %p89
        %p333 = pneg %p86
        %p334 = pneg %p110
        %p335 = pneg %p107
        %p336 = pneg %p131
        %p337 = pneg %p128
        %p338 = pneg %p152
        %p339 = pneg %p149
        %p340 = pneg %p173
        %p341 = pneg %p170
        %p342 = pneg %p199
        %p343 = pneg %p196
        %s344 = sand.u32 %s186, 1
        %s345 = scalar_lea.sflag [#allocation6], %s344
        %s346 = sand.u32 %s186, 1
        %s347 = smul.addr %s346, 128
        %s348 = scalar_lea.vmem [#allocation12], %s347
        %350 = vst [vmem:[#allocation2] sm:$0xf] 0
        %351 = vst [vmem:[#allocation2 + $0x4] sm:$0xf] 0
        %352 = vst [vmem:[#allocation2 + $0x8] sm:$0x1] 0
        %s353 = scalar_lea.vmem [#allocation2], 204
        %354 = vst [vmem:[%s353] sm:$0xf] 0
        %355 = vst [vmem:[%s353 + $0x4] sm:$0xf] 0
        %356 = vst [vmem:[%s353 + $0x8] sm:$0x1] 0
        %vm357 = vcmask 1040384
        %vm358 = vsmask.f32 256
        %vm359 = vmand %vm357, %vm358
        %v360 = vld [vmem:[#allocation2] sm:$0x1]
        %v361 = vsel %vm359, 0, %v360
        %362 = vst [vmem:[#allocation2] sm:$0x1] %v361
        %v363 = vld [vmem:[#allocation2 + $0xc] sm:$0x1]
        %v364 = vsel %vm359, 0, %v363
        %365 = vst [vmem:[#allocation2 + $0xc] sm:$0x1] %v364
        %v366 = vld [vmem:[#allocation2 + $0x18] sm:$0x1]
        %v367 = vsel %vm359, 0, %v366
        %368 = vst [vmem:[#allocation2 + $0x18] sm:$0x1] %v367
        %v369 = vld [vmem:[#allocation2 + $0x24] sm:$0x1]
        %v370 = vsel %vm359, 0, %v369
        %371 = vst [vmem:[#allocation2 + $0x24] sm:$0x1] %v370
        %v372 = vld [vmem:[#allocation2 + $0x30] sm:$0x1]
        %v373 = vsel %vm359, 0, %v372
        %374 = vst [vmem:[#allocation2 + $0x30] sm:$0x1] %v373
        %v375 = vld [vmem:[#allocation2 + $0x3c] sm:$0x1]
        %v376 = vsel %vm359, 0, %v375
        %377 = vst [vmem:[#allocation2 + $0x3c] sm:$0x1] %v376
        %v378 = vld [vmem:[#allocation2 + $0x48] sm:$0x1]
        %v379 = vsel %vm359, 0, %v378
        %380 = vst [vmem:[#allocation2 + $0x48] sm:$0x1] %v379
        %v381 = vld [vmem:[#allocation2 + $0x54] sm:$0x1]
        %v382 = vsel %vm359, 0, %v381
        %383 = vst [vmem:[#allocation2 + $0x54] sm:$0x1] %v382
        %v384 = vld [vmem:[#allocation2 + $0x60] sm:$0x1]
        %v385 = vsel %vm359, 0, %v384
        %386 = vst [vmem:[#allocation2 + $0x60] sm:$0x1] %v385
        %v387 = vld [vmem:[#allocation2 + $0x6c] sm:$0x1]
        %v388 = vsel %vm359, 0, %v387
        %389 = vst [vmem:[#allocation2 + $0x6c] sm:$0x1] %v388
        %v390 = vld [vmem:[#allocation2 + $0x78] sm:$0x1]
        %v391 = vsel %vm359, 0, %v390
        %392 = vst [vmem:[#allocation2 + $0x78] sm:$0x1] %v391
        %v393 = vld [vmem:[#allocation2 + $0x84] sm:$0x1]
        %v394 = vsel %vm359, 0, %v393
        %395 = vst [vmem:[#allocation2 + $0x84] sm:$0x1] %v394
        %v396 = vld [vmem:[#allocation2 + $0x90] sm:$0x1]
        %v397 = vsel %vm359, 0, %v396
        %398 = vst [vmem:[#allocation2 + $0x90] sm:$0x1] %v397
        %v399 = vld [vmem:[#allocation2 + $0x9c] sm:$0x1]
        %v400 = vsel %vm359, 0, %v399
        %401 = vst [vmem:[#allocation2 + $0x9c] sm:$0x1] %v400
        %v402 = vld [vmem:[#allocation2 + $0xa8] sm:$0x1]
        %v403 = vsel %vm359, 0, %v402
        %404 = vst [vmem:[#allocation2 + $0xa8] sm:$0x1] %v403
        %v405 = vld [vmem:[#allocation2 + $0xb4] sm:$0x1]
        %v406 = vsel %vm359, 0, %v405
        %407 = vst [vmem:[#allocation2 + $0xb4] sm:$0x1] %v406
        %v408 = vld [vmem:[#allocation2 + $0xc0] sm:$0x1]
        %v409 = vsel %vm359, 0, %v408
        %410 = vst [vmem:[#allocation2 + $0xc0] sm:$0x1] %v409
        %v411 = vld [vmem:[#allocation2 + $0xcc] sm:$0x1]
        %v412 = vsel %vm359, 0, %v411
        %413 = vst [vmem:[#allocation2 + $0xcc] sm:$0x1] %v412
        %vm414 = vsmask.f32 7938
        %vm415 = vmand %vm357, %vm414
        %v416 = vld [vmem:[#allocation2 + $0x8] sm:$0x1]
        %v417 = vsel %vm415, 0, %v416
        %418 = vst [vmem:[#allocation2 + $0x8] sm:$0x1] %v417
        %v419 = vld [vmem:[#allocation2 + $0x14] sm:$0x1]
        %v420 = vsel %vm415, 0, %v419
        %421 = vst [vmem:[#allocation2 + $0x14] sm:$0x1] %v420
        %v422 = vld [vmem:[#allocation2 + $0x20] sm:$0x1]
        %v423 = vsel %vm415, 0, %v422
        %424 = vst [vmem:[#allocation2 + $0x20] sm:$0x1] %v423
        %v425 = vld [vmem:[#allocation2 + $0x2c] sm:$0x1]
        %v426 = vsel %vm415, 0, %v425
        %427 = vst [vmem:[#allocation2 + $0x2c] sm:$0x1] %v426
        %v428 = vld [vmem:[#allocation2 + $0x38] sm:$0x1]
        %v429 = vsel %vm415, 0, %v428
        %430 = vst [vmem:[#allocation2 + $0x38] sm:$0x1] %v429
        %v431 = vld [vmem:[#allocation2 + $0x44] sm:$0x1]
        %v432 = vsel %vm415, 0, %v431
        %433 = vst [vmem:[#allocation2 + $0x44] sm:$0x1] %v432
        %v434 = vld [vmem:[#allocation2 + $0x50] sm:$0x1]
        %v435 = vsel %vm415, 0, %v434
        %436 = vst [vmem:[#allocation2 + $0x50] sm:$0x1] %v435
        %v437 = vld [vmem:[#allocation2 + $0x5c] sm:$0x1]
        %v438 = vsel %vm415, 0, %v437
        %439 = vst [vmem:[#allocation2 + $0x5c] sm:$0x1] %v438
        %v440 = vld [vmem:[#allocation2 + $0x68] sm:$0x1]
        %v441 = vsel %vm415, 0, %v440
        %442 = vst [vmem:[#allocation2 + $0x68] sm:$0x1] %v441
        %v443 = vld [vmem:[#allocation2 + $0x74] sm:$0x1]
        %v444 = vsel %vm415, 0, %v443
        %445 = vst [vmem:[#allocation2 + $0x74] sm:$0x1] %v444
        %v446 = vld [vmem:[#allocation2 + $0x80] sm:$0x1]
        %v447 = vsel %vm415, 0, %v446
        %448 = vst [vmem:[#allocation2 + $0x80] sm:$0x1] %v447
        %v449 = vld [vmem:[#allocation2 + $0x8c] sm:$0x1]
        %v450 = vsel %vm415, 0, %v449
        %451 = vst [vmem:[#allocation2 + $0x8c] sm:$0x1] %v450
        %v452 = vld [vmem:[#allocation2 + $0x98] sm:$0x1]
        %v453 = vsel %vm415, 0, %v452
        %454 = vst [vmem:[#allocation2 + $0x98] sm:$0x1] %v453
        %v455 = vld [vmem:[#allocation2 + $0xa4] sm:$0x1]
        %v456 = vsel %vm415, 0, %v455
        %457 = vst [vmem:[#allocation2 + $0xa4] sm:$0x1] %v456
        %v458 = vld [vmem:[#allocation2 + $0xb0] sm:$0x1]
        %v459 = vsel %vm415, 0, %v458
        %460 = vst [vmem:[#allocation2 + $0xb0] sm:$0x1] %v459
        %v461 = vld [vmem:[#allocation2 + $0xbc] sm:$0x1]
        %v462 = vsel %vm415, 0, %v461
        %463 = vst [vmem:[#allocation2 + $0xbc] sm:$0x1] %v462
        %v464 = vld [vmem:[#allocation2 + $0xc8] sm:$0x1]
        %v465 = vsel %vm415, 0, %v464
        %466 = vst [vmem:[#allocation2 + $0xc8] sm:$0x1] %v465
        %v467 = vld [vmem:[#allocation2 + $0xd4] sm:$0x1]
        %v468 = vsel %vm415, 0, %v467
        %469 = vst [vmem:[#allocation2 + $0xd4] sm:$0x1] %v468
        %470 = vst [vmem:[#allocation3] sm:$0xf] 0
        %471 = vst [vmem:[#allocation3 + $0x4] sm:$0xf] 0
        %472 = vst [vmem:[#allocation3 + $0x8] sm:$0x1] 0
        %s473 = scalar_lea.vmem [#allocation3], 204
        %474 = vst [vmem:[%s473] sm:$0xf] 0
        %475 = vst [vmem:[%s473 + $0x4] sm:$0xf] 0
        %476 = vst [vmem:[%s473 + $0x8] sm:$0x1] 0
        %v477 = vld [vmem:[#allocation3] sm:$0x1]
        %v478 = vsel %vm359, 0, %v477
        %479 = vst [vmem:[#allocation3] sm:$0x1] %v478
        %v480 = vld [vmem:[#allocation3 + $0xc] sm:$0x1]
        %v481 = vsel %vm359, 0, %v480
        %482 = vst [vmem:[#allocation3 + $0xc] sm:$0x1] %v481
        %v483 = vld [vmem:[#allocation3 + $0x18] sm:$0x1]
        %v484 = vsel %vm359, 0, %v483
        %485 = vst [vmem:[#allocation3 + $0x18] sm:$0x1] %v484
        %v486 = vld [vmem:[#allocation3 + $0x24] sm:$0x1]
        %v487 = vsel %vm359, 0, %v486
        %488 = vst [vmem:[#allocation3 + $0x24] sm:$0x1] %v487
        %v489 = vld [vmem:[#allocation3 + $0x30] sm:$0x1]
        %v490 = vsel %vm359, 0, %v489
        %491 = vst [vmem:[#allocation3 + $0x30] sm:$0x1] %v490
        %v492 = vld [vmem:[#allocation3 + $0x3c] sm:$0x1]
        %v493 = vsel %vm359, 0, %v492
        %494 = vst [vmem:[#allocation3 + $0x3c] sm:$0x1] %v493
        %v495 = vld [vmem:[#allocation3 + $0x48] sm:$0x1]
        %v496 = vsel %vm359, 0, %v495
        %497 = vst [vmem:[#allocation3 + $0x48] sm:$0x1] %v496
        %v498 = vld [vmem:[#allocation3 + $0x54] sm:$0x1]
        %v499 = vsel %vm359, 0, %v498
        %500 = vst [vmem:[#allocation3 + $0x54] sm:$0x1] %v499
        %v501 = vld [vmem:[#allocation3 + $0x60] sm:$0x1]
        %v502 = vsel %vm359, 0, %v501
        %503 = vst [vmem:[#allocation3 + $0x60] sm:$0x1] %v502
        %v504 = vld [vmem:[#allocation3 + $0x6c] sm:$0x1]
        %v505 = vsel %vm359, 0, %v504
        %506 = vst [vmem:[#allocation3 + $0x6c] sm:$0x1] %v505
        %v507 = vld [vmem:[#allocation3 + $0x78] sm:$0x1]
        %v508 = vsel %vm359, 0, %v507
        %509 = vst [vmem:[#allocation3 + $0x78] sm:$0x1] %v508
        %v510 = vld [vmem:[#allocation3 + $0x84] sm:$0x1]
        %v511 = vsel %vm359, 0, %v510
        %512 = vst [vmem:[#allocation3 + $0x84] sm:$0x1] %v511
        %v513 = vld [vmem:[#allocation3 + $0x90] sm:$0x1]
        %v514 = vsel %vm359, 0, %v513
        %515 = vst [vmem:[#allocation3 + $0x90] sm:$0x1] %v514
        %v516 = vld [vmem:[#allocation3 + $0x9c] sm:$0x1]
        %v517 = vsel %vm359, 0, %v516
        %518 = vst [vmem:[#allocation3 + $0x9c] sm:$0x1] %v517
        %v519 = vld [vmem:[#allocation3 + $0xa8] sm:$0x1]
        %v520 = vsel %vm359, 0, %v519
        %521 = vst [vmem:[#allocation3 + $0xa8] sm:$0x1] %v520
        %v522 = vld [vmem:[#allocation3 + $0xb4] sm:$0x1]
        %v523 = vsel %vm359, 0, %v522
        %524 = vst [vmem:[#allocation3 + $0xb4] sm:$0x1] %v523
        %v525 = vld [vmem:[#allocation3 + $0xc0] sm:$0x1]
        %v526 = vsel %vm359, 0, %v525
        %527 = vst [vmem:[#allocation3 + $0xc0] sm:$0x1] %v526
        %v528 = vld [vmem:[#allocation3 + $0xcc] sm:$0x1]
        %v529 = vsel %vm359, 0, %v528
        %530 = vst [vmem:[#allocation3 + $0xcc] sm:$0x1] %v529
        %v531 = vld [vmem:[#allocation3 + $0x8] sm:$0x1]
        %v532 = vsel %vm415, 0, %v531
        %533 = vst [vmem:[#allocation3 + $0x8] sm:$0x1] %v532
        %v534 = vld [vmem:[#allocation3 + $0x14] sm:$0x1]
        %v535 = vsel %vm415, 0, %v534
        %536 = vst [vmem:[#allocation3 + $0x14] sm:$0x1] %v535
        %v537 = vld [vmem:[#allocation3 + $0x20] sm:$0x1]
        %v538 = vsel %vm415, 0, %v537
        %539 = vst [vmem:[#allocation3 + $0x20] sm:$0x1] %v538
        %v540 = vld [vmem:[#allocation3 + $0x2c] sm:$0x1]
        %v541 = vsel %vm415, 0, %v540
        %542 = vst [vmem:[#allocation3 + $0x2c] sm:$0x1] %v541
        %v543 = vld [vmem:[#allocation3 + $0x38] sm:$0x1]
        %v544 = vsel %vm415, 0, %v543
        %545 = vst [vmem:[#allocation3 + $0x38] sm:$0x1] %v544
        %v546 = vld [vmem:[#allocation3 + $0x44] sm:$0x1]
        %v547 = vsel %vm415, 0, %v546
        %548 = vst [vmem:[#allocation3 + $0x44] sm:$0x1] %v547
        %v549 = vld [vmem:[#allocation3 + $0x50] sm:$0x1]
        %v550 = vsel %vm415, 0, %v549
        %551 = vst [vmem:[#allocation3 + $0x50] sm:$0x1] %v550
        %v552 = vld [vmem:[#allocation3 + $0x5c] sm:$0x1]
        %v553 = vsel %vm415, 0, %v552
        %554 = vst [vmem:[#allocation3 + $0x5c] sm:$0x1] %v553
        %v555 = vld [vmem:[#allocation3 + $0x68] sm:$0x1]
        %v556 = vsel %vm415, 0, %v555
        %557 = vst [vmem:[#allocation3 + $0x68] sm:$0x1] %v556
        %v558 = vld [vmem:[#allocation3 + $0x74] sm:$0x1]
        %v559 = vsel %vm415, 0, %v558
        %560 = vst [vmem:[#allocation3 + $0x74] sm:$0x1] %v559
        %v561 = vld [vmem:[#allocation3 + $0x80] sm:$0x1]
        %v562 = vsel %vm415, 0, %v561
        %563 = vst [vmem:[#allocation3 + $0x80] sm:$0x1] %v562
        %v564 = vld [vmem:[#allocation3 + $0x8c] sm:$0x1]
        %v565 = vsel %vm415, 0, %v564
        %566 = vst [vmem:[#allocation3 + $0x8c] sm:$0x1] %v565
        %v567 = vld [vmem:[#allocation3 + $0x98] sm:$0x1]
        %v568 = vsel %vm415, 0, %v567
        %569 = vst [vmem:[#allocation3 + $0x98] sm:$0x1] %v568
        %v570 = vld [vmem:[#allocation3 + $0xa4] sm:$0x1]
        %v571 = vsel %vm415, 0, %v570
        %572 = vst [vmem:[#allocation3 + $0xa4] sm:$0x1] %v571
        %v573 = vld [vmem:[#allocation3 + $0xb0] sm:$0x1]
        %v574 = vsel %vm415, 0, %v573
        %575 = vst [vmem:[#allocation3 + $0xb0] sm:$0x1] %v574
        %v576 = vld [vmem:[#allocation3 + $0xbc] sm:$0x1]
        %v577 = vsel %vm415, 0, %v576
        %578 = vst [vmem:[#allocation3 + $0xbc] sm:$0x1] %v577
        %v579 = vld [vmem:[#allocation3 + $0xc8] sm:$0x1]
        %v580 = vsel %vm415, 0, %v579
        %581 = vst [vmem:[#allocation3 + $0xc8] sm:$0x1] %v580
        %v582 = vld [vmem:[#allocation3 + $0xd4] sm:$0x1]
        %v583 = vsel %vm415, 0, %v582
        %584 = vst [vmem:[#allocation3 + $0xd4] sm:$0x1] %v583
        %v585 = vld [vmem:[%s302] sm:$0xf]
        %v586 = vld [vmem:[%s302 + $0x4] sm:$0xf]
        %v587 = vld [vmem:[%s302 + $0x8] sm:$0xf]
        %v588 = vld [vmem:[%s302 + $0xc] sm:$0xf]
        %v589 = vld [vmem:[%s302 + $0x10] sm:$0xf]
        %v590 = vld [vmem:[%s302 + $0x14] sm:$0xf]
        %v591 = vld [vmem:[%s302 + $0x18] sm:$0xf]
        %v592 = vld [vmem:[%s302 + $0x1c] sm:$0xf]
        %v593 = vld [vmem:[%s302 + $0x20] sm:$0xf]
        %v594 = vld [vmem:[%s302 + $0x24] sm:$0xf]
        %v595 = vld [vmem:[%s302 + $0x28] sm:$0xf]
        %v596 = vld [vmem:[%s302 + $0x2c] sm:$0xf]
        %v597 = vld [vmem:[%s302 + $0x30] sm:$0xf]
        %v598 = vld [vmem:[%s302 + $0x34] sm:$0xf]
        %v599 = vld [vmem:[%s302 + $0x38] sm:$0xf]
        %v600 = vld [vmem:[%s302 + $0x3c] sm:$0xf]
        %v601 = vld [vmem:[%s302 + $0x40] sm:$0xf]
        %v602 = vld [vmem:[%s302 + $0x44] sm:$0xf]
        %v603 = vld [vmem:[%s302 + $0x48] sm:$0xf]
        %v604 = vld [vmem:[%s302 + $0x4c] sm:$0xf]
        %v605 = vld [vmem:[%s302 + $0x50] sm:$0xf]
        %v606 = vld [vmem:[%s302 + $0x54] sm:$0xf]
        %v607 = vld [vmem:[%s302 + $0x58] sm:$0xf]
        %v608 = vld [vmem:[%s302 + $0x5c] sm:$0xf]
        %v609 = vld [vmem:[%s302 + $0x60] sm:$0xf]
        %v610 = vld [vmem:[%s302 + $0x64] sm:$0xf]
        %v611 = vld [vmem:[%s302 + $0x68] sm:$0xf]
        %v612 = vld [vmem:[%s302 + $0x6c] sm:$0xf]
        %v613 = vld [vmem:[%s302 + $0x70] sm:$0xf]
        %v614 = vld [vmem:[%s302 + $0x74] sm:$0xf]
        %v615 = vld [vmem:[%s302 + $0x78] sm:$0xf]
        %v616 = vld [vmem:[%s302 + $0x7c] sm:$0xf]
        %vm617 = vsmask.f32 4368
        %vm618 = vmor %vm358, %vm617
        %v620 = vshrl.u32 %v585, 16
        %v622 = vrot.slane %v620, 7
        %v623 = vshll.u32 %v585, 16
        %v625 = vor.u32 %v622, %v623
        %v626 = vrot.slane %v622, 4
        %v628 = vshrl.u32 %v586, 16
        %v630 = vrot.slane %v628, 7
        %v631 = vshll.u32 %v586, 16
        %v633 = vor.u32 %v630, %v631
        %v634 = vsel %vm618, %v626, %v633
        %v635 = vrot.slane %v630, 4
        %v637 = vshrl.u32 %v587, 16
        %v639 = vrot.slane %v637, 7
        %v640 = vshll.u32 %v587, 16
        %v642 = vor.u32 %v639, %v640
        %v643 = vrot.slane %v639, 4
        %v645 = vshrl.u32 %v588, 16
        %v647 = vrot.slane %v645, 7
        %v648 = vshll.u32 %v588, 16
        %v650 = vor.u32 %v647, %v648
        %v651 = vsel %vm618, %v643, %v650
        %v652 = vrot.slane %v647, 4
        %v654 = vshrl.u32 %v589, 16
        %v656 = vrot.slane %v654, 7
        %v657 = vshll.u32 %v589, 16
        %v659 = vor.u32 %v656, %v657
        %v660 = vrot.slane %v656, 4
        %v662 = vshrl.u32 %v590, 16
        %v664 = vrot.slane %v662, 7
        %v665 = vshll.u32 %v590, 16
        %v667 = vor.u32 %v664, %v665
        %v668 = vsel %vm618, %v660, %v667
        %v669 = vrot.slane %v664, 4
        %v671 = vshrl.u32 %v591, 16
        %v673 = vrot.slane %v671, 7
        %v674 = vshll.u32 %v591, 16
        %v676 = vor.u32 %v673, %v674
        %v677 = vrot.slane %v673, 4
        %v679 = vshrl.u32 %v592, 16
        %v681 = vrot.slane %v679, 7
        %v682 = vshll.u32 %v592, 16
        %v684 = vor.u32 %v681, %v682
        %v685 = vsel %vm618, %v677, %v684
        %v686 = vrot.slane %v681, 4
        %v688 = vshrl.u32 %v593, 16
        %v690 = vrot.slane %v688, 7
        %v691 = vshll.u32 %v593, 16
        %v693 = vor.u32 %v690, %v691
        %v694 = vrot.slane %v690, 4
        %v696 = vshrl.u32 %v594, 16
        %v698 = vrot.slane %v696, 7
        %v699 = vshll.u32 %v594, 16
        %v701 = vor.u32 %v698, %v699
        %v702 = vsel %vm618, %v694, %v701
        %v703 = vrot.slane %v698, 4
        %v705 = vshrl.u32 %v595, 16
        %v707 = vrot.slane %v705, 7
        %v708 = vshll.u32 %v595, 16
        %v710 = vor.u32 %v707, %v708
        %v711 = vrot.slane %v707, 4
        %v713 = vshrl.u32 %v596, 16
        %v715 = vrot.slane %v713, 7
        %v716 = vshll.u32 %v596, 16
        %v718 = vor.u32 %v715, %v716
        %v719 = vsel %vm618, %v711, %v718
        %v720 = vrot.slane %v715, 4
        %v722 = vshrl.u32 %v597, 16
        %v724 = vrot.slane %v722, 7
        %v725 = vshll.u32 %v597, 16
        %v727 = vor.u32 %v724, %v725
        %v728 = vrot.slane %v724, 4
        %v730 = vshrl.u32 %v598, 16
        %v732 = vrot.slane %v730, 7
        %v733 = vshll.u32 %v598, 16
        %v735 = vor.u32 %v732, %v733
        %v736 = vsel %vm618, %v728, %v735
        %v737 = vrot.slane %v732, 4
        %v739 = vshrl.u32 %v599, 16
        %v741 = vrot.slane %v739, 7
        %v742 = vshll.u32 %v599, 16
        %v744 = vor.u32 %v741, %v742
        %v745 = vrot.slane %v741, 4
        %v747 = vshrl.u32 %v600, 16
        %v749 = vrot.slane %v747, 7
        %v750 = vshll.u32 %v600, 16
        %v752 = vor.u32 %v749, %v750
        %v753 = vsel %vm618, %v745, %v752
        %v754 = vrot.slane %v749, 4
        %v756 = vshrl.u32 %v601, 16
        %v758 = vrot.slane %v756, 7
        %v759 = vshll.u32 %v601, 16
        %v761 = vor.u32 %v758, %v759
        %v762 = vrot.slane %v758, 4
        %v764 = vshrl.u32 %v602, 16
        %v766 = vrot.slane %v764, 7
        %v767 = vshll.u32 %v602, 16
        %v769 = vor.u32 %v766, %v767
        %v770 = vsel %vm618, %v762, %v769
        %v771 = vrot.slane %v766, 4
        %v773 = vshrl.u32 %v603, 16
        %v775 = vrot.slane %v773, 7
        %v776 = vshll.u32 %v603, 16
        %v778 = vor.u32 %v775, %v776
        %v779 = vrot.slane %v775, 4
        %v781 = vshrl.u32 %v604, 16
        %v783 = vrot.slane %v781, 7
        %v784 = vshll.u32 %v604, 16
        %v786 = vor.u32 %v783, %v784
        %v787 = vsel %vm618, %v779, %v786
        %v788 = vrot.slane %v783, 4
        %v790 = vshrl.u32 %v605, 16
        %v792 = vrot.slane %v790, 7
        %v793 = vshll.u32 %v605, 16
        %v795 = vor.u32 %v792, %v793
        %v796 = vrot.slane %v792, 4
        %v798 = vshrl.u32 %v606, 16
        %v800 = vrot.slane %v798, 7
        %v801 = vshll.u32 %v606, 16
        %v803 = vor.u32 %v800, %v801
        %v804 = vsel %vm618, %v796, %v803
        %v805 = vrot.slane %v800, 4
        %v807 = vshrl.u32 %v607, 16
        %v809 = vrot.slane %v807, 7
        %v810 = vshll.u32 %v607, 16
        %v812 = vor.u32 %v809, %v810
        %v813 = vrot.slane %v809, 4
        %v815 = vshrl.u32 %v608, 16
        %v817 = vrot.slane %v815, 7
        %v818 = vshll.u32 %v608, 16
        %v820 = vor.u32 %v817, %v818
        %v821 = vsel %vm618, %v813, %v820
        %v822 = vrot.slane %v817, 4
        %v824 = vshrl.u32 %v609, 16
        %v826 = vrot.slane %v824, 7
        %v827 = vshll.u32 %v609, 16
        %v829 = vor.u32 %v826, %v827
        %v830 = vrot.slane %v826, 4
        %v832 = vshrl.u32 %v610, 16
        %v834 = vrot.slane %v832, 7
        %v835 = vshll.u32 %v610, 16
        %v837 = vor.u32 %v834, %v835
        %v838 = vsel %vm618, %v830, %v837
        %v839 = vrot.slane %v834, 4
        %v841 = vshrl.u32 %v611, 16
        %v843 = vrot.slane %v841, 7
        %v844 = vshll.u32 %v611, 16
        %v846 = vor.u32 %v843, %v844
        %v847 = vrot.slane %v843, 4
        %v849 = vshrl.u32 %v612, 16
        %v851 = vrot.slane %v849, 7
        %v852 = vshll.u32 %v612, 16
        %v854 = vor.u32 %v851, %v852
        %v855 = vsel %vm618, %v847, %v854
        %v856 = vrot.slane %v851, 4
        %v858 = vshrl.u32 %v613, 16
        %v860 = vrot.slane %v858, 7
        %v861 = vshll.u32 %v613, 16
        %v863 = vor.u32 %v860, %v861
        %v864 = vrot.slane %v860, 4
        %v866 = vshrl.u32 %v614, 16
        %v868 = vrot.slane %v866, 7
        %v869 = vshll.u32 %v614, 16
        %v871 = vor.u32 %v868, %v869
        %v872 = vsel %vm618, %v864, %v871
        %v873 = vrot.slane %v868, 4
        %v875 = vshrl.u32 %v615, 16
        %v877 = vrot.slane %v875, 7
        %v878 = vshll.u32 %v615, 16
        %v880 = vor.u32 %v877, %v878
        %v881 = vrot.slane %v877, 4
        %v883 = vshrl.u32 %v616, 16
        %v885 = vrot.slane %v883, 7
        %v886 = vshll.u32 %v616, 16
        %v888 = vor.u32 %v885, %v886
        %v889 = vsel %vm618, %v881, %v888
        %v890 = vrot.slane %v885, 4
        %s939 = scalar_lea.vmem [#allocation2], 12
        %vm940 = vcmask 1043456
        %vm941 = vmand %vm940, %vm414
        %v942 = vld [vmem:[%s939] sm:$0xf]
        %v943 = vsel %vm941, %v625, %v942
        %944 = vst [vmem:[%s939] sm:$0xf] %v943
        %945 = vst [vmem:[%s939 + $0x4] sm:$0xf] %v634
        %v946 = vld [vmem:[%s939 + $0x8] sm:$0x1]
        %v947 = vsel %vm359, %v635, %v946
        %948 = vst [vmem:[%s939 + $0x8] sm:$0x1] %v947
        %v949 = vld [vmem:[%s939 + $0xc] sm:$0xf]
        %v950 = vsel %vm941, %v642, %v949
        %951 = vst [vmem:[%s939 + $0xc] sm:$0xf] %v950
        %952 = vst [vmem:[%s939 + $0x10] sm:$0xf] %v651
        %v953 = vld [vmem:[%s939 + $0x14] sm:$0x1]
        %v954 = vsel %vm359, %v652, %v953
        %955 = vst [vmem:[%s939 + $0x14] sm:$0x1] %v954
        %v956 = vld [vmem:[%s939 + $0x18] sm:$0xf]
        %v957 = vsel %vm941, %v659, %v956
        %958 = vst [vmem:[%s939 + $0x18] sm:$0xf] %v957
        %959 = vst [vmem:[%s939 + $0x1c] sm:$0xf] %v668
        %v960 = vld [vmem:[%s939 + $0x20] sm:$0x1]
        %v961 = vsel %vm359, %v669, %v960
        %962 = vst [vmem:[%s939 + $0x20] sm:$0x1] %v961
        %v963 = vld [vmem:[%s939 + $0x24] sm:$0xf]
        %v964 = vsel %vm941, %v676, %v963
        %965 = vst [vmem:[%s939 + $0x24] sm:$0xf] %v964
        %966 = vst [vmem:[%s939 + $0x28] sm:$0xf] %v685
        %v967 = vld [vmem:[%s939 + $0x2c] sm:$0x1]
        %v968 = vsel %vm359, %v686, %v967
        %969 = vst [vmem:[%s939 + $0x2c] sm:$0x1] %v968
        %v970 = vld [vmem:[%s939 + $0x30] sm:$0xf]
        %v971 = vsel %vm941, %v693, %v970
        %972 = vst [vmem:[%s939 + $0x30] sm:$0xf] %v971
        %973 = vst [vmem:[%s939 + $0x34] sm:$0xf] %v702
        %v974 = vld [vmem:[%s939 + $0x38] sm:$0x1]
        %v975 = vsel %vm359, %v703, %v974
        %976 = vst [vmem:[%s939 + $0x38] sm:$0x1] %v975
        %v977 = vld [vmem:[%s939 + $0x3c] sm:$0xf]
        %v978 = vsel %vm941, %v710, %v977
        %979 = vst [vmem:[%s939 + $0x3c] sm:$0xf] %v978
        %980 = vst [vmem:[%s939 + $0x40] sm:$0xf] %v719
        %v981 = vld [vmem:[%s939 + $0x44] sm:$0x1]
        %v982 = vsel %vm359, %v720, %v981
        %983 = vst [vmem:[%s939 + $0x44] sm:$0x1] %v982
        %v984 = vld [vmem:[%s939 + $0x48] sm:$0xf]
        %v985 = vsel %vm941, %v727, %v984
        %986 = vst [vmem:[%s939 + $0x48] sm:$0xf] %v985
        %987 = vst [vmem:[%s939 + $0x4c] sm:$0xf] %v736
        %v988 = vld [vmem:[%s939 + $0x50] sm:$0x1]
        %v989 = vsel %vm359, %v737, %v988
        %990 = vst [vmem:[%s939 + $0x50] sm:$0x1] %v989
        %v991 = vld [vmem:[%s939 + $0x54] sm:$0xf]
        %v992 = vsel %vm941, %v744, %v991
        %993 = vst [vmem:[%s939 + $0x54] sm:$0xf] %v992
        %994 = vst [vmem:[%s939 + $0x58] sm:$0xf] %v753
        %v995 = vld [vmem:[%s939 + $0x5c] sm:$0x1]
        %v996 = vsel %vm359, %v754, %v995
        %997 = vst [vmem:[%s939 + $0x5c] sm:$0x1] %v996
        %v998 = vld [vmem:[%s939 + $0x60] sm:$0xf]
        %v999 = vsel %vm941, %v761, %v998
        %1000 = vst [vmem:[%s939 + $0x60] sm:$0xf] %v999
        %1001 = vst [vmem:[%s939 + $0x64] sm:$0xf] %v770
        %v1002 = vld [vmem:[%s939 + $0x68] sm:$0x1]
        %v1003 = vsel %vm359, %v771, %v1002
        %1004 = vst [vmem:[%s939 + $0x68] sm:$0x1] %v1003
        %v1005 = vld [vmem:[%s939 + $0x6c] sm:$0xf]
        %v1006 = vsel %vm941, %v778, %v1005
        %1007 = vst [vmem:[%s939 + $0x6c] sm:$0xf] %v1006
        %1008 = vst [vmem:[%s939 + $0x70] sm:$0xf] %v787
        %v1009 = vld [vmem:[%s939 + $0x74] sm:$0x1]
        %v1010 = vsel %vm359, %v788, %v1009
        %1011 = vst [vmem:[%s939 + $0x74] sm:$0x1] %v1010
        %v1012 = vld [vmem:[%s939 + $0x78] sm:$0xf]
        %v1013 = vsel %vm941, %v795, %v1012
        %1014 = vst [vmem:[%s939 + $0x78] sm:$0xf] %v1013
        %1015 = vst [vmem:[%s939 + $0x7c] sm:$0xf] %v804
        %v1016 = vld [vmem:[%s939 + $0x80] sm:$0x1]
        %v1017 = vsel %vm359, %v805, %v1016
        %1018 = vst [vmem:[%s939 + $0x80] sm:$0x1] %v1017
        %v1019 = vld [vmem:[%s939 + $0x84] sm:$0xf]
        %v1020 = vsel %vm941, %v812, %v1019
        %1021 = vst [vmem:[%s939 + $0x84] sm:$0xf] %v1020
        %1022 = vst [vmem:[%s939 + $0x88] sm:$0xf] %v821
        %v1023 = vld [vmem:[%s939 + $0x8c] sm:$0x1]
        %v1024 = vsel %vm359, %v822, %v1023
        %1025 = vst [vmem:[%s939 + $0x8c] sm:$0x1] %v1024
        %v1026 = vld [vmem:[%s939 + $0x90] sm:$0xf]
        %v1027 = vsel %vm941, %v829, %v1026
        %1028 = vst [vmem:[%s939 + $0x90] sm:$0xf] %v1027
        %1029 = vst [vmem:[%s939 + $0x94] sm:$0xf] %v838
        %v1030 = vld [vmem:[%s939 + $0x98] sm:$0x1]
        %v1031 = vsel %vm359, %v839, %v1030
        %1032 = vst [vmem:[%s939 + $0x98] sm:$0x1] %v1031
        %v1033 = vld [vmem:[%s939 + $0x9c] sm:$0xf]
        %v1034 = vsel %vm941, %v846, %v1033
        %1035 = vst [vmem:[%s939 + $0x9c] sm:$0xf] %v1034
        %1036 = vst [vmem:[%s939 + $0xa0] sm:$0xf] %v855
        %v1037 = vld [vmem:[%s939 + $0xa4] sm:$0x1]
        %v1038 = vsel %vm359, %v856, %v1037
        %1039 = vst [vmem:[%s939 + $0xa4] sm:$0x1] %v1038
        %v1040 = vld [vmem:[%s939 + $0xa8] sm:$0xf]
        %v1041 = vsel %vm941, %v863, %v1040
        %1042 = vst [vmem:[%s939 + $0xa8] sm:$0xf] %v1041
        %1043 = vst [vmem:[%s939 + $0xac] sm:$0xf] %v872
        %v1044 = vld [vmem:[%s939 + $0xb0] sm:$0x1]
        %v1045 = vsel %vm359, %v873, %v1044
        %1046 = vst [vmem:[%s939 + $0xb0] sm:$0x1] %v1045
        %v1047 = vld [vmem:[%s939 + $0xb4] sm:$0xf]
        %v1048 = vsel %vm941, %v880, %v1047
        %1049 = vst [vmem:[%s939 + $0xb4] sm:$0xf] %v1048
        %1050 = vst [vmem:[%s939 + $0xb8] sm:$0xf] %v889
        %v1051 = vld [vmem:[%s939 + $0xbc] sm:$0x1]
        %v1052 = vsel %vm359, %v890, %v1051
        %1053 = vst [vmem:[%s939 + $0xbc] sm:$0x1] %v1052
        %v1054 = vld [vmem:[%s2] sm:$0x1]
        %v1055 = vld [vmem:[%s4] sm:$0x1]
        %s1056 = smul.u32 0, 3
        %s1057 = smul.addr %s1056, 4
        %s1058 = scalar_lea.vmem [#allocation2], %s1057
        %v1059 = vld [vmem:[%s1058] sm:$0xf]
        %v1060 = vld [vmem:[%s1058 + $0x4] sm:$0xf]
        %v1061 = vld [vmem:[%s1058 + $0xc] sm:$0xf]
        %v1062 = vld [vmem:[%s1058 + $0x10] sm:$0xf]
        %v1063 = vld [vmem:[%s1058 + $0x18] sm:$0xf]
        %v1064 = vld [vmem:[%s1058 + $0x1c] sm:$0xf]
        %v1065 = vld [vmem:[%s1058 + $0x24] sm:$0xf]
        %v1066 = vld [vmem:[%s1058 + $0x28] sm:$0xf]
        %v1067 = vld [vmem:[%s1058 + $0x30] sm:$0xf]
        %v1068 = vld [vmem:[%s1058 + $0x34] sm:$0xf]
        %v1069 = vld [vmem:[%s1058 + $0x3c] sm:$0xf]
        %v1070 = vld [vmem:[%s1058 + $0x40] sm:$0xf]
        %v1071 = vld [vmem:[%s1058 + $0x48] sm:$0xf]
        %v1072 = vld [vmem:[%s1058 + $0x4c] sm:$0xf]
        %v1073 = vld [vmem:[%s1058 + $0x54] sm:$0xf]
        %v1074 = vld [vmem:[%s1058 + $0x58] sm:$0xf]
        %v1075 = vld [vmem:[#allocation7] sm:$0xf]
        %v1076 = vld [vmem:[#allocation7 + $0x4] sm:$0xf]
        %v1077 = vld [vmem:[#allocation7 + $0x8] sm:$0xf]
        %v1078 = vld [vmem:[#allocation7 + $0xc] sm:$0xf]
        %v1079 = vld [vmem:[#allocation7 + $0x10] sm:$0xf]
        %v1080 = vld [vmem:[#allocation7 + $0x14] sm:$0xf]
        %v1081 = vld [vmem:[#allocation7 + $0x18] sm:$0xf]
        %v1082 = vld [vmem:[#allocation7 + $0x1c] sm:$0xf]
        %v1083 = vld [vmem:[#allocation7 + $0x20] sm:$0xf]
        %v1084 = vld [vmem:[#allocation7 + $0x24] sm:$0xf]
        %v1085 = vld [vmem:[#allocation7 + $0x28] sm:$0xf]
        %v1086 = vld [vmem:[#allocation7 + $0x2c] sm:$0xf]
        %v1087 = vld [vmem:[#allocation7 + $0x30] sm:$0xf]
        %v1088 = vld [vmem:[#allocation7 + $0x34] sm:$0xf]
        %v1089 = vld [vmem:[#allocation7 + $0x38] sm:$0xf]
        %v1090 = vld [vmem:[#allocation7 + $0x3c] sm:$0xf]
        %v1091 = vld [vmem:[%s1058 + $0x8] sm:$0x1]
        %v1092 = vld [vmem:[%s1058 + $0x14] sm:$0x1]
        %v1093 = vld [vmem:[%s1058 + $0x20] sm:$0x1]
        %v1094 = vld [vmem:[%s1058 + $0x2c] sm:$0x1]
        %v1095 = vld [vmem:[%s1058 + $0x38] sm:$0x1]
        %v1096 = vld [vmem:[%s1058 + $0x44] sm:$0x1]
        %v1097 = vld [vmem:[%s1058 + $0x50] sm:$0x1]
        %v1098 = vld [vmem:[%s1058 + $0x5c] sm:$0x1]
        %vm1099 = vsmask.f32 3328
        %vm1100 = vsmask.f32 7440
        %vm1101 = vmor %vm1099, %vm1100
        %v1103 = vshrl.u32 %v1059, 16
        %v1105 = vrot.slane %v1103, 4
        %v1106 = vshll.u32 %v1059, 16
        %v1108 = vrot.slane %v1106, 5
        %v1109 = vor.u32 %v1105, %v1108
        %v1110 = vrot.slane %v1109, 4
        %v1112 = vshll.u32 %v1060, 16
        %v1114 = vrot.slane %v1112, 5
        %v1115 = vsel %vm1101, %v1110, %v1114
        %v1116 = vshrl.u32 %v1060, 16
        %v1118 = vrot.slane %v1116, 4
        %v1119 = vor.u32 %v1118, %v1114
        %v1120 = vrot.slane %v1119, 4
        %v1122 = vshll.u32 %v1091, 16
        %v1124 = vrot.slane %v1122, 5
        %v1125 = vsel %vm1101, %v1120, %v1124
        %v1127 = vshrl.u32 %v1061, 16
        %v1129 = vrot.slane %v1127, 4
        %v1130 = vshll.u32 %v1061, 16
        %v1132 = vrot.slane %v1130, 5
        %v1133 = vor.u32 %v1129, %v1132
        %v1134 = vrot.slane %v1133, 4
        %v1136 = vshll.u32 %v1062, 16
        %v1138 = vrot.slane %v1136, 5
        %v1139 = vsel %vm1101, %v1134, %v1138
        %v1140 = vshrl.u32 %v1062, 16
        %v1142 = vrot.slane %v1140, 4
        %v1143 = vor.u32 %v1142, %v1138
        %v1144 = vrot.slane %v1143, 4
        %v1146 = vshll.u32 %v1092, 16
        %v1148 = vrot.slane %v1146, 5
        %v1149 = vsel %vm1101, %v1144, %v1148
        %v1151 = vshrl.u32 %v1063, 16
        %v1153 = vrot.slane %v1151, 4
        %v1154 = vshll.u32 %v1063, 16
        %v1156 = vrot.slane %v1154, 5
        %v1157 = vor.u32 %v1153, %v1156
        %v1158 = vrot.slane %v1157, 4
        %v1160 = vshll.u32 %v1064, 16
        %v1162 = vrot.slane %v1160, 5
        %v1163 = vsel %vm1101, %v1158, %v1162
        %v1164 = vshrl.u32 %v1064, 16
        %v1166 = vrot.slane %v1164, 4
        %v1167 = vor.u32 %v1166, %v1162
        %v1168 = vrot.slane %v1167, 4
        %v1170 = vshll.u32 %v1093, 16
        %v1172 = vrot.slane %v1170, 5
        %v1173 = vsel %vm1101, %v1168, %v1172
        %v1175 = vshrl.u32 %v1065, 16
        %v1177 = vrot.slane %v1175, 4
        %v1178 = vshll.u32 %v1065, 16
        %v1180 = vrot.slane %v1178, 5
        %v1181 = vor.u32 %v1177, %v1180
        %v1182 = vrot.slane %v1181, 4
        %v1184 = vshll.u32 %v1066, 16
        %v1186 = vrot.slane %v1184, 5
        %v1187 = vsel %vm1101, %v1182, %v1186
        %v1188 = vshrl.u32 %v1066, 16
        %v1190 = vrot.slane %v1188, 4
        %v1191 = vor.u32 %v1190, %v1186
        %v1192 = vrot.slane %v1191, 4
        %v1194 = vshll.u32 %v1094, 16
        %v1196 = vrot.slane %v1194, 5
        %v1197 = vsel %vm1101, %v1192, %v1196
        %v1199 = vshrl.u32 %v1067, 16
        %v1201 = vrot.slane %v1199, 4
        %v1202 = vshll.u32 %v1067, 16
        %v1204 = vrot.slane %v1202, 5
        %v1205 = vor.u32 %v1201, %v1204
        %v1206 = vrot.slane %v1205, 4
        %v1208 = vshll.u32 %v1068, 16
        %v1210 = vrot.slane %v1208, 5
        %v1211 = vsel %vm1101, %v1206, %v1210
        %v1212 = vshrl.u32 %v1068, 16
        %v1214 = vrot.slane %v1212, 4
        %v1215 = vor.u32 %v1214, %v1210
        %v1216 = vrot.slane %v1215, 4
        %v1218 = vshll.u32 %v1095, 16
        %v1220 = vrot.slane %v1218, 5
        %v1221 = vsel %vm1101, %v1216, %v1220
        %v1223 = vshrl.u32 %v1069, 16
        %v1225 = vrot.slane %v1223, 4
        %v1226 = vshll.u32 %v1069, 16
        %v1228 = vrot.slane %v1226, 5
        %v1229 = vor.u32 %v1225, %v1228
        %v1230 = vrot.slane %v1229, 4
        %v1232 = vshll.u32 %v1070, 16
        %v1234 = vrot.slane %v1232, 5
        %v1235 = vsel %vm1101, %v1230, %v1234
        %v1236 = vshrl.u32 %v1070, 16
        %v1238 = vrot.slane %v1236, 4
        %v1239 = vor.u32 %v1238, %v1234
        %v1240 = vrot.slane %v1239, 4
        %v1242 = vshll.u32 %v1096, 16
        %v1244 = vrot.slane %v1242, 5
        %v1245 = vsel %vm1101, %v1240, %v1244
        %v1247 = vshrl.u32 %v1071, 16
        %v1249 = vrot.slane %v1247, 4
        %v1250 = vshll.u32 %v1071, 16
        %v1252 = vrot.slane %v1250, 5
        %v1253 = vor.u32 %v1249, %v1252
        %v1254 = vrot.slane %v1253, 4
        %v1256 = vshll.u32 %v1072, 16
        %v1258 = vrot.slane %v1256, 5
        %v1259 = vsel %vm1101, %v1254, %v1258
        %v1260 = vshrl.u32 %v1072, 16
        %v1262 = vrot.slane %v1260, 4
        %v1263 = vor.u32 %v1262, %v1258
        %v1264 = vrot.slane %v1263, 4
        %v1266 = vshll.u32 %v1097, 16
        %v1268 = vrot.slane %v1266, 5
        %v1269 = vsel %vm1101, %v1264, %v1268
        %v1271 = vshrl.u32 %v1073, 16
        %v1273 = vrot.slane %v1271, 4
        %v1274 = vshll.u32 %v1073, 16
        %v1276 = vrot.slane %v1274, 5
        %v1277 = vor.u32 %v1273, %v1276
        %v1278 = vrot.slane %v1277, 4
        %v1280 = vshll.u32 %v1074, 16
        %v1282 = vrot.slane %v1280, 5
        %v1283 = vsel %vm1101, %v1278, %v1282
        %v1284 = vshrl.u32 %v1074, 16
        %v1286 = vrot.slane %v1284, 4
        %v1287 = vor.u32 %v1286, %v1282
        %v1288 = vrot.slane %v1287, 4
        %v1290 = vshll.u32 %v1098, 16
        %v1292 = vrot.slane %v1290, 5
        %v1293 = vsel %vm1101, %v1288, %v1292
        %s1294 = scalar_lea.vmem [#allocation7], 64
        %v1295 = vld [vmem:[%s1294] sm:$0xf]
        %v1296 = vld [vmem:[%s1294 + $0x4] sm:$0xf]
        %v1297 = vld [vmem:[%s1294 + $0x8] sm:$0xf]
        %v1298 = vld [vmem:[%s1294 + $0xc] sm:$0xf]
        %v1299 = vld [vmem:[%s1294 + $0x10] sm:$0xf]
        %v1300 = vld [vmem:[%s1294 + $0x14] sm:$0xf]
        %v1301 = vld [vmem:[%s1294 + $0x18] sm:$0xf]
        %v1302 = vld [vmem:[%s1294 + $0x1c] sm:$0xf]
        %v1303 = vld [vmem:[%s1294 + $0x20] sm:$0xf]
        %v1304 = vld [vmem:[%s1294 + $0x24] sm:$0xf]
        %v1305 = vld [vmem:[%s1294 + $0x28] sm:$0xf]
        %v1306 = vld [vmem:[%s1294 + $0x2c] sm:$0xf]
        %v1307 = vld [vmem:[%s1294 + $0x30] sm:$0xf]
        %v1308 = vld [vmem:[%s1294 + $0x34] sm:$0xf]
        %v1309 = vld [vmem:[%s1294 + $0x38] sm:$0xf]
        %v1310 = vld [vmem:[%s1294 + $0x3c] sm:$0xf]
        %v1311 = vunpack.c.l.b16 %v1115
        %v1312 = vunpack.c.l.b16 %v1125
        %v1313 = vunpack.c.l.b16 %v1139
        %v1314 = vunpack.c.l.b16 %v1149
        %v1315 = vunpack.c.l.b16 %v1163
        %v1316 = vunpack.c.l.b16 %v1173
        %v1317 = vunpack.c.l.b16 %v1187
        %v1318 = vunpack.c.l.b16 %v1197
        %v1319 = vunpack.c.l.b16 %v1211
        %v1320 = vunpack.c.l.b16 %v1221
        %v1321 = vunpack.c.l.b16 %v1235
        %v1322 = vunpack.c.l.b16 %v1245
        %v1323 = vunpack.c.l.b16 %v1259
        %v1324 = vunpack.c.l.b16 %v1269
        %v1325 = vunpack.c.l.b16 %v1283
        %v1326 = vunpack.c.l.b16 %v1293
        %v1327 = vpack.c.b16 %v1312, %v1311
        %v1328 = vpack.c.b16 %v1314, %v1313
        %v1329 = vpack.c.b16 %v1316, %v1315
        %v1330 = vpack.c.b16 %v1318, %v1317
        %v1331 = vpack.c.b16 %v1320, %v1319
        %v1332 = vpack.c.b16 %v1322, %v1321
        %v1333 = vpack.c.b16 %v1324, %v1323
        %v1334 = vpack.c.b16 %v1326, %v1325
        %v1359 = vunpack.c.l.b16 %v1295
        %v1360 = vunpack.c.l.b16 %v1296
        %v1361 = vunpack.c.l.b16 %v1297
        %v1362 = vunpack.c.l.b16 %v1298
        %v1363 = vunpack.c.l.b16 %v1299
        %v1364 = vunpack.c.l.b16 %v1300
        %v1365 = vunpack.c.l.b16 %v1301
        %v1366 = vunpack.c.l.b16 %v1302
        %v1367 = vunpack.c.l.b16 %v1303
        %v1368 = vunpack.c.l.b16 %v1304
        %v1369 = vunpack.c.l.b16 %v1305
        %v1370 = vunpack.c.l.b16 %v1306
        %v1371 = vunpack.c.l.b16 %v1307
        %v1372 = vunpack.c.l.b16 %v1308
        %v1373 = vunpack.c.l.b16 %v1309
        %v1374 = vunpack.c.l.b16 %v1310
        %v1375 = vpack.c.b16 %v1360, %v1359
        %v1376 = vpack.c.b16 %v1362, %v1361
        %v1377 = vpack.c.b16 %v1364, %v1363
        %v1378 = vpack.c.b16 %v1366, %v1365
        %v1379 = vpack.c.b16 %v1368, %v1367
        %v1380 = vpack.c.b16 %v1370, %v1369
        %v1381 = vpack.c.b16 %v1372, %v1371
        %v1382 = vpack.c.b16 %v1374, %v1373
        %1391 = vmatpush.bf16.msra.mxu0 %v1382
        %1392 = vmatpush.bf16.msra.mxu0 %v1381
        %1393 = vmatpush.bf16.msra.mxu0 %v1380
        %1394 = vmatpush.bf16.msra.mxu0 %v1379
        %1395 = vmatpush.bf16.msra.mxu0 %v1378
        %1396 = vmatpush.bf16.msra.mxu0 %v1377
        %1397 = vmatpush.bf16.msra.mxu0 %v1376
        %1398 = vmatpush.bf16.msra.mxu0 %v1375
        %1399 = vmatmul.bf16.gmra.mxu0 %v1327
        %v1400 = vpop.f32.mrf.mxu0
        %v1401 = vadd.f32 0.0, %v1400
        %v1402 = vpop.f32.mrf.mxu0
        %v1403 = vadd.f32 0.0, %v1402
        %1404 = vmatmul.bf16.gmra.mxu0 %v1328
        %v1405 = vpop.f32.mrf.mxu0
        %v1406 = vadd.f32 0.0, %v1405
        %v1407 = vpop.f32.mrf.mxu0
        %v1408 = vadd.f32 0.0, %v1407
        %1409 = vmatmul.bf16.gmra.mxu0 %v1329
        %v1410 = vpop.f32.mrf.mxu0
        %v1411 = vadd.f32 0.0, %v1410
        %v1412 = vpop.f32.mrf.mxu0
        %v1413 = vadd.f32 0.0, %v1412
        %1414 = vmatmul.bf16.gmra.mxu0 %v1330
        %v1415 = vpop.f32.mrf.mxu0
        %v1416 = vadd.f32 0.0, %v1415
        %v1417 = vpop.f32.mrf.mxu0
        %v1418 = vadd.f32 0.0, %v1417
        %1419 = vmatmul.bf16.gmra.mxu0 %v1331
        %v1420 = vpop.f32.mrf.mxu0
        %v1421 = vadd.f32 0.0, %v1420
        %v1422 = vpop.f32.mrf.mxu0
        %v1423 = vadd.f32 0.0, %v1422
        %1424 = vmatmul.bf16.gmra.mxu0 %v1332
        %v1425 = vpop.f32.mrf.mxu0
        %v1426 = vadd.f32 0.0, %v1425
        %v1427 = vpop.f32.mrf.mxu0
        %v1428 = vadd.f32 0.0, %v1427
        %1429 = vmatmul.bf16.gmra.mxu0 %v1333
        %v1430 = vpop.f32.mrf.mxu0
        %v1431 = vadd.f32 0.0, %v1430
        %v1432 = vpop.f32.mrf.mxu0
        %v1433 = vadd.f32 0.0, %v1432
        %1434 = vmatmul.bf16.gmra.mxu0 %v1334
        %v1435 = vpop.f32.mrf.mxu0
        %v1436 = vadd.f32 0.0, %v1435
        %v1437 = vpop.f32.mrf.mxu0
        %v1438 = vadd.f32 0.0, %v1437
        %1439 = vdwg.mxu0
        %v1456 = vunpack.c.l.b16 %v1059
        %v1457 = vunpack.c.l.b16 %v1060
        %v1458 = vunpack.c.l.b16 %v1061
        %v1459 = vunpack.c.l.b16 %v1062
        %v1460 = vunpack.c.l.b16 %v1063
        %v1461 = vunpack.c.l.b16 %v1064
        %v1462 = vunpack.c.l.b16 %v1065
        %v1463 = vunpack.c.l.b16 %v1066
        %v1464 = vunpack.c.l.b16 %v1067
        %v1465 = vunpack.c.l.b16 %v1068
        %v1466 = vunpack.c.l.b16 %v1069
        %v1467 = vunpack.c.l.b16 %v1070
        %v1468 = vunpack.c.l.b16 %v1071
        %v1469 = vunpack.c.l.b16 %v1072
        %v1470 = vunpack.c.l.b16 %v1073
        %v1471 = vunpack.c.l.b16 %v1074
        %v1472 = vpack.c.b16 %v1457, %v1456
        %v1473 = vpack.c.b16 %v1459, %v1458
        %v1474 = vpack.c.b16 %v1461, %v1460
        %v1475 = vpack.c.b16 %v1463, %v1462
        %v1476 = vpack.c.b16 %v1465, %v1464
        %v1477 = vpack.c.b16 %v1467, %v1466
        %v1478 = vpack.c.b16 %v1469, %v1468
        %v1479 = vpack.c.b16 %v1471, %v1470
        %v1504 = vunpack.c.l.b16 %v1075
        %v1505 = vunpack.c.l.b16 %v1076
        %v1506 = vunpack.c.l.b16 %v1077
        %v1507 = vunpack.c.l.b16 %v1078
        %v1508 = vunpack.c.l.b16 %v1079
        %v1509 = vunpack.c.l.b16 %v1080
        %v1510 = vunpack.c.l.b16 %v1081
        %v1511 = vunpack.c.l.b16 %v1082
        %v1512 = vunpack.c.l.b16 %v1083
        %v1513 = vunpack.c.l.b16 %v1084
        %v1514 = vunpack.c.l.b16 %v1085
        %v1515 = vunpack.c.l.b16 %v1086
        %v1516 = vunpack.c.l.b16 %v1087
        %v1517 = vunpack.c.l.b16 %v1088
        %v1518 = vunpack.c.l.b16 %v1089
        %v1519 = vunpack.c.l.b16 %v1090
        %v1520 = vpack.c.b16 %v1505, %v1504
        %v1521 = vpack.c.b16 %v1507, %v1506
        %v1522 = vpack.c.b16 %v1509, %v1508
        %v1523 = vpack.c.b16 %v1511, %v1510
        %v1524 = vpack.c.b16 %v1513, %v1512
        %v1525 = vpack.c.b16 %v1515, %v1514
        %v1526 = vpack.c.b16 %v1517, %v1516
        %v1527 = vpack.c.b16 %v1519, %v1518
        %1536 = vmatpush.bf16.msra.mxu0 %v1527
        %1537 = vmatpush.bf16.msra.mxu0 %v1526
        %1538 = vmatpush.bf16.msra.mxu0 %v1525
        %1539 = vmatpush.bf16.msra.mxu0 %v1524
        %1540 = vmatpush.bf16.msra.mxu0 %v1523
        %1541 = vmatpush.bf16.msra.mxu0 %v1522
        %1542 = vmatpush.bf16.msra.mxu0 %v1521
        %1543 = vmatpush.bf16.msra.mxu0 %v1520
        %1544 = vmatmul.bf16.gmra.mxu0 %v1472
        %v1545 = vpop.f32.mrf.mxu0
        %v1546 = vadd.f32 %v1401, %v1545
        %v1547 = vpop.f32.mrf.mxu0
        %v1548 = vadd.f32 %v1403, %v1547
        %1549 = vmatmul.bf16.gmra.mxu0 %v1473
        %v1550 = vpop.f32.mrf.mxu0
        %v1551 = vadd.f32 %v1406, %v1550
        %v1552 = vpop.f32.mrf.mxu0
        %v1553 = vadd.f32 %v1408, %v1552
        %1554 = vmatmul.bf16.gmra.mxu0 %v1474
        %v1555 = vpop.f32.mrf.mxu0
        %v1556 = vadd.f32 %v1411, %v1555
        %v1557 = vpop.f32.mrf.mxu0
        %v1558 = vadd.f32 %v1413, %v1557
        %1559 = vmatmul.bf16.gmra.mxu0 %v1475
        %v1560 = vpop.f32.mrf.mxu0
        %v1561 = vadd.f32 %v1416, %v1560
        %v1562 = vpop.f32.mrf.mxu0
        %v1563 = vadd.f32 %v1418, %v1562
        %1564 = vmatmul.bf16.gmra.mxu0 %v1476
        %v1565 = vpop.f32.mrf.mxu0
        %v1566 = vadd.f32 %v1421, %v1565
        %v1567 = vpop.f32.mrf.mxu0
        %v1568 = vadd.f32 %v1423, %v1567
        %1569 = vmatmul.bf16.gmra.mxu0 %v1477
        %v1570 = vpop.f32.mrf.mxu0
        %v1571 = vadd.f32 %v1426, %v1570
        %v1572 = vpop.f32.mrf.mxu0
        %v1573 = vadd.f32 %v1428, %v1572
        %1574 = vmatmul.bf16.gmra.mxu0 %v1478
        %v1575 = vpop.f32.mrf.mxu0
        %v1576 = vadd.f32 %v1431, %v1575
        %v1577 = vpop.f32.mrf.mxu0
        %v1578 = vadd.f32 %v1433, %v1577
        %1579 = vmatmul.bf16.gmra.mxu0 %v1479
        %v1580 = vpop.f32.mrf.mxu0
        %v1581 = vadd.f32 %v1436, %v1580
        %v1582 = vpop.f32.mrf.mxu0
        %v1583 = vadd.f32 %v1438, %v1582
        %1584 = vdwg.mxu0
        %v1585 = vld [vmem:[%s1058] sm:$0xe]
        %v1586 = vld [vmem:[%s1058 + $0xc] sm:$0xe]
        %v1587 = vld [vmem:[%s1058 + $0x18] sm:$0xe]
        %v1588 = vld [vmem:[%s1058 + $0x24] sm:$0xe]
        %v1589 = vld [vmem:[%s1058 + $0x30] sm:$0xe]
        %v1590 = vld [vmem:[%s1058 + $0x3c] sm:$0xe]
        %v1591 = vld [vmem:[%s1058 + $0x48] sm:$0xe]
        %v1592 = vld [vmem:[%s1058 + $0x54] sm:$0xe]
        %vm1609 = vcmask 1042432
        %vm1610 = vcmask 1046532
        %vm1611 = vmor %vm1609, %vm1610
        %v1612 = vrot.slane %v1585, 5
        %v1613 = vrot.slane %v1612, 4
        %v1614 = vrot.slane %v1060, 5
        %v1615 = vsel %vm1611, %v1613, %v1614
        %v1616 = vrot.slane %v1614, 4
        %v1617 = vrot.slane %v1091, 5
        %v1618 = vsel %vm1611, %v1616, %v1617
        %v1619 = vrot.slane %v1586, 5
        %v1620 = vrot.slane %v1619, 4
        %v1621 = vrot.slane %v1062, 5
        %v1622 = vsel %vm1611, %v1620, %v1621
        %v1623 = vrot.slane %v1621, 4
        %v1624 = vrot.slane %v1092, 5
        %v1625 = vsel %vm1611, %v1623, %v1624
        %v1626 = vrot.slane %v1587, 5
        %v1627 = vrot.slane %v1626, 4
        %v1628 = vrot.slane %v1064, 5
        %v1629 = vsel %vm1611, %v1627, %v1628
        %v1630 = vrot.slane %v1628, 4
        %v1631 = vrot.slane %v1093, 5
        %v1632 = vsel %vm1611, %v1630, %v1631
        %v1633 = vrot.slane %v1588, 5
        %v1634 = vrot.slane %v1633, 4
        %v1635 = vrot.slane %v1066, 5
        %v1636 = vsel %vm1611, %v1634, %v1635
        %v1637 = vrot.slane %v1635, 4
        %v1638 = vrot.slane %v1094, 5
        %v1639 = vsel %vm1611, %v1637, %v1638
        %v1640 = vrot.slane %v1589, 5
        %v1641 = vrot.slane %v1640, 4
        %v1642 = vrot.slane %v1068, 5
        %v1643 = vsel %vm1611, %v1641, %v1642
        %v1644 = vrot.slane %v1642, 4
        %v1645 = vrot.slane %v1095, 5
        %v1646 = vsel %vm1611, %v1644, %v1645
        %v1647 = vrot.slane %v1590, 5
        %v1648 = vrot.slane %v1647, 4
        %v1649 = vrot.slane %v1070, 5
        %v1650 = vsel %vm1611, %v1648, %v1649
        %v1651 = vrot.slane %v1649, 4
        %v1652 = vrot.slane %v1096, 5
        %v1653 = vsel %vm1611, %v1651, %v1652
        %v1654 = vrot.slane %v1591, 5
        %v1655 = vrot.slane %v1654, 4
        %v1656 = vrot.slane %v1072, 5
        %v1657 = vsel %vm1611, %v1655, %v1656
        %v1658 = vrot.slane %v1656, 4
        %v1659 = vrot.slane %v1097, 5
        %v1660 = vsel %vm1611, %v1658, %v1659
        %v1661 = vrot.slane %v1592, 5
        %v1662 = vrot.slane %v1661, 4
        %v1663 = vrot.slane %v1074, 5
        %v1664 = vsel %vm1611, %v1662, %v1663
        %v1665 = vrot.slane %v1663, 4
        %v1666 = vrot.slane %v1098, 5
        %v1667 = vsel %vm1611, %v1665, %v1666
        %s1668 = scalar_lea.vmem [#allocation7], 128
        %v1669 = vld [vmem:[%s1668] sm:$0xf]
        %v1670 = vld [vmem:[%s1668 + $0x4] sm:$0xf]
        %v1671 = vld [vmem:[%s1668 + $0x8] sm:$0xf]
        %v1672 = vld [vmem:[%s1668 + $0xc] sm:$0xf]
        %v1673 = vld [vmem:[%s1668 + $0x10] sm:$0xf]
        %v1674 = vld [vmem:[%s1668 + $0x14] sm:$0xf]
        %v1675 = vld [vmem:[%s1668 + $0x18] sm:$0xf]
        %v1676 = vld [vmem:[%s1668 + $0x1c] sm:$0xf]
        %v1677 = vld [vmem:[%s1668 + $0x20] sm:$0xf]
        %v1678 = vld [vmem:[%s1668 + $0x24] sm:$0xf]
        %v1679 = vld [vmem:[%s1668 + $0x28] sm:$0xf]
        %v1680 = vld [vmem:[%s1668 + $0x2c] sm:$0xf]
        %v1681 = vld [vmem:[%s1668 + $0x30] sm:$0xf]
        %v1682 = vld [vmem:[%s1668 + $0x34] sm:$0xf]
        %v1683 = vld [vmem:[%s1668 + $0x38] sm:$0xf]
        %v1684 = vld [vmem:[%s1668 + $0x3c] sm:$0xf]
        %v1685 = vunpack.c.l.b16 %v1615
        %v1686 = vunpack.c.l.b16 %v1618
        %v1687 = vunpack.c.l.b16 %v1622
        %v1688 = vunpack.c.l.b16 %v1625
        %v1689 = vunpack.c.l.b16 %v1629
        %v1690 = vunpack.c.l.b16 %v1632
        %v1691 = vunpack.c.l.b16 %v1636
        %v1692 = vunpack.c.l.b16 %v1639
        %v1693 = vunpack.c.l.b16 %v1643
        %v1694 = vunpack.c.l.b16 %v1646
        %v1695 = vunpack.c.l.b16 %v1650
        %v1696 = vunpack.c.l.b16 %v1653
        %v1697 = vunpack.c.l.b16 %v1657
        %v1698 = vunpack.c.l.b16 %v1660
        %v1699 = vunpack.c.l.b16 %v1664
        %v1700 = vunpack.c.l.b16 %v1667
        %v1701 = vpack.c.b16 %v1686, %v1685
        %v1702 = vpack.c.b16 %v1688, %v1687
        %v1703 = vpack.c.b16 %v1690, %v1689
        %v1704 = vpack.c.b16 %v1692, %v1691
        %v1705 = vpack.c.b16 %v1694, %v1693
        %v1706 = vpack.c.b16 %v1696, %v1695
        %v1707 = vpack.c.b16 %v1698, %v1697
        %v1708 = vpack.c.b16 %v1700, %v1699
        %v1733 = vunpack.c.l.b16 %v1669
        %v1734 = vunpack.c.l.b16 %v1670
        %v1735 = vunpack.c.l.b16 %v1671
        %v1736 = vunpack.c.l.b16 %v1672
        %v1737 = vunpack.c.l.b16 %v1673
        %v1738 = vunpack.c.l.b16 %v1674
        %v1739 = vunpack.c.l.b16 %v1675
        %v1740 = vunpack.c.l.b16 %v1676
        %v1741 = vunpack.c.l.b16 %v1677
        %v1742 = vunpack.c.l.b16 %v1678
        %v1743 = vunpack.c.l.b16 %v1679
        %v1744 = vunpack.c.l.b16 %v1680
        %v1745 = vunpack.c.l.b16 %v1681
        %v1746 = vunpack.c.l.b16 %v1682
        %v1747 = vunpack.c.l.b16 %v1683
        %v1748 = vunpack.c.l.b16 %v1684
        %v1749 = vpack.c.b16 %v1734, %v1733
        %v1750 = vpack.c.b16 %v1736, %v1735
        %v1751 = vpack.c.b16 %v1738, %v1737
        %v1752 = vpack.c.b16 %v1740, %v1739
        %v1753 = vpack.c.b16 %v1742, %v1741
        %v1754 = vpack.c.b16 %v1744, %v1743
        %v1755 = vpack.c.b16 %v1746, %v1745
        %v1756 = vpack.c.b16 %v1748, %v1747
        %1765 = vmatpush.bf16.msra.mxu0 %v1756
        %1766 = vmatpush.bf16.msra.mxu0 %v1755
        %1767 = vmatpush.bf16.msra.mxu0 %v1754
        %1768 = vmatpush.bf16.msra.mxu0 %v1753
        %1769 = vmatpush.bf16.msra.mxu0 %v1752
        %1770 = vmatpush.bf16.msra.mxu0 %v1751
        %1771 = vmatpush.bf16.msra.mxu0 %v1750
        %1772 = vmatpush.bf16.msra.mxu0 %v1749
        %1773 = vmatmul.bf16.gmra.mxu0 %v1701
        %v1774 = vpop.f32.mrf.mxu0
        %v1775 = vadd.f32 0.0, %v1774
        %v1776 = vpop.f32.mrf.mxu0
        %v1777 = vadd.f32 0.0, %v1776
        %1778 = vmatmul.bf16.gmra.mxu0 %v1702
        %v1779 = vpop.f32.mrf.mxu0
        %v1780 = vadd.f32 0.0, %v1779
        %v1781 = vpop.f32.mrf.mxu0
        %v1782 = vadd.f32 0.0, %v1781
        %1783 = vmatmul.bf16.gmra.mxu0 %v1703
        %v1784 = vpop.f32.mrf.mxu0
        %v1785 = vadd.f32 0.0, %v1784
        %v1786 = vpop.f32.mrf.mxu0
        %v1787 = vadd.f32 0.0, %v1786
        %1788 = vmatmul.bf16.gmra.mxu0 %v1704
        %v1789 = vpop.f32.mrf.mxu0
        %v1790 = vadd.f32 0.0, %v1789
        %v1791 = vpop.f32.mrf.mxu0
        %v1792 = vadd.f32 0.0, %v1791
        %1793 = vmatmul.bf16.gmra.mxu0 %v1705
        %v1794 = vpop.f32.mrf.mxu0
        %v1795 = vadd.f32 0.0, %v1794
        %v1796 = vpop.f32.mrf.mxu0
        %v1797 = vadd.f32 0.0, %v1796
        %1798 = vmatmul.bf16.gmra.mxu0 %v1706
        %v1799 = vpop.f32.mrf.mxu0
        %v1800 = vadd.f32 0.0, %v1799
        %v1801 = vpop.f32.mrf.mxu0
        %v1802 = vadd.f32 0.0, %v1801
        %1803 = vmatmul.bf16.gmra.mxu0 %v1707
        %v1804 = vpop.f32.mrf.mxu0
        %v1805 = vadd.f32 0.0, %v1804
        %v1806 = vpop.f32.mrf.mxu0
        %v1807 = vadd.f32 0.0, %v1806
        %1808 = vmatmul.bf16.gmra.mxu0 %v1708
        %v1809 = vpop.f32.mrf.mxu0
        %v1810 = vadd.f32 0.0, %v1809
        %v1811 = vpop.f32.mrf.mxu0
        %v1812 = vadd.f32 0.0, %v1811
        %1813 = vdwg.mxu0
        %v1814 = vadd.f32 %v1546, %v1775
        %v1815 = vadd.f32 %v1548, %v1777
        %v1816 = vadd.f32 %v1551, %v1780
        %v1817 = vadd.f32 %v1553, %v1782
        %v1818 = vadd.f32 %v1556, %v1785
        %v1819 = vadd.f32 %v1558, %v1787
        %v1820 = vadd.f32 %v1561, %v1790
        %v1821 = vadd.f32 %v1563, %v1792
        %v1822 = vadd.f32 %v1566, %v1795
        %v1823 = vadd.f32 %v1568, %v1797
        %v1824 = vadd.f32 %v1571, %v1800
        %v1825 = vadd.f32 %v1573, %v1802
        %v1826 = vadd.f32 %v1576, %v1805
        %v1827 = vadd.f32 %v1578, %v1807
        %v1828 = vadd.f32 %v1581, %v1810
        %v1829 = vadd.f32 %v1583, %v1812
        %s1830 = sadd.s32 0, 1
        %s1831 = smul.u32 %s1830, 3
        %s1832 = smul.addr %s1831, 4
        %s1833 = scalar_lea.vmem [#allocation2], %s1832
        %v1834 = vld [vmem:[%s1833] sm:$0xf]
        %v1835 = vld [vmem:[%s1833 + $0x4] sm:$0xf]
        %v1836 = vld [vmem:[%s1833 + $0xc] sm:$0xf]
        %v1837 = vld [vmem:[%s1833 + $0x10] sm:$0xf]
        %v1838 = vld [vmem:[%s1833 + $0x18] sm:$0xf]
        %v1839 = vld [vmem:[%s1833 + $0x1c] sm:$0xf]
        %v1840 = vld [vmem:[%s1833 + $0x24] sm:$0xf]
        %v1841 = vld [vmem:[%s1833 + $0x28] sm:$0xf]
        %v1842 = vld [vmem:[%s1833 + $0x30] sm:$0xf]
        %v1843 = vld [vmem:[%s1833 + $0x34] sm:$0xf]
        %v1844 = vld [vmem:[%s1833 + $0x3c] sm:$0xf]
        %v1845 = vld [vmem:[%s1833 + $0x40] sm:$0xf]
        %v1846 = vld [vmem:[%s1833 + $0x48] sm:$0xf]
        %v1847 = vld [vmem:[%s1833 + $0x4c] sm:$0xf]
        %v1848 = vld [vmem:[%s1833 + $0x54] sm:$0xf]
        %v1849 = vld [vmem:[%s1833 + $0x58] sm:$0xf]
        %s1850 = scalar_lea.vmem [#allocation7], 192
        %v1851 = vld [vmem:[%s1850] sm:$0xf]
        %v1852 = vld [vmem:[%s1850 + $0x4] sm:$0xf]
        %v1853 = vld [vmem:[%s1850 + $0x8] sm:$0xf]
        %v1854 = vld [vmem:[%s1850 + $0xc] sm:$0xf]
        %v1855 = vld [vmem:[%s1850 + $0x10] sm:$0xf]
        %v1856 = vld [vmem:[%s1850 + $0x14] sm:$0xf]
        %v1857 = vld [vmem:[%s1850 + $0x18] sm:$0xf]
        %v1858 = vld [vmem:[%s1850 + $0x1c] sm:$0xf]
        %v1859 = vld [vmem:[%s1850 + $0x20] sm:$0xf]
        %v1860 = vld [vmem:[%s1850 + $0x24] sm:$0xf]
        %v1861 = vld [vmem:[%s1850 + $0x28] sm:$0xf]
        %v1862 = vld [vmem:[%s1850 + $0x2c] sm:$0xf]
        %v1863 = vld [vmem:[%s1850 + $0x30] sm:$0xf]
        %v1864 = vld [vmem:[%s1850 + $0x34] sm:$0xf]
        %v1865 = vld [vmem:[%s1850 + $0x38] sm:$0xf]
        %v1866 = vld [vmem:[%s1850 + $0x3c] sm:$0xf]
        %v1883 = vunpack.c.l.b16 %v1834
        %v1884 = vunpack.c.l.b16 %v1835
        %v1885 = vunpack.c.l.b16 %v1836
        %v1886 = vunpack.c.l.b16 %v1837
        %v1887 = vunpack.c.l.b16 %v1838
        %v1888 = vunpack.c.l.b16 %v1839
        %v1889 = vunpack.c.l.b16 %v1840
        %v1890 = vunpack.c.l.b16 %v1841
        %v1891 = vunpack.c.l.b16 %v1842
        %v1892 = vunpack.c.l.b16 %v1843
        %v1893 = vunpack.c.l.b16 %v1844
        %v1894 = vunpack.c.l.b16 %v1845
        %v1895 = vunpack.c.l.b16 %v1846
        %v1896 = vunpack.c.l.b16 %v1847
        %v1897 = vunpack.c.l.b16 %v1848
        %v1898 = vunpack.c.l.b16 %v1849
        %v1899 = vpack.c.b16 %v1884, %v1883
        %v1900 = vpack.c.b16 %v1886, %v1885
        %v1901 = vpack.c.b16 %v1888, %v1887
        %v1902 = vpack.c.b16 %v1890, %v1889
        %v1903 = vpack.c.b16 %v1892, %v1891
        %v1904 = vpack.c.b16 %v1894, %v1893
        %v1905 = vpack.c.b16 %v1896, %v1895
        %v1906 = vpack.c.b16 %v1898, %v1897
        %v1931 = vunpack.c.l.b16 %v1851
        %v1932 = vunpack.c.l.b16 %v1852
        %v1933 = vunpack.c.l.b16 %v1853
        %v1934 = vunpack.c.l.b16 %v1854
        %v1935 = vunpack.c.l.b16 %v1855
        %v1936 = vunpack.c.l.b16 %v1856
        %v1937 = vunpack.c.l.b16 %v1857
        %v1938 = vunpack.c.l.b16 %v1858
        %v1939 = vunpack.c.l.b16 %v1859
        %v1940 = vunpack.c.l.b16 %v1860
        %v1941 = vunpack.c.l.b16 %v1861
        %v1942 = vunpack.c.l.b16 %v1862
        %v1943 = vunpack.c.l.b16 %v1863
        %v1944 = vunpack.c.l.b16 %v1864
        %v1945 = vunpack.c.l.b16 %v1865
        %v1946 = vunpack.c.l.b16 %v1866
        %v1947 = vpack.c.b16 %v1932, %v1931
        %v1948 = vpack.c.b16 %v1934, %v1933
        %v1949 = vpack.c.b16 %v1936, %v1935
        %v1950 = vpack.c.b16 %v1938, %v1937
        %v1951 = vpack.c.b16 %v1940, %v1939
        %v1952 = vpack.c.b16 %v1942, %v1941
        %v1953 = vpack.c.b16 %v1944, %v1943
        %v1954 = vpack.c.b16 %v1946, %v1945
        %1963 = vmatpush.bf16.msra.mxu0 %v1954
        %1964 = vmatpush.bf16.msra.mxu0 %v1953
        %1965 = vmatpush.bf16.msra.mxu0 %v1952
        %1966 = vmatpush.bf16.msra.mxu0 %v1951
        %1967 = vmatpush.bf16.msra.mxu0 %v1950
        %1968 = vmatpush.bf16.msra.mxu0 %v1949
        %1969 = vmatpush.bf16.msra.mxu0 %v1948
        %1970 = vmatpush.bf16.msra.mxu0 %v1947
        %1971 = vmatmul.bf16.gmra.mxu0 %v1899
        %v1972 = vpop.f32.mrf.mxu0
        %v1973 = vadd.f32 0.0, %v1972
        %v1974 = vpop.f32.mrf.mxu0
        %v1975 = vadd.f32 0.0, %v1974
        %1976 = vmatmul.bf16.gmra.mxu0 %v1900
        %v1977 = vpop.f32.mrf.mxu0
        %v1978 = vadd.f32 0.0, %v1977
        %v1979 = vpop.f32.mrf.mxu0
        %v1980 = vadd.f32 0.0, %v1979
        %1981 = vmatmul.bf16.gmra.mxu0 %v1901
        %v1982 = vpop.f32.mrf.mxu0
        %v1983 = vadd.f32 0.0, %v1982
        %v1984 = vpop.f32.mrf.mxu0
        %v1985 = vadd.f32 0.0, %v1984
        %1986 = vmatmul.bf16.gmra.mxu0 %v1902
        %v1987 = vpop.f32.mrf.mxu0
        %v1988 = vadd.f32 0.0, %v1987
        %v1989 = vpop.f32.mrf.mxu0
        %v1990 = vadd.f32 0.0, %v1989
        %1991 = vmatmul.bf16.gmra.mxu0 %v1903
        %v1992 = vpop.f32.mrf.mxu0
        %v1993 = vadd.f32 0.0, %v1992
        %v1994 = vpop.f32.mrf.mxu0
        %v1995 = vadd.f32 0.0, %v1994
        %1996 = vmatmul.bf16.gmra.mxu0 %v1904
        %v1997 = vpop.f32.mrf.mxu0
        %v1998 = vadd.f32 0.0, %v1997
        %v1999 = vpop.f32.mrf.mxu0
        %v2000 = vadd.f32 0.0, %v1999
        %2001 = vmatmul.bf16.gmra.mxu0 %v1905
        %v2002 = vpop.f32.mrf.mxu0
        %v2003 = vadd.f32 0.0, %v2002
        %v2004 = vpop.f32.mrf.mxu0
        %v2005 = vadd.f32 0.0, %v2004
        %2006 = vmatmul.bf16.gmra.mxu0 %v1906
        %v2007 = vpop.f32.mrf.mxu0
        %v2008 = vadd.f32 0.0, %v2007
        %v2009 = vpop.f32.mrf.mxu0
        %v2010 = vadd.f32 0.0, %v2009
        %2011 = vdwg.mxu0
        %v2012 = vadd.f32 %v1814, %v1973
        %v2013 = vadd.f32 %v1815, %v1975
        %v2014 = vadd.f32 %v1816, %v1978
        %v2015 = vadd.f32 %v1817, %v1980
        %v2016 = vadd.f32 %v1818, %v1983
        %v2017 = vadd.f32 %v1819, %v1985
        %v2018 = vadd.f32 %v1820, %v1988
        %v2019 = vadd.f32 %v1821, %v1990
        %v2020 = vadd.f32 %v1822, %v1993
        %v2021 = vadd.f32 %v1823, %v1995
        %v2022 = vadd.f32 %v1824, %v1998
        %v2023 = vadd.f32 %v1825, %v2000
        %v2024 = vadd.f32 %v1826, %v2003
        %v2025 = vadd.f32 %v1827, %v2005
        %v2026 = vadd.f32 %v1828, %v2008
        %v2027 = vadd.f32 %v1829, %v2010
        %v2028 = vld [vmem:[%s1833] sm:$0xf]
        %v2029 = vld [vmem:[%s1833 + $0x4] sm:$0xf]
        %v2030 = vld [vmem:[%s1833 + $0x8] sm:$0x1]
        %v2031 = vld [vmem:[%s1833 + $0xc] sm:$0xf]
        %v2032 = vld [vmem:[%s1833 + $0x10] sm:$0xf]
        %v2033 = vld [vmem:[%s1833 + $0x14] sm:$0x1]
        %v2034 = vld [vmem:[%s1833 + $0x18] sm:$0xf]
        %v2035 = vld [vmem:[%s1833 + $0x1c] sm:$0xf]
        %v2036 = vld [vmem:[%s1833 + $0x20] sm:$0x1]
        %v2037 = vld [vmem:[%s1833 + $0x24] sm:$0xf]
        %v2038 = vld [vmem:[%s1833 + $0x28] sm:$0xf]
        %v2039 = vld [vmem:[%s1833 + $0x2c] sm:$0x1]
        %v2040 = vld [vmem:[%s1833 + $0x30] sm:$0xf]
        %v2041 = vld [vmem:[%s1833 + $0x34] sm:$0xf]
        %v2042 = vld [vmem:[%s1833 + $0x38] sm:$0x1]
        %v2043 = vld [vmem:[%s1833 + $0x3c] sm:$0xf]
        %v2044 = vld [vmem:[%s1833 + $0x40] sm:$0xf]
        %v2045 = vld [vmem:[%s1833 + $0x44] sm:$0x1]
        %v2046 = vld [vmem:[%s1833 + $0x48] sm:$0xf]
        %v2047 = vld [vmem:[%s1833 + $0x4c] sm:$0xf]
        %v2048 = vld [vmem:[%s1833 + $0x50] sm:$0x1]
        %v2049 = vld [vmem:[%s1833 + $0x54] sm:$0xf]
        %v2050 = vld [vmem:[%s1833 + $0x58] sm:$0xf]
        %v2051 = vld [vmem:[%s1833 + $0x5c] sm:$0x1]
        %v2053 = vshrl.u32 %v2028, 16
        %v2055 = vrot.slane %v2053, 4
        %v2056 = vshll.u32 %v2028, 16
        %v2058 = vrot.slane %v2056, 5
        %v2059 = vor.u32 %v2055, %v2058
        %v2060 = vrot.slane %v2059, 4
        %v2062 = vshll.u32 %v2029, 16
        %v2064 = vrot.slane %v2062, 5
        %v2065 = vsel %vm1101, %v2060, %v2064
        %v2066 = vshrl.u32 %v2029, 16
        %v2068 = vrot.slane %v2066, 4
        %v2069 = vor.u32 %v2068, %v2064
        %v2070 = vrot.slane %v2069, 4
        %v2072 = vshll.u32 %v2030, 16
        %v2074 = vrot.slane %v2072, 5
        %v2075 = vsel %vm1101, %v2070, %v2074
        %v2077 = vshrl.u32 %v2031, 16
        %v2079 = vrot.slane %v2077, 4
        %v2080 = vshll.u32 %v2031, 16
        %v2082 = vrot.slane %v2080, 5
        %v2083 = vor.u32 %v2079, %v2082
        %v2084 = vrot.slane %v2083, 4
        %v2086 = vshll.u32 %v2032, 16
        %v2088 = vrot.slane %v2086, 5
        %v2089 = vsel %vm1101, %v2084, %v2088
        %v2090 = vshrl.u32 %v2032, 16
        %v2092 = vrot.slane %v2090, 4
        %v2093 = vor.u32 %v2092, %v2088
        %v2094 = vrot.slane %v2093, 4
        %v2096 = vshll.u32 %v2033, 16
        %v2098 = vrot.slane %v2096, 5
        %v2099 = vsel %vm1101, %v2094, %v2098
        %v2101 = vshrl.u32 %v2034, 16
        %v2103 = vrot.slane %v2101, 4
        %v2104 = vshll.u32 %v2034, 16
        %v2106 = vrot.slane %v2104, 5
        %v2107 = vor.u32 %v2103, %v2106
        %v2108 = vrot.slane %v2107, 4
        %v2110 = vshll.u32 %v2035, 16
        %v2112 = vrot.slane %v2110, 5
        %v2113 = vsel %vm1101, %v2108, %v2112
        %v2114 = vshrl.u32 %v2035, 16
        %v2116 = vrot.slane %v2114, 4
        %v2117 = vor.u32 %v2116, %v2112
        %v2118 = vrot.slane %v2117, 4
        %v2120 = vshll.u32 %v2036, 16
        %v2122 = vrot.slane %v2120, 5
        %v2123 = vsel %vm1101, %v2118, %v2122
        %v2125 = vshrl.u32 %v2037, 16
        %v2127 = vrot.slane %v2125, 4
        %v2128 = vshll.u32 %v2037, 16
        %v2130 = vrot.slane %v2128, 5
        %v2131 = vor.u32 %v2127, %v2130
        %v2132 = vrot.slane %v2131, 4
        %v2134 = vshll.u32 %v2038, 16
        %v2136 = vrot.slane %v2134, 5
        %v2137 = vsel %vm1101, %v2132, %v2136
        %v2138 = vshrl.u32 %v2038, 16
        %v2140 = vrot.slane %v2138, 4
        %v2141 = vor.u32 %v2140, %v2136
        %v2142 = vrot.slane %v2141, 4
        %v2144 = vshll.u32 %v2039, 16
        %v2146 = vrot.slane %v2144, 5
        %v2147 = vsel %vm1101, %v2142, %v2146
        %v2149 = vshrl.u32 %v2040, 16
        %v2151 = vrot.slane %v2149, 4
        %v2152 = vshll.u32 %v2040, 16
        %v2154 = vrot.slane %v2152, 5
        %v2155 = vor.u32 %v2151, %v2154
        %v2156 = vrot.slane %v2155, 4
        %v2158 = vshll.u32 %v2041, 16
        %v2160 = vrot.slane %v2158, 5
        %v2161 = vsel %vm1101, %v2156, %v2160
        %v2162 = vshrl.u32 %v2041, 16
        %v2164 = vrot.slane %v2162, 4
        %v2165 = vor.u32 %v2164, %v2160
        %v2166 = vrot.slane %v2165, 4
        %v2168 = vshll.u32 %v2042, 16
        %v2170 = vrot.slane %v2168, 5
        %v2171 = vsel %vm1101, %v2166, %v2170
        %v2173 = vshrl.u32 %v2043, 16
        %v2175 = vrot.slane %v2173, 4
        %v2176 = vshll.u32 %v2043, 16
        %v2178 = vrot.slane %v2176, 5
        %v2179 = vor.u32 %v2175, %v2178
        %v2180 = vrot.slane %v2179, 4
        %v2182 = vshll.u32 %v2044, 16
        %v2184 = vrot.slane %v2182, 5
        %v2185 = vsel %vm1101, %v2180, %v2184
        %v2186 = vshrl.u32 %v2044, 16
        %v2188 = vrot.slane %v2186, 4
        %v2189 = vor.u32 %v2188, %v2184
        %v2190 = vrot.slane %v2189, 4
        %v2192 = vshll.u32 %v2045, 16
        %v2194 = vrot.slane %v2192, 5
        %v2195 = vsel %vm1101, %v2190, %v2194
        %v2197 = vshrl.u32 %v2046, 16
        %v2199 = vrot.slane %v2197, 4
        %v2200 = vshll.u32 %v2046, 16
        %v2202 = vrot.slane %v2200, 5
        %v2203 = vor.u32 %v2199, %v2202
        %v2204 = vrot.slane %v2203, 4
        %v2206 = vshll.u32 %v2047, 16
        %v2208 = vrot.slane %v2206, 5
        %v2209 = vsel %vm1101, %v2204, %v2208
        %v2210 = vshrl.u32 %v2047, 16
        %v2212 = vrot.slane %v2210, 4
        %v2213 = vor.u32 %v2212, %v2208
        %v2214 = vrot.slane %v2213, 4
        %v2216 = vshll.u32 %v2048, 16
        %v2218 = vrot.slane %v2216, 5
        %v2219 = vsel %vm1101, %v2214, %v2218
        %v2221 = vshrl.u32 %v2049, 16
        %v2223 = vrot.slane %v2221, 4
        %v2224 = vshll.u32 %v2049, 16
        %v2226 = vrot.slane %v2224, 5
        %v2227 = vor.u32 %v2223, %v2226
        %v2228 = vrot.slane %v2227, 4
        %v2230 = vshll.u32 %v2050, 16
        %v2232 = vrot.slane %v2230, 5
        %v2233 = vsel %vm1101, %v2228, %v2232
        %v2234 = vshrl.u32 %v2050, 16
        %v2236 = vrot.slane %v2234, 4
        %v2237 = vor.u32 %v2236, %v2232
        %v2238 = vrot.slane %v2237, 4
        %v2240 = vshll.u32 %v2051, 16
        %v2242 = vrot.slane %v2240, 5
        %v2243 = vsel %vm1101, %v2238, %v2242
        %s2244 = scalar_lea.vmem [#allocation7], 256
        %v2245 = vld [vmem:[%s2244] sm:$0xf]
        %v2246 = vld [vmem:[%s2244 + $0x4] sm:$0xf]
        %v2247 = vld [vmem:[%s2244 + $0x8] sm:$0xf]
        %v2248 = vld [vmem:[%s2244 + $0xc] sm:$0xf]
        %v2249 = vld [vmem:[%s2244 + $0x10] sm:$0xf]
        %v2250 = vld [vmem:[%s2244 + $0x14] sm:$0xf]
        %v2251 = vld [vmem:[%s2244 + $0x18] sm:$0xf]
        %v2252 = vld [vmem:[%s2244 + $0x1c] sm:$0xf]
        %v2253 = vld [vmem:[%s2244 + $0x20] sm:$0xf]
        %v2254 = vld [vmem:[%s2244 + $0x24] sm:$0xf]
        %v2255 = vld [vmem:[%s2244 + $0x28] sm:$0xf]
        %v2256 = vld [vmem:[%s2244 + $0x2c] sm:$0xf]
        %v2257 = vld [vmem:[%s2244 + $0x30] sm:$0xf]
        %v2258 = vld [vmem:[%s2244 + $0x34] sm:$0xf]
        %v2259 = vld [vmem:[%s2244 + $0x38] sm:$0xf]
        %v2260 = vld [vmem:[%s2244 + $0x3c] sm:$0xf]
        %v2261 = vunpack.c.l.b16 %v2065
        %v2262 = vunpack.c.l.b16 %v2075
        %v2263 = vunpack.c.l.b16 %v2089
        %v2264 = vunpack.c.l.b16 %v2099
        %v2265 = vunpack.c.l.b16 %v2113
        %v2266 = vunpack.c.l.b16 %v2123
        %v2267 = vunpack.c.l.b16 %v2137
        %v2268 = vunpack.c.l.b16 %v2147
        %v2269 = vunpack.c.l.b16 %v2161
        %v2270 = vunpack.c.l.b16 %v2171
        %v2271 = vunpack.c.l.b16 %v2185
        %v2272 = vunpack.c.l.b16 %v2195
        %v2273 = vunpack.c.l.b16 %v2209
        %v2274 = vunpack.c.l.b16 %v2219
        %v2275 = vunpack.c.l.b16 %v2233
        %v2276 = vunpack.c.l.b16 %v2243
        %v2277 = vpack.c.b16 %v2262, %v2261
        %v2278 = vpack.c.b16 %v2264, %v2263
        %v2279 = vpack.c.b16 %v2266, %v2265
        %v2280 = vpack.c.b16 %v2268, %v2267
        %v2281 = vpack.c.b16 %v2270, %v2269
        %v2282 = vpack.c.b16 %v2272, %v2271
        %v2283 = vpack.c.b16 %v2274, %v2273
        %v2284 = vpack.c.b16 %v2276, %v2275
        %v2309 = vunpack.c.l.b16 %v2245
        %v2310 = vunpack.c.l.b16 %v2246
        %v2311 = vunpack.c.l.b16 %v2247
        %v2312 = vunpack.c.l.b16 %v2248
        %v2313 = vunpack.c.l.b16 %v2249
        %v2314 = vunpack.c.l.b16 %v2250
        %v2315 = vunpack.c.l.b16 %v2251
        %v2316 = vunpack.c.l.b16 %v2252
        %v2317 = vunpack.c.l.b16 %v2253
        %v2318 = vunpack.c.l.b16 %v2254
        %v2319 = vunpack.c.l.b16 %v2255
        %v2320 = vunpack.c.l.b16 %v2256
        %v2321 = vunpack.c.l.b16 %v2257
        %v2322 = vunpack.c.l.b16 %v2258
        %v2323 = vunpack.c.l.b16 %v2259
        %v2324 = vunpack.c.l.b16 %v2260
        %v2325 = vpack.c.b16 %v2310, %v2309
        %v2326 = vpack.c.b16 %v2312, %v2311
        %v2327 = vpack.c.b16 %v2314, %v2313
        %v2328 = vpack.c.b16 %v2316, %v2315
        %v2329 = vpack.c.b16 %v2318, %v2317
        %v2330 = vpack.c.b16 %v2320, %v2319
        %v2331 = vpack.c.b16 %v2322, %v2321
        %v2332 = vpack.c.b16 %v2324, %v2323
        %2341 = vmatpush.bf16.msra.mxu0 %v2332
        %2342 = vmatpush.bf16.msra.mxu0 %v2331
        %2343 = vmatpush.bf16.msra.mxu0 %v2330
        %2344 = vmatpush.bf16.msra.mxu0 %v2329
        %2345 = vmatpush.bf16.msra.mxu0 %v2328
        %2346 = vmatpush.bf16.msra.mxu0 %v2327
        %2347 = vmatpush.bf16.msra.mxu0 %v2326
        %2348 = vmatpush.bf16.msra.mxu0 %v2325
        %2349 = vmatmul.bf16.gmra.mxu0 %v2277
        %v2350 = vpop.f32.mrf.mxu0
        %v2351 = vadd.f32 0.0, %v2350
        %v2352 = vpop.f32.mrf.mxu0
        %v2353 = vadd.f32 0.0, %v2352
        %2354 = vmatmul.bf16.gmra.mxu0 %v2278
        %v2355 = vpop.f32.mrf.mxu0
        %v2356 = vadd.f32 0.0, %v2355
        %v2357 = vpop.f32.mrf.mxu0
        %v2358 = vadd.f32 0.0, %v2357
        %2359 = vmatmul.bf16.gmra.mxu0 %v2279
        %v2360 = vpop.f32.mrf.mxu0
        %v2361 = vadd.f32 0.0, %v2360
        %v2362 = vpop.f32.mrf.mxu0
        %v2363 = vadd.f32 0.0, %v2362
        %2364 = vmatmul.bf16.gmra.mxu0 %v2280
        %v2365 = vpop.f32.mrf.mxu0
        %v2366 = vadd.f32 0.0, %v2365
        %v2367 = vpop.f32.mrf.mxu0
        %v2368 = vadd.f32 0.0, %v2367
        %2369 = vmatmul.bf16.gmra.mxu0 %v2281
        %v2370 = vpop.f32.mrf.mxu0
        %v2371 = vadd.f32 0.0, %v2370
        %v2372 = vpop.f32.mrf.mxu0
        %v2373 = vadd.f32 0.0, %v2372
        %2374 = vmatmul.bf16.gmra.mxu0 %v2282
        %v2375 = vpop.f32.mrf.mxu0
        %v2376 = vadd.f32 0.0, %v2375
        %v2377 = vpop.f32.mrf.mxu0
        %v2378 = vadd.f32 0.0, %v2377
        %2379 = vmatmul.bf16.gmra.mxu0 %v2283
        %v2380 = vpop.f32.mrf.mxu0
        %v2381 = vadd.f32 0.0, %v2380
        %v2382 = vpop.f32.mrf.mxu0
        %v2383 = vadd.f32 0.0, %v2382
        %2384 = vmatmul.bf16.gmra.mxu0 %v2284
        %v2385 = vpop.f32.mrf.mxu0
        %v2386 = vadd.f32 0.0, %v2385
        %v2387 = vpop.f32.mrf.mxu0
        %v2388 = vadd.f32 0.0, %v2387
        %2389 = vdwg.mxu0
        %v2390 = vadd.f32 %v2012, %v2351
        %v2391 = vadd.f32 %v2013, %v2353
        %v2392 = vadd.f32 %v2014, %v2356
        %v2393 = vadd.f32 %v2015, %v2358
        %v2394 = vadd.f32 %v2016, %v2361
        %v2395 = vadd.f32 %v2017, %v2363
        %v2396 = vadd.f32 %v2018, %v2366
        %v2397 = vadd.f32 %v2019, %v2368
        %v2398 = vadd.f32 %v2020, %v2371
        %v2399 = vadd.f32 %v2021, %v2373
        %v2400 = vadd.f32 %v2022, %v2376
        %v2401 = vadd.f32 %v2023, %v2378
        %v2402 = vadd.f32 %v2024, %v2381
        %v2403 = vadd.f32 %v2025, %v2383
        %v2404 = vadd.f32 %v2026, %v2386
        %v2405 = vadd.f32 %v2027, %v2388
        %v2406 = vld [vmem:[%s1833] sm:$0xe]
        %v2407 = vld [vmem:[%s1833 + $0xc] sm:$0xe]
        %v2408 = vld [vmem:[%s1833 + $0x18] sm:$0xe]
        %v2409 = vld [vmem:[%s1833 + $0x24] sm:$0xe]
        %v2410 = vld [vmem:[%s1833 + $0x30] sm:$0xe]
        %v2411 = vld [vmem:[%s1833 + $0x3c] sm:$0xe]
        %v2412 = vld [vmem:[%s1833 + $0x48] sm:$0xe]
        %v2413 = vld [vmem:[%s1833 + $0x54] sm:$0xe]
        %v2438 = vrot.slane %v2406, 5
        %v2439 = vrot.slane %v2438, 4
        %v2440 = vrot.slane %v2029, 5
        %v2441 = vsel %vm1611, %v2439, %v2440
        %v2442 = vrot.slane %v2440, 4
        %v2443 = vrot.slane %v2030, 5
        %v2444 = vsel %vm1611, %v2442, %v2443
        %v2445 = vrot.slane %v2407, 5
        %v2446 = vrot.slane %v2445, 4
        %v2447 = vrot.slane %v2032, 5
        %v2448 = vsel %vm1611, %v2446, %v2447
        %v2449 = vrot.slane %v2447, 4
        %v2450 = vrot.slane %v2033, 5
        %v2451 = vsel %vm1611, %v2449, %v2450
        %v2452 = vrot.slane %v2408, 5
        %v2453 = vrot.slane %v2452, 4
        %v2454 = vrot.slane %v2035, 5
        %v2455 = vsel %vm1611, %v2453, %v2454
        %v2456 = vrot.slane %v2454, 4
        %v2457 = vrot.slane %v2036, 5
        %v2458 = vsel %vm1611, %v2456, %v2457
        %v2459 = vrot.slane %v2409, 5
        %v2460 = vrot.slane %v2459, 4
        %v2461 = vrot.slane %v2038, 5
        %v2462 = vsel %vm1611, %v2460, %v2461
        %v2463 = vrot.slane %v2461, 4
        %v2464 = vrot.slane %v2039, 5
        %v2465 = vsel %vm1611, %v2463, %v2464
        %v2466 = vrot.slane %v2410, 5
        %v2467 = vrot.slane %v2466, 4
        %v2468 = vrot.slane %v2041, 5
        %v2469 = vsel %vm1611, %v2467, %v2468
        %v2470 = vrot.slane %v2468, 4
        %v2471 = vrot.slane %v2042, 5
        %v2472 = vsel %vm1611, %v2470, %v2471
        %v2473 = vrot.slane %v2411, 5
        %v2474 = vrot.slane %v2473, 4
        %v2475 = vrot.slane %v2044, 5
        %v2476 = vsel %vm1611, %v2474, %v2475
        %v2477 = vrot.slane %v2475, 4
        %v2478 = vrot.slane %v2045, 5
        %v2479 = vsel %vm1611, %v2477, %v2478
        %v2480 = vrot.slane %v2412, 5
        %v2481 = vrot.slane %v2480, 4
        %v2482 = vrot.slane %v2047, 5
        %v2483 = vsel %vm1611, %v2481, %v2482
        %v2484 = vrot.slane %v2482, 4
        %v2485 = vrot.slane %v2048, 5
        %v2486 = vsel %vm1611, %v2484, %v2485
        %v2487 = vrot.slane %v2413, 5
        %v2488 = vrot.slane %v2487, 4
        %v2489 = vrot.slane %v2050, 5
        %v2490 = vsel %vm1611, %v2488, %v2489
        %v2491 = vrot.slane %v2489, 4
        %v2492 = vrot.slane %v2051, 5
        %v2493 = vsel %vm1611, %v2491, %v2492
        %s2494 = scalar_lea.vmem [#allocation7], 320
        %v2495 = vld [vmem:[%s2494] sm:$0xf]
        %v2496 = vld [vmem:[%s2494 + $0x4] sm:$0xf]
        %v2497 = vld [vmem:[%s2494 + $0x8] sm:$0xf]
        %v2498 = vld [vmem:[%s2494 + $0xc] sm:$0xf]
        %v2499 = vld [vmem:[%s2494 + $0x10] sm:$0xf]
        %v2500 = vld [vmem:[%s2494 + $0x14] sm:$0xf]
        %v2501 = vld [vmem:[%s2494 + $0x18] sm:$0xf]
        %v2502 = vld [vmem:[%s2494 + $0x1c] sm:$0xf]
        %v2503 = vld [vmem:[%s2494 + $0x20] sm:$0xf]
        %v2504 = vld [vmem:[%s2494 + $0x24] sm:$0xf]
        %v2505 = vld [vmem:[%s2494 + $0x28] sm:$0xf]
        %v2506 = vld [vmem:[%s2494 + $0x2c] sm:$0xf]
        %v2507 = vld [vmem:[%s2494 + $0x30] sm:$0xf]
        %v2508 = vld [vmem:[%s2494 + $0x34] sm:$0xf]
        %v2509 = vld [vmem:[%s2494 + $0x38] sm:$0xf]
        %v2510 = vld [vmem:[%s2494 + $0x3c] sm:$0xf]
        %v2511 = vunpack.c.l.b16 %v2441
        %v2512 = vunpack.c.l.b16 %v2444
        %v2513 = vunpack.c.l.b16 %v2448
        %v2514 = vunpack.c.l.b16 %v2451
        %v2515 = vunpack.c.l.b16 %v2455
        %v2516 = vunpack.c.l.b16 %v2458
        %v2517 = vunpack.c.l.b16 %v2462
        %v2518 = vunpack.c.l.b16 %v2465
        %v2519 = vunpack.c.l.b16 %v2469
        %v2520 = vunpack.c.l.b16 %v2472
        %v2521 = vunpack.c.l.b16 %v2476
        %v2522 = vunpack.c.l.b16 %v2479
        %v2523 = vunpack.c.l.b16 %v2483
        %v2524 = vunpack.c.l.b16 %v2486
        %v2525 = vunpack.c.l.b16 %v2490
        %v2526 = vunpack.c.l.b16 %v2493
        %v2527 = vpack.c.b16 %v2512, %v2511
        %v2528 = vpack.c.b16 %v2514, %v2513
        %v2529 = vpack.c.b16 %v2516, %v2515
        %v2530 = vpack.c.b16 %v2518, %v2517
        %v2531 = vpack.c.b16 %v2520, %v2519
        %v2532 = vpack.c.b16 %v2522, %v2521
        %v2533 = vpack.c.b16 %v2524, %v2523
        %v2534 = vpack.c.b16 %v2526, %v2525
        %v2559 = vunpack.c.l.b16 %v2495
        %v2560 = vunpack.c.l.b16 %v2496
        %v2561 = vunpack.c.l.b16 %v2497
        %v2562 = vunpack.c.l.b16 %v2498
        %v2563 = vunpack.c.l.b16 %v2499
        %v2564 = vunpack.c.l.b16 %v2500
        %v2565 = vunpack.c.l.b16 %v2501
        %v2566 = vunpack.c.l.b16 %v2502
        %v2567 = vunpack.c.l.b16 %v2503
        %v2568 = vunpack.c.l.b16 %v2504
        %v2569 = vunpack.c.l.b16 %v2505
        %v2570 = vunpack.c.l.b16 %v2506
        %v2571 = vunpack.c.l.b16 %v2507
        %v2572 = vunpack.c.l.b16 %v2508
        %v2573 = vunpack.c.l.b16 %v2509
        %v2574 = vunpack.c.l.b16 %v2510
        %v2575 = vpack.c.b16 %v2560, %v2559
        %v2576 = vpack.c.b16 %v2562, %v2561
        %v2577 = vpack.c.b16 %v2564, %v2563
        %v2578 = vpack.c.b16 %v2566, %v2565
        %v2579 = vpack.c.b16 %v2568, %v2567
        %v2580 = vpack.c.b16 %v2570, %v2569
        %v2581 = vpack.c.b16 %v2572, %v2571
        %v2582 = vpack.c.b16 %v2574, %v2573
        %2591 = vmatpush.bf16.msra.mxu0 %v2582
        %2592 = vmatpush.bf16.msra.mxu0 %v2581
        %2593 = vmatpush.bf16.msra.mxu0 %v2580
        %2594 = vmatpush.bf16.msra.mxu0 %v2579
        %2595 = vmatpush.bf16.msra.mxu0 %v2578
        %2596 = vmatpush.bf16.msra.mxu0 %v2577
        %2597 = vmatpush.bf16.msra.mxu0 %v2576
        %2598 = vmatpush.bf16.msra.mxu0 %v2575
        %2599 = vmatmul.bf16.gmra.mxu0 %v2527
        %v2600 = vpop.f32.mrf.mxu0
        %v2601 = vadd.f32 0.0, %v2600
        %v2602 = vpop.f32.mrf.mxu0
        %v2603 = vadd.f32 0.0, %v2602
        %2604 = vmatmul.bf16.gmra.mxu0 %v2528
        %v2605 = vpop.f32.mrf.mxu0
        %v2606 = vadd.f32 0.0, %v2605
        %v2607 = vpop.f32.mrf.mxu0
        %v2608 = vadd.f32 0.0, %v2607
        %2609 = vmatmul.bf16.gmra.mxu0 %v2529
        %v2610 = vpop.f32.mrf.mxu0
        %v2611 = vadd.f32 0.0, %v2610
        %v2612 = vpop.f32.mrf.mxu0
        %v2613 = vadd.f32 0.0, %v2612
        %2614 = vmatmul.bf16.gmra.mxu0 %v2530
        %v2615 = vpop.f32.mrf.mxu0
        %v2616 = vadd.f32 0.0, %v2615
        %v2617 = vpop.f32.mrf.mxu0
        %v2618 = vadd.f32 0.0, %v2617
        %2619 = vmatmul.bf16.gmra.mxu0 %v2531
        %v2620 = vpop.f32.mrf.mxu0
        %v2621 = vadd.f32 0.0, %v2620
        %v2622 = vpop.f32.mrf.mxu0
        %v2623 = vadd.f32 0.0, %v2622
        %2624 = vmatmul.bf16.gmra.mxu0 %v2532
        %v2625 = vpop.f32.mrf.mxu0
        %v2626 = vadd.f32 0.0, %v2625
        %v2627 = vpop.f32.mrf.mxu0
        %v2628 = vadd.f32 0.0, %v2627
        %2629 = vmatmul.bf16.gmra.mxu0 %v2533
        %v2630 = vpop.f32.mrf.mxu0
        %v2631 = vadd.f32 0.0, %v2630
        %v2632 = vpop.f32.mrf.mxu0
        %v2633 = vadd.f32 0.0, %v2632
        %2634 = vmatmul.bf16.gmra.mxu0 %v2534
        %v2635 = vpop.f32.mrf.mxu0
        %v2636 = vadd.f32 0.0, %v2635
        %v2637 = vpop.f32.mrf.mxu0
        %v2638 = vadd.f32 0.0, %v2637
        %2639 = vdwg.mxu0
        %v2640 = vadd.f32 %v2390, %v2601
        %v2641 = vadd.f32 %v2391, %v2603
        %v2642 = vadd.f32 %v2392, %v2606
        %v2643 = vadd.f32 %v2393, %v2608
        %v2644 = vadd.f32 %v2394, %v2611
        %v2645 = vadd.f32 %v2395, %v2613
        %v2646 = vadd.f32 %v2396, %v2616
        %v2647 = vadd.f32 %v2397, %v2618
        %v2648 = vadd.f32 %v2398, %v2621
        %v2649 = vadd.f32 %v2399, %v2623
        %v2650 = vadd.f32 %v2400, %v2626
        %v2651 = vadd.f32 %v2401, %v2628
        %v2652 = vadd.f32 %v2402, %v2631
        %v2653 = vadd.f32 %v2403, %v2633
        %v2654 = vadd.f32 %v2404, %v2636
        %v2655 = vadd.f32 %v2405, %v2638
        %s2656 = sadd.s32 0, 2
        %s2657 = smul.u32 %s2656, 3
        %s2658 = smul.addr %s2657, 4
        %s2659 = scalar_lea.vmem [#allocation2], %s2658
        %v2660 = vld [vmem:[%s2659] sm:$0xf]
        %v2661 = vld [vmem:[%s2659 + $0x4] sm:$0xf]
        %v2662 = vld [vmem:[%s2659 + $0xc] sm:$0xf]
        %v2663 = vld [vmem:[%s2659 + $0x10] sm:$0xf]
        %v2664 = vld [vmem:[%s2659 + $0x18] sm:$0xf]
        %v2665 = vld [vmem:[%s2659 + $0x1c] sm:$0xf]
        %v2666 = vld [vmem:[%s2659 + $0x24] sm:$0xf]
        %v2667 = vld [vmem:[%s2659 + $0x28] sm:$0xf]
        %v2668 = vld [vmem:[%s2659 + $0x30] sm:$0xf]
        %v2669 = vld [vmem:[%s2659 + $0x34] sm:$0xf]
        %v2670 = vld [vmem:[%s2659 + $0x3c] sm:$0xf]
        %v2671 = vld [vmem:[%s2659 + $0x40] sm:$0xf]
        %v2672 = vld [vmem:[%s2659 + $0x48] sm:$0xf]
        %v2673 = vld [vmem:[%s2659 + $0x4c] sm:$0xf]
        %v2674 = vld [vmem:[%s2659 + $0x54] sm:$0xf]
        %v2675 = vld [vmem:[%s2659 + $0x58] sm:$0xf]
        %s2676 = scalar_lea.vmem [#allocation7], 384
        %v2677 = vld [vmem:[%s2676] sm:$0xf]
        %v2678 = vld [vmem:[%s2676 + $0x4] sm:$0xf]
        %v2679 = vld [vmem:[%s2676 + $0x8] sm:$0xf]
        %v2680 = vld [vmem:[%s2676 + $0xc] sm:$0xf]
        %v2681 = vld [vmem:[%s2676 + $0x10] sm:$0xf]
        %v2682 = vld [vmem:[%s2676 + $0x14] sm:$0xf]
        %v2683 = vld [vmem:[%s2676 + $0x18] sm:$0xf]
        %v2684 = vld [vmem:[%s2676 + $0x1c] sm:$0xf]
        %v2685 = vld [vmem:[%s2676 + $0x20] sm:$0xf]
        %v2686 = vld [vmem:[%s2676 + $0x24] sm:$0xf]
        %v2687 = vld [vmem:[%s2676 + $0x28] sm:$0xf]
        %v2688 = vld [vmem:[%s2676 + $0x2c] sm:$0xf]
        %v2689 = vld [vmem:[%s2676 + $0x30] sm:$0xf]
        %v2690 = vld [vmem:[%s2676 + $0x34] sm:$0xf]
        %v2691 = vld [vmem:[%s2676 + $0x38] sm:$0xf]
        %v2692 = vld [vmem:[%s2676 + $0x3c] sm:$0xf]
        %v2709 = vunpack.c.l.b16 %v2660
        %v2710 = vunpack.c.l.b16 %v2661
        %v2711 = vunpack.c.l.b16 %v2662
        %v2712 = vunpack.c.l.b16 %v2663
        %v2713 = vunpack.c.l.b16 %v2664
        %v2714 = vunpack.c.l.b16 %v2665
        %v2715 = vunpack.c.l.b16 %v2666
        %v2716 = vunpack.c.l.b16 %v2667
        %v2717 = vunpack.c.l.b16 %v2668
        %v2718 = vunpack.c.l.b16 %v2669
        %v2719 = vunpack.c.l.b16 %v2670
        %v2720 = vunpack.c.l.b16 %v2671
        %v2721 = vunpack.c.l.b16 %v2672
        %v2722 = vunpack.c.l.b16 %v2673
        %v2723 = vunpack.c.l.b16 %v2674
        %v2724 = vunpack.c.l.b16 %v2675
        %v2725 = vpack.c.b16 %v2710, %v2709
        %v2726 = vpack.c.b16 %v2712, %v2711
        %v2727 = vpack.c.b16 %v2714, %v2713
        %v2728 = vpack.c.b16 %v2716, %v2715
        %v2729 = vpack.c.b16 %v2718, %v2717
        %v2730 = vpack.c.b16 %v2720, %v2719
        %v2731 = vpack.c.b16 %v2722, %v2721
        %v2732 = vpack.c.b16 %v2724, %v2723
        %v2757 = vunpack.c.l.b16 %v2677
        %v2758 = vunpack.c.l.b16 %v2678
        %v2759 = vunpack.c.l.b16 %v2679
        %v2760 = vunpack.c.l.b16 %v2680
        %v2761 = vunpack.c.l.b16 %v2681
        %v2762 = vunpack.c.l.b16 %v2682
        %v2763 = vunpack.c.l.b16 %v2683
        %v2764 = vunpack.c.l.b16 %v2684
        %v2765 = vunpack.c.l.b16 %v2685
        %v2766 = vunpack.c.l.b16 %v2686
        %v2767 = vunpack.c.l.b16 %v2687
        %v2768 = vunpack.c.l.b16 %v2688
        %v2769 = vunpack.c.l.b16 %v2689
        %v2770 = vunpack.c.l.b16 %v2690
        %v2771 = vunpack.c.l.b16 %v2691
        %v2772 = vunpack.c.l.b16 %v2692
        %v2773 = vpack.c.b16 %v2758, %v2757
        %v2774 = vpack.c.b16 %v2760, %v2759
        %v2775 = vpack.c.b16 %v2762, %v2761
        %v2776 = vpack.c.b16 %v2764, %v2763
        %v2777 = vpack.c.b16 %v2766, %v2765
        %v2778 = vpack.c.b16 %v2768, %v2767
        %v2779 = vpack.c.b16 %v2770, %v2769
        %v2780 = vpack.c.b16 %v2772, %v2771
        %2789 = vmatpush.bf16.msra.mxu0 %v2780
        %2790 = vmatpush.bf16.msra.mxu0 %v2779
        %2791 = vmatpush.bf16.msra.mxu0 %v2778
        %2792 = vmatpush.bf16.msra.mxu0 %v2777
        %2793 = vmatpush.bf16.msra.mxu0 %v2776
        %2794 = vmatpush.bf16.msra.mxu0 %v2775
        %2795 = vmatpush.bf16.msra.mxu0 %v2774
        %2796 = vmatpush.bf16.msra.mxu0 %v2773
        %2797 = vmatmul.bf16.gmra.mxu0 %v2725
        %v2798 = vpop.f32.mrf.mxu0
        %v2799 = vadd.f32 0.0, %v2798
        %v2800 = vpop.f32.mrf.mxu0
        %v2801 = vadd.f32 0.0, %v2800
        %2802 = vmatmul.bf16.gmra.mxu0 %v2726
        %v2803 = vpop.f32.mrf.mxu0
        %v2804 = vadd.f32 0.0, %v2803
        %v2805 = vpop.f32.mrf.mxu0
        %v2806 = vadd.f32 0.0, %v2805
        %2807 = vmatmul.bf16.gmra.mxu0 %v2727
        %v2808 = vpop.f32.mrf.mxu0
        %v2809 = vadd.f32 0.0, %v2808
        %v2810 = vpop.f32.mrf.mxu0
        %v2811 = vadd.f32 0.0, %v2810
        %2812 = vmatmul.bf16.gmra.mxu0 %v2728
        %v2813 = vpop.f32.mrf.mxu0
        %v2814 = vadd.f32 0.0, %v2813
        %v2815 = vpop.f32.mrf.mxu0
        %v2816 = vadd.f32 0.0, %v2815
        %2817 = vmatmul.bf16.gmra.mxu0 %v2729
        %v2818 = vpop.f32.mrf.mxu0
        %v2819 = vadd.f32 0.0, %v2818
        %v2820 = vpop.f32.mrf.mxu0
        %v2821 = vadd.f32 0.0, %v2820
        %2822 = vmatmul.bf16.gmra.mxu0 %v2730
        %v2823 = vpop.f32.mrf.mxu0
        %v2824 = vadd.f32 0.0, %v2823
        %v2825 = vpop.f32.mrf.mxu0
        %v2826 = vadd.f32 0.0, %v2825
        %2827 = vmatmul.bf16.gmra.mxu0 %v2731
        %v2828 = vpop.f32.mrf.mxu0
        %v2829 = vadd.f32 0.0, %v2828
        %v2830 = vpop.f32.mrf.mxu0
        %v2831 = vadd.f32 0.0, %v2830
        %2832 = vmatmul.bf16.gmra.mxu0 %v2732
        %v2833 = vpop.f32.mrf.mxu0
        %v2834 = vadd.f32 0.0, %v2833
        %v2835 = vpop.f32.mrf.mxu0
        %v2836 = vadd.f32 0.0, %v2835
        %2837 = vdwg.mxu0
        %v2838 = vadd.f32 %v2640, %v2799
        %v2839 = vadd.f32 %v2641, %v2801
        %v2840 = vadd.f32 %v2642, %v2804
        %v2841 = vadd.f32 %v2643, %v2806
        %v2842 = vadd.f32 %v2644, %v2809
        %v2843 = vadd.f32 %v2645, %v2811
        %v2844 = vadd.f32 %v2646, %v2814
        %v2845 = vadd.f32 %v2647, %v2816
        %v2846 = vadd.f32 %v2648, %v2819
        %v2847 = vadd.f32 %v2649, %v2821
        %v2848 = vadd.f32 %v2650, %v2824
        %v2849 = vadd.f32 %v2651, %v2826
        %v2850 = vadd.f32 %v2652, %v2829
        %v2851 = vadd.f32 %v2653, %v2831
        %v2852 = vadd.f32 %v2654, %v2834
        %v2853 = vadd.f32 %v2655, %v2836
        %v2854 = vld [vmem:[%s2659] sm:$0xf]
        %v2855 = vld [vmem:[%s2659 + $0x4] sm:$0xf]
        %v2856 = vld [vmem:[%s2659 + $0x8] sm:$0x1]
        %v2857 = vld [vmem:[%s2659 + $0xc] sm:$0xf]
        %v2858 = vld [vmem:[%s2659 + $0x10] sm:$0xf]
        %v2859 = vld [vmem:[%s2659 + $0x14] sm:$0x1]
        %v2860 = vld [vmem:[%s2659 + $0x18] sm:$0xf]
        %v2861 = vld [vmem:[%s2659 + $0x1c] sm:$0xf]
        %v2862 = vld [vmem:[%s2659 + $0x20] sm:$0x1]
        %v2863 = vld [vmem:[%s2659 + $0x24] sm:$0xf]
        %v2864 = vld [vmem:[%s2659 + $0x28] sm:$0xf]
        %v2865 = vld [vmem:[%s2659 + $0x2c] sm:$0x1]
        %v2866 = vld [vmem:[%s2659 + $0x30] sm:$0xf]
        %v2867 = vld [vmem:[%s2659 + $0x34] sm:$0xf]
        %v2868 = vld [vmem:[%s2659 + $0x38] sm:$0x1]
        %v2869 = vld [vmem:[%s2659 + $0x3c] sm:$0xf]
        %v2870 = vld [vmem:[%s2659 + $0x40] sm:$0xf]
        %v2871 = vld [vmem:[%s2659 + $0x44] sm:$0x1]
        %v2872 = vld [vmem:[%s2659 + $0x48] sm:$0xf]
        %v2873 = vld [vmem:[%s2659 + $0x4c] sm:$0xf]
        %v2874 = vld [vmem:[%s2659 + $0x50] sm:$0x1]
        %v2875 = vld [vmem:[%s2659 + $0x54] sm:$0xf]
        %v2876 = vld [vmem:[%s2659 + $0x58] sm:$0xf]
        %v2877 = vld [vmem:[%s2659 + $0x5c] sm:$0x1]
        %v2879 = vshrl.u32 %v2854, 16
        %v2881 = vrot.slane %v2879, 4
        %v2882 = vshll.u32 %v2854, 16
        %v2884 = vrot.slane %v2882, 5
        %v2885 = vor.u32 %v2881, %v2884
        %v2886 = vrot.slane %v2885, 4
        %v2888 = vshll.u32 %v2855, 16
        %v2890 = vrot.slane %v2888, 5
        %v2891 = vsel %vm1101, %v2886, %v2890
        %v2892 = vshrl.u32 %v2855, 16
        %v2894 = vrot.slane %v2892, 4
        %v2895 = vor.u32 %v2894, %v2890
        %v2896 = vrot.slane %v2895, 4
        %v2898 = vshll.u32 %v2856, 16
        %v2900 = vrot.slane %v2898, 5
        %v2901 = vsel %vm1101, %v2896, %v2900
        %v2903 = vshrl.u32 %v2857, 16
        %v2905 = vrot.slane %v2903, 4
        %v2906 = vshll.u32 %v2857, 16
        %v2908 = vrot.slane %v2906, 5
        %v2909 = vor.u32 %v2905, %v2908
        %v2910 = vrot.slane %v2909, 4
        %v2912 = vshll.u32 %v2858, 16
        %v2914 = vrot.slane %v2912, 5
        %v2915 = vsel %vm1101, %v2910, %v2914
        %v2916 = vshrl.u32 %v2858, 16
        %v2918 = vrot.slane %v2916, 4
        %v2919 = vor.u32 %v2918, %v2914
        %v2920 = vrot.slane %v2919, 4
        %v2922 = vshll.u32 %v2859, 16
        %v2924 = vrot.slane %v2922, 5
        %v2925 = vsel %vm1101, %v2920, %v2924
        %v2927 = vshrl.u32 %v2860, 16
        %v2929 = vrot.slane %v2927, 4
        %v2930 = vshll.u32 %v2860, 16
        %v2932 = vrot.slane %v2930, 5
        %v2933 = vor.u32 %v2929, %v2932
        %v2934 = vrot.slane %v2933, 4
        %v2936 = vshll.u32 %v2861, 16
        %v2938 = vrot.slane %v2936, 5
        %v2939 = vsel %vm1101, %v2934, %v2938
        %v2940 = vshrl.u32 %v2861, 16
        %v2942 = vrot.slane %v2940, 4
        %v2943 = vor.u32 %v2942, %v2938
        %v2944 = vrot.slane %v2943, 4
        %v2946 = vshll.u32 %v2862, 16
        %v2948 = vrot.slane %v2946, 5
        %v2949 = vsel %vm1101, %v2944, %v2948
        %v2951 = vshrl.u32 %v2863, 16
        %v2953 = vrot.slane %v2951, 4
        %v2954 = vshll.u32 %v2863, 16
        %v2956 = vrot.slane %v2954, 5
        %v2957 = vor.u32 %v2953, %v2956
        %v2958 = vrot.slane %v2957, 4
        %v2960 = vshll.u32 %v2864, 16
        %v2962 = vrot.slane %v2960, 5
        %v2963 = vsel %vm1101, %v2958, %v2962
        %v2964 = vshrl.u32 %v2864, 16
        %v2966 = vrot.slane %v2964, 4
        %v2967 = vor.u32 %v2966, %v2962
        %v2968 = vrot.slane %v2967, 4
        %v2970 = vshll.u32 %v2865, 16
        %v2972 = vrot.slane %v2970, 5
        %v2973 = vsel %vm1101, %v2968, %v2972
        %v2975 = vshrl.u32 %v2866, 16
        %v2977 = vrot.slane %v2975, 4
        %v2978 = vshll.u32 %v2866, 16
        %v2980 = vrot.slane %v2978, 5
        %v2981 = vor.u32 %v2977, %v2980
        %v2982 = vrot.slane %v2981, 4
        %v2984 = vshll.u32 %v2867, 16
        %v2986 = vrot.slane %v2984, 5
        %v2987 = vsel %vm1101, %v2982, %v2986
        %v2988 = vshrl.u32 %v2867, 16
        %v2990 = vrot.slane %v2988, 4
        %v2991 = vor.u32 %v2990, %v2986
        %v2992 = vrot.slane %v2991, 4
        %v2994 = vshll.u32 %v2868, 16
        %v2996 = vrot.slane %v2994, 5
        %v2997 = vsel %vm1101, %v2992, %v2996
        %v2999 = vshrl.u32 %v2869, 16
        %v3001 = vrot.slane %v2999, 4
        %v3002 = vshll.u32 %v2869, 16
        %v3004 = vrot.slane %v3002, 5
        %v3005 = vor.u32 %v3001, %v3004
        %v3006 = vrot.slane %v3005, 4
        %v3008 = vshll.u32 %v2870, 16
        %v3010 = vrot.slane %v3008, 5
        %v3011 = vsel %vm1101, %v3006, %v3010
        %v3012 = vshrl.u32 %v2870, 16
        %v3014 = vrot.slane %v3012, 4
        %v3015 = vor.u32 %v3014, %v3010
        %v3016 = vrot.slane %v3015, 4
        %v3018 = vshll.u32 %v2871, 16
        %v3020 = vrot.slane %v3018, 5
        %v3021 = vsel %vm1101, %v3016, %v3020
        %v3023 = vshrl.u32 %v2872, 16
        %v3025 = vrot.slane %v3023, 4
        %v3026 = vshll.u32 %v2872, 16
        %v3028 = vrot.slane %v3026, 5
        %v3029 = vor.u32 %v3025, %v3028
        %v3030 = vrot.slane %v3029, 4
        %v3032 = vshll.u32 %v2873, 16
        %v3034 = vrot.slane %v3032, 5
        %v3035 = vsel %vm1101, %v3030, %v3034
        %v3036 = vshrl.u32 %v2873, 16
        %v3038 = vrot.slane %v3036, 4
        %v3039 = vor.u32 %v3038, %v3034
        %v3040 = vrot.slane %v3039, 4
        %v3042 = vshll.u32 %v2874, 16
        %v3044 = vrot.slane %v3042, 5
        %v3045 = vsel %vm1101, %v3040, %v3044
        %v3047 = vshrl.u32 %v2875, 16
        %v3049 = vrot.slane %v3047, 4
        %v3050 = vshll.u32 %v2875, 16
        %v3052 = vrot.slane %v3050, 5
        %v3053 = vor.u32 %v3049, %v3052
        %v3054 = vrot.slane %v3053, 4
        %v3056 = vshll.u32 %v2876, 16
        %v3058 = vrot.slane %v3056, 5
        %v3059 = vsel %vm1101, %v3054, %v3058
        %v3060 = vshrl.u32 %v2876, 16
        %v3062 = vrot.slane %v3060, 4
        %v3063 = vor.u32 %v3062, %v3058
        %v3064 = vrot.slane %v3063, 4
        %v3066 = vshll.u32 %v2877, 16
        %v3068 = vrot.slane %v3066, 5
        %v3069 = vsel %vm1101, %v3064, %v3068
        %s3070 = scalar_lea.vmem [#allocation7], 448
        %v3071 = vld [vmem:[%s3070] sm:$0xf]
        %v3072 = vld [vmem:[%s3070 + $0x4] sm:$0xf]
        %v3073 = vld [vmem:[%s3070 + $0x8] sm:$0xf]
        %v3074 = vld [vmem:[%s3070 + $0xc] sm:$0xf]
        %v3075 = vld [vmem:[%s3070 + $0x10] sm:$0xf]
        %v3076 = vld [vmem:[%s3070 + $0x14] sm:$0xf]
        %v3077 = vld [vmem:[%s3070 + $0x18] sm:$0xf]
        %v3078 = vld [vmem:[%s3070 + $0x1c] sm:$0xf]
        %v3079 = vld [vmem:[%s3070 + $0x20] sm:$0xf]
        %v3080 = vld [vmem:[%s3070 + $0x24] sm:$0xf]
        %v3081 = vld [vmem:[%s3070 + $0x28] sm:$0xf]
        %v3082 = vld [vmem:[%s3070 + $0x2c] sm:$0xf]
        %v3083 = vld [vmem:[%s3070 + $0x30] sm:$0xf]
        %v3084 = vld [vmem:[%s3070 + $0x34] sm:$0xf]
        %v3085 = vld [vmem:[%s3070 + $0x38] sm:$0xf]
        %v3086 = vld [vmem:[%s3070 + $0x3c] sm:$0xf]
        %v3087 = vunpack.c.l.b16 %v2891
        %v3088 = vunpack.c.l.b16 %v2901
        %v3089 = vunpack.c.l.b16 %v2915
        %v3090 = vunpack.c.l.b16 %v2925
        %v3091 = vunpack.c.l.b16 %v2939
        %v3092 = vunpack.c.l.b16 %v2949
        %v3093 = vunpack.c.l.b16 %v2963
        %v3094 = vunpack.c.l.b16 %v2973
        %v3095 = vunpack.c.l.b16 %v2987
        %v3096 = vunpack.c.l.b16 %v2997
        %v3097 = vunpack.c.l.b16 %v3011
        %v3098 = vunpack.c.l.b16 %v3021
        %v3099 = vunpack.c.l.b16 %v3035
        %v3100 = vunpack.c.l.b16 %v3045
        %v3101 = vunpack.c.l.b16 %v3059
        %v3102 = vunpack.c.l.b16 %v3069
        %v3103 = vpack.c.b16 %v3088, %v3087
        %v3104 = vpack.c.b16 %v3090, %v3089
        %v3105 = vpack.c.b16 %v3092, %v3091
        %v3106 = vpack.c.b16 %v3094, %v3093
        %v3107 = vpack.c.b16 %v3096, %v3095
        %v3108 = vpack.c.b16 %v3098, %v3097
        %v3109 = vpack.c.b16 %v3100, %v3099
        %v3110 = vpack.c.b16 %v3102, %v3101
        %v3135 = vunpack.c.l.b16 %v3071
        %v3136 = vunpack.c.l.b16 %v3072
        %v3137 = vunpack.c.l.b16 %v3073
        %v3138 = vunpack.c.l.b16 %v3074
        %v3139 = vunpack.c.l.b16 %v3075
        %v3140 = vunpack.c.l.b16 %v3076
        %v3141 = vunpack.c.l.b16 %v3077
        %v3142 = vunpack.c.l.b16 %v3078
        %v3143 = vunpack.c.l.b16 %v3079
        %v3144 = vunpack.c.l.b16 %v3080
        %v3145 = vunpack.c.l.b16 %v3081
        %v3146 = vunpack.c.l.b16 %v3082
        %v3147 = vunpack.c.l.b16 %v3083
        %v3148 = vunpack.c.l.b16 %v3084
        %v3149 = vunpack.c.l.b16 %v3085
        %v3150 = vunpack.c.l.b16 %v3086
        %v3151 = vpack.c.b16 %v3136, %v3135
        %v3152 = vpack.c.b16 %v3138, %v3137
        %v3153 = vpack.c.b16 %v3140, %v3139
        %v3154 = vpack.c.b16 %v3142, %v3141
        %v3155 = vpack.c.b16 %v3144, %v3143
        %v3156 = vpack.c.b16 %v3146, %v3145
        %v3157 = vpack.c.b16 %v3148, %v3147
        %v3158 = vpack.c.b16 %v3150, %v3149
        %3167 = vmatpush.bf16.msra.mxu0 %v3158
        %3168 = vmatpush.bf16.msra.mxu0 %v3157
        %3169 = vmatpush.bf16.msra.mxu0 %v3156
        %3170 = vmatpush.bf16.msra.mxu0 %v3155
        %3171 = vmatpush.bf16.msra.mxu0 %v3154
        %3172 = vmatpush.bf16.msra.mxu0 %v3153
        %3173 = vmatpush.bf16.msra.mxu0 %v3152
        %3174 = vmatpush.bf16.msra.mxu0 %v3151
        %3175 = vmatmul.bf16.gmra.mxu0 %v3103
        %v3176 = vpop.f32.mrf.mxu0
        %v3177 = vadd.f32 0.0, %v3176
        %v3178 = vpop.f32.mrf.mxu0
        %v3179 = vadd.f32 0.0, %v3178
        %3180 = vmatmul.bf16.gmra.mxu0 %v3104
        %v3181 = vpop.f32.mrf.mxu0
        %v3182 = vadd.f32 0.0, %v3181
        %v3183 = vpop.f32.mrf.mxu0
        %v3184 = vadd.f32 0.0, %v3183
        %3185 = vmatmul.bf16.gmra.mxu0 %v3105
        %v3186 = vpop.f32.mrf.mxu0
        %v3187 = vadd.f32 0.0, %v3186
        %v3188 = vpop.f32.mrf.mxu0
        %v3189 = vadd.f32 0.0, %v3188
        %3190 = vmatmul.bf16.gmra.mxu0 %v3106
        %v3191 = vpop.f32.mrf.mxu0
        %v3192 = vadd.f32 0.0, %v3191
        %v3193 = vpop.f32.mrf.mxu0
        %v3194 = vadd.f32 0.0, %v3193
        %3195 = vmatmul.bf16.gmra.mxu0 %v3107
        %v3196 = vpop.f32.mrf.mxu0
        %v3197 = vadd.f32 0.0, %v3196
        %v3198 = vpop.f32.mrf.mxu0
        %v3199 = vadd.f32 0.0, %v3198
        %3200 = vmatmul.bf16.gmra.mxu0 %v3108
        %v3201 = vpop.f32.mrf.mxu0
        %v3202 = vadd.f32 0.0, %v3201
        %v3203 = vpop.f32.mrf.mxu0
        %v3204 = vadd.f32 0.0, %v3203
        %3205 = vmatmul.bf16.gmra.mxu0 %v3109
        %v3206 = vpop.f32.mrf.mxu0
        %v3207 = vadd.f32 0.0, %v3206
        %v3208 = vpop.f32.mrf.mxu0
        %v3209 = vadd.f32 0.0, %v3208
        %3210 = vmatmul.bf16.gmra.mxu0 %v3110
        %v3211 = vpop.f32.mrf.mxu0
        %v3212 = vadd.f32 0.0, %v3211
        %v3213 = vpop.f32.mrf.mxu0
        %v3214 = vadd.f32 0.0, %v3213
        %3215 = vdwg.mxu0
        %v3216 = vadd.f32 %v2838, %v3177
        %v3217 = vadd.f32 %v2839, %v3179
        %v3218 = vadd.f32 %v2840, %v3182
        %v3219 = vadd.f32 %v2841, %v3184
        %v3220 = vadd.f32 %v2842, %v3187
        %v3221 = vadd.f32 %v2843, %v3189
        %v3222 = vadd.f32 %v2844, %v3192
        %v3223 = vadd.f32 %v2845, %v3194
        %v3224 = vadd.f32 %v2846, %v3197
        %v3225 = vadd.f32 %v2847, %v3199
        %v3226 = vadd.f32 %v2848, %v3202
        %v3227 = vadd.f32 %v2849, %v3204
        %v3228 = vadd.f32 %v2850, %v3207
        %v3229 = vadd.f32 %v2851, %v3209
        %v3230 = vadd.f32 %v2852, %v3212
        %v3231 = vadd.f32 %v2853, %v3214
        %v3232 = vld [vmem:[%s2659] sm:$0xe]
        %v3233 = vld [vmem:[%s2659 + $0xc] sm:$0xe]
        %v3234 = vld [vmem:[%s2659 + $0x18] sm:$0xe]
        %v3235 = vld [vmem:[%s2659 + $0x24] sm:$0xe]
        %v3236 = vld [vmem:[%s2659 + $0x30] sm:$0xe]
        %v3237 = vld [vmem:[%s2659 + $0x3c] sm:$0xe]
        %v3238 = vld [vmem:[%s2659 + $0x48] sm:$0xe]
        %v3239 = vld [vmem:[%s2659 + $0x54] sm:$0xe]
        %v3264 = vrot.slane %v3232, 5
        %v3265 = vrot.slane %v3264, 4
        %v3266 = vrot.slane %v2855, 5
        %v3267 = vsel %vm1611, %v3265, %v3266
        %v3268 = vrot.slane %v3266, 4
        %v3269 = vrot.slane %v2856, 5
        %v3270 = vsel %vm1611, %v3268, %v3269
        %v3271 = vrot.slane %v3233, 5
        %v3272 = vrot.slane %v3271, 4
        %v3273 = vrot.slane %v2858, 5
        %v3274 = vsel %vm1611, %v3272, %v3273
        %v3275 = vrot.slane %v3273, 4
        %v3276 = vrot.slane %v2859, 5
        %v3277 = vsel %vm1611, %v3275, %v3276
        %v3278 = vrot.slane %v3234, 5
        %v3279 = vrot.slane %v3278, 4
        %v3280 = vrot.slane %v2861, 5
        %v3281 = vsel %vm1611, %v3279, %v3280
        %v3282 = vrot.slane %v3280, 4
        %v3283 = vrot.slane %v2862, 5
        %v3284 = vsel %vm1611, %v3282, %v3283
        %v3285 = vrot.slane %v3235, 5
        %v3286 = vrot.slane %v3285, 4
        %v3287 = vrot.slane %v2864, 5
        %v3288 = vsel %vm1611, %v3286, %v3287
        %v3289 = vrot.slane %v3287, 4
        %v3290 = vrot.slane %v2865, 5
        %v3291 = vsel %vm1611, %v3289, %v3290
        %v3292 = vrot.slane %v3236, 5
        %v3293 = vrot.slane %v3292, 4
        %v3294 = vrot.slane %v2867, 5
        %v3295 = vsel %vm1611, %v3293, %v3294
        %v3296 = vrot.slane %v3294, 4
        %v3297 = vrot.slane %v2868, 5
        %v3298 = vsel %vm1611, %v3296, %v3297
        %v3299 = vrot.slane %v3237, 5
        %v3300 = vrot.slane %v3299, 4
        %v3301 = vrot.slane %v2870, 5
        %v3302 = vsel %vm1611, %v3300, %v3301
        %v3303 = vrot.slane %v3301, 4
        %v3304 = vrot.slane %v2871, 5
        %v3305 = vsel %vm1611, %v3303, %v3304
        %v3306 = vrot.slane %v3238, 5
        %v3307 = vrot.slane %v3306, 4
        %v3308 = vrot.slane %v2873, 5
        %v3309 = vsel %vm1611, %v3307, %v3308
        %v3310 = vrot.slane %v3308, 4
        %v3311 = vrot.slane %v2874, 5
        %v3312 = vsel %vm1611, %v3310, %v3311
        %v3313 = vrot.slane %v3239, 5
        %v3314 = vrot.slane %v3313, 4
        %v3315 = vrot.slane %v2876, 5
        %v3316 = vsel %vm1611, %v3314, %v3315
        %v3317 = vrot.slane %v3315, 4
        %v3318 = vrot.slane %v2877, 5
        %v3319 = vsel %vm1611, %v3317, %v3318
        %s3320 = scalar_lea.vmem [#allocation7], 512
        %v3321 = vld [vmem:[%s3320] sm:$0xf]
        %v3322 = vld [vmem:[%s3320 + $0x4] sm:$0xf]
        %v3323 = vld [vmem:[%s3320 + $0x8] sm:$0xf]
        %v3324 = vld [vmem:[%s3320 + $0xc] sm:$0xf]
        %v3325 = vld [vmem:[%s3320 + $0x10] sm:$0xf]
        %v3326 = vld [vmem:[%s3320 + $0x14] sm:$0xf]
        %v3327 = vld [vmem:[%s3320 + $0x18] sm:$0xf]
        %v3328 = vld [vmem:[%s3320 + $0x1c] sm:$0xf]
        %v3329 = vld [vmem:[%s3320 + $0x20] sm:$0xf]
        %v3330 = vld [vmem:[%s3320 + $0x24] sm:$0xf]
        %v3331 = vld [vmem:[%s3320 + $0x28] sm:$0xf]
        %v3332 = vld [vmem:[%s3320 + $0x2c] sm:$0xf]
        %v3333 = vld [vmem:[%s3320 + $0x30] sm:$0xf]
        %v3334 = vld [vmem:[%s3320 + $0x34] sm:$0xf]
        %v3335 = vld [vmem:[%s3320 + $0x38] sm:$0xf]
        %v3336 = vld [vmem:[%s3320 + $0x3c] sm:$0xf]
        %v3337 = vunpack.c.l.b16 %v3267
        %v3338 = vunpack.c.l.b16 %v3270
        %v3339 = vunpack.c.l.b16 %v3274
        %v3340 = vunpack.c.l.b16 %v3277
        %v3341 = vunpack.c.l.b16 %v3281
        %v3342 = vunpack.c.l.b16 %v3284
        %v3343 = vunpack.c.l.b16 %v3288
        %v3344 = vunpack.c.l.b16 %v3291
        %v3345 = vunpack.c.l.b16 %v3295
        %v3346 = vunpack.c.l.b16 %v3298
        %v3347 = vunpack.c.l.b16 %v3302
        %v3348 = vunpack.c.l.b16 %v3305
        %v3349 = vunpack.c.l.b16 %v3309
        %v3350 = vunpack.c.l.b16 %v3312
        %v3351 = vunpack.c.l.b16 %v3316
        %v3352 = vunpack.c.l.b16 %v3319
        %v3353 = vpack.c.b16 %v3338, %v3337
        %v3354 = vpack.c.b16 %v3340, %v3339
        %v3355 = vpack.c.b16 %v3342, %v3341
        %v3356 = vpack.c.b16 %v3344, %v3343
        %v3357 = vpack.c.b16 %v3346, %v3345
        %v3358 = vpack.c.b16 %v3348, %v3347
        %v3359 = vpack.c.b16 %v3350, %v3349
        %v3360 = vpack.c.b16 %v3352, %v3351
        %v3385 = vunpack.c.l.b16 %v3321
        %v3386 = vunpack.c.l.b16 %v3322
        %v3387 = vunpack.c.l.b16 %v3323
        %v3388 = vunpack.c.l.b16 %v3324
        %v3389 = vunpack.c.l.b16 %v3325
        %v3390 = vunpack.c.l.b16 %v3326
        %v3391 = vunpack.c.l.b16 %v3327
        %v3392 = vunpack.c.l.b16 %v3328
        %v3393 = vunpack.c.l.b16 %v3329
        %v3394 = vunpack.c.l.b16 %v3330
        %v3395 = vunpack.c.l.b16 %v3331
        %v3396 = vunpack.c.l.b16 %v3332
        %v3397 = vunpack.c.l.b16 %v3333
        %v3398 = vunpack.c.l.b16 %v3334
        %v3399 = vunpack.c.l.b16 %v3335
        %v3400 = vunpack.c.l.b16 %v3336
        %v3401 = vpack.c.b16 %v3386, %v3385
        %v3402 = vpack.c.b16 %v3388, %v3387
        %v3403 = vpack.c.b16 %v3390, %v3389
        %v3404 = vpack.c.b16 %v3392, %v3391
        %v3405 = vpack.c.b16 %v3394, %v3393
        %v3406 = vpack.c.b16 %v3396, %v3395
        %v3407 = vpack.c.b16 %v3398, %v3397
        %v3408 = vpack.c.b16 %v3400, %v3399
        %3417 = vmatpush.bf16.msra.mxu0 %v3408
        %3418 = vmatpush.bf16.msra.mxu0 %v3407
        %3419 = vmatpush.bf16.msra.mxu0 %v3406
        %3420 = vmatpush.bf16.msra.mxu0 %v3405
        %3421 = vmatpush.bf16.msra.mxu0 %v3404
        %3422 = vmatpush.bf16.msra.mxu0 %v3403
        %3423 = vmatpush.bf16.msra.mxu0 %v3402
        %3424 = vmatpush.bf16.msra.mxu0 %v3401
        %3425 = vmatmul.bf16.gmra.mxu0 %v3353
        %v3426 = vpop.f32.mrf.mxu0
        %v3427 = vadd.f32 0.0, %v3426
        %v3428 = vpop.f32.mrf.mxu0
        %v3429 = vadd.f32 0.0, %v3428
        %3430 = vmatmul.bf16.gmra.mxu0 %v3354
        %v3431 = vpop.f32.mrf.mxu0
        %v3432 = vadd.f32 0.0, %v3431
        %v3433 = vpop.f32.mrf.mxu0
        %v3434 = vadd.f32 0.0, %v3433
        %3435 = vmatmul.bf16.gmra.mxu0 %v3355
        %v3436 = vpop.f32.mrf.mxu0
        %v3437 = vadd.f32 0.0, %v3436
        %v3438 = vpop.f32.mrf.mxu0
        %v3439 = vadd.f32 0.0, %v3438
        %3440 = vmatmul.bf16.gmra.mxu0 %v3356
        %v3441 = vpop.f32.mrf.mxu0
        %v3442 = vadd.f32 0.0, %v3441
        %v3443 = vpop.f32.mrf.mxu0
        %v3444 = vadd.f32 0.0, %v3443
        %3445 = vmatmul.bf16.gmra.mxu0 %v3357
        %v3446 = vpop.f32.mrf.mxu0
        %v3447 = vadd.f32 0.0, %v3446
        %v3448 = vpop.f32.mrf.mxu0
        %v3449 = vadd.f32 0.0, %v3448
        %3450 = vmatmul.bf16.gmra.mxu0 %v3358
        %v3451 = vpop.f32.mrf.mxu0
        %v3452 = vadd.f32 0.0, %v3451
        %v3453 = vpop.f32.mrf.mxu0
        %v3454 = vadd.f32 0.0, %v3453
        %3455 = vmatmul.bf16.gmra.mxu0 %v3359
        %v3456 = vpop.f32.mrf.mxu0
        %v3457 = vadd.f32 0.0, %v3456
        %v3458 = vpop.f32.mrf.mxu0
        %v3459 = vadd.f32 0.0, %v3458
        %3460 = vmatmul.bf16.gmra.mxu0 %v3360
        %v3461 = vpop.f32.mrf.mxu0
        %v3462 = vadd.f32 0.0, %v3461
        %v3463 = vpop.f32.mrf.mxu0
        %v3464 = vadd.f32 0.0, %v3463
        %3465 = vdwg.mxu0
        %v3466 = vadd.f32 %v3216, %v3427
        %v3467 = vadd.f32 %v3217, %v3429
        %v3468 = vadd.f32 %v3218, %v3432
        %v3469 = vadd.f32 %v3219, %v3434
        %v3470 = vadd.f32 %v3220, %v3437
        %v3471 = vadd.f32 %v3221, %v3439
        %v3472 = vadd.f32 %v3222, %v3442
        %v3473 = vadd.f32 %v3223, %v3444
        %v3474 = vadd.f32 %v3224, %v3447
        %v3475 = vadd.f32 %v3225, %v3449
        %v3476 = vadd.f32 %v3226, %v3452
        %v3477 = vadd.f32 %v3227, %v3454
        %v3478 = vadd.f32 %v3228, %v3457
        %v3479 = vadd.f32 %v3229, %v3459
        %v3480 = vadd.f32 %v3230, %v3462
        %v3481 = vadd.f32 %v3231, %v3464
        %v3483 = vperm.slane %v1054, 0
        %v3485 = vadd.f32 %v3466, %v3483
        %v3486 = vadd.f32 %v3467, %v3483
        %v3487 = vadd.f32 %v3468, %v3483
        %v3488 = vadd.f32 %v3469, %v3483
        %v3489 = vadd.f32 %v3470, %v3483
        %v3490 = vadd.f32 %v3471, %v3483
        %v3491 = vadd.f32 %v3472, %v3483
        %v3492 = vadd.f32 %v3473, %v3483
        %v3493 = vadd.f32 %v3474, %v3483
        %v3494 = vadd.f32 %v3475, %v3483
        %v3495 = vadd.f32 %v3476, %v3483
        %v3496 = vadd.f32 %v3477, %v3483
        %v3497 = vadd.f32 %v3478, %v3483
        %v3498 = vadd.f32 %v3479, %v3483
        %v3499 = vadd.f32 %v3480, %v3483
        %v3500 = vadd.f32 %v3481, %v3483
        %v3501 = vmax.f32 %v3485, 0.0
        %v3502 = vmax.f32 %v3486, 0.0
        %v3503 = vmax.f32 %v3487, 0.0
        %v3504 = vmax.f32 %v3488, 0.0
        %v3505 = vmax.f32 %v3489, 0.0
        %v3506 = vmax.f32 %v3490, 0.0
        %v3507 = vmax.f32 %v3491, 0.0
        %v3508 = vmax.f32 %v3492, 0.0
        %v3509 = vmax.f32 %v3493, 0.0
        %v3510 = vmax.f32 %v3494, 0.0
        %v3511 = vmax.f32 %v3495, 0.0
        %v3512 = vmax.f32 %v3496, 0.0
        %v3513 = vmax.f32 %v3497, 0.0
        %v3514 = vmax.f32 %v3498, 0.0
        %v3515 = vmax.f32 %v3499, 0.0
        %v3516 = vmax.f32 %v3500, 0.0
        %v3517 = vpack.c.bf16 %v3501, %v3501
        %v3518 = vpack.c.bf16 %v3502, %v3502
        %v3519 = vpack.c.bf16 %v3503, %v3503
        %v3520 = vpack.c.bf16 %v3504, %v3504
        %v3521 = vpack.c.bf16 %v3505, %v3505
        %v3522 = vpack.c.bf16 %v3506, %v3506
        %v3523 = vpack.c.bf16 %v3507, %v3507
        %v3524 = vpack.c.bf16 %v3508, %v3508
        %v3525 = vpack.c.bf16 %v3509, %v3509
        %v3526 = vpack.c.bf16 %v3510, %v3510
        %v3527 = vpack.c.bf16 %v3511, %v3511
        %v3528 = vpack.c.bf16 %v3512, %v3512
        %v3529 = vpack.c.bf16 %v3513, %v3513
        %v3530 = vpack.c.bf16 %v3514, %v3514
        %v3531 = vpack.c.bf16 %v3515, %v3515
        %v3532 = vpack.c.bf16 %v3516, %v3516
        %v3534 = vshrl.u32 %v3517, 16
        %v3536 = vrot.slane %v3534, 7
        %v3537 = vshll.u32 %v3517, 16
        %v3539 = vor.u32 %v3536, %v3537
        %v3540 = vrot.slane %v3536, 4
        %v3542 = vshrl.u32 %v3518, 16
        %v3544 = vrot.slane %v3542, 7
        %v3545 = vshll.u32 %v3518, 16
        %v3547 = vor.u32 %v3544, %v3545
        %v3548 = vsel %vm618, %v3540, %v3547
        %v3549 = vrot.slane %v3544, 4
        %v3551 = vshrl.u32 %v3519, 16
        %v3553 = vrot.slane %v3551, 7
        %v3554 = vshll.u32 %v3519, 16
        %v3556 = vor.u32 %v3553, %v3554
        %v3557 = vrot.slane %v3553, 4
        %v3559 = vshrl.u32 %v3520, 16
        %v3561 = vrot.slane %v3559, 7
        %v3562 = vshll.u32 %v3520, 16
        %v3564 = vor.u32 %v3561, %v3562
        %v3565 = vsel %vm618, %v3557, %v3564
        %v3566 = vrot.slane %v3561, 4
        %v3568 = vshrl.u32 %v3521, 16
        %v3570 = vrot.slane %v3568, 7
        %v3571 = vshll.u32 %v3521, 16
        %v3573 = vor.u32 %v3570, %v3571
        %v3574 = vrot.slane %v3570, 4
        %v3576 = vshrl.u32 %v3522, 16
        %v3578 = vrot.slane %v3576, 7
        %v3579 = vshll.u32 %v3522, 16
        %v3581 = vor.u32 %v3578, %v3579
        %v3582 = vsel %vm618, %v3574, %v3581
        %v3583 = vrot.slane %v3578, 4
        %v3585 = vshrl.u32 %v3523, 16
        %v3587 = vrot.slane %v3585, 7
        %v3588 = vshll.u32 %v3523, 16
        %v3590 = vor.u32 %v3587, %v3588
        %v3591 = vrot.slane %v3587, 4
        %v3593 = vshrl.u32 %v3524, 16
        %v3595 = vrot.slane %v3593, 7
        %v3596 = vshll.u32 %v3524, 16
        %v3598 = vor.u32 %v3595, %v3596
        %v3599 = vsel %vm618, %v3591, %v3598
        %v3600 = vrot.slane %v3595, 4
        %v3602 = vshrl.u32 %v3525, 16
        %v3604 = vrot.slane %v3602, 7
        %v3605 = vshll.u32 %v3525, 16
        %v3607 = vor.u32 %v3604, %v3605
        %v3608 = vrot.slane %v3604, 4
        %v3610 = vshrl.u32 %v3526, 16
        %v3612 = vrot.slane %v3610, 7
        %v3613 = vshll.u32 %v3526, 16
        %v3615 = vor.u32 %v3612, %v3613
        %v3616 = vsel %vm618, %v3608, %v3615
        %v3617 = vrot.slane %v3612, 4
        %v3619 = vshrl.u32 %v3527, 16
        %v3621 = vrot.slane %v3619, 7
        %v3622 = vshll.u32 %v3527, 16
        %v3624 = vor.u32 %v3621, %v3622
        %v3625 = vrot.slane %v3621, 4
        %v3627 = vshrl.u32 %v3528, 16
        %v3629 = vrot.slane %v3627, 7
        %v3630 = vshll.u32 %v3528, 16
        %v3632 = vor.u32 %v3629, %v3630
        %v3633 = vsel %vm618, %v3625, %v3632
        %v3634 = vrot.slane %v3629, 4
        %v3636 = vshrl.u32 %v3529, 16
        %v3638 = vrot.slane %v3636, 7
        %v3639 = vshll.u32 %v3529, 16
        %v3641 = vor.u32 %v3638, %v3639
        %v3642 = vrot.slane %v3638, 4
        %v3644 = vshrl.u32 %v3530, 16
        %v3646 = vrot.slane %v3644, 7
        %v3647 = vshll.u32 %v3530, 16
        %v3649 = vor.u32 %v3646, %v3647
        %v3650 = vsel %vm618, %v3642, %v3649
        %v3651 = vrot.slane %v3646, 4
        %v3653 = vshrl.u32 %v3531, 16
        %v3655 = vrot.slane %v3653, 7
        %v3656 = vshll.u32 %v3531, 16
        %v3658 = vor.u32 %v3655, %v3656
        %v3659 = vrot.slane %v3655, 4
        %v3661 = vshrl.u32 %v3532, 16
        %v3663 = vrot.slane %v3661, 7
        %v3664 = vshll.u32 %v3532, 16
        %v3666 = vor.u32 %v3663, %v3664
        %v3667 = vsel %vm618, %v3659, %v3666
        %v3668 = vrot.slane %v3663, 4
        %s3693 = smul.addr %s1831, 4
        %s3694 = scalar_lea.vmem [#allocation3], %s3693
        %v3695 = vld [vmem:[%s3694] sm:$0xf]
        %v3696 = vsel %vm941, %v3539, %v3695
        %3697 = vst [vmem:[%s3694] sm:$0xf] %v3696
        %3698 = vst [vmem:[%s3694 + $0x4] sm:$0xf] %v3548
        %v3699 = vld [vmem:[%s3694 + $0x8] sm:$0x1]
        %v3700 = vsel %vm359, %v3549, %v3699
        %3701 = vst [vmem:[%s3694 + $0x8] sm:$0x1] %v3700
        %v3702 = vld [vmem:[%s3694 + $0xc] sm:$0xf]
        %v3703 = vsel %vm941, %v3556, %v3702
        %3704 = vst [vmem:[%s3694 + $0xc] sm:$0xf] %v3703
        %3705 = vst [vmem:[%s3694 + $0x10] sm:$0xf] %v3565
        %v3706 = vld [vmem:[%s3694 + $0x14] sm:$0x1]
        %v3707 = vsel %vm359, %v3566, %v3706
        %3708 = vst [vmem:[%s3694 + $0x14] sm:$0x1] %v3707
        %v3709 = vld [vmem:[%s3694 + $0x18] sm:$0xf]
        %v3710 = vsel %vm941, %v3573, %v3709
        %3711 = vst [vmem:[%s3694 + $0x18] sm:$0xf] %v3710
        %3712 = vst [vmem:[%s3694 + $0x1c] sm:$0xf] %v3582
        %v3713 = vld [vmem:[%s3694 + $0x20] sm:$0x1]
        %v3714 = vsel %vm359, %v3583, %v3713
        %3715 = vst [vmem:[%s3694 + $0x20] sm:$0x1] %v3714
        %v3716 = vld [vmem:[%s3694 + $0x24] sm:$0xf]
        %v3717 = vsel %vm941, %v3590, %v3716
        %3718 = vst [vmem:[%s3694 + $0x24] sm:$0xf] %v3717
        %3719 = vst [vmem:[%s3694 + $0x28] sm:$0xf] %v3599
        %v3720 = vld [vmem:[%s3694 + $0x2c] sm:$0x1]
        %v3721 = vsel %vm359, %v3600, %v3720
        %3722 = vst [vmem:[%s3694 + $0x2c] sm:$0x1] %v3721
        %v3723 = vld [vmem:[%s3694 + $0x30] sm:$0xf]
        %v3724 = vsel %vm941, %v3607, %v3723
        %3725 = vst [vmem:[%s3694 + $0x30] sm:$0xf] %v3724
        %3726 = vst [vmem:[%s3694 + $0x34] sm:$0xf] %v3616
        %v3727 = vld [vmem:[%s3694 + $0x38] sm:$0x1]
        %v3728 = vsel %vm359, %v3617, %v3727
        %3729 = vst [vmem:[%s3694 + $0x38] sm:$0x1] %v3728
        %v3730 = vld [vmem:[%s3694 + $0x3c] sm:$0xf]
        %v3731 = vsel %vm941, %v3624, %v3730
        %3732 = vst [vmem:[%s3694 + $0x3c] sm:$0xf] %v3731
        %3733 = vst [vmem:[%s3694 + $0x40] sm:$0xf] %v3633
        %v3734 = vld [vmem:[%s3694 + $0x44] sm:$0x1]
        %v3735 = vsel %vm359, %v3634, %v3734
        %3736 = vst [vmem:[%s3694 + $0x44] sm:$0x1] %v3735
        %v3737 = vld [vmem:[%s3694 + $0x48] sm:$0xf]
        %v3738 = vsel %vm941, %v3641, %v3737
        %3739 = vst [vmem:[%s3694 + $0x48] sm:$0xf] %v3738
        %3740 = vst [vmem:[%s3694 + $0x4c] sm:$0xf] %v3650
        %v3741 = vld [vmem:[%s3694 + $0x50] sm:$0x1]
        %v3742 = vsel %vm359, %v3651, %v3741
        %3743 = vst [vmem:[%s3694 + $0x50] sm:$0x1] %v3742
        %v3744 = vld [vmem:[%s3694 + $0x54] sm:$0xf]
        %v3745 = vsel %vm941, %v3658, %v3744
        %3746 = vst [vmem:[%s3694 + $0x54] sm:$0xf] %v3745
        %3747 = vst [vmem:[%s3694 + $0x58] sm:$0xf] %v3667
        %v3748 = vld [vmem:[%s3694 + $0x5c] sm:$0x1]
        %v3749 = vsel %vm359, %v3668, %v3748
        %3750 = vst [vmem:[%s3694 + $0x5c] sm:$0x1] %v3749
        %s3751 = smul.u32 8, 3
        %s3752 = smul.addr %s3751, 4
        %s3753 = scalar_lea.vmem [#allocation2], %s3752
        %v3754 = vld [vmem:[%s3753] sm:$0xf]
        %v3755 = vld [vmem:[%s3753 + $0x4] sm:$0xf]
        %v3756 = vld [vmem:[%s3753 + $0xc] sm:$0xf]
        %v3757 = vld [vmem:[%s3753 + $0x10] sm:$0xf]
        %v3758 = vld [vmem:[%s3753 + $0x18] sm:$0xf]
        %v3759 = vld [vmem:[%s3753 + $0x1c] sm:$0xf]
        %v3760 = vld [vmem:[%s3753 + $0x24] sm:$0xf]
        %v3761 = vld [vmem:[%s3753 + $0x28] sm:$0xf]
        %v3762 = vld [vmem:[%s3753 + $0x30] sm:$0xf]
        %v3763 = vld [vmem:[%s3753 + $0x34] sm:$0xf]
        %v3764 = vld [vmem:[%s3753 + $0x3c] sm:$0xf]
        %v3765 = vld [vmem:[%s3753 + $0x40] sm:$0xf]
        %v3766 = vld [vmem:[%s3753 + $0x48] sm:$0xf]
        %v3767 = vld [vmem:[%s3753 + $0x4c] sm:$0xf]
        %v3768 = vld [vmem:[%s3753 + $0x54] sm:$0xf]
        %v3769 = vld [vmem:[%s3753 + $0x58] sm:$0xf]
        %v3770 = vld [vmem:[#allocation7] sm:$0xf]
        %v3771 = vld [vmem:[#allocation7 + $0x4] sm:$0xf]
        %v3772 = vld [vmem:[#allocation7 + $0x8] sm:$0xf]
        %v3773 = vld [vmem:[#allocation7 + $0xc] sm:$0xf]
        %v3774 = vld [vmem:[#allocation7 + $0x10] sm:$0xf]
        %v3775 = vld [vmem:[#allocation7 + $0x14] sm:$0xf]
        %v3776 = vld [vmem:[#allocation7 + $0x18] sm:$0xf]
        %v3777 = vld [vmem:[#allocation7 + $0x1c] sm:$0xf]
        %v3778 = vld [vmem:[#allocation7 + $0x20] sm:$0xf]
        %v3779 = vld [vmem:[#allocation7 + $0x24] sm:$0xf]
        %v3780 = vld [vmem:[#allocation7 + $0x28] sm:$0xf]
        %v3781 = vld [vmem:[#allocation7 + $0x2c] sm:$0xf]
        %v3782 = vld [vmem:[#allocation7 + $0x30] sm:$0xf]
        %v3783 = vld [vmem:[#allocation7 + $0x34] sm:$0xf]
        %v3784 = vld [vmem:[#allocation7 + $0x38] sm:$0xf]
        %v3785 = vld [vmem:[#allocation7 + $0x3c] sm:$0xf]
        %v3786 = vld [vmem:[%s3753 + $0x8] sm:$0x1]
        %v3787 = vld [vmem:[%s3753 + $0x14] sm:$0x1]
        %v3788 = vld [vmem:[%s3753 + $0x20] sm:$0x1]
        %v3789 = vld [vmem:[%s3753 + $0x2c] sm:$0x1]
        %v3790 = vld [vmem:[%s3753 + $0x38] sm:$0x1]
        %v3791 = vld [vmem:[%s3753 + $0x44] sm:$0x1]
        %v3792 = vld [vmem:[%s3753 + $0x50] sm:$0x1]
        %v3793 = vld [vmem:[%s3753 + $0x5c] sm:$0x1]
        %v3795 = vshrl.u32 %v3754, 16
        %v3797 = vrot.slane %v3795, 4
        %v3798 = vshll.u32 %v3754, 16
        %v3800 = vrot.slane %v3798, 5
        %v3801 = vor.u32 %v3797, %v3800
        %v3802 = vrot.slane %v3801, 4
        %v3804 = vshll.u32 %v3755, 16
        %v3806 = vrot.slane %v3804, 5
        %v3807 = vsel %vm1101, %v3802, %v3806
        %v3808 = vshrl.u32 %v3755, 16
        %v3810 = vrot.slane %v3808, 4
        %v3811 = vor.u32 %v3810, %v3806
        %v3812 = vrot.slane %v3811, 4
        %v3814 = vshll.u32 %v3786, 16
        %v3816 = vrot.slane %v3814, 5
        %v3817 = vsel %vm1101, %v3812, %v3816
        %v3819 = vshrl.u32 %v3756, 16
        %v3821 = vrot.slane %v3819, 4
        %v3822 = vshll.u32 %v3756, 16
        %v3824 = vrot.slane %v3822, 5
        %v3825 = vor.u32 %v3821, %v3824
        %v3826 = vrot.slane %v3825, 4
        %v3828 = vshll.u32 %v3757, 16
        %v3830 = vrot.slane %v3828, 5
        %v3831 = vsel %vm1101, %v3826, %v3830
        %v3832 = vshrl.u32 %v3757, 16
        %v3834 = vrot.slane %v3832, 4
        %v3835 = vor.u32 %v3834, %v3830
        %v3836 = vrot.slane %v3835, 4
        %v3838 = vshll.u32 %v3787, 16
        %v3840 = vrot.slane %v3838, 5
        %v3841 = vsel %vm1101, %v3836, %v3840
        %v3843 = vshrl.u32 %v3758, 16
        %v3845 = vrot.slane %v3843, 4
        %v3846 = vshll.u32 %v3758, 16
        %v3848 = vrot.slane %v3846, 5
        %v3849 = vor.u32 %v3845, %v3848
        %v3850 = vrot.slane %v3849, 4
        %v3852 = vshll.u32 %v3759, 16
        %v3854 = vrot.slane %v3852, 5
        %v3855 = vsel %vm1101, %v3850, %v3854
        %v3856 = vshrl.u32 %v3759, 16
        %v3858 = vrot.slane %v3856, 4
        %v3859 = vor.u32 %v3858, %v3854
        %v3860 = vrot.slane %v3859, 4
        %v3862 = vshll.u32 %v3788, 16
        %v3864 = vrot.slane %v3862, 5
        %v3865 = vsel %vm1101, %v3860, %v3864
        %v3867 = vshrl.u32 %v3760, 16
        %v3869 = vrot.slane %v3867, 4
        %v3870 = vshll.u32 %v3760, 16
        %v3872 = vrot.slane %v3870, 5
        %v3873 = vor.u32 %v3869, %v3872
        %v3874 = vrot.slane %v3873, 4
        %v3876 = vshll.u32 %v3761, 16
        %v3878 = vrot.slane %v3876, 5
        %v3879 = vsel %vm1101, %v3874, %v3878
        %v3880 = vshrl.u32 %v3761, 16
        %v3882 = vrot.slane %v3880, 4
        %v3883 = vor.u32 %v3882, %v3878
        %v3884 = vrot.slane %v3883, 4
        %v3886 = vshll.u32 %v3789, 16
        %v3888 = vrot.slane %v3886, 5
        %v3889 = vsel %vm1101, %v3884, %v3888
        %v3891 = vshrl.u32 %v3762, 16
        %v3893 = vrot.slane %v3891, 4
        %v3894 = vshll.u32 %v3762, 16
        %v3896 = vrot.slane %v3894, 5
        %v3897 = vor.u32 %v3893, %v3896
        %v3898 = vrot.slane %v3897, 4
        %v3900 = vshll.u32 %v3763, 16
        %v3902 = vrot.slane %v3900, 5
        %v3903 = vsel %vm1101, %v3898, %v3902
        %v3904 = vshrl.u32 %v3763, 16
        %v3906 = vrot.slane %v3904, 4
        %v3907 = vor.u32 %v3906, %v3902
        %v3908 = vrot.slane %v3907, 4
        %v3910 = vshll.u32 %v3790, 16
        %v3912 = vrot.slane %v3910, 5
        %v3913 = vsel %vm1101, %v3908, %v3912
        %v3915 = vshrl.u32 %v3764, 16
        %v3917 = vrot.slane %v3915, 4
        %v3918 = vshll.u32 %v3764, 16
        %v3920 = vrot.slane %v3918, 5
        %v3921 = vor.u32 %v3917, %v3920
        %v3922 = vrot.slane %v3921, 4
        %v3924 = vshll.u32 %v3765, 16
        %v3926 = vrot.slane %v3924, 5
        %v3927 = vsel %vm1101, %v3922, %v3926
        %v3928 = vshrl.u32 %v3765, 16
        %v3930 = vrot.slane %v3928, 4
        %v3931 = vor.u32 %v3930, %v3926
        %v3932 = vrot.slane %v3931, 4
        %v3934 = vshll.u32 %v3791, 16
        %v3936 = vrot.slane %v3934, 5
        %v3937 = vsel %vm1101, %v3932, %v3936
        %v3939 = vshrl.u32 %v3766, 16
        %v3941 = vrot.slane %v3939, 4
        %v3942 = vshll.u32 %v3766, 16
        %v3944 = vrot.slane %v3942, 5
        %v3945 = vor.u32 %v3941, %v3944
        %v3946 = vrot.slane %v3945, 4
        %v3948 = vshll.u32 %v3767, 16
        %v3950 = vrot.slane %v3948, 5
        %v3951 = vsel %vm1101, %v3946, %v3950
        %v3952 = vshrl.u32 %v3767, 16
        %v3954 = vrot.slane %v3952, 4
        %v3955 = vor.u32 %v3954, %v3950
        %v3956 = vrot.slane %v3955, 4
        %v3958 = vshll.u32 %v3792, 16
        %v3960 = vrot.slane %v3958, 5
        %v3961 = vsel %vm1101, %v3956, %v3960
        %v3963 = vshrl.u32 %v3768, 16
        %v3965 = vrot.slane %v3963, 4
        %v3966 = vshll.u32 %v3768, 16
        %v3968 = vrot.slane %v3966, 5
        %v3969 = vor.u32 %v3965, %v3968
        %v3970 = vrot.slane %v3969, 4
        %v3972 = vshll.u32 %v3769, 16
        %v3974 = vrot.slane %v3972, 5
        %v3975 = vsel %vm1101, %v3970, %v3974
        %v3976 = vshrl.u32 %v3769, 16
        %v3978 = vrot.slane %v3976, 4
        %v3979 = vor.u32 %v3978, %v3974
        %v3980 = vrot.slane %v3979, 4
        %v3982 = vshll.u32 %v3793, 16
        %v3984 = vrot.slane %v3982, 5
        %v3985 = vsel %vm1101, %v3980, %v3984
        %v3986 = vld [vmem:[%s1294] sm:$0xf]
        %v3987 = vld [vmem:[%s1294 + $0x4] sm:$0xf]
        %v3988 = vld [vmem:[%s1294 + $0x8] sm:$0xf]
        %v3989 = vld [vmem:[%s1294 + $0xc] sm:$0xf]
        %v3990 = vld [vmem:[%s1294 + $0x10] sm:$0xf]
        %v3991 = vld [vmem:[%s1294 + $0x14] sm:$0xf]
        %v3992 = vld [vmem:[%s1294 + $0x18] sm:$0xf]
        %v3993 = vld [vmem:[%s1294 + $0x1c] sm:$0xf]
        %v3994 = vld [vmem:[%s1294 + $0x20] sm:$0xf]
        %v3995 = vld [vmem:[%s1294 + $0x24] sm:$0xf]
        %v3996 = vld [vmem:[%s1294 + $0x28] sm:$0xf]
        %v3997 = vld [vmem:[%s1294 + $0x2c] sm:$0xf]
        %v3998 = vld [vmem:[%s1294 + $0x30] sm:$0xf]
        %v3999 = vld [vmem:[%s1294 + $0x34] sm:$0xf]
        %v4000 = vld [vmem:[%s1294 + $0x38] sm:$0xf]
        %v4001 = vld [vmem:[%s1294 + $0x3c] sm:$0xf]
        %v4002 = vunpack.c.l.b16 %v3807
        %v4003 = vunpack.c.l.b16 %v3817
        %v4004 = vunpack.c.l.b16 %v3831
        %v4005 = vunpack.c.l.b16 %v3841
        %v4006 = vunpack.c.l.b16 %v3855
        %v4007 = vunpack.c.l.b16 %v3865
        %v4008 = vunpack.c.l.b16 %v3879
        %v4009 = vunpack.c.l.b16 %v3889
        %v4010 = vunpack.c.l.b16 %v3903
        %v4011 = vunpack.c.l.b16 %v3913
        %v4012 = vunpack.c.l.b16 %v3927
        %v4013 = vunpack.c.l.b16 %v3937
        %v4014 = vunpack.c.l.b16 %v3951
        %v4015 = vunpack.c.l.b16 %v3961
        %v4016 = vunpack.c.l.b16 %v3975
        %v4017 = vunpack.c.l.b16 %v3985
        %v4018 = vpack.c.b16 %v4003, %v4002
        %v4019 = vpack.c.b16 %v4005, %v4004
        %v4020 = vpack.c.b16 %v4007, %v4006
        %v4021 = vpack.c.b16 %v4009, %v4008
        %v4022 = vpack.c.b16 %v4011, %v4010
        %v4023 = vpack.c.b16 %v4013, %v4012
        %v4024 = vpack.c.b16 %v4015, %v4014
        %v4025 = vpack.c.b16 %v4017, %v4016
        %v4050 = vunpack.c.l.b16 %v3986
        %v4051 = vunpack.c.l.b16 %v3987
        %v4052 = vunpack.c.l.b16 %v3988
        %v4053 = vunpack.c.l.b16 %v3989
        %v4054 = vunpack.c.l.b16 %v3990
        %v4055 = vunpack.c.l.b16 %v3991
        %v4056 = vunpack.c.l.b16 %v3992
        %v4057 = vunpack.c.l.b16 %v3993
        %v4058 = vunpack.c.l.b16 %v3994
        %v4059 = vunpack.c.l.b16 %v3995
        %v4060 = vunpack.c.l.b16 %v3996
        %v4061 = vunpack.c.l.b16 %v3997
        %v4062 = vunpack.c.l.b16 %v3998
        %v4063 = vunpack.c.l.b16 %v3999
        %v4064 = vunpack.c.l.b16 %v4000
        %v4065 = vunpack.c.l.b16 %v4001
        %v4066 = vpack.c.b16 %v4051, %v4050
        %v4067 = vpack.c.b16 %v4053, %v4052
        %v4068 = vpack.c.b16 %v4055, %v4054
        %v4069 = vpack.c.b16 %v4057, %v4056
        %v4070 = vpack.c.b16 %v4059, %v4058
        %v4071 = vpack.c.b16 %v4061, %v4060
        %v4072 = vpack.c.b16 %v4063, %v4062
        %v4073 = vpack.c.b16 %v4065, %v4064
        %4082 = vmatpush.bf16.msra.mxu0 %v4073
        %4083 = vmatpush.bf16.msra.mxu0 %v4072
        %4084 = vmatpush.bf16.msra.mxu0 %v4071
        %4085 = vmatpush.bf16.msra.mxu0 %v4070
        %4086 = vmatpush.bf16.msra.mxu0 %v4069
        %4087 = vmatpush.bf16.msra.mxu0 %v4068
        %4088 = vmatpush.bf16.msra.mxu0 %v4067
        %4089 = vmatpush.bf16.msra.mxu0 %v4066
        %4090 = vmatmul.bf16.gmra.mxu0 %v4018
        %v4091 = vpop.f32.mrf.mxu0
        %v4092 = vadd.f32 0.0, %v4091
        %v4093 = vpop.f32.mrf.mxu0
        %v4094 = vadd.f32 0.0, %v4093
        %4095 = vmatmul.bf16.gmra.mxu0 %v4019
        %v4096 = vpop.f32.mrf.mxu0
        %v4097 = vadd.f32 0.0, %v4096
        %v4098 = vpop.f32.mrf.mxu0
        %v4099 = vadd.f32 0.0, %v4098
        %4100 = vmatmul.bf16.gmra.mxu0 %v4020
        %v4101 = vpop.f32.mrf.mxu0
        %v4102 = vadd.f32 0.0, %v4101
        %v4103 = vpop.f32.mrf.mxu0
        %v4104 = vadd.f32 0.0, %v4103
        %4105 = vmatmul.bf16.gmra.mxu0 %v4021
        %v4106 = vpop.f32.mrf.mxu0
        %v4107 = vadd.f32 0.0, %v4106
        %v4108 = vpop.f32.mrf.mxu0
        %v4109 = vadd.f32 0.0, %v4108
        %4110 = vmatmul.bf16.gmra.mxu0 %v4022
        %v4111 = vpop.f32.mrf.mxu0
        %v4112 = vadd.f32 0.0, %v4111
        %v4113 = vpop.f32.mrf.mxu0
        %v4114 = vadd.f32 0.0, %v4113
        %4115 = vmatmul.bf16.gmra.mxu0 %v4023
        %v4116 = vpop.f32.mrf.mxu0
        %v4117 = vadd.f32 0.0, %v4116
        %v4118 = vpop.f32.mrf.mxu0
        %v4119 = vadd.f32 0.0, %v4118
        %4120 = vmatmul.bf16.gmra.mxu0 %v4024
        %v4121 = vpop.f32.mrf.mxu0
        %v4122 = vadd.f32 0.0, %v4121
        %v4123 = vpop.f32.mrf.mxu0
        %v4124 = vadd.f32 0.0, %v4123
        %4125 = vmatmul.bf16.gmra.mxu0 %v4025
        %v4126 = vpop.f32.mrf.mxu0
        %v4127 = vadd.f32 0.0, %v4126
        %v4128 = vpop.f32.mrf.mxu0
        %v4129 = vadd.f32 0.0, %v4128
        %4130 = vdwg.mxu0
        %v4147 = vunpack.c.l.b16 %v3754
        %v4148 = vunpack.c.l.b16 %v3755
        %v4149 = vunpack.c.l.b16 %v3756
        %v4150 = vunpack.c.l.b16 %v3757
        %v4151 = vunpack.c.l.b16 %v3758
        %v4152 = vunpack.c.l.b16 %v3759
        %v4153 = vunpack.c.l.b16 %v3760
        %v4154 = vunpack.c.l.b16 %v3761
        %v4155 = vunpack.c.l.b16 %v3762
        %v4156 = vunpack.c.l.b16 %v3763
        %v4157 = vunpack.c.l.b16 %v3764
        %v4158 = vunpack.c.l.b16 %v3765
        %v4159 = vunpack.c.l.b16 %v3766
        %v4160 = vunpack.c.l.b16 %v3767
        %v4161 = vunpack.c.l.b16 %v3768
        %v4162 = vunpack.c.l.b16 %v3769
        %v4163 = vpack.c.b16 %v4148, %v4147
        %v4164 = vpack.c.b16 %v4150, %v4149
        %v4165 = vpack.c.b16 %v4152, %v4151
        %v4166 = vpack.c.b16 %v4154, %v4153
        %v4167 = vpack.c.b16 %v4156, %v4155
        %v4168 = vpack.c.b16 %v4158, %v4157
        %v4169 = vpack.c.b16 %v4160, %v4159
        %v4170 = vpack.c.b16 %v4162, %v4161
        %v4195 = vunpack.c.l.b16 %v3770
        %v4196 = vunpack.c.l.b16 %v3771
        %v4197 = vunpack.c.l.b16 %v3772
        %v4198 = vunpack.c.l.b16 %v3773
        %v4199 = vunpack.c.l.b16 %v3774
        %v4200 = vunpack.c.l.b16 %v3775
        %v4201 = vunpack.c.l.b16 %v3776
        %v4202 = vunpack.c.l.b16 %v3777
        %v4203 = vunpack.c.l.b16 %v3778
        %v4204 = vunpack.c.l.b16 %v3779
        %v4205 = vunpack.c.l.b16 %v3780
        %v4206 = vunpack.c.l.b16 %v3781
        %v4207 = vunpack.c.l.b16 %v3782
        %v4208 = vunpack.c.l.b16 %v3783
        %v4209 = vunpack.c.l.b16 %v3784
        %v4210 = vunpack.c.l.b16 %v3785
        %v4211 = vpack.c.b16 %v4196, %v4195
        %v4212 = vpack.c.b16 %v4198, %v4197
        %v4213 = vpack.c.b16 %v4200, %v4199
        %v4214 = vpack.c.b16 %v4202, %v4201
        %v4215 = vpack.c.b16 %v4204, %v4203
        %v4216 = vpack.c.b16 %v4206, %v4205
        %v4217 = vpack.c.b16 %v4208, %v4207
        %v4218 = vpack.c.b16 %v4210, %v4209
        %4227 = vmatpush.bf16.msra.mxu0 %v4218
        %4228 = vmatpush.bf16.msra.mxu0 %v4217
        %4229 = vmatpush.bf16.msra.mxu0 %v4216
        %4230 = vmatpush.bf16.msra.mxu0 %v4215
        %4231 = vmatpush.bf16.msra.mxu0 %v4214
        %4232 = vmatpush.bf16.msra.mxu0 %v4213
        %4233 = vmatpush.bf16.msra.mxu0 %v4212
        %4234 = vmatpush.bf16.msra.mxu0 %v4211
        %4235 = vmatmul.bf16.gmra.mxu0 %v4163
        %v4236 = vpop.f32.mrf.mxu0
        %v4237 = vadd.f32 %v4092, %v4236
        %v4238 = vpop.f32.mrf.mxu0
        %v4239 = vadd.f32 %v4094, %v4238
        %4240 = vmatmul.bf16.gmra.mxu0 %v4164
        %v4241 = vpop.f32.mrf.mxu0
        %v4242 = vadd.f32 %v4097, %v4241
        %v4243 = vpop.f32.mrf.mxu0
        %v4244 = vadd.f32 %v4099, %v4243
        %4245 = vmatmul.bf16.gmra.mxu0 %v4165
        %v4246 = vpop.f32.mrf.mxu0
        %v4247 = vadd.f32 %v4102, %v4246
        %v4248 = vpop.f32.mrf.mxu0
        %v4249 = vadd.f32 %v4104, %v4248
        %4250 = vmatmul.bf16.gmra.mxu0 %v4166
        %v4251 = vpop.f32.mrf.mxu0
        %v4252 = vadd.f32 %v4107, %v4251
        %v4253 = vpop.f32.mrf.mxu0
        %v4254 = vadd.f32 %v4109, %v4253
        %4255 = vmatmul.bf16.gmra.mxu0 %v4167
        %v4256 = vpop.f32.mrf.mxu0
        %v4257 = vadd.f32 %v4112, %v4256
        %v4258 = vpop.f32.mrf.mxu0
        %v4259 = vadd.f32 %v4114, %v4258
        %4260 = vmatmul.bf16.gmra.mxu0 %v4168
        %v4261 = vpop.f32.mrf.mxu0
        %v4262 = vadd.f32 %v4117, %v4261
        %v4263 = vpop.f32.mrf.mxu0
        %v4264 = vadd.f32 %v4119, %v4263
        %4265 = vmatmul.bf16.gmra.mxu0 %v4169
        %v4266 = vpop.f32.mrf.mxu0
        %v4267 = vadd.f32 %v4122, %v4266
        %v4268 = vpop.f32.mrf.mxu0
        %v4269 = vadd.f32 %v4124, %v4268
        %4270 = vmatmul.bf16.gmra.mxu0 %v4170
        %v4271 = vpop.f32.mrf.mxu0
        %v4272 = vadd.f32 %v4127, %v4271
        %v4273 = vpop.f32.mrf.mxu0
        %v4274 = vadd.f32 %v4129, %v4273
        %4275 = vdwg.mxu0
        %v4276 = vld [vmem:[%s3753] sm:$0xe]
        %v4277 = vld [vmem:[%s3753 + $0xc] sm:$0xe]
        %v4278 = vld [vmem:[%s3753 + $0x18] sm:$0xe]
        %v4279 = vld [vmem:[%s3753 + $0x24] sm:$0xe]
        %v4280 = vld [vmem:[%s3753 + $0x30] sm:$0xe]
        %v4281 = vld [vmem:[%s3753 + $0x3c] sm:$0xe]
        %v4282 = vld [vmem:[%s3753 + $0x48] sm:$0xe]
        %v4283 = vld [vmem:[%s3753 + $0x54] sm:$0xe]
        %v4300 = vrot.slane %v4276, 5
        %v4301 = vrot.slane %v4300, 4
        %v4302 = vrot.slane %v3755, 5
        %v4303 = vsel %vm1611, %v4301, %v4302
        %v4304 = vrot.slane %v4302, 4
        %v4305 = vrot.slane %v3786, 5
        %v4306 = vsel %vm1611, %v4304, %v4305
        %v4307 = vrot.slane %v4277, 5
        %v4308 = vrot.slane %v4307, 4
        %v4309 = vrot.slane %v3757, 5
        %v4310 = vsel %vm1611, %v4308, %v4309
        %v4311 = vrot.slane %v4309, 4
        %v4312 = vrot.slane %v3787, 5
        %v4313 = vsel %vm1611, %v4311, %v4312
        %v4314 = vrot.slane %v4278, 5
        %v4315 = vrot.slane %v4314, 4
        %v4316 = vrot.slane %v3759, 5
        %v4317 = vsel %vm1611, %v4315, %v4316
        %v4318 = vrot.slane %v4316, 4
        %v4319 = vrot.slane %v3788, 5
        %v4320 = vsel %vm1611, %v4318, %v4319
        %v4321 = vrot.slane %v4279, 5
        %v4322 = vrot.slane %v4321, 4
        %v4323 = vrot.slane %v3761, 5
        %v4324 = vsel %vm1611, %v4322, %v4323
        %v4325 = vrot.slane %v4323, 4
        %v4326 = vrot.slane %v3789, 5
        %v4327 = vsel %vm1611, %v4325, %v4326
        %v4328 = vrot.slane %v4280, 5
        %v4329 = vrot.slane %v4328, 4
        %v4330 = vrot.slane %v3763, 5
        %v4331 = vsel %vm1611, %v4329, %v4330
        %v4332 = vrot.slane %v4330, 4
        %v4333 = vrot.slane %v3790, 5
        %v4334 = vsel %vm1611, %v4332, %v4333
        %v4335 = vrot.slane %v4281, 5
        %v4336 = vrot.slane %v4335, 4
        %v4337 = vrot.slane %v3765, 5
        %v4338 = vsel %vm1611, %v4336, %v4337
        %v4339 = vrot.slane %v4337, 4
        %v4340 = vrot.slane %v3791, 5
        %v4341 = vsel %vm1611, %v4339, %v4340
        %v4342 = vrot.slane %v4282, 5
        %v4343 = vrot.slane %v4342, 4
        %v4344 = vrot.slane %v3767, 5
        %v4345 = vsel %vm1611, %v4343, %v4344
        %v4346 = vrot.slane %v4344, 4
        %v4347 = vrot.slane %v3792, 5
        %v4348 = vsel %vm1611, %v4346, %v4347
        %v4349 = vrot.slane %v4283, 5
        %v4350 = vrot.slane %v4349, 4
        %v4351 = vrot.slane %v3769, 5
        %v4352 = vsel %vm1611, %v4350, %v4351
        %v4353 = vrot.slane %v4351, 4
        %v4354 = vrot.slane %v3793, 5
        %v4355 = vsel %vm1611, %v4353, %v4354
        %v4356 = vld [vmem:[%s1668] sm:$0xf]
        %v4357 = vld [vmem:[%s1668 + $0x4] sm:$0xf]
        %v4358 = vld [vmem:[%s1668 + $0x8] sm:$0xf]
        %v4359 = vld [vmem:[%s1668 + $0xc] sm:$0xf]
        %v4360 = vld [vmem:[%s1668 + $0x10] sm:$0xf]
        %v4361 = vld [vmem:[%s1668 + $0x14] sm:$0xf]
        %v4362 = vld [vmem:[%s1668 + $0x18] sm:$0xf]
        %v4363 = vld [vmem:[%s1668 + $0x1c] sm:$0xf]
        %v4364 = vld [vmem:[%s1668 + $0x20] sm:$0xf]
        %v4365 = vld [vmem:[%s1668 + $0x24] sm:$0xf]
        %v4366 = vld [vmem:[%s1668 + $0x28] sm:$0xf]
        %v4367 = vld [vmem:[%s1668 + $0x2c] sm:$0xf]
        %v4368 = vld [vmem:[%s1668 + $0x30] sm:$0xf]
        %v4369 = vld [vmem:[%s1668 + $0x34] sm:$0xf]
        %v4370 = vld [vmem:[%s1668 + $0x38] sm:$0xf]
        %v4371 = vld [vmem:[%s1668 + $0x3c] sm:$0xf]
        %v4372 = vunpack.c.l.b16 %v4303
        %v4373 = vunpack.c.l.b16 %v4306
        %v4374 = vunpack.c.l.b16 %v4310
        %v4375 = vunpack.c.l.b16 %v4313
        %v4376 = vunpack.c.l.b16 %v4317
        %v4377 = vunpack.c.l.b16 %v4320
        %v4378 = vunpack.c.l.b16 %v4324
        %v4379 = vunpack.c.l.b16 %v4327
        %v4380 = vunpack.c.l.b16 %v4331
        %v4381 = vunpack.c.l.b16 %v4334
        %v4382 = vunpack.c.l.b16 %v4338
        %v4383 = vunpack.c.l.b16 %v4341
        %v4384 = vunpack.c.l.b16 %v4345
        %v4385 = vunpack.c.l.b16 %v4348
        %v4386 = vunpack.c.l.b16 %v4352
        %v4387 = vunpack.c.l.b16 %v4355
        %v4388 = vpack.c.b16 %v4373, %v4372
        %v4389 = vpack.c.b16 %v4375, %v4374
        %v4390 = vpack.c.b16 %v4377, %v4376
        %v4391 = vpack.c.b16 %v4379, %v4378
        %v4392 = vpack.c.b16 %v4381, %v4380
        %v4393 = vpack.c.b16 %v4383, %v4382
        %v4394 = vpack.c.b16 %v4385, %v4384
        %v4395 = vpack.c.b16 %v4387, %v4386
        %v4420 = vunpack.c.l.b16 %v4356
        %v4421 = vunpack.c.l.b16 %v4357
        %v4422 = vunpack.c.l.b16 %v4358
        %v4423 = vunpack.c.l.b16 %v4359
        %v4424 = vunpack.c.l.b16 %v4360
        %v4425 = vunpack.c.l.b16 %v4361
        %v4426 = vunpack.c.l.b16 %v4362
        %v4427 = vunpack.c.l.b16 %v4363
        %v4428 = vunpack.c.l.b16 %v4364
        %v4429 = vunpack.c.l.b16 %v4365
        %v4430 = vunpack.c.l.b16 %v4366
        %v4431 = vunpack.c.l.b16 %v4367
        %v4432 = vunpack.c.l.b16 %v4368
        %v4433 = vunpack.c.l.b16 %v4369
        %v4434 = vunpack.c.l.b16 %v4370
        %v4435 = vunpack.c.l.b16 %v4371
        %v4436 = vpack.c.b16 %v4421, %v4420
        %v4437 = vpack.c.b16 %v4423, %v4422
        %v4438 = vpack.c.b16 %v4425, %v4424
        %v4439 = vpack.c.b16 %v4427, %v4426
        %v4440 = vpack.c.b16 %v4429, %v4428
        %v4441 = vpack.c.b16 %v4431, %v4430
        %v4442 = vpack.c.b16 %v4433, %v4432
        %v4443 = vpack.c.b16 %v4435, %v4434
        %4452 = vmatpush.bf16.msra.mxu0 %v4443
        %4453 = vmatpush.bf16.msra.mxu0 %v4442
        %4454 = vmatpush.bf16.msra.mxu0 %v4441
        %4455 = vmatpush.bf16.msra.mxu0 %v4440
        %4456 = vmatpush.bf16.msra.mxu0 %v4439
        %4457 = vmatpush.bf16.msra.mxu0 %v4438
        %4458 = vmatpush.bf16.msra.mxu0 %v4437
        %4459 = vmatpush.bf16.msra.mxu0 %v4436
        %4460 = vmatmul.bf16.gmra.mxu0 %v4388
        %v4461 = vpop.f32.mrf.mxu0
        %v4462 = vadd.f32 0.0, %v4461
        %v4463 = vpop.f32.mrf.mxu0
        %v4464 = vadd.f32 0.0, %v4463
        %4465 = vmatmul.bf16.gmra.mxu0 %v4389
        %v4466 = vpop.f32.mrf.mxu0
        %v4467 = vadd.f32 0.0, %v4466
        %v4468 = vpop.f32.mrf.mxu0
        %v4469 = vadd.f32 0.0, %v4468
        %4470 = vmatmul.bf16.gmra.mxu0 %v4390
        %v4471 = vpop.f32.mrf.mxu0
        %v4472 = vadd.f32 0.0, %v4471
        %v4473 = vpop.f32.mrf.mxu0
        %v4474 = vadd.f32 0.0, %v4473
        %4475 = vmatmul.bf16.gmra.mxu0 %v4391
        %v4476 = vpop.f32.mrf.mxu0
        %v4477 = vadd.f32 0.0, %v4476
        %v4478 = vpop.f32.mrf.mxu0
        %v4479 = vadd.f32 0.0, %v4478
        %4480 = vmatmul.bf16.gmra.mxu0 %v4392
        %v4481 = vpop.f32.mrf.mxu0
        %v4482 = vadd.f32 0.0, %v4481
        %v4483 = vpop.f32.mrf.mxu0
        %v4484 = vadd.f32 0.0, %v4483
        %4485 = vmatmul.bf16.gmra.mxu0 %v4393
        %v4486 = vpop.f32.mrf.mxu0
        %v4487 = vadd.f32 0.0, %v4486
        %v4488 = vpop.f32.mrf.mxu0
        %v4489 = vadd.f32 0.0, %v4488
        %4490 = vmatmul.bf16.gmra.mxu0 %v4394
        %v4491 = vpop.f32.mrf.mxu0
        %v4492 = vadd.f32 0.0, %v4491
        %v4493 = vpop.f32.mrf.mxu0
        %v4494 = vadd.f32 0.0, %v4493
        %4495 = vmatmul.bf16.gmra.mxu0 %v4395
        %v4496 = vpop.f32.mrf.mxu0
        %v4497 = vadd.f32 0.0, %v4496
        %v4498 = vpop.f32.mrf.mxu0
        %v4499 = vadd.f32 0.0, %v4498
        %4500 = vdwg.mxu0
        %v4501 = vadd.f32 %v4237, %v4462
        %v4502 = vadd.f32 %v4239, %v4464
        %v4503 = vadd.f32 %v4242, %v4467
        %v4504 = vadd.f32 %v4244, %v4469
        %v4505 = vadd.f32 %v4247, %v4472
        %v4506 = vadd.f32 %v4249, %v4474
        %v4507 = vadd.f32 %v4252, %v4477
        %v4508 = vadd.f32 %v4254, %v4479
        %v4509 = vadd.f32 %v4257, %v4482
        %v4510 = vadd.f32 %v4259, %v4484
        %v4511 = vadd.f32 %v4262, %v4487
        %v4512 = vadd.f32 %v4264, %v4489
        %v4513 = vadd.f32 %v4267, %v4492
        %v4514 = vadd.f32 %v4269, %v4494
        %v4515 = vadd.f32 %v4272, %v4497
        %v4516 = vadd.f32 %v4274, %v4499
        %s4517 = sadd.s32 8, 1
        %s4518 = smul.u32 %s4517, 3
        %s4519 = smul.addr %s4518, 4
        %s4520 = scalar_lea.vmem [#allocation2], %s4519
        %v4521 = vld [vmem:[%s4520] sm:$0xf]
        %v4522 = vld [vmem:[%s4520 + $0x4] sm:$0xf]
        %v4523 = vld [vmem:[%s4520 + $0xc] sm:$0xf]
        %v4524 = vld [vmem:[%s4520 + $0x10] sm:$0xf]
        %v4525 = vld [vmem:[%s4520 + $0x18] sm:$0xf]
        %v4526 = vld [vmem:[%s4520 + $0x1c] sm:$0xf]
        %v4527 = vld [vmem:[%s4520 + $0x24] sm:$0xf]
        %v4528 = vld [vmem:[%s4520 + $0x28] sm:$0xf]
        %v4529 = vld [vmem:[%s4520 + $0x30] sm:$0xf]
        %v4530 = vld [vmem:[%s4520 + $0x34] sm:$0xf]
        %v4531 = vld [vmem:[%s4520 + $0x3c] sm:$0xf]
        %v4532 = vld [vmem:[%s4520 + $0x40] sm:$0xf]
        %v4533 = vld [vmem:[%s4520 + $0x48] sm:$0xf]
        %v4534 = vld [vmem:[%s4520 + $0x4c] sm:$0xf]
        %v4535 = vld [vmem:[%s4520 + $0x54] sm:$0xf]
        %v4536 = vld [vmem:[%s4520 + $0x58] sm:$0xf]
        %v4537 = vld [vmem:[%s1850] sm:$0xf]
        %v4538 = vld [vmem:[%s1850 + $0x4] sm:$0xf]
        %v4539 = vld [vmem:[%s1850 + $0x8] sm:$0xf]
        %v4540 = vld [vmem:[%s1850 + $0xc] sm:$0xf]
        %v4541 = vld [vmem:[%s1850 + $0x10] sm:$0xf]
        %v4542 = vld [vmem:[%s1850 + $0x14] sm:$0xf]
        %v4543 = vld [vmem:[%s1850 + $0x18] sm:$0xf]
        %v4544 = vld [vmem:[%s1850 + $0x1c] sm:$0xf]
        %v4545 = vld [vmem:[%s1850 + $0x20] sm:$0xf]
        %v4546 = vld [vmem:[%s1850 + $0x24] sm:$0xf]
        %v4547 = vld [vmem:[%s1850 + $0x28] sm:$0xf]
        %v4548 = vld [vmem:[%s1850 + $0x2c] sm:$0xf]
        %v4549 = vld [vmem:[%s1850 + $0x30] sm:$0xf]
        %v4550 = vld [vmem:[%s1850 + $0x34] sm:$0xf]
        %v4551 = vld [vmem:[%s1850 + $0x38] sm:$0xf]
        %v4552 = vld [vmem:[%s1850 + $0x3c] sm:$0xf]
        %v4569 = vunpack.c.l.b16 %v4521
        %v4570 = vunpack.c.l.b16 %v4522
        %v4571 = vunpack.c.l.b16 %v4523
        %v4572 = vunpack.c.l.b16 %v4524
        %v4573 = vunpack.c.l.b16 %v4525
        %v4574 = vunpack.c.l.b16 %v4526
        %v4575 = vunpack.c.l.b16 %v4527
        %v4576 = vunpack.c.l.b16 %v4528
        %v4577 = vunpack.c.l.b16 %v4529
        %v4578 = vunpack.c.l.b16 %v4530
        %v4579 = vunpack.c.l.b16 %v4531
        %v4580 = vunpack.c.l.b16 %v4532
        %v4581 = vunpack.c.l.b16 %v4533
        %v4582 = vunpack.c.l.b16 %v4534
        %v4583 = vunpack.c.l.b16 %v4535
        %v4584 = vunpack.c.l.b16 %v4536
        %v4585 = vpack.c.b16 %v4570, %v4569
        %v4586 = vpack.c.b16 %v4572, %v4571
        %v4587 = vpack.c.b16 %v4574, %v4573
        %v4588 = vpack.c.b16 %v4576, %v4575
        %v4589 = vpack.c.b16 %v4578, %v4577
        %v4590 = vpack.c.b16 %v4580, %v4579
        %v4591 = vpack.c.b16 %v4582, %v4581
        %v4592 = vpack.c.b16 %v4584, %v4583
        %v4617 = vunpack.c.l.b16 %v4537
        %v4618 = vunpack.c.l.b16 %v4538
        %v4619 = vunpack.c.l.b16 %v4539
        %v4620 = vunpack.c.l.b16 %v4540
        %v4621 = vunpack.c.l.b16 %v4541
        %v4622 = vunpack.c.l.b16 %v4542
        %v4623 = vunpack.c.l.b16 %v4543
        %v4624 = vunpack.c.l.b16 %v4544
        %v4625 = vunpack.c.l.b16 %v4545
        %v4626 = vunpack.c.l.b16 %v4546
        %v4627 = vunpack.c.l.b16 %v4547
        %v4628 = vunpack.c.l.b16 %v4548
        %v4629 = vunpack.c.l.b16 %v4549
        %v4630 = vunpack.c.l.b16 %v4550
        %v4631 = vunpack.c.l.b16 %v4551
        %v4632 = vunpack.c.l.b16 %v4552
        %v4633 = vpack.c.b16 %v4618, %v4617
        %v4634 = vpack.c.b16 %v4620, %v4619
        %v4635 = vpack.c.b16 %v4622, %v4621
        %v4636 = vpack.c.b16 %v4624, %v4623
        %v4637 = vpack.c.b16 %v4626, %v4625
        %v4638 = vpack.c.b16 %v4628, %v4627
        %v4639 = vpack.c.b16 %v4630, %v4629
        %v4640 = vpack.c.b16 %v4632, %v4631
        %4649 = vmatpush.bf16.msra.mxu0 %v4640
        %4650 = vmatpush.bf16.msra.mxu0 %v4639
        %4651 = vmatpush.bf16.msra.mxu0 %v4638
        %4652 = vmatpush.bf16.msra.mxu0 %v4637
        %4653 = vmatpush.bf16.msra.mxu0 %v4636
        %4654 = vmatpush.bf16.msra.mxu0 %v4635
        %4655 = vmatpush.bf16.msra.mxu0 %v4634
        %4656 = vmatpush.bf16.msra.mxu0 %v4633
        %4657 = vmatmul.bf16.gmra.mxu0 %v4585
        %v4658 = vpop.f32.mrf.mxu0
        %v4659 = vadd.f32 0.0, %v4658
        %v4660 = vpop.f32.mrf.mxu0
        %v4661 = vadd.f32 0.0, %v4660
        %4662 = vmatmul.bf16.gmra.mxu0 %v4586
        %v4663 = vpop.f32.mrf.mxu0
        %v4664 = vadd.f32 0.0, %v4663
        %v4665 = vpop.f32.mrf.mxu0
        %v4666 = vadd.f32 0.0, %v4665
        %4667 = vmatmul.bf16.gmra.mxu0 %v4587
        %v4668 = vpop.f32.mrf.mxu0
        %v4669 = vadd.f32 0.0, %v4668
        %v4670 = vpop.f32.mrf.mxu0
        %v4671 = vadd.f32 0.0, %v4670
        %4672 = vmatmul.bf16.gmra.mxu0 %v4588
        %v4673 = vpop.f32.mrf.mxu0
        %v4674 = vadd.f32 0.0, %v4673
        %v4675 = vpop.f32.mrf.mxu0
        %v4676 = vadd.f32 0.0, %v4675
        %4677 = vmatmul.bf16.gmra.mxu0 %v4589
        %v4678 = vpop.f32.mrf.mxu0
        %v4679 = vadd.f32 0.0, %v4678
        %v4680 = vpop.f32.mrf.mxu0
        %v4681 = vadd.f32 0.0, %v4680
        %4682 = vmatmul.bf16.gmra.mxu0 %v4590
        %v4683 = vpop.f32.mrf.mxu0
        %v4684 = vadd.f32 0.0, %v4683
        %v4685 = vpop.f32.mrf.mxu0
        %v4686 = vadd.f32 0.0, %v4685
        %4687 = vmatmul.bf16.gmra.mxu0 %v4591
        %v4688 = vpop.f32.mrf.mxu0
        %v4689 = vadd.f32 0.0, %v4688
        %v4690 = vpop.f32.mrf.mxu0
        %v4691 = vadd.f32 0.0, %v4690
        %4692 = vmatmul.bf16.gmra.mxu0 %v4592
        %v4693 = vpop.f32.mrf.mxu0
        %v4694 = vadd.f32 0.0, %v4693
        %v4695 = vpop.f32.mrf.mxu0
        %v4696 = vadd.f32 0.0, %v4695
        %4697 = vdwg.mxu0
        %v4698 = vadd.f32 %v4501, %v4659
        %v4699 = vadd.f32 %v4502, %v4661
        %v4700 = vadd.f32 %v4503, %v4664
        %v4701 = vadd.f32 %v4504, %v4666
        %v4702 = vadd.f32 %v4505, %v4669
        %v4703 = vadd.f32 %v4506, %v4671
        %v4704 = vadd.f32 %v4507, %v4674
        %v4705 = vadd.f32 %v4508, %v4676
        %v4706 = vadd.f32 %v4509, %v4679
        %v4707 = vadd.f32 %v4510, %v4681
        %v4708 = vadd.f32 %v4511, %v4684
        %v4709 = vadd.f32 %v4512, %v4686
        %v4710 = vadd.f32 %v4513, %v4689
        %v4711 = vadd.f32 %v4514, %v4691
        %v4712 = vadd.f32 %v4515, %v4694
        %v4713 = vadd.f32 %v4516, %v4696
        %v4714 = vld [vmem:[%s4520] sm:$0xf]
        %v4715 = vld [vmem:[%s4520 + $0x4] sm:$0xf]
        %v4716 = vld [vmem:[%s4520 + $0x8] sm:$0x1]
        %v4717 = vld [vmem:[%s4520 + $0xc] sm:$0xf]
        %v4718 = vld [vmem:[%s4520 + $0x10] sm:$0xf]
        %v4719 = vld [vmem:[%s4520 + $0x14] sm:$0x1]
        %v4720 = vld [vmem:[%s4520 + $0x18] sm:$0xf]
        %v4721 = vld [vmem:[%s4520 + $0x1c] sm:$0xf]
        %v4722 = vld [vmem:[%s4520 + $0x20] sm:$0x1]
        %v4723 = vld [vmem:[%s4520 + $0x24] sm:$0xf]
        %v4724 = vld [vmem:[%s4520 + $0x28] sm:$0xf]
        %v4725 = vld [vmem:[%s4520 + $0x2c] sm:$0x1]
        %v4726 = vld [vmem:[%s4520 + $0x30] sm:$0xf]
        %v4727 = vld [vmem:[%s4520 + $0x34] sm:$0xf]
        %v4728 = vld [vmem:[%s4520 + $0x38] sm:$0x1]
        %v4729 = vld [vmem:[%s4520 + $0x3c] sm:$0xf]
        %v4730 = vld [vmem:[%s4520 + $0x40] sm:$0xf]
        %v4731 = vld [vmem:[%s4520 + $0x44] sm:$0x1]
        %v4732 = vld [vmem:[%s4520 + $0x48] sm:$0xf]
        %v4733 = vld [vmem:[%s4520 + $0x4c] sm:$0xf]
        %v4734 = vld [vmem:[%s4520 + $0x50] sm:$0x1]
        %v4735 = vld [vmem:[%s4520 + $0x54] sm:$0xf]
        %v4736 = vld [vmem:[%s4520 + $0x58] sm:$0xf]
        %v4737 = vld [vmem:[%s4520 + $0x5c] sm:$0x1]
        %v4739 = vshrl.u32 %v4714, 16
        %v4741 = vrot.slane %v4739, 4
        %v4742 = vshll.u32 %v4714, 16
        %v4744 = vrot.slane %v4742, 5
        %v4745 = vor.u32 %v4741, %v4744
        %v4746 = vrot.slane %v4745, 4
        %v4748 = vshll.u32 %v4715, 16
        %v4750 = vrot.slane %v4748, 5
        %v4751 = vsel %vm1101, %v4746, %v4750
        %v4752 = vshrl.u32 %v4715, 16
        %v4754 = vrot.slane %v4752, 4
        %v4755 = vor.u32 %v4754, %v4750
        %v4756 = vrot.slane %v4755, 4
        %v4758 = vshll.u32 %v4716, 16
        %v4760 = vrot.slane %v4758, 5
        %v4761 = vsel %vm1101, %v4756, %v4760
        %v4763 = vshrl.u32 %v4717, 16
        %v4765 = vrot.slane %v4763, 4
        %v4766 = vshll.u32 %v4717, 16
        %v4768 = vrot.slane %v4766, 5
        %v4769 = vor.u32 %v4765, %v4768
        %v4770 = vrot.slane %v4769, 4
        %v4772 = vshll.u32 %v4718, 16
        %v4774 = vrot.slane %v4772, 5
        %v4775 = vsel %vm1101, %v4770, %v4774
        %v4776 = vshrl.u32 %v4718, 16
        %v4778 = vrot.slane %v4776, 4
        %v4779 = vor.u32 %v4778, %v4774
        %v4780 = vrot.slane %v4779, 4
        %v4782 = vshll.u32 %v4719, 16
        %v4784 = vrot.slane %v4782, 5
        %v4785 = vsel %vm1101, %v4780, %v4784
        %v4787 = vshrl.u32 %v4720, 16
        %v4789 = vrot.slane %v4787, 4
        %v4790 = vshll.u32 %v4720, 16
        %v4792 = vrot.slane %v4790, 5
        %v4793 = vor.u32 %v4789, %v4792
        %v4794 = vrot.slane %v4793, 4
        %v4796 = vshll.u32 %v4721, 16
        %v4798 = vrot.slane %v4796, 5
        %v4799 = vsel %vm1101, %v4794, %v4798
        %v4800 = vshrl.u32 %v4721, 16
        %v4802 = vrot.slane %v4800, 4
        %v4803 = vor.u32 %v4802, %v4798
        %v4804 = vrot.slane %v4803, 4
        %v4806 = vshll.u32 %v4722, 16
        %v4808 = vrot.slane %v4806, 5
        %v4809 = vsel %vm1101, %v4804, %v4808
        %v4811 = vshrl.u32 %v4723, 16
        %v4813 = vrot.slane %v4811, 4
        %v4814 = vshll.u32 %v4723, 16
        %v4816 = vrot.slane %v4814, 5
        %v4817 = vor.u32 %v4813, %v4816
        %v4818 = vrot.slane %v4817, 4
        %v4820 = vshll.u32 %v4724, 16
        %v4822 = vrot.slane %v4820, 5
        %v4823 = vsel %vm1101, %v4818, %v4822
        %v4824 = vshrl.u32 %v4724, 16
        %v4826 = vrot.slane %v4824, 4
        %v4827 = vor.u32 %v4826, %v4822
        %v4828 = vrot.slane %v4827, 4
        %v4830 = vshll.u32 %v4725, 16
        %v4832 = vrot.slane %v4830, 5
        %v4833 = vsel %vm1101, %v4828, %v4832
        %v4835 = vshrl.u32 %v4726, 16
        %v4837 = vrot.slane %v4835, 4
        %v4838 = vshll.u32 %v4726, 16
        %v4840 = vrot.slane %v4838, 5
        %v4841 = vor.u32 %v4837, %v4840
        %v4842 = vrot.slane %v4841, 4
        %v4844 = vshll.u32 %v4727, 16
        %v4846 = vrot.slane %v4844, 5
        %v4847 = vsel %vm1101, %v4842, %v4846
        %v4848 = vshrl.u32 %v4727, 16
        %v4850 = vrot.slane %v4848, 4
        %v4851 = vor.u32 %v4850, %v4846
        %v4852 = vrot.slane %v4851, 4
        %v4854 = vshll.u32 %v4728, 16
        %v4856 = vrot.slane %v4854, 5
        %v4857 = vsel %vm1101, %v4852, %v4856
        %v4859 = vshrl.u32 %v4729, 16
        %v4861 = vrot.slane %v4859, 4
        %v4862 = vshll.u32 %v4729, 16
        %v4864 = vrot.slane %v4862, 5
        %v4865 = vor.u32 %v4861, %v4864
        %v4866 = vrot.slane %v4865, 4
        %v4868 = vshll.u32 %v4730, 16
        %v4870 = vrot.slane %v4868, 5
        %v4871 = vsel %vm1101, %v4866, %v4870
        %v4872 = vshrl.u32 %v4730, 16
        %v4874 = vrot.slane %v4872, 4
        %v4875 = vor.u32 %v4874, %v4870
        %v4876 = vrot.slane %v4875, 4
        %v4878 = vshll.u32 %v4731, 16
        %v4880 = vrot.slane %v4878, 5
        %v4881 = vsel %vm1101, %v4876, %v4880
        %v4883 = vshrl.u32 %v4732, 16
        %v4885 = vrot.slane %v4883, 4
        %v4886 = vshll.u32 %v4732, 16
        %v4888 = vrot.slane %v4886, 5
        %v4889 = vor.u32 %v4885, %v4888
        %v4890 = vrot.slane %v4889, 4
        %v4892 = vshll.u32 %v4733, 16
        %v4894 = vrot.slane %v4892, 5
        %v4895 = vsel %vm1101, %v4890, %v4894
        %v4896 = vshrl.u32 %v4733, 16
        %v4898 = vrot.slane %v4896, 4
        %v4899 = vor.u32 %v4898, %v4894
        %v4900 = vrot.slane %v4899, 4
        %v4902 = vshll.u32 %v4734, 16
        %v4904 = vrot.slane %v4902, 5
        %v4905 = vsel %vm1101, %v4900, %v4904
        %v4907 = vshrl.u32 %v4735, 16
        %v4909 = vrot.slane %v4907, 4
        %v4910 = vshll.u32 %v4735, 16
        %v4912 = vrot.slane %v4910, 5
        %v4913 = vor.u32 %v4909, %v4912
        %v4914 = vrot.slane %v4913, 4
        %v4916 = vshll.u32 %v4736, 16
        %v4918 = vrot.slane %v4916, 5
        %v4919 = vsel %vm1101, %v4914, %v4918
        %v4920 = vshrl.u32 %v4736, 16
        %v4922 = vrot.slane %v4920, 4
        %v4923 = vor.u32 %v4922, %v4918
        %v4924 = vrot.slane %v4923, 4
        %v4926 = vshll.u32 %v4737, 16
        %v4928 = vrot.slane %v4926, 5
        %v4929 = vsel %vm1101, %v4924, %v4928
        %v4930 = vld [vmem:[%s2244] sm:$0xf]
        %v4931 = vld [vmem:[%s2244 + $0x4] sm:$0xf]
        %v4932 = vld [vmem:[%s2244 + $0x8] sm:$0xf]
        %v4933 = vld [vmem:[%s2244 + $0xc] sm:$0xf]
        %v4934 = vld [vmem:[%s2244 + $0x10] sm:$0xf]
        %v4935 = vld [vmem:[%s2244 + $0x14] sm:$0xf]
        %v4936 = vld [vmem:[%s2244 + $0x18] sm:$0xf]
        %v4937 = vld [vmem:[%s2244 + $0x1c] sm:$0xf]
        %v4938 = vld [vmem:[%s2244 + $0x20] sm:$0xf]
        %v4939 = vld [vmem:[%s2244 + $0x24] sm:$0xf]
        %v4940 = vld [vmem:[%s2244 + $0x28] sm:$0xf]
        %v4941 = vld [vmem:[%s2244 + $0x2c] sm:$0xf]
        %v4942 = vld [vmem:[%s2244 + $0x30] sm:$0xf]
        %v4943 = vld [vmem:[%s2244 + $0x34] sm:$0xf]
        %v4944 = vld [vmem:[%s2244 + $0x38] sm:$0xf]
        %v4945 = vld [vmem:[%s2244 + $0x3c] sm:$0xf]
        %v4946 = vunpack.c.l.b16 %v4751
        %v4947 = vunpack.c.l.b16 %v4761
        %v4948 = vunpack.c.l.b16 %v4775
        %v4949 = vunpack.c.l.b16 %v4785
        %v4950 = vunpack.c.l.b16 %v4799
        %v4951 = vunpack.c.l.b16 %v4809
        %v4952 = vunpack.c.l.b16 %v4823
        %v4953 = vunpack.c.l.b16 %v4833
        %v4954 = vunpack.c.l.b16 %v4847
        %v4955 = vunpack.c.l.b16 %v4857
        %v4956 = vunpack.c.l.b16 %v4871
        %v4957 = vunpack.c.l.b16 %v4881
        %v4958 = vunpack.c.l.b16 %v4895
        %v4959 = vunpack.c.l.b16 %v4905
        %v4960 = vunpack.c.l.b16 %v4919
        %v4961 = vunpack.c.l.b16 %v4929
        %v4962 = vpack.c.b16 %v4947, %v4946
        %v4963 = vpack.c.b16 %v4949, %v4948
        %v4964 = vpack.c.b16 %v4951, %v4950
        %v4965 = vpack.c.b16 %v4953, %v4952
        %v4966 = vpack.c.b16 %v4955, %v4954
        %v4967 = vpack.c.b16 %v4957, %v4956
        %v4968 = vpack.c.b16 %v4959, %v4958
        %v4969 = vpack.c.b16 %v4961, %v4960
        %v4994 = vunpack.c.l.b16 %v4930
        %v4995 = vunpack.c.l.b16 %v4931
        %v4996 = vunpack.c.l.b16 %v4932
        %v4997 = vunpack.c.l.b16 %v4933
        %v4998 = vunpack.c.l.b16 %v4934
        %v4999 = vunpack.c.l.b16 %v4935
        %v5000 = vunpack.c.l.b16 %v4936
        %v5001 = vunpack.c.l.b16 %v4937
        %v5002 = vunpack.c.l.b16 %v4938
        %v5003 = vunpack.c.l.b16 %v4939
        %v5004 = vunpack.c.l.b16 %v4940
        %v5005 = vunpack.c.l.b16 %v4941
        %v5006 = vunpack.c.l.b16 %v4942
        %v5007 = vunpack.c.l.b16 %v4943
        %v5008 = vunpack.c.l.b16 %v4944
        %v5009 = vunpack.c.l.b16 %v4945
        %v5010 = vpack.c.b16 %v4995, %v4994
        %v5011 = vpack.c.b16 %v4997, %v4996
        %v5012 = vpack.c.b16 %v4999, %v4998
        %v5013 = vpack.c.b16 %v5001, %v5000
        %v5014 = vpack.c.b16 %v5003, %v5002
        %v5015 = vpack.c.b16 %v5005, %v5004
        %v5016 = vpack.c.b16 %v5007, %v5006
        %v5017 = vpack.c.b16 %v5009, %v5008
        %5026 = vmatpush.bf16.msra.mxu0 %v5017
        %5027 = vmatpush.bf16.msra.mxu0 %v5016
        %5028 = vmatpush.bf16.msra.mxu0 %v5015
        %5029 = vmatpush.bf16.msra.mxu0 %v5014
        %5030 = vmatpush.bf16.msra.mxu0 %v5013
        %5031 = vmatpush.bf16.msra.mxu0 %v5012
        %5032 = vmatpush.bf16.msra.mxu0 %v5011
        %5033 = vmatpush.bf16.msra.mxu0 %v5010
        %5034 = vmatmul.bf16.gmra.mxu0 %v4962
        %v5035 = vpop.f32.mrf.mxu0
        %v5036 = vadd.f32 0.0, %v5035
        %v5037 = vpop.f32.mrf.mxu0
        %v5038 = vadd.f32 0.0, %v5037
        %5039 = vmatmul.bf16.gmra.mxu0 %v4963
        %v5040 = vpop.f32.mrf.mxu0
        %v5041 = vadd.f32 0.0, %v5040
        %v5042 = vpop.f32.mrf.mxu0
        %v5043 = vadd.f32 0.0, %v5042
        %5044 = vmatmul.bf16.gmra.mxu0 %v4964
        %v5045 = vpop.f32.mrf.mxu0
        %v5046 = vadd.f32 0.0, %v5045
        %v5047 = vpop.f32.mrf.mxu0
        %v5048 = vadd.f32 0.0, %v5047
        %5049 = vmatmul.bf16.gmra.mxu0 %v4965
        %v5050 = vpop.f32.mrf.mxu0
        %v5051 = vadd.f32 0.0, %v5050
        %v5052 = vpop.f32.mrf.mxu0
        %v5053 = vadd.f32 0.0, %v5052
        %5054 = vmatmul.bf16.gmra.mxu0 %v4966
        %v5055 = vpop.f32.mrf.mxu0
        %v5056 = vadd.f32 0.0, %v5055
        %v5057 = vpop.f32.mrf.mxu0
        %v5058 = vadd.f32 0.0, %v5057
        %5059 = vmatmul.bf16.gmra.mxu0 %v4967
        %v5060 = vpop.f32.mrf.mxu0
        %v5061 = vadd.f32 0.0, %v5060
        %v5062 = vpop.f32.mrf.mxu0
        %v5063 = vadd.f32 0.0, %v5062
        %5064 = vmatmul.bf16.gmra.mxu0 %v4968
        %v5065 = vpop.f32.mrf.mxu0
        %v5066 = vadd.f32 0.0, %v5065
        %v5067 = vpop.f32.mrf.mxu0
        %v5068 = vadd.f32 0.0, %v5067
        %5069 = vmatmul.bf16.gmra.mxu0 %v4969
        %v5070 = vpop.f32.mrf.mxu0
        %v5071 = vadd.f32 0.0, %v5070
        %v5072 = vpop.f32.mrf.mxu0
        %v5073 = vadd.f32 0.0, %v5072
        %5074 = vdwg.mxu0
        %v5075 = vadd.f32 %v4698, %v5036
        %v5076 = vadd.f32 %v4699, %v5038
        %v5077 = vadd.f32 %v4700, %v5041
        %v5078 = vadd.f32 %v4701, %v5043
        %v5079 = vadd.f32 %v4702, %v5046
        %v5080 = vadd.f32 %v4703, %v5048
        %v5081 = vadd.f32 %v4704, %v5051
        %v5082 = vadd.f32 %v4705, %v5053
        %v5083 = vadd.f32 %v4706, %v5056
        %v5084 = vadd.f32 %v4707, %v5058
        %v5085 = vadd.f32 %v4708, %v5061
        %v5086 = vadd.f32 %v4709, %v5063
        %v5087 = vadd.f32 %v4710, %v5066
        %v5088 = vadd.f32 %v4711, %v5068
        %v5089 = vadd.f32 %v4712, %v5071
        %v5090 = vadd.f32 %v4713, %v5073
        %v5091 = vld [vmem:[%s4520] sm:$0xe]
        %v5092 = vld [vmem:[%s4520 + $0xc] sm:$0xe]
        %v5093 = vld [vmem:[%s4520 + $0x18] sm:$0xe]
        %v5094 = vld [vmem:[%s4520 + $0x24] sm:$0xe]
        %v5095 = vld [vmem:[%s4520 + $0x30] sm:$0xe]
        %v5096 = vld [vmem:[%s4520 + $0x3c] sm:$0xe]
        %v5097 = vld [vmem:[%s4520 + $0x48] sm:$0xe]
        %v5098 = vld [vmem:[%s4520 + $0x54] sm:$0xe]
        %v5123 = vrot.slane %v5091, 5
        %v5124 = vrot.slane %v5123, 4
        %v5125 = vrot.slane %v4715, 5
        %v5126 = vsel %vm1611, %v5124, %v5125
        %v5127 = vrot.slane %v5125, 4
        %v5128 = vrot.slane %v4716, 5
        %v5129 = vsel %vm1611, %v5127, %v5128
        %v5130 = vrot.slane %v5092, 5
        %v5131 = vrot.slane %v5130, 4
        %v5132 = vrot.slane %v4718, 5
        %v5133 = vsel %vm1611, %v5131, %v5132
        %v5134 = vrot.slane %v5132, 4
        %v5135 = vrot.slane %v4719, 5
        %v5136 = vsel %vm1611, %v5134, %v5135
        %v5137 = vrot.slane %v5093, 5
        %v5138 = vrot.slane %v5137, 4
        %v5139 = vrot.slane %v4721, 5
        %v5140 = vsel %vm1611, %v5138, %v5139
        %v5141 = vrot.slane %v5139, 4
        %v5142 = vrot.slane %v4722, 5
        %v5143 = vsel %vm1611, %v5141, %v5142
        %v5144 = vrot.slane %v5094, 5
        %v5145 = vrot.slane %v5144, 4
        %v5146 = vrot.slane %v4724, 5
        %v5147 = vsel %vm1611, %v5145, %v5146
        %v5148 = vrot.slane %v5146, 4
        %v5149 = vrot.slane %v4725, 5
        %v5150 = vsel %vm1611, %v5148, %v5149
        %v5151 = vrot.slane %v5095, 5
        %v5152 = vrot.slane %v5151, 4
        %v5153 = vrot.slane %v4727, 5
        %v5154 = vsel %vm1611, %v5152, %v5153
        %v5155 = vrot.slane %v5153, 4
        %v5156 = vrot.slane %v4728, 5
        %v5157 = vsel %vm1611, %v5155, %v5156
        %v5158 = vrot.slane %v5096, 5
        %v5159 = vrot.slane %v5158, 4
        %v5160 = vrot.slane %v4730, 5
        %v5161 = vsel %vm1611, %v5159, %v5160
        %v5162 = vrot.slane %v5160, 4
        %v5163 = vrot.slane %v4731, 5
        %v5164 = vsel %vm1611, %v5162, %v5163
        %v5165 = vrot.slane %v5097, 5
        %v5166 = vrot.slane %v5165, 4
        %v5167 = vrot.slane %v4733, 5
        %v5168 = vsel %vm1611, %v5166, %v5167
        %v5169 = vrot.slane %v5167, 4
        %v5170 = vrot.slane %v4734, 5
        %v5171 = vsel %vm1611, %v5169, %v5170
        %v5172 = vrot.slane %v5098, 5
        %v5173 = vrot.slane %v5172, 4
        %v5174 = vrot.slane %v4736, 5
        %v5175 = vsel %vm1611, %v5173, %v5174
        %v5176 = vrot.slane %v5174, 4
        %v5177 = vrot.slane %v4737, 5
        %v5178 = vsel %vm1611, %v5176, %v5177
        %v5179 = vld [vmem:[%s2494] sm:$0xf]
        %v5180 = vld [vmem:[%s2494 + $0x4] sm:$0xf]
        %v5181 = vld [vmem:[%s2494 + $0x8] sm:$0xf]
        %v5182 = vld [vmem:[%s2494 + $0xc] sm:$0xf]
        %v5183 = vld [vmem:[%s2494 + $0x10] sm:$0xf]
        %v5184 = vld [vmem:[%s2494 + $0x14] sm:$0xf]
        %v5185 = vld [vmem:[%s2494 + $0x18] sm:$0xf]
        %v5186 = vld [vmem:[%s2494 + $0x1c] sm:$0xf]
        %v5187 = vld [vmem:[%s2494 + $0x20] sm:$0xf]
        %v5188 = vld [vmem:[%s2494 + $0x24] sm:$0xf]
        %v5189 = vld [vmem:[%s2494 + $0x28] sm:$0xf]
        %v5190 = vld [vmem:[%s2494 + $0x2c] sm:$0xf]
        %v5191 = vld [vmem:[%s2494 + $0x30] sm:$0xf]
        %v5192 = vld [vmem:[%s2494 + $0x34] sm:$0xf]
        %v5193 = vld [vmem:[%s2494 + $0x38] sm:$0xf]
        %v5194 = vld [vmem:[%s2494 + $0x3c] sm:$0xf]
        %v5195 = vunpack.c.l.b16 %v5126
        %v5196 = vunpack.c.l.b16 %v5129
        %v5197 = vunpack.c.l.b16 %v5133
        %v5198 = vunpack.c.l.b16 %v5136
        %v5199 = vunpack.c.l.b16 %v5140
        %v5200 = vunpack.c.l.b16 %v5143
        %v5201 = vunpack.c.l.b16 %v5147
        %v5202 = vunpack.c.l.b16 %v5150
        %v5203 = vunpack.c.l.b16 %v5154
        %v5204 = vunpack.c.l.b16 %v5157
        %v5205 = vunpack.c.l.b16 %v5161
        %v5206 = vunpack.c.l.b16 %v5164
        %v5207 = vunpack.c.l.b16 %v5168
        %v5208 = vunpack.c.l.b16 %v5171
        %v5209 = vunpack.c.l.b16 %v5175
        %v5210 = vunpack.c.l.b16 %v5178
        %v5211 = vpack.c.b16 %v5196, %v5195
        %v5212 = vpack.c.b16 %v5198, %v5197
        %v5213 = vpack.c.b16 %v5200, %v5199
        %v5214 = vpack.c.b16 %v5202, %v5201
        %v5215 = vpack.c.b16 %v5204, %v5203
        %v5216 = vpack.c.b16 %v5206, %v5205
        %v5217 = vpack.c.b16 %v5208, %v5207
        %v5218 = vpack.c.b16 %v5210, %v5209
        %v5243 = vunpack.c.l.b16 %v5179
        %v5244 = vunpack.c.l.b16 %v5180
        %v5245 = vunpack.c.l.b16 %v5181
        %v5246 = vunpack.c.l.b16 %v5182
        %v5247 = vunpack.c.l.b16 %v5183
        %v5248 = vunpack.c.l.b16 %v5184
        %v5249 = vunpack.c.l.b16 %v5185
        %v5250 = vunpack.c.l.b16 %v5186
        %v5251 = vunpack.c.l.b16 %v5187
        %v5252 = vunpack.c.l.b16 %v5188
        %v5253 = vunpack.c.l.b16 %v5189
        %v5254 = vunpack.c.l.b16 %v5190
        %v5255 = vunpack.c.l.b16 %v5191
        %v5256 = vunpack.c.l.b16 %v5192
        %v5257 = vunpack.c.l.b16 %v5193
        %v5258 = vunpack.c.l.b16 %v5194
        %v5259 = vpack.c.b16 %v5244, %v5243
        %v5260 = vpack.c.b16 %v5246, %v5245
        %v5261 = vpack.c.b16 %v5248, %v5247
        %v5262 = vpack.c.b16 %v5250, %v5249
        %v5263 = vpack.c.b16 %v5252, %v5251
        %v5264 = vpack.c.b16 %v5254, %v5253
        %v5265 = vpack.c.b16 %v5256, %v5255
        %v5266 = vpack.c.b16 %v5258, %v5257
        %5275 = vmatpush.bf16.msra.mxu0 %v5266
        %5276 = vmatpush.bf16.msra.mxu0 %v5265
        %5277 = vmatpush.bf16.msra.mxu0 %v5264
        %5278 = vmatpush.bf16.msra.mxu0 %v5263
        %5279 = vmatpush.bf16.msra.mxu0 %v5262
        %5280 = vmatpush.bf16.msra.mxu0 %v5261
        %5281 = vmatpush.bf16.msra.mxu0 %v5260
        %5282 = vmatpush.bf16.msra.mxu0 %v5259
        %5283 = vmatmul.bf16.gmra.mxu0 %v5211
        %v5284 = vpop.f32.mrf.mxu0
        %v5285 = vadd.f32 0.0, %v5284
        %v5286 = vpop.f32.mrf.mxu0
        %v5287 = vadd.f32 0.0, %v5286
        %5288 = vmatmul.bf16.gmra.mxu0 %v5212
        %v5289 = vpop.f32.mrf.mxu0
        %v5290 = vadd.f32 0.0, %v5289
        %v5291 = vpop.f32.mrf.mxu0
        %v5292 = vadd.f32 0.0, %v5291
        %5293 = vmatmul.bf16.gmra.mxu0 %v5213
        %v5294 = vpop.f32.mrf.mxu0
        %v5295 = vadd.f32 0.0, %v5294
        %v5296 = vpop.f32.mrf.mxu0
        %v5297 = vadd.f32 0.0, %v5296
        %5298 = vmatmul.bf16.gmra.mxu0 %v5214
        %v5299 = vpop.f32.mrf.mxu0
        %v5300 = vadd.f32 0.0, %v5299
        %v5301 = vpop.f32.mrf.mxu0
        %v5302 = vadd.f32 0.0, %v5301
        %5303 = vmatmul.bf16.gmra.mxu0 %v5215
        %v5304 = vpop.f32.mrf.mxu0
        %v5305 = vadd.f32 0.0, %v5304
        %v5306 = vpop.f32.mrf.mxu0
        %v5307 = vadd.f32 0.0, %v5306
        %5308 = vmatmul.bf16.gmra.mxu0 %v5216
        %v5309 = vpop.f32.mrf.mxu0
        %v5310 = vadd.f32 0.0, %v5309
        %v5311 = vpop.f32.mrf.mxu0
        %v5312 = vadd.f32 0.0, %v5311
        %5313 = vmatmul.bf16.gmra.mxu0 %v5217
        %v5314 = vpop.f32.mrf.mxu0
        %v5315 = vadd.f32 0.0, %v5314
        %v5316 = vpop.f32.mrf.mxu0
        %v5317 = vadd.f32 0.0, %v5316
        %5318 = vmatmul.bf16.gmra.mxu0 %v5218
        %v5319 = vpop.f32.mrf.mxu0
        %v5320 = vadd.f32 0.0, %v5319
        %v5321 = vpop.f32.mrf.mxu0
        %v5322 = vadd.f32 0.0, %v5321
        %5323 = vdwg.mxu0
        %v5324 = vadd.f32 %v5075, %v5285
        %v5325 = vadd.f32 %v5076, %v5287
        %v5326 = vadd.f32 %v5077, %v5290
        %v5327 = vadd.f32 %v5078, %v5292
        %v5328 = vadd.f32 %v5079, %v5295
        %v5329 = vadd.f32 %v5080, %v5297
        %v5330 = vadd.f32 %v5081, %v5300
        %v5331 = vadd.f32 %v5082, %v5302
        %v5332 = vadd.f32 %v5083, %v5305
        %v5333 = vadd.f32 %v5084, %v5307
        %v5334 = vadd.f32 %v5085, %v5310
        %v5335 = vadd.f32 %v5086, %v5312
        %v5336 = vadd.f32 %v5087, %v5315
        %v5337 = vadd.f32 %v5088, %v5317
        %v5338 = vadd.f32 %v5089, %v5320
        %v5339 = vadd.f32 %v5090, %v5322
        %s5340 = sadd.s32 8, 2
        %s5341 = smul.u32 %s5340, 3
        %s5342 = smul.addr %s5341, 4
        %s5343 = scalar_lea.vmem [#allocation2], %s5342
        %v5344 = vld [vmem:[%s5343] sm:$0xf]
        %v5345 = vld [vmem:[%s5343 + $0x4] sm:$0xf]
        %v5346 = vld [vmem:[%s5343 + $0xc] sm:$0xf]
        %v5347 = vld [vmem:[%s5343 + $0x10] sm:$0xf]
        %v5348 = vld [vmem:[%s5343 + $0x18] sm:$0xf]
        %v5349 = vld [vmem:[%s5343 + $0x1c] sm:$0xf]
        %v5350 = vld [vmem:[%s5343 + $0x24] sm:$0xf]
        %v5351 = vld [vmem:[%s5343 + $0x28] sm:$0xf]
        %v5352 = vld [vmem:[%s5343 + $0x30] sm:$0xf]
        %v5353 = vld [vmem:[%s5343 + $0x34] sm:$0xf]
        %v5354 = vld [vmem:[%s5343 + $0x3c] sm:$0xf]
        %v5355 = vld [vmem:[%s5343 + $0x40] sm:$0xf]
        %v5356 = vld [vmem:[%s5343 + $0x48] sm:$0xf]
        %v5357 = vld [vmem:[%s5343 + $0x4c] sm:$0xf]
        %v5358 = vld [vmem:[%s5343 + $0x54] sm:$0xf]
        %v5359 = vld [vmem:[%s5343 + $0x58] sm:$0xf]
        %v5360 = vld [vmem:[%s2676] sm:$0xf]
        %v5361 = vld [vmem:[%s2676 + $0x4] sm:$0xf]
        %v5362 = vld [vmem:[%s2676 + $0x8] sm:$0xf]
        %v5363 = vld [vmem:[%s2676 + $0xc] sm:$0xf]
        %v5364 = vld [vmem:[%s2676 + $0x10] sm:$0xf]
        %v5365 = vld [vmem:[%s2676 + $0x14] sm:$0xf]
        %v5366 = vld [vmem:[%s2676 + $0x18] sm:$0xf]
        %v5367 = vld [vmem:[%s2676 + $0x1c] sm:$0xf]
        %v5368 = vld [vmem:[%s2676 + $0x20] sm:$0xf]
        %v5369 = vld [vmem:[%s2676 + $0x24] sm:$0xf]
        %v5370 = vld [vmem:[%s2676 + $0x28] sm:$0xf]
        %v5371 = vld [vmem:[%s2676 + $0x2c] sm:$0xf]
        %v5372 = vld [vmem:[%s2676 + $0x30] sm:$0xf]
        %v5373 = vld [vmem:[%s2676 + $0x34] sm:$0xf]
        %v5374 = vld [vmem:[%s2676 + $0x38] sm:$0xf]
        %v5375 = vld [vmem:[%s2676 + $0x3c] sm:$0xf]
        %v5392 = vunpack.c.l.b16 %v5344
        %v5393 = vunpack.c.l.b16 %v5345
        %v5394 = vunpack.c.l.b16 %v5346
        %v5395 = vunpack.c.l.b16 %v5347
        %v5396 = vunpack.c.l.b16 %v5348
        %v5397 = vunpack.c.l.b16 %v5349
        %v5398 = vunpack.c.l.b16 %v5350
        %v5399 = vunpack.c.l.b16 %v5351
        %v5400 = vunpack.c.l.b16 %v5352
        %v5401 = vunpack.c.l.b16 %v5353
        %v5402 = vunpack.c.l.b16 %v5354
        %v5403 = vunpack.c.l.b16 %v5355
        %v5404 = vunpack.c.l.b16 %v5356
        %v5405 = vunpack.c.l.b16 %v5357
        %v5406 = vunpack.c.l.b16 %v5358
        %v5407 = vunpack.c.l.b16 %v5359
        %v5408 = vpack.c.b16 %v5393, %v5392
        %v5409 = vpack.c.b16 %v5395, %v5394
        %v5410 = vpack.c.b16 %v5397, %v5396
        %v5411 = vpack.c.b16 %v5399, %v5398
        %v5412 = vpack.c.b16 %v5401, %v5400
        %v5413 = vpack.c.b16 %v5403, %v5402
        %v5414 = vpack.c.b16 %v5405, %v5404
        %v5415 = vpack.c.b16 %v5407, %v5406
        %v5440 = vunpack.c.l.b16 %v5360
        %v5441 = vunpack.c.l.b16 %v5361
        %v5442 = vunpack.c.l.b16 %v5362
        %v5443 = vunpack.c.l.b16 %v5363
        %v5444 = vunpack.c.l.b16 %v5364
        %v5445 = vunpack.c.l.b16 %v5365
        %v5446 = vunpack.c.l.b16 %v5366
        %v5447 = vunpack.c.l.b16 %v5367
        %v5448 = vunpack.c.l.b16 %v5368
        %v5449 = vunpack.c.l.b16 %v5369
        %v5450 = vunpack.c.l.b16 %v5370
        %v5451 = vunpack.c.l.b16 %v5371
        %v5452 = vunpack.c.l.b16 %v5372
        %v5453 = vunpack.c.l.b16 %v5373
        %v5454 = vunpack.c.l.b16 %v5374
        %v5455 = vunpack.c.l.b16 %v5375
        %v5456 = vpack.c.b16 %v5441, %v5440
        %v5457 = vpack.c.b16 %v5443, %v5442
        %v5458 = vpack.c.b16 %v5445, %v5444
        %v5459 = vpack.c.b16 %v5447, %v5446
        %v5460 = vpack.c.b16 %v5449, %v5448
        %v5461 = vpack.c.b16 %v5451, %v5450
        %v5462 = vpack.c.b16 %v5453, %v5452
        %v5463 = vpack.c.b16 %v5455, %v5454
        %5472 = vmatpush.bf16.msra.mxu0 %v5463
        %5473 = vmatpush.bf16.msra.mxu0 %v5462
        %5474 = vmatpush.bf16.msra.mxu0 %v5461
        %5475 = vmatpush.bf16.msra.mxu0 %v5460
        %5476 = vmatpush.bf16.msra.mxu0 %v5459
        %5477 = vmatpush.bf16.msra.mxu0 %v5458
        %5478 = vmatpush.bf16.msra.mxu0 %v5457
        %5479 = vmatpush.bf16.msra.mxu0 %v5456
        %5480 = vmatmul.bf16.gmra.mxu0 %v5408
        %v5481 = vpop.f32.mrf.mxu0
        %v5482 = vadd.f32 0.0, %v5481
        %v5483 = vpop.f32.mrf.mxu0
        %v5484 = vadd.f32 0.0, %v5483
        %5485 = vmatmul.bf16.gmra.mxu0 %v5409
        %v5486 = vpop.f32.mrf.mxu0
        %v5487 = vadd.f32 0.0, %v5486
        %v5488 = vpop.f32.mrf.mxu0
        %v5489 = vadd.f32 0.0, %v5488
        %5490 = vmatmul.bf16.gmra.mxu0 %v5410
        %v5491 = vpop.f32.mrf.mxu0
        %v5492 = vadd.f32 0.0, %v5491
        %v5493 = vpop.f32.mrf.mxu0
        %v5494 = vadd.f32 0.0, %v5493
        %5495 = vmatmul.bf16.gmra.mxu0 %v5411
        %v5496 = vpop.f32.mrf.mxu0
        %v5497 = vadd.f32 0.0, %v5496
        %v5498 = vpop.f32.mrf.mxu0
        %v5499 = vadd.f32 0.0, %v5498
        %5500 = vmatmul.bf16.gmra.mxu0 %v5412
        %v5501 = vpop.f32.mrf.mxu0
        %v5502 = vadd.f32 0.0, %v5501
        %v5503 = vpop.f32.mrf.mxu0
        %v5504 = vadd.f32 0.0, %v5503
        %5505 = vmatmul.bf16.gmra.mxu0 %v5413
        %v5506 = vpop.f32.mrf.mxu0
        %v5507 = vadd.f32 0.0, %v5506
        %v5508 = vpop.f32.mrf.mxu0
        %v5509 = vadd.f32 0.0, %v5508
        %5510 = vmatmul.bf16.gmra.mxu0 %v5414
        %v5511 = vpop.f32.mrf.mxu0
        %v5512 = vadd.f32 0.0, %v5511
        %v5513 = vpop.f32.mrf.mxu0
        %v5514 = vadd.f32 0.0, %v5513
        %5515 = vmatmul.bf16.gmra.mxu0 %v5415
        %v5516 = vpop.f32.mrf.mxu0
        %v5517 = vadd.f32 0.0, %v5516
        %v5518 = vpop.f32.mrf.mxu0
        %v5519 = vadd.f32 0.0, %v5518
        %5520 = vdwg.mxu0
        %v5521 = vadd.f32 %v5324, %v5482
        %v5522 = vadd.f32 %v5325, %v5484
        %v5523 = vadd.f32 %v5326, %v5487
        %v5524 = vadd.f32 %v5327, %v5489
        %v5525 = vadd.f32 %v5328, %v5492
        %v5526 = vadd.f32 %v5329, %v5494
        %v5527 = vadd.f32 %v5330, %v5497
        %v5528 = vadd.f32 %v5331, %v5499
        %v5529 = vadd.f32 %v5332, %v5502
        %v5530 = vadd.f32 %v5333, %v5504
        %v5531 = vadd.f32 %v5334, %v5507
        %v5532 = vadd.f32 %v5335, %v5509
        %v5533 = vadd.f32 %v5336, %v5512
        %v5534 = vadd.f32 %v5337, %v5514
        %v5535 = vadd.f32 %v5338, %v5517
        %v5536 = vadd.f32 %v5339, %v5519
        %v5537 = vld [vmem:[%s5343] sm:$0xf]
        %v5538 = vld [vmem:[%s5343 + $0x4] sm:$0xf]
        %v5539 = vld [vmem:[%s5343 + $0x8] sm:$0x1]
        %v5540 = vld [vmem:[%s5343 + $0xc] sm:$0xf]
        %v5541 = vld [vmem:[%s5343 + $0x10] sm:$0xf]
        %v5542 = vld [vmem:[%s5343 + $0x14] sm:$0x1]
        %v5543 = vld [vmem:[%s5343 + $0x18] sm:$0xf]
        %v5544 = vld [vmem:[%s5343 + $0x1c] sm:$0xf]
        %v5545 = vld [vmem:[%s5343 + $0x20] sm:$0x1]
        %v5546 = vld [vmem:[%s5343 + $0x24] sm:$0xf]
        %v5547 = vld [vmem:[%s5343 + $0x28] sm:$0xf]
        %v5548 = vld [vmem:[%s5343 + $0x2c] sm:$0x1]
        %v5549 = vld [vmem:[%s5343 + $0x30] sm:$0xf]
        %v5550 = vld [vmem:[%s5343 + $0x34] sm:$0xf]
        %v5551 = vld [vmem:[%s5343 + $0x38] sm:$0x1]
        %v5552 = vld [vmem:[%s5343 + $0x3c] sm:$0xf]
        %v5553 = vld [vmem:[%s5343 + $0x40] sm:$0xf]
        %v5554 = vld [vmem:[%s5343 + $0x44] sm:$0x1]
        %v5555 = vld [vmem:[%s5343 + $0x48] sm:$0xf]
        %v5556 = vld [vmem:[%s5343 + $0x4c] sm:$0xf]
        %v5557 = vld [vmem:[%s5343 + $0x50] sm:$0x1]
        %v5558 = vld [vmem:[%s5343 + $0x54] sm:$0xf]
        %v5559 = vld [vmem:[%s5343 + $0x58] sm:$0xf]
        %v5560 = vld [vmem:[%s5343 + $0x5c] sm:$0x1]
        %v5562 = vshrl.u32 %v5537, 16
        %v5564 = vrot.slane %v5562, 4
        %v5565 = vshll.u32 %v5537, 16
        %v5567 = vrot.slane %v5565, 5
        %v5568 = vor.u32 %v5564, %v5567
        %v5569 = vrot.slane %v5568, 4
        %v5571 = vshll.u32 %v5538, 16
        %v5573 = vrot.slane %v5571, 5
        %v5574 = vsel %vm1101, %v5569, %v5573
        %v5575 = vshrl.u32 %v5538, 16
        %v5577 = vrot.slane %v5575, 4
        %v5578 = vor.u32 %v5577, %v5573
        %v5579 = vrot.slane %v5578, 4
        %v5581 = vshll.u32 %v5539, 16
        %v5583 = vrot.slane %v5581, 5
        %v5584 = vsel %vm1101, %v5579, %v5583
        %v5586 = vshrl.u32 %v5540, 16
        %v5588 = vrot.slane %v5586, 4
        %v5589 = vshll.u32 %v5540, 16
        %v5591 = vrot.slane %v5589, 5
        %v5592 = vor.u32 %v5588, %v5591
        %v5593 = vrot.slane %v5592, 4
        %v5595 = vshll.u32 %v5541, 16
        %v5597 = vrot.slane %v5595, 5
        %v5598 = vsel %vm1101, %v5593, %v5597
        %v5599 = vshrl.u32 %v5541, 16
        %v5601 = vrot.slane %v5599, 4
        %v5602 = vor.u32 %v5601, %v5597
        %v5603 = vrot.slane %v5602, 4
        %v5605 = vshll.u32 %v5542, 16
        %v5607 = vrot.slane %v5605, 5
        %v5608 = vsel %vm1101, %v5603, %v5607
        %v5610 = vshrl.u32 %v5543, 16
        %v5612 = vrot.slane %v5610, 4
        %v5613 = vshll.u32 %v5543, 16
        %v5615 = vrot.slane %v5613, 5
        %v5616 = vor.u32 %v5612, %v5615
        %v5617 = vrot.slane %v5616, 4
        %v5619 = vshll.u32 %v5544, 16
        %v5621 = vrot.slane %v5619, 5
        %v5622 = vsel %vm1101, %v5617, %v5621
        %v5623 = vshrl.u32 %v5544, 16
        %v5625 = vrot.slane %v5623, 4
        %v5626 = vor.u32 %v5625, %v5621
        %v5627 = vrot.slane %v5626, 4
        %v5629 = vshll.u32 %v5545, 16
        %v5631 = vrot.slane %v5629, 5
        %v5632 = vsel %vm1101, %v5627, %v5631
        %v5634 = vshrl.u32 %v5546, 16
        %v5636 = vrot.slane %v5634, 4
        %v5637 = vshll.u32 %v5546, 16
        %v5639 = vrot.slane %v5637, 5
        %v5640 = vor.u32 %v5636, %v5639
        %v5641 = vrot.slane %v5640, 4
        %v5643 = vshll.u32 %v5547, 16
        %v5645 = vrot.slane %v5643, 5
        %v5646 = vsel %vm1101, %v5641, %v5645
        %v5647 = vshrl.u32 %v5547, 16
        %v5649 = vrot.slane %v5647, 4
        %v5650 = vor.u32 %v5649, %v5645
        %v5651 = vrot.slane %v5650, 4
        %v5653 = vshll.u32 %v5548, 16
        %v5655 = vrot.slane %v5653, 5
        %v5656 = vsel %vm1101, %v5651, %v5655
        %v5658 = vshrl.u32 %v5549, 16
        %v5660 = vrot.slane %v5658, 4
        %v5661 = vshll.u32 %v5549, 16
        %v5663 = vrot.slane %v5661, 5
        %v5664 = vor.u32 %v5660, %v5663
        %v5665 = vrot.slane %v5664, 4
        %v5667 = vshll.u32 %v5550, 16
        %v5669 = vrot.slane %v5667, 5
        %v5670 = vsel %vm1101, %v5665, %v5669
        %v5671 = vshrl.u32 %v5550, 16
        %v5673 = vrot.slane %v5671, 4
        %v5674 = vor.u32 %v5673, %v5669
        %v5675 = vrot.slane %v5674, 4
        %v5677 = vshll.u32 %v5551, 16
        %v5679 = vrot.slane %v5677, 5
        %v5680 = vsel %vm1101, %v5675, %v5679
        %v5682 = vshrl.u32 %v5552, 16
        %v5684 = vrot.slane %v5682, 4
        %v5685 = vshll.u32 %v5552, 16
        %v5687 = vrot.slane %v5685, 5
        %v5688 = vor.u32 %v5684, %v5687
        %v5689 = vrot.slane %v5688, 4
        %v5691 = vshll.u32 %v5553, 16
        %v5693 = vrot.slane %v5691, 5
        %v5694 = vsel %vm1101, %v5689, %v5693
        %v5695 = vshrl.u32 %v5553, 16
        %v5697 = vrot.slane %v5695, 4
        %v5698 = vor.u32 %v5697, %v5693
        %v5699 = vrot.slane %v5698, 4
        %v5701 = vshll.u32 %v5554, 16
        %v5703 = vrot.slane %v5701, 5
        %v5704 = vsel %vm1101, %v5699, %v5703
        %v5706 = vshrl.u32 %v5555, 16
        %v5708 = vrot.slane %v5706, 4
        %v5709 = vshll.u32 %v5555, 16
        %v5711 = vrot.slane %v5709, 5
        %v5712 = vor.u32 %v5708, %v5711
        %v5713 = vrot.slane %v5712, 4
        %v5715 = vshll.u32 %v5556, 16
        %v5717 = vrot.slane %v5715, 5
        %v5718 = vsel %vm1101, %v5713, %v5717
        %v5719 = vshrl.u32 %v5556, 16
        %v5721 = vrot.slane %v5719, 4
        %v5722 = vor.u32 %v5721, %v5717
        %v5723 = vrot.slane %v5722, 4
        %v5725 = vshll.u32 %v5557, 16
        %v5727 = vrot.slane %v5725, 5
        %v5728 = vsel %vm1101, %v5723, %v5727
        %v5730 = vshrl.u32 %v5558, 16
        %v5732 = vrot.slane %v5730, 4
        %v5733 = vshll.u32 %v5558, 16
        %v5735 = vrot.slane %v5733, 5
        %v5736 = vor.u32 %v5732, %v5735
        %v5737 = vrot.slane %v5736, 4
        %v5739 = vshll.u32 %v5559, 16
        %v5741 = vrot.slane %v5739, 5
        %v5742 = vsel %vm1101, %v5737, %v5741
        %v5743 = vshrl.u32 %v5559, 16
        %v5745 = vrot.slane %v5743, 4
        %v5746 = vor.u32 %v5745, %v5741
        %v5747 = vrot.slane %v5746, 4
        %v5749 = vshll.u32 %v5560, 16
        %v5751 = vrot.slane %v5749, 5
        %v5752 = vsel %vm1101, %v5747, %v5751
        %v5753 = vld [vmem:[%s3070] sm:$0xf]
        %v5754 = vld [vmem:[%s3070 + $0x4] sm:$0xf]
        %v5755 = vld [vmem:[%s3070 + $0x8] sm:$0xf]
        %v5756 = vld [vmem:[%s3070 + $0xc] sm:$0xf]
        %v5757 = vld [vmem:[%s3070 + $0x10] sm:$0xf]
        %v5758 = vld [vmem:[%s3070 + $0x14] sm:$0xf]
        %v5759 = vld [vmem:[%s3070 + $0x18] sm:$0xf]
        %v5760 = vld [vmem:[%s3070 + $0x1c] sm:$0xf]
        %v5761 = vld [vmem:[%s3070 + $0x20] sm:$0xf]
        %v5762 = vld [vmem:[%s3070 + $0x24] sm:$0xf]
        %v5763 = vld [vmem:[%s3070 + $0x28] sm:$0xf]
        %v5764 = vld [vmem:[%s3070 + $0x2c] sm:$0xf]
        %v5765 = vld [vmem:[%s3070 + $0x30] sm:$0xf]
        %v5766 = vld [vmem:[%s3070 + $0x34] sm:$0xf]
        %v5767 = vld [vmem:[%s3070 + $0x38] sm:$0xf]
        %v5768 = vld [vmem:[%s3070 + $0x3c] sm:$0xf]
        %v5769 = vunpack.c.l.b16 %v5574
        %v5770 = vunpack.c.l.b16 %v5584
        %v5771 = vunpack.c.l.b16 %v5598
        %v5772 = vunpack.c.l.b16 %v5608
        %v5773 = vunpack.c.l.b16 %v5622
        %v5774 = vunpack.c.l.b16 %v5632
        %v5775 = vunpack.c.l.b16 %v5646
        %v5776 = vunpack.c.l.b16 %v5656
        %v5777 = vunpack.c.l.b16 %v5670
        %v5778 = vunpack.c.l.b16 %v5680
        %v5779 = vunpack.c.l.b16 %v5694
        %v5780 = vunpack.c.l.b16 %v5704
        %v5781 = vunpack.c.l.b16 %v5718
        %v5782 = vunpack.c.l.b16 %v5728
        %v5783 = vunpack.c.l.b16 %v5742
        %v5784 = vunpack.c.l.b16 %v5752
        %v5785 = vpack.c.b16 %v5770, %v5769
        %v5786 = vpack.c.b16 %v5772, %v5771
        %v5787 = vpack.c.b16 %v5774, %v5773
        %v5788 = vpack.c.b16 %v5776, %v5775
        %v5789 = vpack.c.b16 %v5778, %v5777
        %v5790 = vpack.c.b16 %v5780, %v5779
        %v5791 = vpack.c.b16 %v5782, %v5781
        %v5792 = vpack.c.b16 %v5784, %v5783
        %v5817 = vunpack.c.l.b16 %v5753
        %v5818 = vunpack.c.l.b16 %v5754
        %v5819 = vunpack.c.l.b16 %v5755
        %v5820 = vunpack.c.l.b16 %v5756
        %v5821 = vunpack.c.l.b16 %v5757
        %v5822 = vunpack.c.l.b16 %v5758
        %v5823 = vunpack.c.l.b16 %v5759
        %v5824 = vunpack.c.l.b16 %v5760
        %v5825 = vunpack.c.l.b16 %v5761
        %v5826 = vunpack.c.l.b16 %v5762
        %v5827 = vunpack.c.l.b16 %v5763
        %v5828 = vunpack.c.l.b16 %v5764
        %v5829 = vunpack.c.l.b16 %v5765
        %v5830 = vunpack.c.l.b16 %v5766
        %v5831 = vunpack.c.l.b16 %v5767
        %v5832 = vunpack.c.l.b16 %v5768
        %v5833 = vpack.c.b16 %v5818, %v5817
        %v5834 = vpack.c.b16 %v5820, %v5819
        %v5835 = vpack.c.b16 %v5822, %v5821
        %v5836 = vpack.c.b16 %v5824, %v5823
        %v5837 = vpack.c.b16 %v5826, %v5825
        %v5838 = vpack.c.b16 %v5828, %v5827
        %v5839 = vpack.c.b16 %v5830, %v5829
        %v5840 = vpack.c.b16 %v5832, %v5831
        %5849 = vmatpush.bf16.msra.mxu0 %v5840
        %5850 = vmatpush.bf16.msra.mxu0 %v5839
        %5851 = vmatpush.bf16.msra.mxu0 %v5838
        %5852 = vmatpush.bf16.msra.mxu0 %v5837
        %5853 = vmatpush.bf16.msra.mxu0 %v5836
        %5854 = vmatpush.bf16.msra.mxu0 %v5835
        %5855 = vmatpush.bf16.msra.mxu0 %v5834
        %5856 = vmatpush.bf16.msra.mxu0 %v5833
        %5857 = vmatmul.bf16.gmra.mxu0 %v5785
        %v5858 = vpop.f32.mrf.mxu0
        %v5859 = vadd.f32 0.0, %v5858
        %v5860 = vpop.f32.mrf.mxu0
        %v5861 = vadd.f32 0.0, %v5860
        %5862 = vmatmul.bf16.gmra.mxu0 %v5786
        %v5863 = vpop.f32.mrf.mxu0
        %v5864 = vadd.f32 0.0, %v5863
        %v5865 = vpop.f32.mrf.mxu0
        %v5866 = vadd.f32 0.0, %v5865
        %5867 = vmatmul.bf16.gmra.mxu0 %v5787
        %v5868 = vpop.f32.mrf.mxu0
        %v5869 = vadd.f32 0.0, %v5868
        %v5870 = vpop.f32.mrf.mxu0
        %v5871 = vadd.f32 0.0, %v5870
        %5872 = vmatmul.bf16.gmra.mxu0 %v5788
        %v5873 = vpop.f32.mrf.mxu0
        %v5874 = vadd.f32 0.0, %v5873
        %v5875 = vpop.f32.mrf.mxu0
        %v5876 = vadd.f32 0.0, %v5875
        %5877 = vmatmul.bf16.gmra.mxu0 %v5789
        %v5878 = vpop.f32.mrf.mxu0
        %v5879 = vadd.f32 0.0, %v5878
        %v5880 = vpop.f32.mrf.mxu0
        %v5881 = vadd.f32 0.0, %v5880
        %5882 = vmatmul.bf16.gmra.mxu0 %v5790
        %v5883 = vpop.f32.mrf.mxu0
        %v5884 = vadd.f32 0.0, %v5883
        %v5885 = vpop.f32.mrf.mxu0
        %v5886 = vadd.f32 0.0, %v5885
        %5887 = vmatmul.bf16.gmra.mxu0 %v5791
        %v5888 = vpop.f32.mrf.mxu0
        %v5889 = vadd.f32 0.0, %v5888
        %v5890 = vpop.f32.mrf.mxu0
        %v5891 = vadd.f32 0.0, %v5890
        %5892 = vmatmul.bf16.gmra.mxu0 %v5792
        %v5893 = vpop.f32.mrf.mxu0
        %v5894 = vadd.f32 0.0, %v5893
        %v5895 = vpop.f32.mrf.mxu0
        %v5896 = vadd.f32 0.0, %v5895
        %5897 = vdwg.mxu0
        %v5898 = vadd.f32 %v5521, %v5859
        %v5899 = vadd.f32 %v5522, %v5861
        %v5900 = vadd.f32 %v5523, %v5864
        %v5901 = vadd.f32 %v5524, %v5866
        %v5902 = vadd.f32 %v5525, %v5869
        %v5903 = vadd.f32 %v5526, %v5871
        %v5904 = vadd.f32 %v5527, %v5874
        %v5905 = vadd.f32 %v5528, %v5876
        %v5906 = vadd.f32 %v5529, %v5879
        %v5907 = vadd.f32 %v5530, %v5881
        %v5908 = vadd.f32 %v5531, %v5884
        %v5909 = vadd.f32 %v5532, %v5886
        %v5910 = vadd.f32 %v5533, %v5889
        %v5911 = vadd.f32 %v5534, %v5891
        %v5912 = vadd.f32 %v5535, %v5894
        %v5913 = vadd.f32 %v5536, %v5896
        %v5914 = vld [vmem:[%s5343] sm:$0xe]
        %v5915 = vld [vmem:[%s5343 + $0xc] sm:$0xe]
        %v5916 = vld [vmem:[%s5343 + $0x18] sm:$0xe]
        %v5917 = vld [vmem:[%s5343 + $0x24] sm:$0xe]
        %v5918 = vld [vmem:[%s5343 + $0x30] sm:$0xe]
        %v5919 = vld [vmem:[%s5343 + $0x3c] sm:$0xe]
        %v5920 = vld [vmem:[%s5343 + $0x48] sm:$0xe]
        %v5921 = vld [vmem:[%s5343 + $0x54] sm:$0xe]
        %v5946 = vrot.slane %v5914, 5
        %v5947 = vrot.slane %v5946, 4
        %v5948 = vrot.slane %v5538, 5
        %v5949 = vsel %vm1611, %v5947, %v5948
        %v5950 = vrot.slane %v5948, 4
        %v5951 = vrot.slane %v5539, 5
        %v5952 = vsel %vm1611, %v5950, %v5951
        %v5953 = vrot.slane %v5915, 5
        %v5954 = vrot.slane %v5953, 4
        %v5955 = vrot.slane %v5541, 5
        %v5956 = vsel %vm1611, %v5954, %v5955
        %v5957 = vrot.slane %v5955, 4
        %v5958 = vrot.slane %v5542, 5
        %v5959 = vsel %vm1611, %v5957, %v5958
        %v5960 = vrot.slane %v5916, 5
        %v5961 = vrot.slane %v5960, 4
        %v5962 = vrot.slane %v5544, 5
        %v5963 = vsel %vm1611, %v5961, %v5962
        %v5964 = vrot.slane %v5962, 4
        %v5965 = vrot.slane %v5545, 5
        %v5966 = vsel %vm1611, %v5964, %v5965
        %v5967 = vrot.slane %v5917, 5
        %v5968 = vrot.slane %v5967, 4
        %v5969 = vrot.slane %v5547, 5
        %v5970 = vsel %vm1611, %v5968, %v5969
        %v5971 = vrot.slane %v5969, 4
        %v5972 = vrot.slane %v5548, 5
        %v5973 = vsel %vm1611, %v5971, %v5972
        %v5974 = vrot.slane %v5918, 5
        %v5975 = vrot.slane %v5974, 4
        %v5976 = vrot.slane %v5550, 5
        %v5977 = vsel %vm1611, %v5975, %v5976
        %v5978 = vrot.slane %v5976, 4
        %v5979 = vrot.slane %v5551, 5
        %v5980 = vsel %vm1611, %v5978, %v5979
        %v5981 = vrot.slane %v5919, 5
        %v5982 = vrot.slane %v5981, 4
        %v5983 = vrot.slane %v5553, 5
        %v5984 = vsel %vm1611, %v5982, %v5983
        %v5985 = vrot.slane %v5983, 4
        %v5986 = vrot.slane %v5554, 5
        %v5987 = vsel %vm1611, %v5985, %v5986
        %v5988 = vrot.slane %v5920, 5
        %v5989 = vrot.slane %v5988, 4
        %v5990 = vrot.slane %v5556, 5
        %v5991 = vsel %vm1611, %v5989, %v5990
        %v5992 = vrot.slane %v5990, 4
        %v5993 = vrot.slane %v5557, 5
        %v5994 = vsel %vm1611, %v5992, %v5993
        %v5995 = vrot.slane %v5921, 5
        %v5996 = vrot.slane %v5995, 4
        %v5997 = vrot.slane %v5559, 5
        %v5998 = vsel %vm1611, %v5996, %v5997
        %v5999 = vrot.slane %v5997, 4
        %v6000 = vrot.slane %v5560, 5
        %v6001 = vsel %vm1611, %v5999, %v6000
        %v6002 = vld [vmem:[%s3320] sm:$0xf]
        %v6003 = vld [vmem:[%s3320 + $0x4] sm:$0xf]
        %v6004 = vld [vmem:[%s3320 + $0x8] sm:$0xf]
        %v6005 = vld [vmem:[%s3320 + $0xc] sm:$0xf]
        %v6006 = vld [vmem:[%s3320 + $0x10] sm:$0xf]
        %v6007 = vld [vmem:[%s3320 + $0x14] sm:$0xf]
        %v6008 = vld [vmem:[%s3320 + $0x18] sm:$0xf]
        %v6009 = vld [vmem:[%s3320 + $0x1c] sm:$0xf]
        %v6010 = vld [vmem:[%s3320 + $0x20] sm:$0xf]
        %v6011 = vld [vmem:[%s3320 + $0x24] sm:$0xf]
        %v6012 = vld [vmem:[%s3320 + $0x28] sm:$0xf]
        %v6013 = vld [vmem:[%s3320 + $0x2c] sm:$0xf]
        %v6014 = vld [vmem:[%s3320 + $0x30] sm:$0xf]
        %v6015 = vld [vmem:[%s3320 + $0x34] sm:$0xf]
        %v6016 = vld [vmem:[%s3320 + $0x38] sm:$0xf]
        %v6017 = vld [vmem:[%s3320 + $0x3c] sm:$0xf]
        %v6018 = vunpack.c.l.b16 %v5949
        %v6019 = vunpack.c.l.b16 %v5952
        %v6020 = vunpack.c.l.b16 %v5956
        %v6021 = vunpack.c.l.b16 %v5959
        %v6022 = vunpack.c.l.b16 %v5963
        %v6023 = vunpack.c.l.b16 %v5966
        %v6024 = vunpack.c.l.b16 %v5970
        %v6025 = vunpack.c.l.b16 %v5973
        %v6026 = vunpack.c.l.b16 %v5977
        %v6027 = vunpack.c.l.b16 %v5980
        %v6028 = vunpack.c.l.b16 %v5984
        %v6029 = vunpack.c.l.b16 %v5987
        %v6030 = vunpack.c.l.b16 %v5991
        %v6031 = vunpack.c.l.b16 %v5994
        %v6032 = vunpack.c.l.b16 %v5998
        %v6033 = vunpack.c.l.b16 %v6001
        %v6034 = vpack.c.b16 %v6019, %v6018
        %v6035 = vpack.c.b16 %v6021, %v6020
        %v6036 = vpack.c.b16 %v6023, %v6022
        %v6037 = vpack.c.b16 %v6025, %v6024
        %v6038 = vpack.c.b16 %v6027, %v6026
        %v6039 = vpack.c.b16 %v6029, %v6028
        %v6040 = vpack.c.b16 %v6031, %v6030
        %v6041 = vpack.c.b16 %v6033, %v6032
        %v6066 = vunpack.c.l.b16 %v6002
        %v6067 = vunpack.c.l.b16 %v6003
        %v6068 = vunpack.c.l.b16 %v6004
        %v6069 = vunpack.c.l.b16 %v6005
        %v6070 = vunpack.c.l.b16 %v6006
        %v6071 = vunpack.c.l.b16 %v6007
        %v6072 = vunpack.c.l.b16 %v6008
        %v6073 = vunpack.c.l.b16 %v6009
        %v6074 = vunpack.c.l.b16 %v6010
        %v6075 = vunpack.c.l.b16 %v6011
        %v6076 = vunpack.c.l.b16 %v6012
        %v6077 = vunpack.c.l.b16 %v6013
        %v6078 = vunpack.c.l.b16 %v6014
        %v6079 = vunpack.c.l.b16 %v6015
        %v6080 = vunpack.c.l.b16 %v6016
        %v6081 = vunpack.c.l.b16 %v6017
        %v6082 = vpack.c.b16 %v6067, %v6066
        %v6083 = vpack.c.b16 %v6069, %v6068
        %v6084 = vpack.c.b16 %v6071, %v6070
        %v6085 = vpack.c.b16 %v6073, %v6072
        %v6086 = vpack.c.b16 %v6075, %v6074
        %v6087 = vpack.c.b16 %v6077, %v6076
        %v6088 = vpack.c.b16 %v6079, %v6078
        %v6089 = vpack.c.b16 %v6081, %v6080
        %6098 = vmatpush.bf16.msra.mxu0 %v6089
        %6099 = vmatpush.bf16.msra.mxu0 %v6088
        %6100 = vmatpush.bf16.msra.mxu0 %v6087
        %6101 = vmatpush.bf16.msra.mxu0 %v6086
        %6102 = vmatpush.bf16.msra.mxu0 %v6085
        %6103 = vmatpush.bf16.msra.mxu0 %v6084
        %6104 = vmatpush.bf16.msra.mxu0 %v6083
        %6105 = vmatpush.bf16.msra.mxu0 %v6082
        %6106 = vmatmul.bf16.gmra.mxu0 %v6034
        %v6107 = vpop.f32.mrf.mxu0
        %v6108 = vadd.f32 0.0, %v6107
        %v6109 = vpop.f32.mrf.mxu0
        %v6110 = vadd.f32 0.0, %v6109
        %6111 = vmatmul.bf16.gmra.mxu0 %v6035
        %v6112 = vpop.f32.mrf.mxu0
        %v6113 = vadd.f32 0.0, %v6112
        %v6114 = vpop.f32.mrf.mxu0
        %v6115 = vadd.f32 0.0, %v6114
        %6116 = vmatmul.bf16.gmra.mxu0 %v6036
        %v6117 = vpop.f32.mrf.mxu0
        %v6118 = vadd.f32 0.0, %v6117
        %v6119 = vpop.f32.mrf.mxu0
        %v6120 = vadd.f32 0.0, %v6119
        %6121 = vmatmul.bf16.gmra.mxu0 %v6037
        %v6122 = vpop.f32.mrf.mxu0
        %v6123 = vadd.f32 0.0, %v6122
        %v6124 = vpop.f32.mrf.mxu0
        %v6125 = vadd.f32 0.0, %v6124
        %6126 = vmatmul.bf16.gmra.mxu0 %v6038
        %v6127 = vpop.f32.mrf.mxu0
        %v6128 = vadd.f32 0.0, %v6127
        %v6129 = vpop.f32.mrf.mxu0
        %v6130 = vadd.f32 0.0, %v6129
        %6131 = vmatmul.bf16.gmra.mxu0 %v6039
        %v6132 = vpop.f32.mrf.mxu0
        %v6133 = vadd.f32 0.0, %v6132
        %v6134 = vpop.f32.mrf.mxu0
        %v6135 = vadd.f32 0.0, %v6134
        %6136 = vmatmul.bf16.gmra.mxu0 %v6040
        %v6137 = vpop.f32.mrf.mxu0
        %v6138 = vadd.f32 0.0, %v6137
        %v6139 = vpop.f32.mrf.mxu0
        %v6140 = vadd.f32 0.0, %v6139
        %6141 = vmatmul.bf16.gmra.mxu0 %v6041
        %v6142 = vpop.f32.mrf.mxu0
        %v6143 = vadd.f32 0.0, %v6142
        %v6144 = vpop.f32.mrf.mxu0
        %v6145 = vadd.f32 0.0, %v6144
        %6146 = vdwg.mxu0
        %v6147 = vadd.f32 %v5898, %v6108
        %v6148 = vadd.f32 %v5899, %v6110
        %v6149 = vadd.f32 %v5900, %v6113
        %v6150 = vadd.f32 %v5901, %v6115
        %v6151 = vadd.f32 %v5902, %v6118
        %v6152 = vadd.f32 %v5903, %v6120
        %v6153 = vadd.f32 %v5904, %v6123
        %v6154 = vadd.f32 %v5905, %v6125
        %v6155 = vadd.f32 %v5906, %v6128
        %v6156 = vadd.f32 %v5907, %v6130
        %v6157 = vadd.f32 %v5908, %v6133
        %v6158 = vadd.f32 %v5909, %v6135
        %v6159 = vadd.f32 %v5910, %v6138
        %v6160 = vadd.f32 %v5911, %v6140
        %v6161 = vadd.f32 %v5912, %v6143
        %v6162 = vadd.f32 %v5913, %v6145
        %v6163 = vadd.f32 %v6147, %v3483
        %v6164 = vadd.f32 %v6148, %v3483
        %v6165 = vadd.f32 %v6149, %v3483
        %v6166 = vadd.f32 %v6150, %v3483
        %v6167 = vadd.f32 %v6151, %v3483
        %v6168 = vadd.f32 %v6152, %v3483
        %v6169 = vadd.f32 %v6153, %v3483
        %v6170 = vadd.f32 %v6154, %v3483
        %v6171 = vadd.f32 %v6155, %v3483
        %v6172 = vadd.f32 %v6156, %v3483
        %v6173 = vadd.f32 %v6157, %v3483
        %v6174 = vadd.f32 %v6158, %v3483
        %v6175 = vadd.f32 %v6159, %v3483
        %v6176 = vadd.f32 %v6160, %v3483
        %v6177 = vadd.f32 %v6161, %v3483
        %v6178 = vadd.f32 %v6162, %v3483
        %v6179 = vmax.f32 %v6163, 0.0
        %v6180 = vmax.f32 %v6164, 0.0
        %v6181 = vmax.f32 %v6165, 0.0
        %v6182 = vmax.f32 %v6166, 0.0
        %v6183 = vmax.f32 %v6167, 0.0
        %v6184 = vmax.f32 %v6168, 0.0
        %v6185 = vmax.f32 %v6169, 0.0
        %v6186 = vmax.f32 %v6170, 0.0
        %v6187 = vmax.f32 %v6171, 0.0
        %v6188 = vmax.f32 %v6172, 0.0
        %v6189 = vmax.f32 %v6173, 0.0
        %v6190 = vmax.f32 %v6174, 0.0
        %v6191 = vmax.f32 %v6175, 0.0
        %v6192 = vmax.f32 %v6176, 0.0
        %v6193 = vmax.f32 %v6177, 0.0
        %v6194 = vmax.f32 %v6178, 0.0
        %v6195 = vpack.c.bf16 %v6179, %v6179
        %v6196 = vpack.c.bf16 %v6180, %v6180
        %v6197 = vpack.c.bf16 %v6181, %v6181
        %v6198 = vpack.c.bf16 %v6182, %v6182
        %v6199 = vpack.c.bf16 %v6183, %v6183
        %v6200 = vpack.c.bf16 %v6184, %v6184
        %v6201 = vpack.c.bf16 %v6185, %v6185
        %v6202 = vpack.c.bf16 %v6186, %v6186
        %v6203 = vpack.c.bf16 %v6187, %v6187
        %v6204 = vpack.c.bf16 %v6188, %v6188
        %v6205 = vpack.c.bf16 %v6189, %v6189
        %v6206 = vpack.c.bf16 %v6190, %v6190
        %v6207 = vpack.c.bf16 %v6191, %v6191
        %v6208 = vpack.c.bf16 %v6192, %v6192
        %v6209 = vpack.c.bf16 %v6193, %v6193
        %v6210 = vpack.c.bf16 %v6194, %v6194
        %v6212 = vshrl.u32 %v6195, 16
        %v6214 = vrot.slane %v6212, 7
        %v6215 = vshll.u32 %v6195, 16
        %v6217 = vor.u32 %v6214, %v6215
        %v6218 = vrot.slane %v6214, 4
        %v6220 = vshrl.u32 %v6196, 16
        %v6222 = vrot.slane %v6220, 7
        %v6223 = vshll.u32 %v6196, 16
        %v6225 = vor.u32 %v6222, %v6223
        %v6226 = vsel %vm618, %v6218, %v6225
        %v6227 = vrot.slane %v6222, 4
        %v6229 = vshrl.u32 %v6197, 16
        %v6231 = vrot.slane %v6229, 7
        %v6232 = vshll.u32 %v6197, 16
        %v6234 = vor.u32 %v6231, %v6232
        %v6235 = vrot.slane %v6231, 4
        %v6237 = vshrl.u32 %v6198, 16
        %v6239 = vrot.slane %v6237, 7
        %v6240 = vshll.u32 %v6198, 16
        %v6242 = vor.u32 %v6239, %v6240
        %v6243 = vsel %vm618, %v6235, %v6242
        %v6244 = vrot.slane %v6239, 4
        %v6246 = vshrl.u32 %v6199, 16
        %v6248 = vrot.slane %v6246, 7
        %v6249 = vshll.u32 %v6199, 16
        %v6251 = vor.u32 %v6248, %v6249
        %v6252 = vrot.slane %v6248, 4
        %v6254 = vshrl.u32 %v6200, 16
        %v6256 = vrot.slane %v6254, 7
        %v6257 = vshll.u32 %v6200, 16
        %v6259 = vor.u32 %v6256, %v6257
        %v6260 = vsel %vm618, %v6252, %v6259
        %v6261 = vrot.slane %v6256, 4
        %v6263 = vshrl.u32 %v6201, 16
        %v6265 = vrot.slane %v6263, 7
        %v6266 = vshll.u32 %v6201, 16
        %v6268 = vor.u32 %v6265, %v6266
        %v6269 = vrot.slane %v6265, 4
        %v6271 = vshrl.u32 %v6202, 16
        %v6273 = vrot.slane %v6271, 7
        %v6274 = vshll.u32 %v6202, 16
        %v6276 = vor.u32 %v6273, %v6274
        %v6277 = vsel %vm618, %v6269, %v6276
        %v6278 = vrot.slane %v6273, 4
        %v6280 = vshrl.u32 %v6203, 16
        %v6282 = vrot.slane %v6280, 7
        %v6283 = vshll.u32 %v6203, 16
        %v6285 = vor.u32 %v6282, %v6283
        %v6286 = vrot.slane %v6282, 4
        %v6288 = vshrl.u32 %v6204, 16
        %v6290 = vrot.slane %v6288, 7
        %v6291 = vshll.u32 %v6204, 16
        %v6293 = vor.u32 %v6290, %v6291
        %v6294 = vsel %vm618, %v6286, %v6293
        %v6295 = vrot.slane %v6290, 4
        %v6297 = vshrl.u32 %v6205, 16
        %v6299 = vrot.slane %v6297, 7
        %v6300 = vshll.u32 %v6205, 16
        %v6302 = vor.u32 %v6299, %v6300
        %v6303 = vrot.slane %v6299, 4
        %v6305 = vshrl.u32 %v6206, 16
        %v6307 = vrot.slane %v6305, 7
        %v6308 = vshll.u32 %v6206, 16
        %v6310 = vor.u32 %v6307, %v6308
        %v6311 = vsel %vm618, %v6303, %v6310
        %v6312 = vrot.slane %v6307, 4
        %v6314 = vshrl.u32 %v6207, 16
        %v6316 = vrot.slane %v6314, 7
        %v6317 = vshll.u32 %v6207, 16
        %v6319 = vor.u32 %v6316, %v6317
        %v6320 = vrot.slane %v6316, 4
        %v6322 = vshrl.u32 %v6208, 16
        %v6324 = vrot.slane %v6322, 7
        %v6325 = vshll.u32 %v6208, 16
        %v6327 = vor.u32 %v6324, %v6325
        %v6328 = vsel %vm618, %v6320, %v6327
        %v6329 = vrot.slane %v6324, 4
        %v6331 = vshrl.u32 %v6209, 16
        %v6333 = vrot.slane %v6331, 7
        %v6334 = vshll.u32 %v6209, 16
        %v6336 = vor.u32 %v6333, %v6334
        %v6337 = vrot.slane %v6333, 4
        %v6339 = vshrl.u32 %v6210, 16
        %v6341 = vrot.slane %v6339, 7
        %v6342 = vshll.u32 %v6210, 16
        %v6344 = vor.u32 %v6341, %v6342
        %v6345 = vsel %vm618, %v6337, %v6344
        %v6346 = vrot.slane %v6341, 4
        %s6371 = smul.addr %s4518, 4
        %s6372 = scalar_lea.vmem [#allocation3], %s6371
        %v6373 = vld [vmem:[%s6372] sm:$0xf]
        %v6374 = vsel %vm941, %v6217, %v6373
        %6375 = vst [vmem:[%s6372] sm:$0xf] %v6374
        %6376 = vst [vmem:[%s6372 + $0x4] sm:$0xf] %v6226
        %v6377 = vld [vmem:[%s6372 + $0x8] sm:$0x1]
        %v6378 = vsel %vm359, %v6227, %v6377
        %6379 = vst [vmem:[%s6372 + $0x8] sm:$0x1] %v6378
        %v6380 = vld [vmem:[%s6372 + $0xc] sm:$0xf]
        %v6381 = vsel %vm941, %v6234, %v6380
        %6382 = vst [vmem:[%s6372 + $0xc] sm:$0xf] %v6381
        %6383 = vst [vmem:[%s6372 + $0x10] sm:$0xf] %v6243
        %v6384 = vld [vmem:[%s6372 + $0x14] sm:$0x1]
        %v6385 = vsel %vm359, %v6244, %v6384
        %6386 = vst [vmem:[%s6372 + $0x14] sm:$0x1] %v6385
        %v6387 = vld [vmem:[%s6372 + $0x18] sm:$0xf]
        %v6388 = vsel %vm941, %v6251, %v6387
        %6389 = vst [vmem:[%s6372 + $0x18] sm:$0xf] %v6388
        %6390 = vst [vmem:[%s6372 + $0x1c] sm:$0xf] %v6260
        %v6391 = vld [vmem:[%s6372 + $0x20] sm:$0x1]
        %v6392 = vsel %vm359, %v6261, %v6391
        %6393 = vst [vmem:[%s6372 + $0x20] sm:$0x1] %v6392
        %v6394 = vld [vmem:[%s6372 + $0x24] sm:$0xf]
        %v6395 = vsel %vm941, %v6268, %v6394
        %6396 = vst [vmem:[%s6372 + $0x24] sm:$0xf] %v6395
        %6397 = vst [vmem:[%s6372 + $0x28] sm:$0xf] %v6277
        %v6398 = vld [vmem:[%s6372 + $0x2c] sm:$0x1]
        %v6399 = vsel %vm359, %v6278, %v6398
        %6400 = vst [vmem:[%s6372 + $0x2c] sm:$0x1] %v6399
        %v6401 = vld [vmem:[%s6372 + $0x30] sm:$0xf]
        %v6402 = vsel %vm941, %v6285, %v6401
        %6403 = vst [vmem:[%s6372 + $0x30] sm:$0xf] %v6402
        %6404 = vst [vmem:[%s6372 + $0x34] sm:$0xf] %v6294
        %v6405 = vld [vmem:[%s6372 + $0x38] sm:$0x1]
        %v6406 = vsel %vm359, %v6295, %v6405
        %6407 = vst [vmem:[%s6372 + $0x38] sm:$0x1] %v6406
        %v6408 = vld [vmem:[%s6372 + $0x3c] sm:$0xf]
        %v6409 = vsel %vm941, %v6302, %v6408
        %6410 = vst [vmem:[%s6372 + $0x3c] sm:$0xf] %v6409
        %6411 = vst [vmem:[%s6372 + $0x40] sm:$0xf] %v6311
        %v6412 = vld [vmem:[%s6372 + $0x44] sm:$0x1]
        %v6413 = vsel %vm359, %v6312, %v6412
        %6414 = vst [vmem:[%s6372 + $0x44] sm:$0x1] %v6413
        %v6415 = vld [vmem:[%s6372 + $0x48] sm:$0xf]
        %v6416 = vsel %vm941, %v6319, %v6415
        %6417 = vst [vmem:[%s6372 + $0x48] sm:$0xf] %v6416
        %6418 = vst [vmem:[%s6372 + $0x4c] sm:$0xf] %v6328
        %v6419 = vld [vmem:[%s6372 + $0x50] sm:$0x1]
        %v6420 = vsel %vm359, %v6329, %v6419
        %6421 = vst [vmem:[%s6372 + $0x50] sm:$0x1] %v6420
        %v6422 = vld [vmem:[%s6372 + $0x54] sm:$0xf]
        %v6423 = vsel %vm941, %v6336, %v6422
        %6424 = vst [vmem:[%s6372 + $0x54] sm:$0xf] %v6423
        %6425 = vst [vmem:[%s6372 + $0x58] sm:$0xf] %v6345
        %v6426 = vld [vmem:[%s6372 + $0x5c] sm:$0x1]
        %v6427 = vsel %vm359, %v6346, %v6426
        %6428 = vst [vmem:[%s6372 + $0x5c] sm:$0x1] %v6427
        %s6429 = smul.addr %s1056, 4
        %s6430 = scalar_lea.vmem [#allocation3], %s6429
        %v6431 = vld [vmem:[%s6430] sm:$0xf]
        %v6432 = vld [vmem:[%s6430 + $0x4] sm:$0xf]
        %v6433 = vld [vmem:[%s6430 + $0xc] sm:$0xf]
        %v6434 = vld [vmem:[%s6430 + $0x10] sm:$0xf]
        %v6435 = vld [vmem:[%s6430 + $0x18] sm:$0xf]
        %v6436 = vld [vmem:[%s6430 + $0x1c] sm:$0xf]
        %v6437 = vld [vmem:[%s6430 + $0x24] sm:$0xf]
        %v6438 = vld [vmem:[%s6430 + $0x28] sm:$0xf]
        %v6439 = vld [vmem:[%s6430 + $0x30] sm:$0xf]
        %v6440 = vld [vmem:[%s6430 + $0x34] sm:$0xf]
        %v6441 = vld [vmem:[%s6430 + $0x3c] sm:$0xf]
        %v6442 = vld [vmem:[%s6430 + $0x40] sm:$0xf]
        %v6443 = vld [vmem:[%s6430 + $0x48] sm:$0xf]
        %v6444 = vld [vmem:[%s6430 + $0x4c] sm:$0xf]
        %v6445 = vld [vmem:[%s6430 + $0x54] sm:$0xf]
        %v6446 = vld [vmem:[%s6430 + $0x58] sm:$0xf]
        %v6447 = vld [vmem:[#allocation9] sm:$0xf]
        %v6448 = vld [vmem:[#allocation9 + $0x4] sm:$0xf]
        %v6449 = vld [vmem:[#allocation9 + $0x8] sm:$0xf]
        %v6450 = vld [vmem:[#allocation9 + $0xc] sm:$0xf]
        %v6451 = vld [vmem:[#allocation9 + $0x10] sm:$0xf]
        %v6452 = vld [vmem:[#allocation9 + $0x14] sm:$0xf]
        %v6453 = vld [vmem:[#allocation9 + $0x18] sm:$0xf]
        %v6454 = vld [vmem:[#allocation9 + $0x1c] sm:$0xf]
        %v6455 = vld [vmem:[#allocation9 + $0x20] sm:$0xf]
        %v6456 = vld [vmem:[#allocation9 + $0x24] sm:$0xf]
        %v6457 = vld [vmem:[#allocation9 + $0x28] sm:$0xf]
        %v6458 = vld [vmem:[#allocation9 + $0x2c] sm:$0xf]
        %v6459 = vld [vmem:[#allocation9 + $0x30] sm:$0xf]
        %v6460 = vld [vmem:[#allocation9 + $0x34] sm:$0xf]
        %v6461 = vld [vmem:[#allocation9 + $0x38] sm:$0xf]
        %v6462 = vld [vmem:[#allocation9 + $0x3c] sm:$0xf]
        %v6463 = vld [vmem:[%s6430 + $0x8] sm:$0x1]
        %v6464 = vld [vmem:[%s6430 + $0x14] sm:$0x1]
        %v6465 = vld [vmem:[%s6430 + $0x20] sm:$0x1]
        %v6466 = vld [vmem:[%s6430 + $0x2c] sm:$0x1]
        %v6467 = vld [vmem:[%s6430 + $0x38] sm:$0x1]
        %v6468 = vld [vmem:[%s6430 + $0x44] sm:$0x1]
        %v6469 = vld [vmem:[%s6430 + $0x50] sm:$0x1]
        %v6470 = vld [vmem:[%s6430 + $0x5c] sm:$0x1]
        %v6472 = vshrl.u32 %v6431, 16
        %v6474 = vrot.slane %v6472, 4
        %v6475 = vshll.u32 %v6431, 16
        %v6477 = vrot.slane %v6475, 5
        %v6478 = vor.u32 %v6474, %v6477
        %v6479 = vrot.slane %v6478, 4
        %v6481 = vshll.u32 %v6432, 16
        %v6483 = vrot.slane %v6481, 5
        %v6484 = vsel %vm1101, %v6479, %v6483
        %v6485 = vshrl.u32 %v6432, 16
        %v6487 = vrot.slane %v6485, 4
        %v6488 = vor.u32 %v6487, %v6483
        %v6489 = vrot.slane %v6488, 4
        %v6491 = vshll.u32 %v6463, 16
        %v6493 = vrot.slane %v6491, 5
        %v6494 = vsel %vm1101, %v6489, %v6493
        %v6496 = vshrl.u32 %v6433, 16
        %v6498 = vrot.slane %v6496, 4
        %v6499 = vshll.u32 %v6433, 16
        %v6501 = vrot.slane %v6499, 5
        %v6502 = vor.u32 %v6498, %v6501
        %v6503 = vrot.slane %v6502, 4
        %v6505 = vshll.u32 %v6434, 16
        %v6507 = vrot.slane %v6505, 5
        %v6508 = vsel %vm1101, %v6503, %v6507
        %v6509 = vshrl.u32 %v6434, 16
        %v6511 = vrot.slane %v6509, 4
        %v6512 = vor.u32 %v6511, %v6507
        %v6513 = vrot.slane %v6512, 4
        %v6515 = vshll.u32 %v6464, 16
        %v6517 = vrot.slane %v6515, 5
        %v6518 = vsel %vm1101, %v6513, %v6517
        %v6520 = vshrl.u32 %v6435, 16
        %v6522 = vrot.slane %v6520, 4
        %v6523 = vshll.u32 %v6435, 16
        %v6525 = vrot.slane %v6523, 5
        %v6526 = vor.u32 %v6522, %v6525
        %v6527 = vrot.slane %v6526, 4
        %v6529 = vshll.u32 %v6436, 16
        %v6531 = vrot.slane %v6529, 5
        %v6532 = vsel %vm1101, %v6527, %v6531
        %v6533 = vshrl.u32 %v6436, 16
        %v6535 = vrot.slane %v6533, 4
        %v6536 = vor.u32 %v6535, %v6531
        %v6537 = vrot.slane %v6536, 4
        %v6539 = vshll.u32 %v6465, 16
        %v6541 = vrot.slane %v6539, 5
        %v6542 = vsel %vm1101, %v6537, %v6541
        %v6544 = vshrl.u32 %v6437, 16
        %v6546 = vrot.slane %v6544, 4
        %v6547 = vshll.u32 %v6437, 16
        %v6549 = vrot.slane %v6547, 5
        %v6550 = vor.u32 %v6546, %v6549
        %v6551 = vrot.slane %v6550, 4
        %v6553 = vshll.u32 %v6438, 16
        %v6555 = vrot.slane %v6553, 5
        %v6556 = vsel %vm1101, %v6551, %v6555
        %v6557 = vshrl.u32 %v6438, 16
        %v6559 = vrot.slane %v6557, 4
        %v6560 = vor.u32 %v6559, %v6555
        %v6561 = vrot.slane %v6560, 4
        %v6563 = vshll.u32 %v6466, 16
        %v6565 = vrot.slane %v6563, 5
        %v6566 = vsel %vm1101, %v6561, %v6565
        %v6568 = vshrl.u32 %v6439, 16
        %v6570 = vrot.slane %v6568, 4
        %v6571 = vshll.u32 %v6439, 16
        %v6573 = vrot.slane %v6571, 5
        %v6574 = vor.u32 %v6570, %v6573
        %v6575 = vrot.slane %v6574, 4
        %v6577 = vshll.u32 %v6440, 16
        %v6579 = vrot.slane %v6577, 5
        %v6580 = vsel %vm1101, %v6575, %v6579
        %v6581 = vshrl.u32 %v6440, 16
        %v6583 = vrot.slane %v6581, 4
        %v6584 = vor.u32 %v6583, %v6579
        %v6585 = vrot.slane %v6584, 4
        %v6587 = vshll.u32 %v6467, 16
        %v6589 = vrot.slane %v6587, 5
        %v6590 = vsel %vm1101, %v6585, %v6589
        %v6592 = vshrl.u32 %v6441, 16
        %v6594 = vrot.slane %v6592, 4
        %v6595 = vshll.u32 %v6441, 16
        %v6597 = vrot.slane %v6595, 5
        %v6598 = vor.u32 %v6594, %v6597
        %v6599 = vrot.slane %v6598, 4
        %v6601 = vshll.u32 %v6442, 16
        %v6603 = vrot.slane %v6601, 5
        %v6604 = vsel %vm1101, %v6599, %v6603
        %v6605 = vshrl.u32 %v6442, 16
        %v6607 = vrot.slane %v6605, 4
        %v6608 = vor.u32 %v6607, %v6603
        %v6609 = vrot.slane %v6608, 4
        %v6611 = vshll.u32 %v6468, 16
        %v6613 = vrot.slane %v6611, 5
        %v6614 = vsel %vm1101, %v6609, %v6613
        %v6616 = vshrl.u32 %v6443, 16
        %v6618 = vrot.slane %v6616, 4
        %v6619 = vshll.u32 %v6443, 16
        %v6621 = vrot.slane %v6619, 5
        %v6622 = vor.u32 %v6618, %v6621
        %v6623 = vrot.slane %v6622, 4
        %v6625 = vshll.u32 %v6444, 16
        %v6627 = vrot.slane %v6625, 5
        %v6628 = vsel %vm1101, %v6623, %v6627
        %v6629 = vshrl.u32 %v6444, 16
        %v6631 = vrot.slane %v6629, 4
        %v6632 = vor.u32 %v6631, %v6627
        %v6633 = vrot.slane %v6632, 4
        %v6635 = vshll.u32 %v6469, 16
        %v6637 = vrot.slane %v6635, 5
        %v6638 = vsel %vm1101, %v6633, %v6637
        %v6640 = vshrl.u32 %v6445, 16
        %v6642 = vrot.slane %v6640, 4
        %v6643 = vshll.u32 %v6445, 16
        %v6645 = vrot.slane %v6643, 5
        %v6646 = vor.u32 %v6642, %v6645
        %v6647 = vrot.slane %v6646, 4
        %v6649 = vshll.u32 %v6446, 16
        %v6651 = vrot.slane %v6649, 5
        %v6652 = vsel %vm1101, %v6647, %v6651
        %v6653 = vshrl.u32 %v6446, 16
        %v6655 = vrot.slane %v6653, 4
        %v6656 = vor.u32 %v6655, %v6651
        %v6657 = vrot.slane %v6656, 4
        %v6659 = vshll.u32 %v6470, 16
        %v6661 = vrot.slane %v6659, 5
        %v6662 = vsel %vm1101, %v6657, %v6661
        %s6663 = scalar_lea.vmem [#allocation9], 64
        %v6664 = vld [vmem:[%s6663] sm:$0xf]
        %v6665 = vld [vmem:[%s6663 + $0x4] sm:$0xf]
        %v6666 = vld [vmem:[%s6663 + $0x8] sm:$0xf]
        %v6667 = vld [vmem:[%s6663 + $0xc] sm:$0xf]
        %v6668 = vld [vmem:[%s6663 + $0x10] sm:$0xf]
        %v6669 = vld [vmem:[%s6663 + $0x14] sm:$0xf]
        %v6670 = vld [vmem:[%s6663 + $0x18] sm:$0xf]
        %v6671 = vld [vmem:[%s6663 + $0x1c] sm:$0xf]
        %v6672 = vld [vmem:[%s6663 + $0x20] sm:$0xf]
        %v6673 = vld [vmem:[%s6663 + $0x24] sm:$0xf]
        %v6674 = vld [vmem:[%s6663 + $0x28] sm:$0xf]
        %v6675 = vld [vmem:[%s6663 + $0x2c] sm:$0xf]
        %v6676 = vld [vmem:[%s6663 + $0x30] sm:$0xf]
        %v6677 = vld [vmem:[%s6663 + $0x34] sm:$0xf]
        %v6678 = vld [vmem:[%s6663 + $0x38] sm:$0xf]
        %v6679 = vld [vmem:[%s6663 + $0x3c] sm:$0xf]
        %v6680 = vunpack.c.l.b16 %v6484
        %v6681 = vunpack.c.l.b16 %v6494
        %v6682 = vunpack.c.l.b16 %v6508
        %v6683 = vunpack.c.l.b16 %v6518
        %v6684 = vunpack.c.l.b16 %v6532
        %v6685 = vunpack.c.l.b16 %v6542
        %v6686 = vunpack.c.l.b16 %v6556
        %v6687 = vunpack.c.l.b16 %v6566
        %v6688 = vunpack.c.l.b16 %v6580
        %v6689 = vunpack.c.l.b16 %v6590
        %v6690 = vunpack.c.l.b16 %v6604
        %v6691 = vunpack.c.l.b16 %v6614
        %v6692 = vunpack.c.l.b16 %v6628
        %v6693 = vunpack.c.l.b16 %v6638
        %v6694 = vunpack.c.l.b16 %v6652
        %v6695 = vunpack.c.l.b16 %v6662
        %v6696 = vpack.c.b16 %v6681, %v6680
        %v6697 = vpack.c.b16 %v6683, %v6682
        %v6698 = vpack.c.b16 %v6685, %v6684
        %v6699 = vpack.c.b16 %v6687, %v6686
        %v6700 = vpack.c.b16 %v6689, %v6688
        %v6701 = vpack.c.b16 %v6691, %v6690
        %v6702 = vpack.c.b16 %v6693, %v6692
        %v6703 = vpack.c.b16 %v6695, %v6694
        %v6728 = vunpack.c.l.b16 %v6664
        %v6729 = vunpack.c.l.b16 %v6665
        %v6730 = vunpack.c.l.b16 %v6666
        %v6731 = vunpack.c.l.b16 %v6667
        %v6732 = vunpack.c.l.b16 %v6668
        %v6733 = vunpack.c.l.b16 %v6669
        %v6734 = vunpack.c.l.b16 %v6670
        %v6735 = vunpack.c.l.b16 %v6671
        %v6736 = vunpack.c.l.b16 %v6672
        %v6737 = vunpack.c.l.b16 %v6673
        %v6738 = vunpack.c.l.b16 %v6674
        %v6739 = vunpack.c.l.b16 %v6675
        %v6740 = vunpack.c.l.b16 %v6676
        %v6741 = vunpack.c.l.b16 %v6677
        %v6742 = vunpack.c.l.b16 %v6678
        %v6743 = vunpack.c.l.b16 %v6679
        %v6744 = vpack.c.b16 %v6729, %v6728
        %v6745 = vpack.c.b16 %v6731, %v6730
        %v6746 = vpack.c.b16 %v6733, %v6732
        %v6747 = vpack.c.b16 %v6735, %v6734
        %v6748 = vpack.c.b16 %v6737, %v6736
        %v6749 = vpack.c.b16 %v6739, %v6738
        %v6750 = vpack.c.b16 %v6741, %v6740
        %v6751 = vpack.c.b16 %v6743, %v6742
        %6760 = vmatpush.bf16.msra.mxu0 %v6751
        %6761 = vmatpush.bf16.msra.mxu0 %v6750
        %6762 = vmatpush.bf16.msra.mxu0 %v6749
        %6763 = vmatpush.bf16.msra.mxu0 %v6748
        %6764 = vmatpush.bf16.msra.mxu0 %v6747
        %6765 = vmatpush.bf16.msra.mxu0 %v6746
        %6766 = vmatpush.bf16.msra.mxu0 %v6745
        %6767 = vmatpush.bf16.msra.mxu0 %v6744
        %6768 = vmatmul.bf16.gmra.mxu0 %v6696
        %v6769 = vpop.f32.mrf.mxu0
        %v6770 = vadd.f32 0.0, %v6769
        %v6771 = vpop.f32.mrf.mxu0
        %v6772 = vadd.f32 0.0, %v6771
        %6773 = vmatmul.bf16.gmra.mxu0 %v6697
        %v6774 = vpop.f32.mrf.mxu0
        %v6775 = vadd.f32 0.0, %v6774
        %v6776 = vpop.f32.mrf.mxu0
        %v6777 = vadd.f32 0.0, %v6776
        %6778 = vmatmul.bf16.gmra.mxu0 %v6698
        %v6779 = vpop.f32.mrf.mxu0
        %v6780 = vadd.f32 0.0, %v6779
        %v6781 = vpop.f32.mrf.mxu0
        %v6782 = vadd.f32 0.0, %v6781
        %6783 = vmatmul.bf16.gmra.mxu0 %v6699
        %v6784 = vpop.f32.mrf.mxu0
        %v6785 = vadd.f32 0.0, %v6784
        %v6786 = vpop.f32.mrf.mxu0
        %v6787 = vadd.f32 0.0, %v6786
        %6788 = vmatmul.bf16.gmra.mxu0 %v6700
        %v6789 = vpop.f32.mrf.mxu0
        %v6790 = vadd.f32 0.0, %v6789
        %v6791 = vpop.f32.mrf.mxu0
        %v6792 = vadd.f32 0.0, %v6791
        %6793 = vmatmul.bf16.gmra.mxu0 %v6701
        %v6794 = vpop.f32.mrf.mxu0
        %v6795 = vadd.f32 0.0, %v6794
        %v6796 = vpop.f32.mrf.mxu0
        %v6797 = vadd.f32 0.0, %v6796
        %6798 = vmatmul.bf16.gmra.mxu0 %v6702
        %v6799 = vpop.f32.mrf.mxu0
        %v6800 = vadd.f32 0.0, %v6799
        %v6801 = vpop.f32.mrf.mxu0
        %v6802 = vadd.f32 0.0, %v6801
        %6803 = vmatmul.bf16.gmra.mxu0 %v6703
        %v6804 = vpop.f32.mrf.mxu0
        %v6805 = vadd.f32 0.0, %v6804
        %v6806 = vpop.f32.mrf.mxu0
        %v6807 = vadd.f32 0.0, %v6806
        %6808 = vdwg.mxu0
        %v6825 = vunpack.c.l.b16 %v6431
        %v6826 = vunpack.c.l.b16 %v6432
        %v6827 = vunpack.c.l.b16 %v6433
        %v6828 = vunpack.c.l.b16 %v6434
        %v6829 = vunpack.c.l.b16 %v6435
        %v6830 = vunpack.c.l.b16 %v6436
        %v6831 = vunpack.c.l.b16 %v6437
        %v6832 = vunpack.c.l.b16 %v6438
        %v6833 = vunpack.c.l.b16 %v6439
        %v6834 = vunpack.c.l.b16 %v6440
        %v6835 = vunpack.c.l.b16 %v6441
        %v6836 = vunpack.c.l.b16 %v6442
        %v6837 = vunpack.c.l.b16 %v6443
        %v6838 = vunpack.c.l.b16 %v6444
        %v6839 = vunpack.c.l.b16 %v6445
        %v6840 = vunpack.c.l.b16 %v6446
        %v6841 = vpack.c.b16 %v6826, %v6825
        %v6842 = vpack.c.b16 %v6828, %v6827
        %v6843 = vpack.c.b16 %v6830, %v6829
        %v6844 = vpack.c.b16 %v6832, %v6831
        %v6845 = vpack.c.b16 %v6834, %v6833
        %v6846 = vpack.c.b16 %v6836, %v6835
        %v6847 = vpack.c.b16 %v6838, %v6837
        %v6848 = vpack.c.b16 %v6840, %v6839
        %v6873 = vunpack.c.l.b16 %v6447
        %v6874 = vunpack.c.l.b16 %v6448
        %v6875 = vunpack.c.l.b16 %v6449
        %v6876 = vunpack.c.l.b16 %v6450
        %v6877 = vunpack.c.l.b16 %v6451
        %v6878 = vunpack.c.l.b16 %v6452
        %v6879 = vunpack.c.l.b16 %v6453
        %v6880 = vunpack.c.l.b16 %v6454
        %v6881 = vunpack.c.l.b16 %v6455
        %v6882 = vunpack.c.l.b16 %v6456
        %v6883 = vunpack.c.l.b16 %v6457
        %v6884 = vunpack.c.l.b16 %v6458
        %v6885 = vunpack.c.l.b16 %v6459
        %v6886 = vunpack.c.l.b16 %v6460
        %v6887 = vunpack.c.l.b16 %v6461
        %v6888 = vunpack.c.l.b16 %v6462
        %v6889 = vpack.c.b16 %v6874, %v6873
        %v6890 = vpack.c.b16 %v6876, %v6875
        %v6891 = vpack.c.b16 %v6878, %v6877
        %v6892 = vpack.c.b16 %v6880, %v6879
        %v6893 = vpack.c.b16 %v6882, %v6881
        %v6894 = vpack.c.b16 %v6884, %v6883
        %v6895 = vpack.c.b16 %v6886, %v6885
        %v6896 = vpack.c.b16 %v6888, %v6887
        %6905 = vmatpush.bf16.msra.mxu0 %v6896
        %6906 = vmatpush.bf16.msra.mxu0 %v6895
        %6907 = vmatpush.bf16.msra.mxu0 %v6894
        %6908 = vmatpush.bf16.msra.mxu0 %v6893
        %6909 = vmatpush.bf16.msra.mxu0 %v6892
        %6910 = vmatpush.bf16.msra.mxu0 %v6891
        %6911 = vmatpush.bf16.msra.mxu0 %v6890
        %6912 = vmatpush.bf16.msra.mxu0 %v6889
        %6913 = vmatmul.bf16.gmra.mxu0 %v6841
        %v6914 = vpop.f32.mrf.mxu0
        %v6915 = vadd.f32 %v6770, %v6914
        %v6916 = vpop.f32.mrf.mxu0
        %v6917 = vadd.f32 %v6772, %v6916
        %6918 = vmatmul.bf16.gmra.mxu0 %v6842
        %v6919 = vpop.f32.mrf.mxu0
        %v6920 = vadd.f32 %v6775, %v6919
        %v6921 = vpop.f32.mrf.mxu0
        %v6922 = vadd.f32 %v6777, %v6921
        %6923 = vmatmul.bf16.gmra.mxu0 %v6843
        %v6924 = vpop.f32.mrf.mxu0
        %v6925 = vadd.f32 %v6780, %v6924
        %v6926 = vpop.f32.mrf.mxu0
        %v6927 = vadd.f32 %v6782, %v6926
        %6928 = vmatmul.bf16.gmra.mxu0 %v6844
        %v6929 = vpop.f32.mrf.mxu0
        %v6930 = vadd.f32 %v6785, %v6929
        %v6931 = vpop.f32.mrf.mxu0
        %v6932 = vadd.f32 %v6787, %v6931
        %6933 = vmatmul.bf16.gmra.mxu0 %v6845
        %v6934 = vpop.f32.mrf.mxu0
        %v6935 = vadd.f32 %v6790, %v6934
        %v6936 = vpop.f32.mrf.mxu0
        %v6937 = vadd.f32 %v6792, %v6936
        %6938 = vmatmul.bf16.gmra.mxu0 %v6846
        %v6939 = vpop.f32.mrf.mxu0
        %v6940 = vadd.f32 %v6795, %v6939
        %v6941 = vpop.f32.mrf.mxu0
        %v6942 = vadd.f32 %v6797, %v6941
        %6943 = vmatmul.bf16.gmra.mxu0 %v6847
        %v6944 = vpop.f32.mrf.mxu0
        %v6945 = vadd.f32 %v6800, %v6944
        %v6946 = vpop.f32.mrf.mxu0
        %v6947 = vadd.f32 %v6802, %v6946
        %6948 = vmatmul.bf16.gmra.mxu0 %v6848
        %v6949 = vpop.f32.mrf.mxu0
        %v6950 = vadd.f32 %v6805, %v6949
        %v6951 = vpop.f32.mrf.mxu0
        %v6952 = vadd.f32 %v6807, %v6951
        %6953 = vdwg.mxu0
        %v6954 = vld [vmem:[%s6430] sm:$0xe]
        %v6955 = vld [vmem:[%s6430 + $0xc] sm:$0xe]
        %v6956 = vld [vmem:[%s6430 + $0x18] sm:$0xe]
        %v6957 = vld [vmem:[%s6430 + $0x24] sm:$0xe]
        %v6958 = vld [vmem:[%s6430 + $0x30] sm:$0xe]
        %v6959 = vld [vmem:[%s6430 + $0x3c] sm:$0xe]
        %v6960 = vld [vmem:[%s6430 + $0x48] sm:$0xe]
        %v6961 = vld [vmem:[%s6430 + $0x54] sm:$0xe]
        %v6978 = vrot.slane %v6954, 5
        %v6979 = vrot.slane %v6978, 4
        %v6980 = vrot.slane %v6432, 5
        %v6981 = vsel %vm1611, %v6979, %v6980
        %v6982 = vrot.slane %v6980, 4
        %v6983 = vrot.slane %v6463, 5
        %v6984 = vsel %vm1611, %v6982, %v6983
        %v6985 = vrot.slane %v6955, 5
        %v6986 = vrot.slane %v6985, 4
        %v6987 = vrot.slane %v6434, 5
        %v6988 = vsel %vm1611, %v6986, %v6987
        %v6989 = vrot.slane %v6987, 4
        %v6990 = vrot.slane %v6464, 5
        %v6991 = vsel %vm1611, %v6989, %v6990
        %v6992 = vrot.slane %v6956, 5
        %v6993 = vrot.slane %v6992, 4
        %v6994 = vrot.slane %v6436, 5
        %v6995 = vsel %vm1611, %v6993, %v6994
        %v6996 = vrot.slane %v6994, 4
        %v6997 = vrot.slane %v6465, 5
        %v6998 = vsel %vm1611, %v6996, %v6997
        %v6999 = vrot.slane %v6957, 5
        %v7000 = vrot.slane %v6999, 4
        %v7001 = vrot.slane %v6438, 5
        %v7002 = vsel %vm1611, %v7000, %v7001
        %v7003 = vrot.slane %v7001, 4
        %v7004 = vrot.slane %v6466, 5
        %v7005 = vsel %vm1611, %v7003, %v7004
        %v7006 = vrot.slane %v6958, 5
        %v7007 = vrot.slane %v7006, 4
        %v7008 = vrot.slane %v6440, 5
        %v7009 = vsel %vm1611, %v7007, %v7008
        %v7010 = vrot.slane %v7008, 4
        %v7011 = vrot.slane %v6467, 5
        %v7012 = vsel %vm1611, %v7010, %v7011
        %v7013 = vrot.slane %v6959, 5
        %v7014 = vrot.slane %v7013, 4
        %v7015 = vrot.slane %v6442, 5
        %v7016 = vsel %vm1611, %v7014, %v7015
        %v7017 = vrot.slane %v7015, 4
        %v7018 = vrot.slane %v6468, 5
        %v7019 = vsel %vm1611, %v7017, %v7018
        %v7020 = vrot.slane %v6960, 5
        %v7021 = vrot.slane %v7020, 4
        %v7022 = vrot.slane %v6444, 5
        %v7023 = vsel %vm1611, %v7021, %v7022
        %v7024 = vrot.slane %v7022, 4
        %v7025 = vrot.slane %v6469, 5
        %v7026 = vsel %vm1611, %v7024, %v7025
        %v7027 = vrot.slane %v6961, 5
        %v7028 = vrot.slane %v7027, 4
        %v7029 = vrot.slane %v6446, 5
        %v7030 = vsel %vm1611, %v7028, %v7029
        %v7031 = vrot.slane %v7029, 4
        %v7032 = vrot.slane %v6470, 5
        %v7033 = vsel %vm1611, %v7031, %v7032
        %s7034 = scalar_lea.vmem [#allocation9], 128
        %v7035 = vld [vmem:[%s7034] sm:$0xf]
        %v7036 = vld [vmem:[%s7034 + $0x4] sm:$0xf]
        %v7037 = vld [vmem:[%s7034 + $0x8] sm:$0xf]
        %v7038 = vld [vmem:[%s7034 + $0xc] sm:$0xf]
        %v7039 = vld [vmem:[%s7034 + $0x10] sm:$0xf]
        %v7040 = vld [vmem:[%s7034 + $0x14] sm:$0xf]
        %v7041 = vld [vmem:[%s7034 + $0x18] sm:$0xf]
        %v7042 = vld [vmem:[%s7034 + $0x1c] sm:$0xf]
        %v7043 = vld [vmem:[%s7034 + $0x20] sm:$0xf]
        %v7044 = vld [vmem:[%s7034 + $0x24] sm:$0xf]
        %v7045 = vld [vmem:[%s7034 + $0x28] sm:$0xf]
        %v7046 = vld [vmem:[%s7034 + $0x2c] sm:$0xf]
        %v7047 = vld [vmem:[%s7034 + $0x30] sm:$0xf]
        %v7048 = vld [vmem:[%s7034 + $0x34] sm:$0xf]
        %v7049 = vld [vmem:[%s7034 + $0x38] sm:$0xf]
        %v7050 = vld [vmem:[%s7034 + $0x3c] sm:$0xf]
        %v7051 = vunpack.c.l.b16 %v6981
        %v7052 = vunpack.c.l.b16 %v6984
        %v7053 = vunpack.c.l.b16 %v6988
        %v7054 = vunpack.c.l.b16 %v6991
        %v7055 = vunpack.c.l.b16 %v6995
        %v7056 = vunpack.c.l.b16 %v6998
        %v7057 = vunpack.c.l.b16 %v7002
        %v7058 = vunpack.c.l.b16 %v7005
        %v7059 = vunpack.c.l.b16 %v7009
        %v7060 = vunpack.c.l.b16 %v7012
        %v7061 = vunpack.c.l.b16 %v7016
        %v7062 = vunpack.c.l.b16 %v7019
        %v7063 = vunpack.c.l.b16 %v7023
        %v7064 = vunpack.c.l.b16 %v7026
        %v7065 = vunpack.c.l.b16 %v7030
        %v7066 = vunpack.c.l.b16 %v7033
        %v7067 = vpack.c.b16 %v7052, %v7051
        %v7068 = vpack.c.b16 %v7054, %v7053
        %v7069 = vpack.c.b16 %v7056, %v7055
        %v7070 = vpack.c.b16 %v7058, %v7057
        %v7071 = vpack.c.b16 %v7060, %v7059
        %v7072 = vpack.c.b16 %v7062, %v7061
        %v7073 = vpack.c.b16 %v7064, %v7063
        %v7074 = vpack.c.b16 %v7066, %v7065
        %v7099 = vunpack.c.l.b16 %v7035
        %v7100 = vunpack.c.l.b16 %v7036
        %v7101 = vunpack.c.l.b16 %v7037
        %v7102 = vunpack.c.l.b16 %v7038
        %v7103 = vunpack.c.l.b16 %v7039
        %v7104 = vunpack.c.l.b16 %v7040
        %v7105 = vunpack.c.l.b16 %v7041
        %v7106 = vunpack.c.l.b16 %v7042
        %v7107 = vunpack.c.l.b16 %v7043
        %v7108 = vunpack.c.l.b16 %v7044
        %v7109 = vunpack.c.l.b16 %v7045
        %v7110 = vunpack.c.l.b16 %v7046
        %v7111 = vunpack.c.l.b16 %v7047
        %v7112 = vunpack.c.l.b16 %v7048
        %v7113 = vunpack.c.l.b16 %v7049
        %v7114 = vunpack.c.l.b16 %v7050
        %v7115 = vpack.c.b16 %v7100, %v7099
        %v7116 = vpack.c.b16 %v7102, %v7101
        %v7117 = vpack.c.b16 %v7104, %v7103
        %v7118 = vpack.c.b16 %v7106, %v7105
        %v7119 = vpack.c.b16 %v7108, %v7107
        %v7120 = vpack.c.b16 %v7110, %v7109
        %v7121 = vpack.c.b16 %v7112, %v7111
        %v7122 = vpack.c.b16 %v7114, %v7113
        %7131 = vmatpush.bf16.msra.mxu0 %v7122
        %7132 = vmatpush.bf16.msra.mxu0 %v7121
        %7133 = vmatpush.bf16.msra.mxu0 %v7120
        %7134 = vmatpush.bf16.msra.mxu0 %v7119
        %7135 = vmatpush.bf16.msra.mxu0 %v7118
        %7136 = vmatpush.bf16.msra.mxu0 %v7117
        %7137 = vmatpush.bf16.msra.mxu0 %v7116
        %7138 = vmatpush.bf16.msra.mxu0 %v7115
        %7139 = vmatmul.bf16.gmra.mxu0 %v7067
        %v7140 = vpop.f32.mrf.mxu0
        %v7141 = vadd.f32 0.0, %v7140
        %v7142 = vpop.f32.mrf.mxu0
        %v7143 = vadd.f32 0.0, %v7142
        %7144 = vmatmul.bf16.gmra.mxu0 %v7068
        %v7145 = vpop.f32.mrf.mxu0
        %v7146 = vadd.f32 0.0, %v7145
        %v7147 = vpop.f32.mrf.mxu0
        %v7148 = vadd.f32 0.0, %v7147
        %7149 = vmatmul.bf16.gmra.mxu0 %v7069
        %v7150 = vpop.f32.mrf.mxu0
        %v7151 = vadd.f32 0.0, %v7150
        %v7152 = vpop.f32.mrf.mxu0
        %v7153 = vadd.f32 0.0, %v7152
        %7154 = vmatmul.bf16.gmra.mxu0 %v7070
        %v7155 = vpop.f32.mrf.mxu0
        %v7156 = vadd.f32 0.0, %v7155
        %v7157 = vpop.f32.mrf.mxu0
        %v7158 = vadd.f32 0.0, %v7157
        %7159 = vmatmul.bf16.gmra.mxu0 %v7071
        %v7160 = vpop.f32.mrf.mxu0
        %v7161 = vadd.f32 0.0, %v7160
        %v7162 = vpop.f32.mrf.mxu0
        %v7163 = vadd.f32 0.0, %v7162
        %7164 = vmatmul.bf16.gmra.mxu0 %v7072
        %v7165 = vpop.f32.mrf.mxu0
        %v7166 = vadd.f32 0.0, %v7165
        %v7167 = vpop.f32.mrf.mxu0
        %v7168 = vadd.f32 0.0, %v7167
        %7169 = vmatmul.bf16.gmra.mxu0 %v7073
        %v7170 = vpop.f32.mrf.mxu0
        %v7171 = vadd.f32 0.0, %v7170
        %v7172 = vpop.f32.mrf.mxu0
        %v7173 = vadd.f32 0.0, %v7172
        %7174 = vmatmul.bf16.gmra.mxu0 %v7074
        %v7175 = vpop.f32.mrf.mxu0
        %v7176 = vadd.f32 0.0, %v7175
        %v7177 = vpop.f32.mrf.mxu0
        %v7178 = vadd.f32 0.0, %v7177
        %7179 = vdwg.mxu0
        %v7180 = vadd.f32 %v6915, %v7141
        %v7181 = vadd.f32 %v6917, %v7143
        %v7182 = vadd.f32 %v6920, %v7146
        %v7183 = vadd.f32 %v6922, %v7148
        %v7184 = vadd.f32 %v6925, %v7151
        %v7185 = vadd.f32 %v6927, %v7153
        %v7186 = vadd.f32 %v6930, %v7156
        %v7187 = vadd.f32 %v6932, %v7158
        %v7188 = vadd.f32 %v6935, %v7161
        %v7189 = vadd.f32 %v6937, %v7163
        %v7190 = vadd.f32 %v6940, %v7166
        %v7191 = vadd.f32 %v6942, %v7168
        %v7192 = vadd.f32 %v6945, %v7171
        %v7193 = vadd.f32 %v6947, %v7173
        %v7194 = vadd.f32 %v6950, %v7176
        %v7195 = vadd.f32 %v6952, %v7178
        %v7196 = vld [vmem:[%s3694] sm:$0xf]
        %v7197 = vld [vmem:[%s3694 + $0x4] sm:$0xf]
        %v7198 = vld [vmem:[%s3694 + $0xc] sm:$0xf]
        %v7199 = vld [vmem:[%s3694 + $0x10] sm:$0xf]
        %v7200 = vld [vmem:[%s3694 + $0x18] sm:$0xf]
        %v7201 = vld [vmem:[%s3694 + $0x1c] sm:$0xf]
        %v7202 = vld [vmem:[%s3694 + $0x24] sm:$0xf]
        %v7203 = vld [vmem:[%s3694 + $0x28] sm:$0xf]
        %v7204 = vld [vmem:[%s3694 + $0x30] sm:$0xf]
        %v7205 = vld [vmem:[%s3694 + $0x34] sm:$0xf]
        %v7206 = vld [vmem:[%s3694 + $0x3c] sm:$0xf]
        %v7207 = vld [vmem:[%s3694 + $0x40] sm:$0xf]
        %v7208 = vld [vmem:[%s3694 + $0x48] sm:$0xf]
        %v7209 = vld [vmem:[%s3694 + $0x4c] sm:$0xf]
        %v7210 = vld [vmem:[%s3694 + $0x54] sm:$0xf]
        %v7211 = vld [vmem:[%s3694 + $0x58] sm:$0xf]
        %s7212 = scalar_lea.vmem [#allocation9], 192
        %v7213 = vld [vmem:[%s7212] sm:$0xf]
        %v7214 = vld [vmem:[%s7212 + $0x4] sm:$0xf]
        %v7215 = vld [vmem:[%s7212 + $0x8] sm:$0xf]
        %v7216 = vld [vmem:[%s7212 + $0xc] sm:$0xf]
        %v7217 = vld [vmem:[%s7212 + $0x10] sm:$0xf]
        %v7218 = vld [vmem:[%s7212 + $0x14] sm:$0xf]
        %v7219 = vld [vmem:[%s7212 + $0x18] sm:$0xf]
        %v7220 = vld [vmem:[%s7212 + $0x1c] sm:$0xf]
        %v7221 = vld [vmem:[%s7212 + $0x20] sm:$0xf]
        %v7222 = vld [vmem:[%s7212 + $0x24] sm:$0xf]
        %v7223 = vld [vmem:[%s7212 + $0x28] sm:$0xf]
        %v7224 = vld [vmem:[%s7212 + $0x2c] sm:$0xf]
        %v7225 = vld [vmem:[%s7212 + $0x30] sm:$0xf]
        %v7226 = vld [vmem:[%s7212 + $0x34] sm:$0xf]
        %v7227 = vld [vmem:[%s7212 + $0x38] sm:$0xf]
        %v7228 = vld [vmem:[%s7212 + $0x3c] sm:$0xf]
        %v7245 = vunpack.c.l.b16 %v7196
        %v7246 = vunpack.c.l.b16 %v7197
        %v7247 = vunpack.c.l.b16 %v7198
        %v7248 = vunpack.c.l.b16 %v7199
        %v7249 = vunpack.c.l.b16 %v7200
        %v7250 = vunpack.c.l.b16 %v7201
        %v7251 = vunpack.c.l.b16 %v7202
        %v7252 = vunpack.c.l.b16 %v7203
        %v7253 = vunpack.c.l.b16 %v7204
        %v7254 = vunpack.c.l.b16 %v7205
        %v7255 = vunpack.c.l.b16 %v7206
        %v7256 = vunpack.c.l.b16 %v7207
        %v7257 = vunpack.c.l.b16 %v7208
        %v7258 = vunpack.c.l.b16 %v7209
        %v7259 = vunpack.c.l.b16 %v7210
        %v7260 = vunpack.c.l.b16 %v7211
        %v7261 = vpack.c.b16 %v7246, %v7245
        %v7262 = vpack.c.b16 %v7248, %v7247
        %v7263 = vpack.c.b16 %v7250, %v7249
        %v7264 = vpack.c.b16 %v7252, %v7251
        %v7265 = vpack.c.b16 %v7254, %v7253
        %v7266 = vpack.c.b16 %v7256, %v7255
        %v7267 = vpack.c.b16 %v7258, %v7257
        %v7268 = vpack.c.b16 %v7260, %v7259
        %v7293 = vunpack.c.l.b16 %v7213
        %v7294 = vunpack.c.l.b16 %v7214
        %v7295 = vunpack.c.l.b16 %v7215
        %v7296 = vunpack.c.l.b16 %v7216
        %v7297 = vunpack.c.l.b16 %v7217
        %v7298 = vunpack.c.l.b16 %v7218
        %v7299 = vunpack.c.l.b16 %v7219
        %v7300 = vunpack.c.l.b16 %v7220
        %v7301 = vunpack.c.l.b16 %v7221
        %v7302 = vunpack.c.l.b16 %v7222
        %v7303 = vunpack.c.l.b16 %v7223
        %v7304 = vunpack.c.l.b16 %v7224
        %v7305 = vunpack.c.l.b16 %v7225
        %v7306 = vunpack.c.l.b16 %v7226
        %v7307 = vunpack.c.l.b16 %v7227
        %v7308 = vunpack.c.l.b16 %v7228
        %v7309 = vpack.c.b16 %v7294, %v7293
        %v7310 = vpack.c.b16 %v7296, %v7295
        %v7311 = vpack.c.b16 %v7298, %v7297
        %v7312 = vpack.c.b16 %v7300, %v7299
        %v7313 = vpack.c.b16 %v7302, %v7301
        %v7314 = vpack.c.b16 %v7304, %v7303
        %v7315 = vpack.c.b16 %v7306, %v7305
        %v7316 = vpack.c.b16 %v7308, %v7307
        %7325 = vmatpush.bf16.msra.mxu0 %v7316
        %7326 = vmatpush.bf16.msra.mxu0 %v7315
        %7327 = vmatpush.bf16.msra.mxu0 %v7314
        %7328 = vmatpush.bf16.msra.mxu0 %v7313
        %7329 = vmatpush.bf16.msra.mxu0 %v7312
        %7330 = vmatpush.bf16.msra.mxu0 %v7311
        %7331 = vmatpush.bf16.msra.mxu0 %v7310
        %7332 = vmatpush.bf16.msra.mxu0 %v7309
        %7333 = vmatmul.bf16.gmra.mxu0 %v7261
        %v7334 = vpop.f32.mrf.mxu0
        %v7335 = vadd.f32 0.0, %v7334
        %v7336 = vpop.f32.mrf.mxu0
        %v7337 = vadd.f32 0.0, %v7336
        %7338 = vmatmul.bf16.gmra.mxu0 %v7262
        %v7339 = vpop.f32.mrf.mxu0
        %v7340 = vadd.f32 0.0, %v7339
        %v7341 = vpop.f32.mrf.mxu0
        %v7342 = vadd.f32 0.0, %v7341
        %7343 = vmatmul.bf16.gmra.mxu0 %v7263
        %v7344 = vpop.f32.mrf.mxu0
        %v7345 = vadd.f32 0.0, %v7344
        %v7346 = vpop.f32.mrf.mxu0
        %v7347 = vadd.f32 0.0, %v7346
        %7348 = vmatmul.bf16.gmra.mxu0 %v7264
        %v7349 = vpop.f32.mrf.mxu0
        %v7350 = vadd.f32 0.0, %v7349
        %v7351 = vpop.f32.mrf.mxu0
        %v7352 = vadd.f32 0.0, %v7351
        %7353 = vmatmul.bf16.gmra.mxu0 %v7265
        %v7354 = vpop.f32.mrf.mxu0
        %v7355 = vadd.f32 0.0, %v7354
        %v7356 = vpop.f32.mrf.mxu0
        %v7357 = vadd.f32 0.0, %v7356
        %7358 = vmatmul.bf16.gmra.mxu0 %v7266
        %v7359 = vpop.f32.mrf.mxu0
        %v7360 = vadd.f32 0.0, %v7359
        %v7361 = vpop.f32.mrf.mxu0
        %v7362 = vadd.f32 0.0, %v7361
        %7363 = vmatmul.bf16.gmra.mxu0 %v7267
        %v7364 = vpop.f32.mrf.mxu0
        %v7365 = vadd.f32 0.0, %v7364
        %v7366 = vpop.f32.mrf.mxu0
        %v7367 = vadd.f32 0.0, %v7366
        %7368 = vmatmul.bf16.gmra.mxu0 %v7268
        %v7369 = vpop.f32.mrf.mxu0
        %v7370 = vadd.f32 0.0, %v7369
        %v7371 = vpop.f32.mrf.mxu0
        %v7372 = vadd.f32 0.0, %v7371
        %7373 = vdwg.mxu0
        %v7374 = vadd.f32 %v7180, %v7335
        %v7375 = vadd.f32 %v7181, %v7337
        %v7376 = vadd.f32 %v7182, %v7340
        %v7377 = vadd.f32 %v7183, %v7342
        %v7378 = vadd.f32 %v7184, %v7345
        %v7379 = vadd.f32 %v7185, %v7347
        %v7380 = vadd.f32 %v7186, %v7350
        %v7381 = vadd.f32 %v7187, %v7352
        %v7382 = vadd.f32 %v7188, %v7355
        %v7383 = vadd.f32 %v7189, %v7357
        %v7384 = vadd.f32 %v7190, %v7360
        %v7385 = vadd.f32 %v7191, %v7362
        %v7386 = vadd.f32 %v7192, %v7365
        %v7387 = vadd.f32 %v7193, %v7367
        %v7388 = vadd.f32 %v7194, %v7370
        %v7389 = vadd.f32 %v7195, %v7372
        %v7390 = vld [vmem:[%s3694] sm:$0xf]
        %v7391 = vld [vmem:[%s3694 + $0x4] sm:$0xf]
        %v7392 = vld [vmem:[%s3694 + $0x8] sm:$0x1]
        %v7393 = vld [vmem:[%s3694 + $0xc] sm:$0xf]
        %v7394 = vld [vmem:[%s3694 + $0x10] sm:$0xf]
        %v7395 = vld [vmem:[%s3694 + $0x14] sm:$0x1]
        %v7396 = vld [vmem:[%s3694 + $0x18] sm:$0xf]
        %v7397 = vld [vmem:[%s3694 + $0x1c] sm:$0xf]
        %v7398 = vld [vmem:[%s3694 + $0x20] sm:$0x1]
        %v7399 = vld [vmem:[%s3694 + $0x24] sm:$0xf]
        %v7400 = vld [vmem:[%s3694 + $0x28] sm:$0xf]
        %v7401 = vld [vmem:[%s3694 + $0x2c] sm:$0x1]
        %v7402 = vld [vmem:[%s3694 + $0x30] sm:$0xf]
        %v7403 = vld [vmem:[%s3694 + $0x34] sm:$0xf]
        %v7404 = vld [vmem:[%s3694 + $0x38] sm:$0x1]
        %v7405 = vld [vmem:[%s3694 + $0x3c] sm:$0xf]
        %v7406 = vld [vmem:[%s3694 + $0x40] sm:$0xf]
        %v7407 = vld [vmem:[%s3694 + $0x44] sm:$0x1]
        %v7408 = vld [vmem:[%s3694 + $0x48] sm:$0xf]
        %v7409 = vld [vmem:[%s3694 + $0x4c] sm:$0xf]
        %v7410 = vld [vmem:[%s3694 + $0x50] sm:$0x1]
        %v7411 = vld [vmem:[%s3694 + $0x54] sm:$0xf]
        %v7412 = vld [vmem:[%s3694 + $0x58] sm:$0xf]
        %v7413 = vld [vmem:[%s3694 + $0x5c] sm:$0x1]
        %v7415 = vshrl.u32 %v7390, 16
        %v7417 = vrot.slane %v7415, 4
        %v7418 = vshll.u32 %v7390, 16
        %v7420 = vrot.slane %v7418, 5
        %v7421 = vor.u32 %v7417, %v7420
        %v7422 = vrot.slane %v7421, 4
        %v7424 = vshll.u32 %v7391, 16
        %v7426 = vrot.slane %v7424, 5
        %v7427 = vsel %vm1101, %v7422, %v7426
        %v7428 = vshrl.u32 %v7391, 16
        %v7430 = vrot.slane %v7428, 4
        %v7431 = vor.u32 %v7430, %v7426
        %v7432 = vrot.slane %v7431, 4
        %v7434 = vshll.u32 %v7392, 16
        %v7436 = vrot.slane %v7434, 5
        %v7437 = vsel %vm1101, %v7432, %v7436
        %v7439 = vshrl.u32 %v7393, 16
        %v7441 = vrot.slane %v7439, 4
        %v7442 = vshll.u32 %v7393, 16
        %v7444 = vrot.slane %v7442, 5
        %v7445 = vor.u32 %v7441, %v7444
        %v7446 = vrot.slane %v7445, 4
        %v7448 = vshll.u32 %v7394, 16
        %v7450 = vrot.slane %v7448, 5
        %v7451 = vsel %vm1101, %v7446, %v7450
        %v7452 = vshrl.u32 %v7394, 16
        %v7454 = vrot.slane %v7452, 4
        %v7455 = vor.u32 %v7454, %v7450
        %v7456 = vrot.slane %v7455, 4
        %v7458 = vshll.u32 %v7395, 16
        %v7460 = vrot.slane %v7458, 5
        %v7461 = vsel %vm1101, %v7456, %v7460
        %v7463 = vshrl.u32 %v7396, 16
        %v7465 = vrot.slane %v7463, 4
        %v7466 = vshll.u32 %v7396, 16
        %v7468 = vrot.slane %v7466, 5
        %v7469 = vor.u32 %v7465, %v7468
        %v7470 = vrot.slane %v7469, 4
        %v7472 = vshll.u32 %v7397, 16
        %v7474 = vrot.slane %v7472, 5
        %v7475 = vsel %vm1101, %v7470, %v7474
        %v7476 = vshrl.u32 %v7397, 16
        %v7478 = vrot.slane %v7476, 4
        %v7479 = vor.u32 %v7478, %v7474
        %v7480 = vrot.slane %v7479, 4
        %v7482 = vshll.u32 %v7398, 16
        %v7484 = vrot.slane %v7482, 5
        %v7485 = vsel %vm1101, %v7480, %v7484
        %v7487 = vshrl.u32 %v7399, 16
        %v7489 = vrot.slane %v7487, 4
        %v7490 = vshll.u32 %v7399, 16
        %v7492 = vrot.slane %v7490, 5
        %v7493 = vor.u32 %v7489, %v7492
        %v7494 = vrot.slane %v7493, 4
        %v7496 = vshll.u32 %v7400, 16
        %v7498 = vrot.slane %v7496, 5
        %v7499 = vsel %vm1101, %v7494, %v7498
        %v7500 = vshrl.u32 %v7400, 16
        %v7502 = vrot.slane %v7500, 4
        %v7503 = vor.u32 %v7502, %v7498
        %v7504 = vrot.slane %v7503, 4
        %v7506 = vshll.u32 %v7401, 16
        %v7508 = vrot.slane %v7506, 5
        %v7509 = vsel %vm1101, %v7504, %v7508
        %v7511 = vshrl.u32 %v7402, 16
        %v7513 = vrot.slane %v7511, 4
        %v7514 = vshll.u32 %v7402, 16
        %v7516 = vrot.slane %v7514, 5
        %v7517 = vor.u32 %v7513, %v7516
        %v7518 = vrot.slane %v7517, 4
        %v7520 = vshll.u32 %v7403, 16
        %v7522 = vrot.slane %v7520, 5
        %v7523 = vsel %vm1101, %v7518, %v7522
        %v7524 = vshrl.u32 %v7403, 16
        %v7526 = vrot.slane %v7524, 4
        %v7527 = vor.u32 %v7526, %v7522
        %v7528 = vrot.slane %v7527, 4
        %v7530 = vshll.u32 %v7404, 16
        %v7532 = vrot.slane %v7530, 5
        %v7533 = vsel %vm1101, %v7528, %v7532
        %v7535 = vshrl.u32 %v7405, 16
        %v7537 = vrot.slane %v7535, 4
        %v7538 = vshll.u32 %v7405, 16
        %v7540 = vrot.slane %v7538, 5
        %v7541 = vor.u32 %v7537, %v7540
        %v7542 = vrot.slane %v7541, 4
        %v7544 = vshll.u32 %v7406, 16
        %v7546 = vrot.slane %v7544, 5
        %v7547 = vsel %vm1101, %v7542, %v7546
        %v7548 = vshrl.u32 %v7406, 16
        %v7550 = vrot.slane %v7548, 4
        %v7551 = vor.u32 %v7550, %v7546
        %v7552 = vrot.slane %v7551, 4
        %v7554 = vshll.u32 %v7407, 16
        %v7556 = vrot.slane %v7554, 5
        %v7557 = vsel %vm1101, %v7552, %v7556
        %v7559 = vshrl.u32 %v7408, 16
        %v7561 = vrot.slane %v7559, 4
        %v7562 = vshll.u32 %v7408, 16
        %v7564 = vrot.slane %v7562, 5
        %v7565 = vor.u32 %v7561, %v7564
        %v7566 = vrot.slane %v7565, 4
        %v7568 = vshll.u32 %v7409, 16
        %v7570 = vrot.slane %v7568, 5
        %v7571 = vsel %vm1101, %v7566, %v7570
        %v7572 = vshrl.u32 %v7409, 16
        %v7574 = vrot.slane %v7572, 4
        %v7575 = vor.u32 %v7574, %v7570
        %v7576 = vrot.slane %v7575, 4
        %v7578 = vshll.u32 %v7410, 16
        %v7580 = vrot.slane %v7578, 5
        %v7581 = vsel %vm1101, %v7576, %v7580
        %v7583 = vshrl.u32 %v7411, 16
        %v7585 = vrot.slane %v7583, 4
        %v7586 = vshll.u32 %v7411, 16
        %v7588 = vrot.slane %v7586, 5
        %v7589 = vor.u32 %v7585, %v7588
        %v7590 = vrot.slane %v7589, 4
        %v7592 = vshll.u32 %v7412, 16
        %v7594 = vrot.slane %v7592, 5
        %v7595 = vsel %vm1101, %v7590, %v7594
        %v7596 = vshrl.u32 %v7412, 16
        %v7598 = vrot.slane %v7596, 4
        %v7599 = vor.u32 %v7598, %v7594
        %v7600 = vrot.slane %v7599, 4
        %v7602 = vshll.u32 %v7413, 16
        %v7604 = vrot.slane %v7602, 5
        %v7605 = vsel %vm1101, %v7600, %v7604
        %s7606 = scalar_lea.vmem [#allocation9], 256
        %v7607 = vld [vmem:[%s7606] sm:$0xf]
        %v7608 = vld [vmem:[%s7606 + $0x4] sm:$0xf]
        %v7609 = vld [vmem:[%s7606 + $0x8] sm:$0xf]
        %v7610 = vld [vmem:[%s7606 + $0xc] sm:$0xf]
        %v7611 = vld [vmem:[%s7606 + $0x10] sm:$0xf]
        %v7612 = vld [vmem:[%s7606 + $0x14] sm:$0xf]
        %v7613 = vld [vmem:[%s7606 + $0x18] sm:$0xf]
        %v7614 = vld [vmem:[%s7606 + $0x1c] sm:$0xf]
        %v7615 = vld [vmem:[%s7606 + $0x20] sm:$0xf]
        %v7616 = vld [vmem:[%s7606 + $0x24] sm:$0xf]
        %v7617 = vld [vmem:[%s7606 + $0x28] sm:$0xf]
        %v7618 = vld [vmem:[%s7606 + $0x2c] sm:$0xf]
        %v7619 = vld [vmem:[%s7606 + $0x30] sm:$0xf]
        %v7620 = vld [vmem:[%s7606 + $0x34] sm:$0xf]
        %v7621 = vld [vmem:[%s7606 + $0x38] sm:$0xf]
        %v7622 = vld [vmem:[%s7606 + $0x3c] sm:$0xf]
        %v7623 = vunpack.c.l.b16 %v7427
        %v7624 = vunpack.c.l.b16 %v7437
        %v7625 = vunpack.c.l.b16 %v7451
        %v7626 = vunpack.c.l.b16 %v7461
        %v7627 = vunpack.c.l.b16 %v7475
        %v7628 = vunpack.c.l.b16 %v7485
        %v7629 = vunpack.c.l.b16 %v7499
        %v7630 = vunpack.c.l.b16 %v7509
        %v7631 = vunpack.c.l.b16 %v7523
        %v7632 = vunpack.c.l.b16 %v7533
        %v7633 = vunpack.c.l.b16 %v7547
        %v7634 = vunpack.c.l.b16 %v7557
        %v7635 = vunpack.c.l.b16 %v7571
        %v7636 = vunpack.c.l.b16 %v7581
        %v7637 = vunpack.c.l.b16 %v7595
        %v7638 = vunpack.c.l.b16 %v7605
        %v7639 = vpack.c.b16 %v7624, %v7623
        %v7640 = vpack.c.b16 %v7626, %v7625
        %v7641 = vpack.c.b16 %v7628, %v7627
        %v7642 = vpack.c.b16 %v7630, %v7629
        %v7643 = vpack.c.b16 %v7632, %v7631
        %v7644 = vpack.c.b16 %v7634, %v7633
        %v7645 = vpack.c.b16 %v7636, %v7635
        %v7646 = vpack.c.b16 %v7638, %v7637
        %v7671 = vunpack.c.l.b16 %v7607
        %v7672 = vunpack.c.l.b16 %v7608
        %v7673 = vunpack.c.l.b16 %v7609
        %v7674 = vunpack.c.l.b16 %v7610
        %v7675 = vunpack.c.l.b16 %v7611
        %v7676 = vunpack.c.l.b16 %v7612
        %v7677 = vunpack.c.l.b16 %v7613
        %v7678 = vunpack.c.l.b16 %v7614
        %v7679 = vunpack.c.l.b16 %v7615
        %v7680 = vunpack.c.l.b16 %v7616
        %v7681 = vunpack.c.l.b16 %v7617
        %v7682 = vunpack.c.l.b16 %v7618
        %v7683 = vunpack.c.l.b16 %v7619
        %v7684 = vunpack.c.l.b16 %v7620
        %v7685 = vunpack.c.l.b16 %v7621
        %v7686 = vunpack.c.l.b16 %v7622
        %v7687 = vpack.c.b16 %v7672, %v7671
        %v7688 = vpack.c.b16 %v7674, %v7673
        %v7689 = vpack.c.b16 %v7676, %v7675
        %v7690 = vpack.c.b16 %v7678, %v7677
        %v7691 = vpack.c.b16 %v7680, %v7679
        %v7692 = vpack.c.b16 %v7682, %v7681
        %v7693 = vpack.c.b16 %v7684, %v7683
        %v7694 = vpack.c.b16 %v7686, %v7685
        %7703 = vmatpush.bf16.msra.mxu0 %v7694
        %7704 = vmatpush.bf16.msra.mxu0 %v7693
        %7705 = vmatpush.bf16.msra.mxu0 %v7692
        %7706 = vmatpush.bf16.msra.mxu0 %v7691
        %7707 = vmatpush.bf16.msra.mxu0 %v7690
        %7708 = vmatpush.bf16.msra.mxu0 %v7689
        %7709 = vmatpush.bf16.msra.mxu0 %v7688
        %7710 = vmatpush.bf16.msra.mxu0 %v7687
        %7711 = vmatmul.bf16.gmra.mxu0 %v7639
        %v7712 = vpop.f32.mrf.mxu0
        %v7713 = vadd.f32 0.0, %v7712
        %v7714 = vpop.f32.mrf.mxu0
        %v7715 = vadd.f32 0.0, %v7714
        %7716 = vmatmul.bf16.gmra.mxu0 %v7640
        %v7717 = vpop.f32.mrf.mxu0
        %v7718 = vadd.f32 0.0, %v7717
        %v7719 = vpop.f32.mrf.mxu0
        %v7720 = vadd.f32 0.0, %v7719
        %7721 = vmatmul.bf16.gmra.mxu0 %v7641
        %v7722 = vpop.f32.mrf.mxu0
        %v7723 = vadd.f32 0.0, %v7722
        %v7724 = vpop.f32.mrf.mxu0
        %v7725 = vadd.f32 0.0, %v7724
        %7726 = vmatmul.bf16.gmra.mxu0 %v7642
        %v7727 = vpop.f32.mrf.mxu0
        %v7728 = vadd.f32 0.0, %v7727
        %v7729 = vpop.f32.mrf.mxu0
        %v7730 = vadd.f32 0.0, %v7729
        %7731 = vmatmul.bf16.gmra.mxu0 %v7643
        %v7732 = vpop.f32.mrf.mxu0
        %v7733 = vadd.f32 0.0, %v7732
        %v7734 = vpop.f32.mrf.mxu0
        %v7735 = vadd.f32 0.0, %v7734
        %7736 = vmatmul.bf16.gmra.mxu0 %v7644
        %v7737 = vpop.f32.mrf.mxu0
        %v7738 = vadd.f32 0.0, %v7737
        %v7739 = vpop.f32.mrf.mxu0
        %v7740 = vadd.f32 0.0, %v7739
        %7741 = vmatmul.bf16.gmra.mxu0 %v7645
        %v7742 = vpop.f32.mrf.mxu0
        %v7743 = vadd.f32 0.0, %v7742
        %v7744 = vpop.f32.mrf.mxu0
        %v7745 = vadd.f32 0.0, %v7744
        %7746 = vmatmul.bf16.gmra.mxu0 %v7646
        %v7747 = vpop.f32.mrf.mxu0
        %v7748 = vadd.f32 0.0, %v7747
        %v7749 = vpop.f32.mrf.mxu0
        %v7750 = vadd.f32 0.0, %v7749
        %7751 = vdwg.mxu0
        %v7752 = vadd.f32 %v7374, %v7713
        %v7753 = vadd.f32 %v7375, %v7715
        %v7754 = vadd.f32 %v7376, %v7718
        %v7755 = vadd.f32 %v7377, %v7720
        %v7756 = vadd.f32 %v7378, %v7723
        %v7757 = vadd.f32 %v7379, %v7725
        %v7758 = vadd.f32 %v7380, %v7728
        %v7759 = vadd.f32 %v7381, %v7730
        %v7760 = vadd.f32 %v7382, %v7733
        %v7761 = vadd.f32 %v7383, %v7735
        %v7762 = vadd.f32 %v7384, %v7738
        %v7763 = vadd.f32 %v7385, %v7740
        %v7764 = vadd.f32 %v7386, %v7743
        %v7765 = vadd.f32 %v7387, %v7745
        %v7766 = vadd.f32 %v7388, %v7748
        %v7767 = vadd.f32 %v7389, %v7750
        %v7768 = vld [vmem:[%s3694] sm:$0xe]
        %v7769 = vld [vmem:[%s3694 + $0xc] sm:$0xe]
        %v7770 = vld [vmem:[%s3694 + $0x18] sm:$0xe]
        %v7771 = vld [vmem:[%s3694 + $0x24] sm:$0xe]
        %v7772 = vld [vmem:[%s3694 + $0x30] sm:$0xe]
        %v7773 = vld [vmem:[%s3694 + $0x3c] sm:$0xe]
        %v7774 = vld [vmem:[%s3694 + $0x48] sm:$0xe]
        %v7775 = vld [vmem:[%s3694 + $0x54] sm:$0xe]
        %v7800 = vrot.slane %v7768, 5
        %v7801 = vrot.slane %v7800, 4
        %v7802 = vrot.slane %v7391, 5
        %v7803 = vsel %vm1611, %v7801, %v7802
        %v7804 = vrot.slane %v7802, 4
        %v7805 = vrot.slane %v7392, 5
        %v7806 = vsel %vm1611, %v7804, %v7805
        %v7807 = vrot.slane %v7769, 5
        %v7808 = vrot.slane %v7807, 4
        %v7809 = vrot.slane %v7394, 5
        %v7810 = vsel %vm1611, %v7808, %v7809
        %v7811 = vrot.slane %v7809, 4
        %v7812 = vrot.slane %v7395, 5
        %v7813 = vsel %vm1611, %v7811, %v7812
        %v7814 = vrot.slane %v7770, 5
        %v7815 = vrot.slane %v7814, 4
        %v7816 = vrot.slane %v7397, 5
        %v7817 = vsel %vm1611, %v7815, %v7816
        %v7818 = vrot.slane %v7816, 4
        %v7819 = vrot.slane %v7398, 5
        %v7820 = vsel %vm1611, %v7818, %v7819
        %v7821 = vrot.slane %v7771, 5
        %v7822 = vrot.slane %v7821, 4
        %v7823 = vrot.slane %v7400, 5
        %v7824 = vsel %vm1611, %v7822, %v7823
        %v7825 = vrot.slane %v7823, 4
        %v7826 = vrot.slane %v7401, 5
        %v7827 = vsel %vm1611, %v7825, %v7826
        %v7828 = vrot.slane %v7772, 5
        %v7829 = vrot.slane %v7828, 4
        %v7830 = vrot.slane %v7403, 5
        %v7831 = vsel %vm1611, %v7829, %v7830
        %v7832 = vrot.slane %v7830, 4
        %v7833 = vrot.slane %v7404, 5
        %v7834 = vsel %vm1611, %v7832, %v7833
        %v7835 = vrot.slane %v7773, 5
        %v7836 = vrot.slane %v7835, 4
        %v7837 = vrot.slane %v7406, 5
        %v7838 = vsel %vm1611, %v7836, %v7837
        %v7839 = vrot.slane %v7837, 4
        %v7840 = vrot.slane %v7407, 5
        %v7841 = vsel %vm1611, %v7839, %v7840
        %v7842 = vrot.slane %v7774, 5
        %v7843 = vrot.slane %v7842, 4
        %v7844 = vrot.slane %v7409, 5
        %v7845 = vsel %vm1611, %v7843, %v7844
        %v7846 = vrot.slane %v7844, 4
        %v7847 = vrot.slane %v7410, 5
        %v7848 = vsel %vm1611, %v7846, %v7847
        %v7849 = vrot.slane %v7775, 5
        %v7850 = vrot.slane %v7849, 4
        %v7851 = vrot.slane %v7412, 5
        %v7852 = vsel %vm1611, %v7850, %v7851
        %v7853 = vrot.slane %v7851, 4
        %v7854 = vrot.slane %v7413, 5
        %v7855 = vsel %vm1611, %v7853, %v7854
        %s7856 = scalar_lea.vmem [#allocation9], 320
        %v7857 = vld [vmem:[%s7856] sm:$0xf]
        %v7858 = vld [vmem:[%s7856 + $0x4] sm:$0xf]
        %v7859 = vld [vmem:[%s7856 + $0x8] sm:$0xf]
        %v7860 = vld [vmem:[%s7856 + $0xc] sm:$0xf]
        %v7861 = vld [vmem:[%s7856 + $0x10] sm:$0xf]
        %v7862 = vld [vmem:[%s7856 + $0x14] sm:$0xf]
        %v7863 = vld [vmem:[%s7856 + $0x18] sm:$0xf]
        %v7864 = vld [vmem:[%s7856 + $0x1c] sm:$0xf]
        %v7865 = vld [vmem:[%s7856 + $0x20] sm:$0xf]
        %v7866 = vld [vmem:[%s7856 + $0x24] sm:$0xf]
        %v7867 = vld [vmem:[%s7856 + $0x28] sm:$0xf]
        %v7868 = vld [vmem:[%s7856 + $0x2c] sm:$0xf]
        %v7869 = vld [vmem:[%s7856 + $0x30] sm:$0xf]
        %v7870 = vld [vmem:[%s7856 + $0x34] sm:$0xf]
        %v7871 = vld [vmem:[%s7856 + $0x38] sm:$0xf]
        %v7872 = vld [vmem:[%s7856 + $0x3c] sm:$0xf]
        %v7873 = vunpack.c.l.b16 %v7803
        %v7874 = vunpack.c.l.b16 %v7806
        %v7875 = vunpack.c.l.b16 %v7810
        %v7876 = vunpack.c.l.b16 %v7813
        %v7877 = vunpack.c.l.b16 %v7817
        %v7878 = vunpack.c.l.b16 %v7820
        %v7879 = vunpack.c.l.b16 %v7824
        %v7880 = vunpack.c.l.b16 %v7827
        %v7881 = vunpack.c.l.b16 %v7831
        %v7882 = vunpack.c.l.b16 %v7834
        %v7883 = vunpack.c.l.b16 %v7838
        %v7884 = vunpack.c.l.b16 %v7841
        %v7885 = vunpack.c.l.b16 %v7845
        %v7886 = vunpack.c.l.b16 %v7848
        %v7887 = vunpack.c.l.b16 %v7852
        %v7888 = vunpack.c.l.b16 %v7855
        %v7889 = vpack.c.b16 %v7874, %v7873
        %v7890 = vpack.c.b16 %v7876, %v7875
        %v7891 = vpack.c.b16 %v7878, %v7877
        %v7892 = vpack.c.b16 %v7880, %v7879
        %v7893 = vpack.c.b16 %v7882, %v7881
        %v7894 = vpack.c.b16 %v7884, %v7883
        %v7895 = vpack.c.b16 %v7886, %v7885
        %v7896 = vpack.c.b16 %v7888, %v7887
        %v7921 = vunpack.c.l.b16 %v7857
        %v7922 = vunpack.c.l.b16 %v7858
        %v7923 = vunpack.c.l.b16 %v7859
        %v7924 = vunpack.c.l.b16 %v7860
        %v7925 = vunpack.c.l.b16 %v7861
        %v7926 = vunpack.c.l.b16 %v7862
        %v7927 = vunpack.c.l.b16 %v7863
        %v7928 = vunpack.c.l.b16 %v7864
        %v7929 = vunpack.c.l.b16 %v7865
        %v7930 = vunpack.c.l.b16 %v7866
        %v7931 = vunpack.c.l.b16 %v7867
        %v7932 = vunpack.c.l.b16 %v7868
        %v7933 = vunpack.c.l.b16 %v7869
        %v7934 = vunpack.c.l.b16 %v7870
        %v7935 = vunpack.c.l.b16 %v7871
        %v7936 = vunpack.c.l.b16 %v7872
        %v7937 = vpack.c.b16 %v7922, %v7921
        %v7938 = vpack.c.b16 %v7924, %v7923
        %v7939 = vpack.c.b16 %v7926, %v7925
        %v7940 = vpack.c.b16 %v7928, %v7927
        %v7941 = vpack.c.b16 %v7930, %v7929
        %v7942 = vpack.c.b16 %v7932, %v7931
        %v7943 = vpack.c.b16 %v7934, %v7933
        %v7944 = vpack.c.b16 %v7936, %v7935
        %7953 = vmatpush.bf16.msra.mxu0 %v7944
        %7954 = vmatpush.bf16.msra.mxu0 %v7943
        %7955 = vmatpush.bf16.msra.mxu0 %v7942
        %7956 = vmatpush.bf16.msra.mxu0 %v7941
        %7957 = vmatpush.bf16.msra.mxu0 %v7940
        %7958 = vmatpush.bf16.msra.mxu0 %v7939
        %7959 = vmatpush.bf16.msra.mxu0 %v7938
        %7960 = vmatpush.bf16.msra.mxu0 %v7937
        %7961 = vmatmul.bf16.gmra.mxu0 %v7889
        %v7962 = vpop.f32.mrf.mxu0
        %v7963 = vadd.f32 0.0, %v7962
        %v7964 = vpop.f32.mrf.mxu0
        %v7965 = vadd.f32 0.0, %v7964
        %7966 = vmatmul.bf16.gmra.mxu0 %v7890
        %v7967 = vpop.f32.mrf.mxu0
        %v7968 = vadd.f32 0.0, %v7967
        %v7969 = vpop.f32.mrf.mxu0
        %v7970 = vadd.f32 0.0, %v7969
        %7971 = vmatmul.bf16.gmra.mxu0 %v7891
        %v7972 = vpop.f32.mrf.mxu0
        %v7973 = vadd.f32 0.0, %v7972
        %v7974 = vpop.f32.mrf.mxu0
        %v7975 = vadd.f32 0.0, %v7974
        %7976 = vmatmul.bf16.gmra.mxu0 %v7892
        %v7977 = vpop.f32.mrf.mxu0
        %v7978 = vadd.f32 0.0, %v7977
        %v7979 = vpop.f32.mrf.mxu0
        %v7980 = vadd.f32 0.0, %v7979
        %7981 = vmatmul.bf16.gmra.mxu0 %v7893
        %v7982 = vpop.f32.mrf.mxu0
        %v7983 = vadd.f32 0.0, %v7982
        %v7984 = vpop.f32.mrf.mxu0
        %v7985 = vadd.f32 0.0, %v7984
        %7986 = vmatmul.bf16.gmra.mxu0 %v7894
        %v7987 = vpop.f32.mrf.mxu0
        %v7988 = vadd.f32 0.0, %v7987
        %v7989 = vpop.f32.mrf.mxu0
        %v7990 = vadd.f32 0.0, %v7989
        %7991 = vmatmul.bf16.gmra.mxu0 %v7895
        %v7992 = vpop.f32.mrf.mxu0
        %v7993 = vadd.f32 0.0, %v7992
        %v7994 = vpop.f32.mrf.mxu0
        %v7995 = vadd.f32 0.0, %v7994
        %7996 = vmatmul.bf16.gmra.mxu0 %v7896
        %v7997 = vpop.f32.mrf.mxu0
        %v7998 = vadd.f32 0.0, %v7997
        %v7999 = vpop.f32.mrf.mxu0
        %v8000 = vadd.f32 0.0, %v7999
        %8001 = vdwg.mxu0
        %v8002 = vadd.f32 %v7752, %v7963
        %v8003 = vadd.f32 %v7753, %v7965
        %v8004 = vadd.f32 %v7754, %v7968
        %v8005 = vadd.f32 %v7755, %v7970
        %v8006 = vadd.f32 %v7756, %v7973
        %v8007 = vadd.f32 %v7757, %v7975
        %v8008 = vadd.f32 %v7758, %v7978
        %v8009 = vadd.f32 %v7759, %v7980
        %v8010 = vadd.f32 %v7760, %v7983
        %v8011 = vadd.f32 %v7761, %v7985
        %v8012 = vadd.f32 %v7762, %v7988
        %v8013 = vadd.f32 %v7763, %v7990
        %v8014 = vadd.f32 %v7764, %v7993
        %v8015 = vadd.f32 %v7765, %v7995
        %v8016 = vadd.f32 %v7766, %v7998
        %v8017 = vadd.f32 %v7767, %v8000
        %s8018 = smul.addr %s2657, 4
        %s8019 = scalar_lea.vmem [#allocation3], %s8018
        %v8020 = vld [vmem:[%s8019] sm:$0xf]
        %v8021 = vld [vmem:[%s8019 + $0x4] sm:$0xf]
        %v8022 = vld [vmem:[%s8019 + $0xc] sm:$0xf]
        %v8023 = vld [vmem:[%s8019 + $0x10] sm:$0xf]
        %v8024 = vld [vmem:[%s8019 + $0x18] sm:$0xf]
        %v8025 = vld [vmem:[%s8019 + $0x1c] sm:$0xf]
        %v8026 = vld [vmem:[%s8019 + $0x24] sm:$0xf]
        %v8027 = vld [vmem:[%s8019 + $0x28] sm:$0xf]
        %v8028 = vld [vmem:[%s8019 + $0x30] sm:$0xf]
        %v8029 = vld [vmem:[%s8019 + $0x34] sm:$0xf]
        %v8030 = vld [vmem:[%s8019 + $0x3c] sm:$0xf]
        %v8031 = vld [vmem:[%s8019 + $0x40] sm:$0xf]
        %v8032 = vld [vmem:[%s8019 + $0x48] sm:$0xf]
        %v8033 = vld [vmem:[%s8019 + $0x4c] sm:$0xf]
        %v8034 = vld [vmem:[%s8019 + $0x54] sm:$0xf]
        %v8035 = vld [vmem:[%s8019 + $0x58] sm:$0xf]
        %s8036 = scalar_lea.vmem [#allocation9], 384
        %v8037 = vld [vmem:[%s8036] sm:$0xf]
        %v8038 = vld [vmem:[%s8036 + $0x4] sm:$0xf]
        %v8039 = vld [vmem:[%s8036 + $0x8] sm:$0xf]
        %v8040 = vld [vmem:[%s8036 + $0xc] sm:$0xf]
        %v8041 = vld [vmem:[%s8036 + $0x10] sm:$0xf]
        %v8042 = vld [vmem:[%s8036 + $0x14] sm:$0xf]
        %v8043 = vld [vmem:[%s8036 + $0x18] sm:$0xf]
        %v8044 = vld [vmem:[%s8036 + $0x1c] sm:$0xf]
        %v8045 = vld [vmem:[%s8036 + $0x20] sm:$0xf]
        %v8046 = vld [vmem:[%s8036 + $0x24] sm:$0xf]
        %v8047 = vld [vmem:[%s8036 + $0x28] sm:$0xf]
        %v8048 = vld [vmem:[%s8036 + $0x2c] sm:$0xf]
        %v8049 = vld [vmem:[%s8036 + $0x30] sm:$0xf]
        %v8050 = vld [vmem:[%s8036 + $0x34] sm:$0xf]
        %v8051 = vld [vmem:[%s8036 + $0x38] sm:$0xf]
        %v8052 = vld [vmem:[%s8036 + $0x3c] sm:$0xf]
        %v8069 = vunpack.c.l.b16 %v8020
        %v8070 = vunpack.c.l.b16 %v8021
        %v8071 = vunpack.c.l.b16 %v8022
        %v8072 = vunpack.c.l.b16 %v8023
        %v8073 = vunpack.c.l.b16 %v8024
        %v8074 = vunpack.c.l.b16 %v8025
        %v8075 = vunpack.c.l.b16 %v8026
        %v8076 = vunpack.c.l.b16 %v8027
        %v8077 = vunpack.c.l.b16 %v8028
        %v8078 = vunpack.c.l.b16 %v8029
        %v8079 = vunpack.c.l.b16 %v8030
        %v8080 = vunpack.c.l.b16 %v8031
        %v8081 = vunpack.c.l.b16 %v8032
        %v8082 = vunpack.c.l.b16 %v8033
        %v8083 = vunpack.c.l.b16 %v8034
        %v8084 = vunpack.c.l.b16 %v8035
        %v8085 = vpack.c.b16 %v8070, %v8069
        %v8086 = vpack.c.b16 %v8072, %v8071
        %v8087 = vpack.c.b16 %v8074, %v8073
        %v8088 = vpack.c.b16 %v8076, %v8075
        %v8089 = vpack.c.b16 %v8078, %v8077
        %v8090 = vpack.c.b16 %v8080, %v8079
        %v8091 = vpack.c.b16 %v8082, %v8081
        %v8092 = vpack.c.b16 %v8084, %v8083
        %v8117 = vunpack.c.l.b16 %v8037
        %v8118 = vunpack.c.l.b16 %v8038
        %v8119 = vunpack.c.l.b16 %v8039
        %v8120 = vunpack.c.l.b16 %v8040
        %v8121 = vunpack.c.l.b16 %v8041
        %v8122 = vunpack.c.l.b16 %v8042
        %v8123 = vunpack.c.l.b16 %v8043
        %v8124 = vunpack.c.l.b16 %v8044
        %v8125 = vunpack.c.l.b16 %v8045
        %v8126 = vunpack.c.l.b16 %v8046
        %v8127 = vunpack.c.l.b16 %v8047
        %v8128 = vunpack.c.l.b16 %v8048
        %v8129 = vunpack.c.l.b16 %v8049
        %v8130 = vunpack.c.l.b16 %v8050
        %v8131 = vunpack.c.l.b16 %v8051
        %v8132 = vunpack.c.l.b16 %v8052
        %v8133 = vpack.c.b16 %v8118, %v8117
        %v8134 = vpack.c.b16 %v8120, %v8119
        %v8135 = vpack.c.b16 %v8122, %v8121
        %v8136 = vpack.c.b16 %v8124, %v8123
        %v8137 = vpack.c.b16 %v8126, %v8125
        %v8138 = vpack.c.b16 %v8128, %v8127
        %v8139 = vpack.c.b16 %v8130, %v8129
        %v8140 = vpack.c.b16 %v8132, %v8131
        %8149 = vmatpush.bf16.msra.mxu0 %v8140
        %8150 = vmatpush.bf16.msra.mxu0 %v8139
        %8151 = vmatpush.bf16.msra.mxu0 %v8138
        %8152 = vmatpush.bf16.msra.mxu0 %v8137
        %8153 = vmatpush.bf16.msra.mxu0 %v8136
        %8154 = vmatpush.bf16.msra.mxu0 %v8135
        %8155 = vmatpush.bf16.msra.mxu0 %v8134
        %8156 = vmatpush.bf16.msra.mxu0 %v8133
        %8157 = vmatmul.bf16.gmra.mxu0 %v8085
        %v8158 = vpop.f32.mrf.mxu0
        %v8159 = vadd.f32 0.0, %v8158
        %v8160 = vpop.f32.mrf.mxu0
        %v8161 = vadd.f32 0.0, %v8160
        %8162 = vmatmul.bf16.gmra.mxu0 %v8086
        %v8163 = vpop.f32.mrf.mxu0
        %v8164 = vadd.f32 0.0, %v8163
        %v8165 = vpop.f32.mrf.mxu0
        %v8166 = vadd.f32 0.0, %v8165
        %8167 = vmatmul.bf16.gmra.mxu0 %v8087
        %v8168 = vpop.f32.mrf.mxu0
        %v8169 = vadd.f32 0.0, %v8168
        %v8170 = vpop.f32.mrf.mxu0
        %v8171 = vadd.f32 0.0, %v8170
        %8172 = vmatmul.bf16.gmra.mxu0 %v8088
        %v8173 = vpop.f32.mrf.mxu0
        %v8174 = vadd.f32 0.0, %v8173
        %v8175 = vpop.f32.mrf.mxu0
        %v8176 = vadd.f32 0.0, %v8175
        %8177 = vmatmul.bf16.gmra.mxu0 %v8089
        %v8178 = vpop.f32.mrf.mxu0
        %v8179 = vadd.f32 0.0, %v8178
        %v8180 = vpop.f32.mrf.mxu0
        %v8181 = vadd.f32 0.0, %v8180
        %8182 = vmatmul.bf16.gmra.mxu0 %v8090
        %v8183 = vpop.f32.mrf.mxu0
        %v8184 = vadd.f32 0.0, %v8183
        %v8185 = vpop.f32.mrf.mxu0
        %v8186 = vadd.f32 0.0, %v8185
        %8187 = vmatmul.bf16.gmra.mxu0 %v8091
        %v8188 = vpop.f32.mrf.mxu0
        %v8189 = vadd.f32 0.0, %v8188
        %v8190 = vpop.f32.mrf.mxu0
        %v8191 = vadd.f32 0.0, %v8190
        %8192 = vmatmul.bf16.gmra.mxu0 %v8092
        %v8193 = vpop.f32.mrf.mxu0
        %v8194 = vadd.f32 0.0, %v8193
        %v8195 = vpop.f32.mrf.mxu0
        %v8196 = vadd.f32 0.0, %v8195
        %8197 = vdwg.mxu0
        %v8198 = vadd.f32 %v8002, %v8159
        %v8199 = vadd.f32 %v8003, %v8161
        %v8200 = vadd.f32 %v8004, %v8164
        %v8201 = vadd.f32 %v8005, %v8166
        %v8202 = vadd.f32 %v8006, %v8169
        %v8203 = vadd.f32 %v8007, %v8171
        %v8204 = vadd.f32 %v8008, %v8174
        %v8205 = vadd.f32 %v8009, %v8176
        %v8206 = vadd.f32 %v8010, %v8179
        %v8207 = vadd.f32 %v8011, %v8181
        %v8208 = vadd.f32 %v8012, %v8184
        %v8209 = vadd.f32 %v8013, %v8186
        %v8210 = vadd.f32 %v8014, %v8189
        %v8211 = vadd.f32 %v8015, %v8191
        %v8212 = vadd.f32 %v8016, %v8194
        %v8213 = vadd.f32 %v8017, %v8196
        %v8214 = vld [vmem:[%s8019] sm:$0xf]
        %v8215 = vld [vmem:[%s8019 + $0x4] sm:$0xf]
        %v8216 = vld [vmem:[%s8019 + $0x8] sm:$0x1]
        %v8217 = vld [vmem:[%s8019 + $0xc] sm:$0xf]
        %v8218 = vld [vmem:[%s8019 + $0x10] sm:$0xf]
        %v8219 = vld [vmem:[%s8019 + $0x14] sm:$0x1]
        %v8220 = vld [vmem:[%s8019 + $0x18] sm:$0xf]
        %v8221 = vld [vmem:[%s8019 + $0x1c] sm:$0xf]
        %v8222 = vld [vmem:[%s8019 + $0x20] sm:$0x1]
        %v8223 = vld [vmem:[%s8019 + $0x24] sm:$0xf]
        %v8224 = vld [vmem:[%s8019 + $0x28] sm:$0xf]
        %v8225 = vld [vmem:[%s8019 + $0x2c] sm:$0x1]
        %v8226 = vld [vmem:[%s8019 + $0x30] sm:$0xf]
        %v8227 = vld [vmem:[%s8019 + $0x34] sm:$0xf]
        %v8228 = vld [vmem:[%s8019 + $0x38] sm:$0x1]
        %v8229 = vld [vmem:[%s8019 + $0x3c] sm:$0xf]
        %v8230 = vld [vmem:[%s8019 + $0x40] sm:$0xf]
        %v8231 = vld [vmem:[%s8019 + $0x44] sm:$0x1]
        %v8232 = vld [vmem:[%s8019 + $0x48] sm:$0xf]
        %v8233 = vld [vmem:[%s8019 + $0x4c] sm:$0xf]
        %v8234 = vld [vmem:[%s8019 + $0x50] sm:$0x1]
        %v8235 = vld [vmem:[%s8019 + $0x54] sm:$0xf]
        %v8236 = vld [vmem:[%s8019 + $0x58] sm:$0xf]
        %v8237 = vld [vmem:[%s8019 + $0x5c] sm:$0x1]
        %v8239 = vshrl.u32 %v8214, 16
        %v8241 = vrot.slane %v8239, 4
        %v8242 = vshll.u32 %v8214, 16
        %v8244 = vrot.slane %v8242, 5
        %v8245 = vor.u32 %v8241, %v8244
        %v8246 = vrot.slane %v8245, 4
        %v8248 = vshll.u32 %v8215, 16
        %v8250 = vrot.slane %v8248, 5
        %v8251 = vsel %vm1101, %v8246, %v8250
        %v8252 = vshrl.u32 %v8215, 16
        %v8254 = vrot.slane %v8252, 4
        %v8255 = vor.u32 %v8254, %v8250
        %v8256 = vrot.slane %v8255, 4
        %v8258 = vshll.u32 %v8216, 16
        %v8260 = vrot.slane %v8258, 5
        %v8261 = vsel %vm1101, %v8256, %v8260
        %v8263 = vshrl.u32 %v8217, 16
        %v8265 = vrot.slane %v8263, 4
        %v8266 = vshll.u32 %v8217, 16
        %v8268 = vrot.slane %v8266, 5
        %v8269 = vor.u32 %v8265, %v8268
        %v8270 = vrot.slane %v8269, 4
        %v8272 = vshll.u32 %v8218, 16
        %v8274 = vrot.slane %v8272, 5
        %v8275 = vsel %vm1101, %v8270, %v8274
        %v8276 = vshrl.u32 %v8218, 16
        %v8278 = vrot.slane %v8276, 4
        %v8279 = vor.u32 %v8278, %v8274
        %v8280 = vrot.slane %v8279, 4
        %v8282 = vshll.u32 %v8219, 16
        %v8284 = vrot.slane %v8282, 5
        %v8285 = vsel %vm1101, %v8280, %v8284
        %v8287 = vshrl.u32 %v8220, 16
        %v8289 = vrot.slane %v8287, 4
        %v8290 = vshll.u32 %v8220, 16
        %v8292 = vrot.slane %v8290, 5
        %v8293 = vor.u32 %v8289, %v8292
        %v8294 = vrot.slane %v8293, 4
        %v8296 = vshll.u32 %v8221, 16
        %v8298 = vrot.slane %v8296, 5
        %v8299 = vsel %vm1101, %v8294, %v8298
        %v8300 = vshrl.u32 %v8221, 16
        %v8302 = vrot.slane %v8300, 4
        %v8303 = vor.u32 %v8302, %v8298
        %v8304 = vrot.slane %v8303, 4
        %v8306 = vshll.u32 %v8222, 16
        %v8308 = vrot.slane %v8306, 5
        %v8309 = vsel %vm1101, %v8304, %v8308
        %v8311 = vshrl.u32 %v8223, 16
        %v8313 = vrot.slane %v8311, 4
        %v8314 = vshll.u32 %v8223, 16
        %v8316 = vrot.slane %v8314, 5
        %v8317 = vor.u32 %v8313, %v8316
        %v8318 = vrot.slane %v8317, 4
        %v8320 = vshll.u32 %v8224, 16
        %v8322 = vrot.slane %v8320, 5
        %v8323 = vsel %vm1101, %v8318, %v8322
        %v8324 = vshrl.u32 %v8224, 16
        %v8326 = vrot.slane %v8324, 4
        %v8327 = vor.u32 %v8326, %v8322
        %v8328 = vrot.slane %v8327, 4
        %v8330 = vshll.u32 %v8225, 16
        %v8332 = vrot.slane %v8330, 5
        %v8333 = vsel %vm1101, %v8328, %v8332
        %v8335 = vshrl.u32 %v8226, 16
        %v8337 = vrot.slane %v8335, 4
        %v8338 = vshll.u32 %v8226, 16
        %v8340 = vrot.slane %v8338, 5
        %v8341 = vor.u32 %v8337, %v8340
        %v8342 = vrot.slane %v8341, 4
        %v8344 = vshll.u32 %v8227, 16
        %v8346 = vrot.slane %v8344, 5
        %v8347 = vsel %vm1101, %v8342, %v8346
        %v8348 = vshrl.u32 %v8227, 16
        %v8350 = vrot.slane %v8348, 4
        %v8351 = vor.u32 %v8350, %v8346
        %v8352 = vrot.slane %v8351, 4
        %v8354 = vshll.u32 %v8228, 16
        %v8356 = vrot.slane %v8354, 5
        %v8357 = vsel %vm1101, %v8352, %v8356
        %v8359 = vshrl.u32 %v8229, 16
        %v8361 = vrot.slane %v8359, 4
        %v8362 = vshll.u32 %v8229, 16
        %v8364 = vrot.slane %v8362, 5
        %v8365 = vor.u32 %v8361, %v8364
        %v8366 = vrot.slane %v8365, 4
        %v8368 = vshll.u32 %v8230, 16
        %v8370 = vrot.slane %v8368, 5
        %v8371 = vsel %vm1101, %v8366, %v8370
        %v8372 = vshrl.u32 %v8230, 16
        %v8374 = vrot.slane %v8372, 4
        %v8375 = vor.u32 %v8374, %v8370
        %v8376 = vrot.slane %v8375, 4
        %v8378 = vshll.u32 %v8231, 16
        %v8380 = vrot.slane %v8378, 5
        %v8381 = vsel %vm1101, %v8376, %v8380
        %v8383 = vshrl.u32 %v8232, 16
        %v8385 = vrot.slane %v8383, 4
        %v8386 = vshll.u32 %v8232, 16
        %v8388 = vrot.slane %v8386, 5
        %v8389 = vor.u32 %v8385, %v8388
        %v8390 = vrot.slane %v8389, 4
        %v8392 = vshll.u32 %v8233, 16
        %v8394 = vrot.slane %v8392, 5
        %v8395 = vsel %vm1101, %v8390, %v8394
        %v8396 = vshrl.u32 %v8233, 16
        %v8398 = vrot.slane %v8396, 4
        %v8399 = vor.u32 %v8398, %v8394
        %v8400 = vrot.slane %v8399, 4
        %v8402 = vshll.u32 %v8234, 16
        %v8404 = vrot.slane %v8402, 5
        %v8405 = vsel %vm1101, %v8400, %v8404
        %v8407 = vshrl.u32 %v8235, 16
        %v8409 = vrot.slane %v8407, 4
        %v8410 = vshll.u32 %v8235, 16
        %v8412 = vrot.slane %v8410, 5
        %v8413 = vor.u32 %v8409, %v8412
        %v8414 = vrot.slane %v8413, 4
        %v8416 = vshll.u32 %v8236, 16
        %v8418 = vrot.slane %v8416, 5
        %v8419 = vsel %vm1101, %v8414, %v8418
        %v8420 = vshrl.u32 %v8236, 16
        %v8422 = vrot.slane %v8420, 4
        %v8423 = vor.u32 %v8422, %v8418
        %v8424 = vrot.slane %v8423, 4
        %v8426 = vshll.u32 %v8237, 16
        %v8428 = vrot.slane %v8426, 5
        %v8429 = vsel %vm1101, %v8424, %v8428
        %s8430 = scalar_lea.vmem [#allocation9], 448
        %v8431 = vld [vmem:[%s8430] sm:$0xf]
        %v8432 = vld [vmem:[%s8430 + $0x4] sm:$0xf]
        %v8433 = vld [vmem:[%s8430 + $0x8] sm:$0xf]
        %v8434 = vld [vmem:[%s8430 + $0xc] sm:$0xf]
        %v8435 = vld [vmem:[%s8430 + $0x10] sm:$0xf]
        %v8436 = vld [vmem:[%s8430 + $0x14] sm:$0xf]
        %v8437 = vld [vmem:[%s8430 + $0x18] sm:$0xf]
        %v8438 = vld [vmem:[%s8430 + $0x1c] sm:$0xf]
        %v8439 = vld [vmem:[%s8430 + $0x20] sm:$0xf]
        %v8440 = vld [vmem:[%s8430 + $0x24] sm:$0xf]
        %v8441 = vld [vmem:[%s8430 + $0x28] sm:$0xf]
        %v8442 = vld [vmem:[%s8430 + $0x2c] sm:$0xf]
        %v8443 = vld [vmem:[%s8430 + $0x30] sm:$0xf]
        %v8444 = vld [vmem:[%s8430 + $0x34] sm:$0xf]
        %v8445 = vld [vmem:[%s8430 + $0x38] sm:$0xf]
        %v8446 = vld [vmem:[%s8430 + $0x3c] sm:$0xf]
        %v8447 = vunpack.c.l.b16 %v8251
        %v8448 = vunpack.c.l.b16 %v8261
        %v8449 = vunpack.c.l.b16 %v8275
        %v8450 = vunpack.c.l.b16 %v8285
        %v8451 = vunpack.c.l.b16 %v8299
        %v8452 = vunpack.c.l.b16 %v8309
        %v8453 = vunpack.c.l.b16 %v8323
        %v8454 = vunpack.c.l.b16 %v8333
        %v8455 = vunpack.c.l.b16 %v8347
        %v8456 = vunpack.c.l.b16 %v8357
        %v8457 = vunpack.c.l.b16 %v8371
        %v8458 = vunpack.c.l.b16 %v8381
        %v8459 = vunpack.c.l.b16 %v8395
        %v8460 = vunpack.c.l.b16 %v8405
        %v8461 = vunpack.c.l.b16 %v8419
        %v8462 = vunpack.c.l.b16 %v8429
        %v8463 = vpack.c.b16 %v8448, %v8447
        %v8464 = vpack.c.b16 %v8450, %v8449
        %v8465 = vpack.c.b16 %v8452, %v8451
        %v8466 = vpack.c.b16 %v8454, %v8453
        %v8467 = vpack.c.b16 %v8456, %v8455
        %v8468 = vpack.c.b16 %v8458, %v8457
        %v8469 = vpack.c.b16 %v8460, %v8459
        %v8470 = vpack.c.b16 %v8462, %v8461
        %v8495 = vunpack.c.l.b16 %v8431
        %v8496 = vunpack.c.l.b16 %v8432
        %v8497 = vunpack.c.l.b16 %v8433
        %v8498 = vunpack.c.l.b16 %v8434
        %v8499 = vunpack.c.l.b16 %v8435
        %v8500 = vunpack.c.l.b16 %v8436
        %v8501 = vunpack.c.l.b16 %v8437
        %v8502 = vunpack.c.l.b16 %v8438
        %v8503 = vunpack.c.l.b16 %v8439
        %v8504 = vunpack.c.l.b16 %v8440
        %v8505 = vunpack.c.l.b16 %v8441
        %v8506 = vunpack.c.l.b16 %v8442
        %v8507 = vunpack.c.l.b16 %v8443
        %v8508 = vunpack.c.l.b16 %v8444
        %v8509 = vunpack.c.l.b16 %v8445
        %v8510 = vunpack.c.l.b16 %v8446
        %v8511 = vpack.c.b16 %v8496, %v8495
        %v8512 = vpack.c.b16 %v8498, %v8497
        %v8513 = vpack.c.b16 %v8500, %v8499
        %v8514 = vpack.c.b16 %v8502, %v8501
        %v8515 = vpack.c.b16 %v8504, %v8503
        %v8516 = vpack.c.b16 %v8506, %v8505
        %v8517 = vpack.c.b16 %v8508, %v8507
        %v8518 = vpack.c.b16 %v8510, %v8509
        %8527 = vmatpush.bf16.msra.mxu0 %v8518
        %8528 = vmatpush.bf16.msra.mxu0 %v8517
        %8529 = vmatpush.bf16.msra.mxu0 %v8516
        %8530 = vmatpush.bf16.msra.mxu0 %v8515
        %8531 = vmatpush.bf16.msra.mxu0 %v8514
        %8532 = vmatpush.bf16.msra.mxu0 %v8513
        %8533 = vmatpush.bf16.msra.mxu0 %v8512
        %8534 = vmatpush.bf16.msra.mxu0 %v8511
        %8535 = vmatmul.bf16.gmra.mxu0 %v8463
        %v8536 = vpop.f32.mrf.mxu0
        %v8537 = vadd.f32 0.0, %v8536
        %v8538 = vpop.f32.mrf.mxu0
        %v8539 = vadd.f32 0.0, %v8538
        %8540 = vmatmul.bf16.gmra.mxu0 %v8464
        %v8541 = vpop.f32.mrf.mxu0
        %v8542 = vadd.f32 0.0, %v8541
        %v8543 = vpop.f32.mrf.mxu0
        %v8544 = vadd.f32 0.0, %v8543
        %8545 = vmatmul.bf16.gmra.mxu0 %v8465
        %v8546 = vpop.f32.mrf.mxu0
        %v8547 = vadd.f32 0.0, %v8546
        %v8548 = vpop.f32.mrf.mxu0
        %v8549 = vadd.f32 0.0, %v8548
        %8550 = vmatmul.bf16.gmra.mxu0 %v8466
        %v8551 = vpop.f32.mrf.mxu0
        %v8552 = vadd.f32 0.0, %v8551
        %v8553 = vpop.f32.mrf.mxu0
        %v8554 = vadd.f32 0.0, %v8553
        %8555 = vmatmul.bf16.gmra.mxu0 %v8467
        %v8556 = vpop.f32.mrf.mxu0
        %v8557 = vadd.f32 0.0, %v8556
        %v8558 = vpop.f32.mrf.mxu0
        %v8559 = vadd.f32 0.0, %v8558
        %8560 = vmatmul.bf16.gmra.mxu0 %v8468
        %v8561 = vpop.f32.mrf.mxu0
        %v8562 = vadd.f32 0.0, %v8561
        %v8563 = vpop.f32.mrf.mxu0
        %v8564 = vadd.f32 0.0, %v8563
        %8565 = vmatmul.bf16.gmra.mxu0 %v8469
        %v8566 = vpop.f32.mrf.mxu0
        %v8567 = vadd.f32 0.0, %v8566
        %v8568 = vpop.f32.mrf.mxu0
        %v8569 = vadd.f32 0.0, %v8568
        %8570 = vmatmul.bf16.gmra.mxu0 %v8470
        %v8571 = vpop.f32.mrf.mxu0
        %v8572 = vadd.f32 0.0, %v8571
        %v8573 = vpop.f32.mrf.mxu0
        %v8574 = vadd.f32 0.0, %v8573
        %8575 = vdwg.mxu0
        %v8576 = vadd.f32 %v8198, %v8537
        %v8577 = vadd.f32 %v8199, %v8539
        %v8578 = vadd.f32 %v8200, %v8542
        %v8579 = vadd.f32 %v8201, %v8544
        %v8580 = vadd.f32 %v8202, %v8547
        %v8581 = vadd.f32 %v8203, %v8549
        %v8582 = vadd.f32 %v8204, %v8552
        %v8583 = vadd.f32 %v8205, %v8554
        %v8584 = vadd.f32 %v8206, %v8557
        %v8585 = vadd.f32 %v8207, %v8559
        %v8586 = vadd.f32 %v8208, %v8562
        %v8587 = vadd.f32 %v8209, %v8564
        %v8588 = vadd.f32 %v8210, %v8567
        %v8589 = vadd.f32 %v8211, %v8569
        %v8590 = vadd.f32 %v8212, %v8572
        %v8591 = vadd.f32 %v8213, %v8574
        %v8592 = vld [vmem:[%s8019] sm:$0xe]
        %v8593 = vld [vmem:[%s8019 + $0xc] sm:$0xe]
        %v8594 = vld [vmem:[%s8019 + $0x18] sm:$0xe]
        %v8595 = vld [vmem:[%s8019 + $0x24] sm:$0xe]
        %v8596 = vld [vmem:[%s8019 + $0x30] sm:$0xe]
        %v8597 = vld [vmem:[%s8019 + $0x3c] sm:$0xe]
        %v8598 = vld [vmem:[%s8019 + $0x48] sm:$0xe]
        %v8599 = vld [vmem:[%s8019 + $0x54] sm:$0xe]
        %v8624 = vrot.slane %v8592, 5
        %v8625 = vrot.slane %v8624, 4
        %v8626 = vrot.slane %v8215, 5
        %v8627 = vsel %vm1611, %v8625, %v8626
        %v8628 = vrot.slane %v8626, 4
        %v8629 = vrot.slane %v8216, 5
        %v8630 = vsel %vm1611, %v8628, %v8629
        %v8631 = vrot.slane %v8593, 5
        %v8632 = vrot.slane %v8631, 4
        %v8633 = vrot.slane %v8218, 5
        %v8634 = vsel %vm1611, %v8632, %v8633
        %v8635 = vrot.slane %v8633, 4
        %v8636 = vrot.slane %v8219, 5
        %v8637 = vsel %vm1611, %v8635, %v8636
        %v8638 = vrot.slane %v8594, 5
        %v8639 = vrot.slane %v8638, 4
        %v8640 = vrot.slane %v8221, 5
        %v8641 = vsel %vm1611, %v8639, %v8640
        %v8642 = vrot.slane %v8640, 4
        %v8643 = vrot.slane %v8222, 5
        %v8644 = vsel %vm1611, %v8642, %v8643
        %v8645 = vrot.slane %v8595, 5
        %v8646 = vrot.slane %v8645, 4
        %v8647 = vrot.slane %v8224, 5
        %v8648 = vsel %vm1611, %v8646, %v8647
        %v8649 = vrot.slane %v8647, 4
        %v8650 = vrot.slane %v8225, 5
        %v8651 = vsel %vm1611, %v8649, %v8650
        %v8652 = vrot.slane %v8596, 5
        %v8653 = vrot.slane %v8652, 4
        %v8654 = vrot.slane %v8227, 5
        %v8655 = vsel %vm1611, %v8653, %v8654
        %v8656 = vrot.slane %v8654, 4
        %v8657 = vrot.slane %v8228, 5
        %v8658 = vsel %vm1611, %v8656, %v8657
        %v8659 = vrot.slane %v8597, 5
        %v8660 = vrot.slane %v8659, 4
        %v8661 = vrot.slane %v8230, 5
        %v8662 = vsel %vm1611, %v8660, %v8661
        %v8663 = vrot.slane %v8661, 4
        %v8664 = vrot.slane %v8231, 5
        %v8665 = vsel %vm1611, %v8663, %v8664
        %v8666 = vrot.slane %v8598, 5
        %v8667 = vrot.slane %v8666, 4
        %v8668 = vrot.slane %v8233, 5
        %v8669 = vsel %vm1611, %v8667, %v8668
        %v8670 = vrot.slane %v8668, 4
        %v8671 = vrot.slane %v8234, 5
        %v8672 = vsel %vm1611, %v8670, %v8671
        %v8673 = vrot.slane %v8599, 5
        %v8674 = vrot.slane %v8673, 4
        %v8675 = vrot.slane %v8236, 5
        %v8676 = vsel %vm1611, %v8674, %v8675
        %v8677 = vrot.slane %v8675, 4
        %v8678 = vrot.slane %v8237, 5
        %v8679 = vsel %vm1611, %v8677, %v8678
        %s8680 = scalar_lea.vmem [#allocation9], 512
        %v8681 = vld [vmem:[%s8680] sm:$0xf]
        %v8682 = vld [vmem:[%s8680 + $0x4] sm:$0xf]
        %v8683 = vld [vmem:[%s8680 + $0x8] sm:$0xf]
        %v8684 = vld [vmem:[%s8680 + $0xc] sm:$0xf]
        %v8685 = vld [vmem:[%s8680 + $0x10] sm:$0xf]
        %v8686 = vld [vmem:[%s8680 + $0x14] sm:$0xf]
        %v8687 = vld [vmem:[%s8680 + $0x18] sm:$0xf]
        %v8688 = vld [vmem:[%s8680 + $0x1c] sm:$0xf]
        %v8689 = vld [vmem:[%s8680 + $0x20] sm:$0xf]
        %v8690 = vld [vmem:[%s8680 + $0x24] sm:$0xf]
        %v8691 = vld [vmem:[%s8680 + $0x28] sm:$0xf]
        %v8692 = vld [vmem:[%s8680 + $0x2c] sm:$0xf]
        %v8693 = vld [vmem:[%s8680 + $0x30] sm:$0xf]
        %v8694 = vld [vmem:[%s8680 + $0x34] sm:$0xf]
        %v8695 = vld [vmem:[%s8680 + $0x38] sm:$0xf]
        %v8696 = vld [vmem:[%s8680 + $0x3c] sm:$0xf]
        %v8697 = vunpack.c.l.b16 %v8627
        %v8698 = vunpack.c.l.b16 %v8630
        %v8699 = vunpack.c.l.b16 %v8634
        %v8700 = vunpack.c.l.b16 %v8637
        %v8701 = vunpack.c.l.b16 %v8641
        %v8702 = vunpack.c.l.b16 %v8644
        %v8703 = vunpack.c.l.b16 %v8648
        %v8704 = vunpack.c.l.b16 %v8651
        %v8705 = vunpack.c.l.b16 %v8655
        %v8706 = vunpack.c.l.b16 %v8658
        %v8707 = vunpack.c.l.b16 %v8662
        %v8708 = vunpack.c.l.b16 %v8665
        %v8709 = vunpack.c.l.b16 %v8669
        %v8710 = vunpack.c.l.b16 %v8672
        %v8711 = vunpack.c.l.b16 %v8676
        %v8712 = vunpack.c.l.b16 %v8679
        %v8713 = vpack.c.b16 %v8698, %v8697
        %v8714 = vpack.c.b16 %v8700, %v8699
        %v8715 = vpack.c.b16 %v8702, %v8701
        %v8716 = vpack.c.b16 %v8704, %v8703
        %v8717 = vpack.c.b16 %v8706, %v8705
        %v8718 = vpack.c.b16 %v8708, %v8707
        %v8719 = vpack.c.b16 %v8710, %v8709
        %v8720 = vpack.c.b16 %v8712, %v8711
        %v8745 = vunpack.c.l.b16 %v8681
        %v8746 = vunpack.c.l.b16 %v8682
        %v8747 = vunpack.c.l.b16 %v8683
        %v8748 = vunpack.c.l.b16 %v8684
        %v8749 = vunpack.c.l.b16 %v8685
        %v8750 = vunpack.c.l.b16 %v8686
        %v8751 = vunpack.c.l.b16 %v8687
        %v8752 = vunpack.c.l.b16 %v8688
        %v8753 = vunpack.c.l.b16 %v8689
        %v8754 = vunpack.c.l.b16 %v8690
        %v8755 = vunpack.c.l.b16 %v8691
        %v8756 = vunpack.c.l.b16 %v8692
        %v8757 = vunpack.c.l.b16 %v8693
        %v8758 = vunpack.c.l.b16 %v8694
        %v8759 = vunpack.c.l.b16 %v8695
        %v8760 = vunpack.c.l.b16 %v8696
        %v8761 = vpack.c.b16 %v8746, %v8745
        %v8762 = vpack.c.b16 %v8748, %v8747
        %v8763 = vpack.c.b16 %v8750, %v8749
        %v8764 = vpack.c.b16 %v8752, %v8751
        %v8765 = vpack.c.b16 %v8754, %v8753
        %v8766 = vpack.c.b16 %v8756, %v8755
        %v8767 = vpack.c.b16 %v8758, %v8757
        %v8768 = vpack.c.b16 %v8760, %v8759
        %8777 = vmatpush.bf16.msra.mxu0 %v8768
        %8778 = vmatpush.bf16.msra.mxu0 %v8767
        %8779 = vmatpush.bf16.msra.mxu0 %v8766
        %8780 = vmatpush.bf16.msra.mxu0 %v8765
        %8781 = vmatpush.bf16.msra.mxu0 %v8764
        %8782 = vmatpush.bf16.msra.mxu0 %v8763
        %8783 = vmatpush.bf16.msra.mxu0 %v8762
        %8784 = vmatpush.bf16.msra.mxu0 %v8761
        %8785 = vmatmul.bf16.gmra.mxu0 %v8713
        %v8786 = vpop.f32.mrf.mxu0
        %v8787 = vadd.f32 0.0, %v8786
        %v8788 = vpop.f32.mrf.mxu0
        %v8789 = vadd.f32 0.0, %v8788
        %8790 = vmatmul.bf16.gmra.mxu0 %v8714
        %v8791 = vpop.f32.mrf.mxu0
        %v8792 = vadd.f32 0.0, %v8791
        %v8793 = vpop.f32.mrf.mxu0
        %v8794 = vadd.f32 0.0, %v8793
        %8795 = vmatmul.bf16.gmra.mxu0 %v8715
        %v8796 = vpop.f32.mrf.mxu0
        %v8797 = vadd.f32 0.0, %v8796
        %v8798 = vpop.f32.mrf.mxu0
        %v8799 = vadd.f32 0.0, %v8798
        %8800 = vmatmul.bf16.gmra.mxu0 %v8716
        %v8801 = vpop.f32.mrf.mxu0
        %v8802 = vadd.f32 0.0, %v8801
        %v8803 = vpop.f32.mrf.mxu0
        %v8804 = vadd.f32 0.0, %v8803
        %8805 = vmatmul.bf16.gmra.mxu0 %v8717
        %v8806 = vpop.f32.mrf.mxu0
        %v8807 = vadd.f32 0.0, %v8806
        %v8808 = vpop.f32.mrf.mxu0
        %v8809 = vadd.f32 0.0, %v8808
        %8810 = vmatmul.bf16.gmra.mxu0 %v8718
        %v8811 = vpop.f32.mrf.mxu0
        %v8812 = vadd.f32 0.0, %v8811
        %v8813 = vpop.f32.mrf.mxu0
        %v8814 = vadd.f32 0.0, %v8813
        %8815 = vmatmul.bf16.gmra.mxu0 %v8719
        %v8816 = vpop.f32.mrf.mxu0
        %v8817 = vadd.f32 0.0, %v8816
        %v8818 = vpop.f32.mrf.mxu0
        %v8819 = vadd.f32 0.0, %v8818
        %8820 = vmatmul.bf16.gmra.mxu0 %v8720
        %v8821 = vpop.f32.mrf.mxu0
        %v8822 = vadd.f32 0.0, %v8821
        %v8823 = vpop.f32.mrf.mxu0
        %v8824 = vadd.f32 0.0, %v8823
        %8825 = vdwg.mxu0
        %v8826 = vadd.f32 %v8576, %v8787
        %v8827 = vadd.f32 %v8577, %v8789
        %v8828 = vadd.f32 %v8578, %v8792
        %v8829 = vadd.f32 %v8579, %v8794
        %v8830 = vadd.f32 %v8580, %v8797
        %v8831 = vadd.f32 %v8581, %v8799
        %v8832 = vadd.f32 %v8582, %v8802
        %v8833 = vadd.f32 %v8583, %v8804
        %v8834 = vadd.f32 %v8584, %v8807
        %v8835 = vadd.f32 %v8585, %v8809
        %v8836 = vadd.f32 %v8586, %v8812
        %v8837 = vadd.f32 %v8587, %v8814
        %v8838 = vadd.f32 %v8588, %v8817
        %v8839 = vadd.f32 %v8589, %v8819
        %v8840 = vadd.f32 %v8590, %v8822
        %v8841 = vadd.f32 %v8591, %v8824
        %v8843 = vperm.slane %v1055, 0
        %v8845 = vadd.f32 %v8826, %v8843
        %v8846 = vadd.f32 %v8827, %v8843
        %v8847 = vadd.f32 %v8828, %v8843
        %v8848 = vadd.f32 %v8829, %v8843
        %v8849 = vadd.f32 %v8830, %v8843
        %v8850 = vadd.f32 %v8831, %v8843
        %v8851 = vadd.f32 %v8832, %v8843
        %v8852 = vadd.f32 %v8833, %v8843
        %v8853 = vadd.f32 %v8834, %v8843
        %v8854 = vadd.f32 %v8835, %v8843
        %v8855 = vadd.f32 %v8836, %v8843
        %v8856 = vadd.f32 %v8837, %v8843
        %v8857 = vadd.f32 %v8838, %v8843
        %v8858 = vadd.f32 %v8839, %v8843
        %v8859 = vadd.f32 %v8840, %v8843
        %v8860 = vadd.f32 %v8841, %v8843
        %v8861 = vld [vmem:[%s1833] sm:$0xf]
        %v8862 = vld [vmem:[%s1833 + $0x4] sm:$0xf]
        %v8863 = vld [vmem:[%s1833 + $0x8] sm:$0x1]
        %v8864 = vld [vmem:[%s1833 + $0xc] sm:$0xf]
        %v8865 = vld [vmem:[%s1833 + $0x10] sm:$0xf]
        %v8866 = vld [vmem:[%s1833 + $0x14] sm:$0x1]
        %v8867 = vld [vmem:[%s1833 + $0x18] sm:$0xf]
        %v8868 = vld [vmem:[%s1833 + $0x1c] sm:$0xf]
        %v8869 = vld [vmem:[%s1833 + $0x20] sm:$0x1]
        %v8870 = vld [vmem:[%s1833 + $0x24] sm:$0xf]
        %v8871 = vld [vmem:[%s1833 + $0x28] sm:$0xf]
        %v8872 = vld [vmem:[%s1833 + $0x2c] sm:$0x1]
        %v8873 = vld [vmem:[%s1833 + $0x30] sm:$0xf]
        %v8874 = vld [vmem:[%s1833 + $0x34] sm:$0xf]
        %v8875 = vld [vmem:[%s1833 + $0x38] sm:$0x1]
        %v8876 = vld [vmem:[%s1833 + $0x3c] sm:$0xf]
        %v8877 = vld [vmem:[%s1833 + $0x40] sm:$0xf]
        %v8878 = vld [vmem:[%s1833 + $0x44] sm:$0x1]
        %v8879 = vld [vmem:[%s1833 + $0x48] sm:$0xf]
        %v8880 = vld [vmem:[%s1833 + $0x4c] sm:$0xf]
        %v8881 = vld [vmem:[%s1833 + $0x50] sm:$0x1]
        %v8882 = vld [vmem:[%s1833 + $0x54] sm:$0xf]
        %v8883 = vld [vmem:[%s1833 + $0x58] sm:$0xf]
        %v8884 = vld [vmem:[%s1833 + $0x5c] sm:$0x1]
        %v8886 = vshrl.u32 %v8861, 16
        %v8888 = vrot.slane %v8886, 4
        %v8889 = vshll.u32 %v8861, 16
        %v8891 = vrot.slane %v8889, 5
        %v8892 = vor.u32 %v8888, %v8891
        %v8893 = vrot.slane %v8892, 4
        %v8895 = vshll.u32 %v8862, 16
        %v8897 = vrot.slane %v8895, 5
        %v8898 = vsel %vm1101, %v8893, %v8897
        %v8899 = vshrl.u32 %v8862, 16
        %v8901 = vrot.slane %v8899, 4
        %v8902 = vor.u32 %v8901, %v8897
        %v8903 = vrot.slane %v8902, 4
        %v8905 = vshll.u32 %v8863, 16
        %v8907 = vrot.slane %v8905, 5
        %v8908 = vsel %vm1101, %v8903, %v8907
        %v8910 = vshrl.u32 %v8864, 16
        %v8912 = vrot.slane %v8910, 4
        %v8913 = vshll.u32 %v8864, 16
        %v8915 = vrot.slane %v8913, 5
        %v8916 = vor.u32 %v8912, %v8915
        %v8917 = vrot.slane %v8916, 4
        %v8919 = vshll.u32 %v8865, 16
        %v8921 = vrot.slane %v8919, 5
        %v8922 = vsel %vm1101, %v8917, %v8921
        %v8923 = vshrl.u32 %v8865, 16
        %v8925 = vrot.slane %v8923, 4
        %v8926 = vor.u32 %v8925, %v8921
        %v8927 = vrot.slane %v8926, 4
        %v8929 = vshll.u32 %v8866, 16
        %v8931 = vrot.slane %v8929, 5
        %v8932 = vsel %vm1101, %v8927, %v8931
        %v8934 = vshrl.u32 %v8867, 16
        %v8936 = vrot.slane %v8934, 4
        %v8937 = vshll.u32 %v8867, 16
        %v8939 = vrot.slane %v8937, 5
        %v8940 = vor.u32 %v8936, %v8939
        %v8941 = vrot.slane %v8940, 4
        %v8943 = vshll.u32 %v8868, 16
        %v8945 = vrot.slane %v8943, 5
        %v8946 = vsel %vm1101, %v8941, %v8945
        %v8947 = vshrl.u32 %v8868, 16
        %v8949 = vrot.slane %v8947, 4
        %v8950 = vor.u32 %v8949, %v8945
        %v8951 = vrot.slane %v8950, 4
        %v8953 = vshll.u32 %v8869, 16
        %v8955 = vrot.slane %v8953, 5
        %v8956 = vsel %vm1101, %v8951, %v8955
        %v8958 = vshrl.u32 %v8870, 16
        %v8960 = vrot.slane %v8958, 4
        %v8961 = vshll.u32 %v8870, 16
        %v8963 = vrot.slane %v8961, 5
        %v8964 = vor.u32 %v8960, %v8963
        %v8965 = vrot.slane %v8964, 4
        %v8967 = vshll.u32 %v8871, 16
        %v8969 = vrot.slane %v8967, 5
        %v8970 = vsel %vm1101, %v8965, %v8969
        %v8971 = vshrl.u32 %v8871, 16
        %v8973 = vrot.slane %v8971, 4
        %v8974 = vor.u32 %v8973, %v8969
        %v8975 = vrot.slane %v8974, 4
        %v8977 = vshll.u32 %v8872, 16
        %v8979 = vrot.slane %v8977, 5
        %v8980 = vsel %vm1101, %v8975, %v8979
        %v8982 = vshrl.u32 %v8873, 16
        %v8984 = vrot.slane %v8982, 4
        %v8985 = vshll.u32 %v8873, 16
        %v8987 = vrot.slane %v8985, 5
        %v8988 = vor.u32 %v8984, %v8987
        %v8989 = vrot.slane %v8988, 4
        %v8991 = vshll.u32 %v8874, 16
        %v8993 = vrot.slane %v8991, 5
        %v8994 = vsel %vm1101, %v8989, %v8993
        %v8995 = vshrl.u32 %v8874, 16
        %v8997 = vrot.slane %v8995, 4
        %v8998 = vor.u32 %v8997, %v8993
        %v8999 = vrot.slane %v8998, 4
        %v9001 = vshll.u32 %v8875, 16
        %v9003 = vrot.slane %v9001, 5
        %v9004 = vsel %vm1101, %v8999, %v9003
        %v9006 = vshrl.u32 %v8876, 16
        %v9008 = vrot.slane %v9006, 4
        %v9009 = vshll.u32 %v8876, 16
        %v9011 = vrot.slane %v9009, 5
        %v9012 = vor.u32 %v9008, %v9011
        %v9013 = vrot.slane %v9012, 4
        %v9015 = vshll.u32 %v8877, 16
        %v9017 = vrot.slane %v9015, 5
        %v9018 = vsel %vm1101, %v9013, %v9017
        %v9019 = vshrl.u32 %v8877, 16
        %v9021 = vrot.slane %v9019, 4
        %v9022 = vor.u32 %v9021, %v9017
        %v9023 = vrot.slane %v9022, 4
        %v9025 = vshll.u32 %v8878, 16
        %v9027 = vrot.slane %v9025, 5
        %v9028 = vsel %vm1101, %v9023, %v9027
        %v9030 = vshrl.u32 %v8879, 16
        %v9032 = vrot.slane %v9030, 4
        %v9033 = vshll.u32 %v8879, 16
        %v9035 = vrot.slane %v9033, 5
        %v9036 = vor.u32 %v9032, %v9035
        %v9037 = vrot.slane %v9036, 4
        %v9039 = vshll.u32 %v8880, 16
        %v9041 = vrot.slane %v9039, 5
        %v9042 = vsel %vm1101, %v9037, %v9041
        %v9043 = vshrl.u32 %v8880, 16
        %v9045 = vrot.slane %v9043, 4
        %v9046 = vor.u32 %v9045, %v9041
        %v9047 = vrot.slane %v9046, 4
        %v9049 = vshll.u32 %v8881, 16
        %v9051 = vrot.slane %v9049, 5
        %v9052 = vsel %vm1101, %v9047, %v9051
        %v9054 = vshrl.u32 %v8882, 16
        %v9056 = vrot.slane %v9054, 4
        %v9057 = vshll.u32 %v8882, 16
        %v9059 = vrot.slane %v9057, 5
        %v9060 = vor.u32 %v9056, %v9059
        %v9061 = vrot.slane %v9060, 4
        %v9063 = vshll.u32 %v8883, 16
        %v9065 = vrot.slane %v9063, 5
        %v9066 = vsel %vm1101, %v9061, %v9065
        %v9067 = vshrl.u32 %v8883, 16
        %v9069 = vrot.slane %v9067, 4
        %v9070 = vor.u32 %v9069, %v9065
        %v9071 = vrot.slane %v9070, 4
        %v9073 = vshll.u32 %v8884, 16
        %v9075 = vrot.slane %v9073, 5
        %v9076 = vsel %vm1101, %v9071, %v9075
        %v9077 = vld [vmem:[#allocation10] sm:$0xf]
        %v9078 = vld [vmem:[#allocation10 + $0x4] sm:$0xf]
        %v9079 = vld [vmem:[#allocation10 + $0x8] sm:$0xf]
        %v9080 = vld [vmem:[#allocation10 + $0xc] sm:$0xf]
        %v9081 = vld [vmem:[#allocation10 + $0x10] sm:$0xf]
        %v9082 = vld [vmem:[#allocation10 + $0x14] sm:$0xf]
        %v9083 = vld [vmem:[#allocation10 + $0x18] sm:$0xf]
        %v9084 = vld [vmem:[#allocation10 + $0x1c] sm:$0xf]
        %v9085 = vld [vmem:[#allocation10 + $0x20] sm:$0xf]
        %v9086 = vld [vmem:[#allocation10 + $0x24] sm:$0xf]
        %v9087 = vld [vmem:[#allocation10 + $0x28] sm:$0xf]
        %v9088 = vld [vmem:[#allocation10 + $0x2c] sm:$0xf]
        %v9089 = vld [vmem:[#allocation10 + $0x30] sm:$0xf]
        %v9090 = vld [vmem:[#allocation10 + $0x34] sm:$0xf]
        %v9091 = vld [vmem:[#allocation10 + $0x38] sm:$0xf]
        %v9092 = vld [vmem:[#allocation10 + $0x3c] sm:$0xf]
        %v9093 = vld [vmem:[%s6] sm:$0x1]
        %v9095 = vperm.slane %v9093, 0
        %v9097 = vunpack.c.l.b16 %v8898
        %v9098 = vunpack.c.l.b16 %v8908
        %v9099 = vunpack.c.l.b16 %v8922
        %v9100 = vunpack.c.l.b16 %v8932
        %v9101 = vunpack.c.l.b16 %v8946
        %v9102 = vunpack.c.l.b16 %v8956
        %v9103 = vunpack.c.l.b16 %v8970
        %v9104 = vunpack.c.l.b16 %v8980
        %v9105 = vunpack.c.l.b16 %v8994
        %v9106 = vunpack.c.l.b16 %v9004
        %v9107 = vunpack.c.l.b16 %v9018
        %v9108 = vunpack.c.l.b16 %v9028
        %v9109 = vunpack.c.l.b16 %v9042
        %v9110 = vunpack.c.l.b16 %v9052
        %v9111 = vunpack.c.l.b16 %v9066
        %v9112 = vunpack.c.l.b16 %v9076
        %v9113 = vpack.c.b16 %v9098, %v9097
        %v9114 = vpack.c.b16 %v9100, %v9099
        %v9115 = vpack.c.b16 %v9102, %v9101
        %v9116 = vpack.c.b16 %v9104, %v9103
        %v9117 = vpack.c.b16 %v9106, %v9105
        %v9118 = vpack.c.b16 %v9108, %v9107
        %v9119 = vpack.c.b16 %v9110, %v9109
        %v9120 = vpack.c.b16 %v9112, %v9111
        %v9145 = vunpack.c.l.b16 %v9077
        %v9146 = vunpack.c.l.b16 %v9078
        %v9147 = vunpack.c.l.b16 %v9079
        %v9148 = vunpack.c.l.b16 %v9080
        %v9149 = vunpack.c.l.b16 %v9081
        %v9150 = vunpack.c.l.b16 %v9082
        %v9151 = vunpack.c.l.b16 %v9083
        %v9152 = vunpack.c.l.b16 %v9084
        %v9153 = vunpack.c.l.b16 %v9085
        %v9154 = vunpack.c.l.b16 %v9086
        %v9155 = vunpack.c.l.b16 %v9087
        %v9156 = vunpack.c.l.b16 %v9088
        %v9157 = vunpack.c.l.b16 %v9089
        %v9158 = vunpack.c.l.b16 %v9090
        %v9159 = vunpack.c.l.b16 %v9091
        %v9160 = vunpack.c.l.b16 %v9092
        %v9161 = vpack.c.b16 %v9146, %v9145
        %v9162 = vpack.c.b16 %v9148, %v9147
        %v9163 = vpack.c.b16 %v9150, %v9149
        %v9164 = vpack.c.b16 %v9152, %v9151
        %v9165 = vpack.c.b16 %v9154, %v9153
        %v9166 = vpack.c.b16 %v9156, %v9155
        %v9167 = vpack.c.b16 %v9158, %v9157
        %v9168 = vpack.c.b16 %v9160, %v9159
        %9177 = vmatpush.bf16.msra.mxu0 %v9168
        %9178 = vmatpush.bf16.msra.mxu0 %v9167
        %9179 = vmatpush.bf16.msra.mxu0 %v9166
        %9180 = vmatpush.bf16.msra.mxu0 %v9165
        %9181 = vmatpush.bf16.msra.mxu0 %v9164
        %9182 = vmatpush.bf16.msra.mxu0 %v9163
        %9183 = vmatpush.bf16.msra.mxu0 %v9162
        %9184 = vmatpush.bf16.msra.mxu0 %v9161
        %9185 = vmatmul.bf16.gmra.mxu0 %v9113
        %v9186 = vpop.f32.mrf.mxu0
        %v9187 = vadd.f32 %v9095, %v9186
        %v9188 = vpop.f32.mrf.mxu0
        %v9189 = vadd.f32 %v9095, %v9188
        %9190 = vmatmul.bf16.gmra.mxu0 %v9114
        %v9191 = vpop.f32.mrf.mxu0
        %v9192 = vadd.f32 %v9095, %v9191
        %v9193 = vpop.f32.mrf.mxu0
        %v9194 = vadd.f32 %v9095, %v9193
        %9195 = vmatmul.bf16.gmra.mxu0 %v9115
        %v9196 = vpop.f32.mrf.mxu0
        %v9197 = vadd.f32 %v9095, %v9196
        %v9198 = vpop.f32.mrf.mxu0
        %v9199 = vadd.f32 %v9095, %v9198
        %9200 = vmatmul.bf16.gmra.mxu0 %v9116
        %v9201 = vpop.f32.mrf.mxu0
        %v9202 = vadd.f32 %v9095, %v9201
        %v9203 = vpop.f32.mrf.mxu0
        %v9204 = vadd.f32 %v9095, %v9203
        %9205 = vmatmul.bf16.gmra.mxu0 %v9117
        %v9206 = vpop.f32.mrf.mxu0
        %v9207 = vadd.f32 %v9095, %v9206
        %v9208 = vpop.f32.mrf.mxu0
        %v9209 = vadd.f32 %v9095, %v9208
        %9210 = vmatmul.bf16.gmra.mxu0 %v9118
        %v9211 = vpop.f32.mrf.mxu0
        %v9212 = vadd.f32 %v9095, %v9211
        %v9213 = vpop.f32.mrf.mxu0
        %v9214 = vadd.f32 %v9095, %v9213
        %9215 = vmatmul.bf16.gmra.mxu0 %v9119
        %v9216 = vpop.f32.mrf.mxu0
        %v9217 = vadd.f32 %v9095, %v9216
        %v9218 = vpop.f32.mrf.mxu0
        %v9219 = vadd.f32 %v9095, %v9218
        %9220 = vmatmul.bf16.gmra.mxu0 %v9120
        %v9221 = vpop.f32.mrf.mxu0
        %v9222 = vadd.f32 %v9095, %v9221
        %v9223 = vpop.f32.mrf.mxu0
        %v9224 = vadd.f32 %v9095, %v9223
        %9225 = vdwg.mxu0
        %v9226 = vadd.f32 %v8845, %v9187
        %v9227 = vadd.f32 %v8846, %v9189
        %v9228 = vadd.f32 %v8847, %v9192
        %v9229 = vadd.f32 %v8848, %v9194
        %v9230 = vadd.f32 %v8849, %v9197
        %v9231 = vadd.f32 %v8850, %v9199
        %v9232 = vadd.f32 %v8851, %v9202
        %v9233 = vadd.f32 %v8852, %v9204
        %v9234 = vadd.f32 %v8853, %v9207
        %v9235 = vadd.f32 %v8854, %v9209
        %v9236 = vadd.f32 %v8855, %v9212
        %v9237 = vadd.f32 %v8856, %v9214
        %v9238 = vadd.f32 %v8857, %v9217
        %v9239 = vadd.f32 %v8858, %v9219
        %v9240 = vadd.f32 %v8859, %v9222
        %v9241 = vadd.f32 %v8860, %v9224
        %v9242 = vmax.f32 %v9226, 0.0
        %v9243 = vmax.f32 %v9227, 0.0
        %v9244 = vmax.f32 %v9228, 0.0
        %v9245 = vmax.f32 %v9229, 0.0
        %v9246 = vmax.f32 %v9230, 0.0
        %v9247 = vmax.f32 %v9231, 0.0
        %v9248 = vmax.f32 %v9232, 0.0
        %v9249 = vmax.f32 %v9233, 0.0
        %v9250 = vmax.f32 %v9234, 0.0
        %v9251 = vmax.f32 %v9235, 0.0
        %v9252 = vmax.f32 %v9236, 0.0
        %v9253 = vmax.f32 %v9237, 0.0
        %v9254 = vmax.f32 %v9238, 0.0
        %v9255 = vmax.f32 %v9239, 0.0
        %v9256 = vmax.f32 %v9240, 0.0
        %v9257 = vmax.f32 %v9241, 0.0
        %v9258 = vpack.c.bf16 %v9242, %v9242
        %v9259 = vpack.c.bf16 %v9243, %v9243
        %v9260 = vpack.c.bf16 %v9244, %v9244
        %v9261 = vpack.c.bf16 %v9245, %v9245
        %v9262 = vpack.c.bf16 %v9246, %v9246
        %v9263 = vpack.c.bf16 %v9247, %v9247
        %v9264 = vpack.c.bf16 %v9248, %v9248
        %v9265 = vpack.c.bf16 %v9249, %v9249
        %v9266 = vpack.c.bf16 %v9250, %v9250
        %v9267 = vpack.c.bf16 %v9251, %v9251
        %v9268 = vpack.c.bf16 %v9252, %v9252
        %v9269 = vpack.c.bf16 %v9253, %v9253
        %v9270 = vpack.c.bf16 %v9254, %v9254
        %v9271 = vpack.c.bf16 %v9255, %v9255
        %v9272 = vpack.c.bf16 %v9256, %v9256
        %v9273 = vpack.c.bf16 %v9257, %v9257
        %s9274 = smul.u32 0, 2
        %s9275 = smul.addr %s9274, 4
        %s9276 = scalar_lea.vmem %s348, %s9275 [#allocation12]
        %9277 = vst [vmem:[%s9276] sm:$0xf] %v9258
        %9278 = vst [vmem:[%s9276 + $0x4] sm:$0xf] %v9259
        %9279 = vst [vmem:[%s9276 + $0x8] sm:$0xf] %v9260
        %9280 = vst [vmem:[%s9276 + $0xc] sm:$0xf] %v9261
        %9281 = vst [vmem:[%s9276 + $0x10] sm:$0xf] %v9262
        %9282 = vst [vmem:[%s9276 + $0x14] sm:$0xf] %v9263
        %9283 = vst [vmem:[%s9276 + $0x18] sm:$0xf] %v9264
        %9284 = vst [vmem:[%s9276 + $0x1c] sm:$0xf] %v9265
        %9285 = vst [vmem:[%s9276 + $0x20] sm:$0xf] %v9266
        %9286 = vst [vmem:[%s9276 + $0x24] sm:$0xf] %v9267
        %9287 = vst [vmem:[%s9276 + $0x28] sm:$0xf] %v9268
        %9288 = vst [vmem:[%s9276 + $0x2c] sm:$0xf] %v9269
        %9289 = vst [vmem:[%s9276 + $0x30] sm:$0xf] %v9270
        %9290 = vst [vmem:[%s9276 + $0x34] sm:$0xf] %v9271
        %9291 = vst [vmem:[%s9276 + $0x38] sm:$0xf] %v9272
        %9292 = vst [vmem:[%s9276 + $0x3c] sm:$0xf] %v9273
        %s9293 = smul.addr %s3751, 4
        %s9294 = scalar_lea.vmem [#allocation3], %s9293
        %v9295 = vld [vmem:[%s9294] sm:$0xf]
        %v9296 = vld [vmem:[%s9294 + $0x4] sm:$0xf]
        %v9297 = vld [vmem:[%s9294 + $0xc] sm:$0xf]
        %v9298 = vld [vmem:[%s9294 + $0x10] sm:$0xf]
        %v9299 = vld [vmem:[%s9294 + $0x18] sm:$0xf]
        %v9300 = vld [vmem:[%s9294 + $0x1c] sm:$0xf]
        %v9301 = vld [vmem:[%s9294 + $0x24] sm:$0xf]
        %v9302 = vld [vmem:[%s9294 + $0x28] sm:$0xf]
        %v9303 = vld [vmem:[%s9294 + $0x30] sm:$0xf]
        %v9304 = vld [vmem:[%s9294 + $0x34] sm:$0xf]
        %v9305 = vld [vmem:[%s9294 + $0x3c] sm:$0xf]
        %v9306 = vld [vmem:[%s9294 + $0x40] sm:$0xf]
        %v9307 = vld [vmem:[%s9294 + $0x48] sm:$0xf]
        %v9308 = vld [vmem:[%s9294 + $0x4c] sm:$0xf]
        %v9309 = vld [vmem:[%s9294 + $0x54] sm:$0xf]
        %v9310 = vld [vmem:[%s9294 + $0x58] sm:$0xf]
        %v9311 = vld [vmem:[#allocation9] sm:$0xf]
        %v9312 = vld [vmem:[#allocation9 + $0x4] sm:$0xf]
        %v9313 = vld [vmem:[#allocation9 + $0x8] sm:$0xf]
        %v9314 = vld [vmem:[#allocation9 + $0xc] sm:$0xf]
        %v9315 = vld [vmem:[#allocation9 + $0x10] sm:$0xf]
        %v9316 = vld [vmem:[#allocation9 + $0x14] sm:$0xf]
        %v9317 = vld [vmem:[#allocation9 + $0x18] sm:$0xf]
        %v9318 = vld [vmem:[#allocation9 + $0x1c] sm:$0xf]
        %v9319 = vld [vmem:[#allocation9 + $0x20] sm:$0xf]
        %v9320 = vld [vmem:[#allocation9 + $0x24] sm:$0xf]
        %v9321 = vld [vmem:[#allocation9 + $0x28] sm:$0xf]
        %v9322 = vld [vmem:[#allocation9 + $0x2c] sm:$0xf]
        %v9323 = vld [vmem:[#allocation9 + $0x30] sm:$0xf]
        %v9324 = vld [vmem:[#allocation9 + $0x34] sm:$0xf]
        %v9325 = vld [vmem:[#allocation9 + $0x38] sm:$0xf]
        %v9326 = vld [vmem:[#allocation9 + $0x3c] sm:$0xf]
        %v9327 = vld [vmem:[%s9294 + $0x8] sm:$0x1]
        %v9328 = vld [vmem:[%s9294 + $0x14] sm:$0x1]
        %v9329 = vld [vmem:[%s9294 + $0x20] sm:$0x1]
        %v9330 = vld [vmem:[%s9294 + $0x2c] sm:$0x1]
        %v9331 = vld [vmem:[%s9294 + $0x38] sm:$0x1]
        %v9332 = vld [vmem:[%s9294 + $0x44] sm:$0x1]
        %v9333 = vld [vmem:[%s9294 + $0x50] sm:$0x1]
        %v9334 = vld [vmem:[%s9294 + $0x5c] sm:$0x1]
        %v9336 = vshrl.u32 %v9295, 16
        %v9338 = vrot.slane %v9336, 4
        %v9339 = vshll.u32 %v9295, 16
        %v9341 = vrot.slane %v9339, 5
        %v9342 = vor.u32 %v9338, %v9341
        %v9343 = vrot.slane %v9342, 4
        %v9345 = vshll.u32 %v9296, 16
        %v9347 = vrot.slane %v9345, 5
        %v9348 = vsel %vm1101, %v9343, %v9347
        %v9349 = vshrl.u32 %v9296, 16
        %v9351 = vrot.slane %v9349, 4
        %v9352 = vor.u32 %v9351, %v9347
        %v9353 = vrot.slane %v9352, 4
        %v9355 = vshll.u32 %v9327, 16
        %v9357 = vrot.slane %v9355, 5
        %v9358 = vsel %vm1101, %v9353, %v9357
        %v9360 = vshrl.u32 %v9297, 16
        %v9362 = vrot.slane %v9360, 4
        %v9363 = vshll.u32 %v9297, 16
        %v9365 = vrot.slane %v9363, 5
        %v9366 = vor.u32 %v9362, %v9365
        %v9367 = vrot.slane %v9366, 4
        %v9369 = vshll.u32 %v9298, 16
        %v9371 = vrot.slane %v9369, 5
        %v9372 = vsel %vm1101, %v9367, %v9371
        %v9373 = vshrl.u32 %v9298, 16
        %v9375 = vrot.slane %v9373, 4
        %v9376 = vor.u32 %v9375, %v9371
        %v9377 = vrot.slane %v9376, 4
        %v9379 = vshll.u32 %v9328, 16
        %v9381 = vrot.slane %v9379, 5
        %v9382 = vsel %vm1101, %v9377, %v9381
        %v9384 = vshrl.u32 %v9299, 16
        %v9386 = vrot.slane %v9384, 4
        %v9387 = vshll.u32 %v9299, 16
        %v9389 = vrot.slane %v9387, 5
        %v9390 = vor.u32 %v9386, %v9389
        %v9391 = vrot.slane %v9390, 4
        %v9393 = vshll.u32 %v9300, 16
        %v9395 = vrot.slane %v9393, 5
        %v9396 = vsel %vm1101, %v9391, %v9395
        %v9397 = vshrl.u32 %v9300, 16
        %v9399 = vrot.slane %v9397, 4
        %v9400 = vor.u32 %v9399, %v9395
        %v9401 = vrot.slane %v9400, 4
        %v9403 = vshll.u32 %v9329, 16
        %v9405 = vrot.slane %v9403, 5
        %v9406 = vsel %vm1101, %v9401, %v9405
        %v9408 = vshrl.u32 %v9301, 16
        %v9410 = vrot.slane %v9408, 4
        %v9411 = vshll.u32 %v9301, 16
        %v9413 = vrot.slane %v9411, 5
        %v9414 = vor.u32 %v9410, %v9413
        %v9415 = vrot.slane %v9414, 4
        %v9417 = vshll.u32 %v9302, 16
        %v9419 = vrot.slane %v9417, 5
        %v9420 = vsel %vm1101, %v9415, %v9419
        %v9421 = vshrl.u32 %v9302, 16
        %v9423 = vrot.slane %v9421, 4
        %v9424 = vor.u32 %v9423, %v9419
        %v9425 = vrot.slane %v9424, 4
        %v9427 = vshll.u32 %v9330, 16
        %v9429 = vrot.slane %v9427, 5
        %v9430 = vsel %vm1101, %v9425, %v9429
        %v9432 = vshrl.u32 %v9303, 16
        %v9434 = vrot.slane %v9432, 4
        %v9435 = vshll.u32 %v9303, 16
        %v9437 = vrot.slane %v9435, 5
        %v9438 = vor.u32 %v9434, %v9437
        %v9439 = vrot.slane %v9438, 4
        %v9441 = vshll.u32 %v9304, 16
        %v9443 = vrot.slane %v9441, 5
        %v9444 = vsel %vm1101, %v9439, %v9443
        %v9445 = vshrl.u32 %v9304, 16
        %v9447 = vrot.slane %v9445, 4
        %v9448 = vor.u32 %v9447, %v9443
        %v9449 = vrot.slane %v9448, 4
        %v9451 = vshll.u32 %v9331, 16
        %v9453 = vrot.slane %v9451, 5
        %v9454 = vsel %vm1101, %v9449, %v9453
        %v9456 = vshrl.u32 %v9305, 16
        %v9458 = vrot.slane %v9456, 4
        %v9459 = vshll.u32 %v9305, 16
        %v9461 = vrot.slane %v9459, 5
        %v9462 = vor.u32 %v9458, %v9461
        %v9463 = vrot.slane %v9462, 4
        %v9465 = vshll.u32 %v9306, 16
        %v9467 = vrot.slane %v9465, 5
        %v9468 = vsel %vm1101, %v9463, %v9467
        %v9469 = vshrl.u32 %v9306, 16
        %v9471 = vrot.slane %v9469, 4
        %v9472 = vor.u32 %v9471, %v9467
        %v9473 = vrot.slane %v9472, 4
        %v9475 = vshll.u32 %v9332, 16
        %v9477 = vrot.slane %v9475, 5
        %v9478 = vsel %vm1101, %v9473, %v9477
        %v9480 = vshrl.u32 %v9307, 16
        %v9482 = vrot.slane %v9480, 4
        %v9483 = vshll.u32 %v9307, 16
        %v9485 = vrot.slane %v9483, 5
        %v9486 = vor.u32 %v9482, %v9485
        %v9487 = vrot.slane %v9486, 4
        %v9489 = vshll.u32 %v9308, 16
        %v9491 = vrot.slane %v9489, 5
        %v9492 = vsel %vm1101, %v9487, %v9491
        %v9493 = vshrl.u32 %v9308, 16
        %v9495 = vrot.slane %v9493, 4
        %v9496 = vor.u32 %v9495, %v9491
        %v9497 = vrot.slane %v9496, 4
        %v9499 = vshll.u32 %v9333, 16
        %v9501 = vrot.slane %v9499, 5
        %v9502 = vsel %vm1101, %v9497, %v9501
        %v9504 = vshrl.u32 %v9309, 16
        %v9506 = vrot.slane %v9504, 4
        %v9507 = vshll.u32 %v9309, 16
        %v9509 = vrot.slane %v9507, 5
        %v9510 = vor.u32 %v9506, %v9509
        %v9511 = vrot.slane %v9510, 4
        %v9513 = vshll.u32 %v9310, 16
        %v9515 = vrot.slane %v9513, 5
        %v9516 = vsel %vm1101, %v9511, %v9515
        %v9517 = vshrl.u32 %v9310, 16
        %v9519 = vrot.slane %v9517, 4
        %v9520 = vor.u32 %v9519, %v9515
        %v9521 = vrot.slane %v9520, 4
        %v9523 = vshll.u32 %v9334, 16
        %v9525 = vrot.slane %v9523, 5
        %v9526 = vsel %vm1101, %v9521, %v9525
        %v9527 = vld [vmem:[%s6663] sm:$0xf]
        %v9528 = vld [vmem:[%s6663 + $0x4] sm:$0xf]
        %v9529 = vld [vmem:[%s6663 + $0x8] sm:$0xf]
        %v9530 = vld [vmem:[%s6663 + $0xc] sm:$0xf]
        %v9531 = vld [vmem:[%s6663 + $0x10] sm:$0xf]
        %v9532 = vld [vmem:[%s6663 + $0x14] sm:$0xf]
        %v9533 = vld [vmem:[%s6663 + $0x18] sm:$0xf]
        %v9534 = vld [vmem:[%s6663 + $0x1c] sm:$0xf]
        %v9535 = vld [vmem:[%s6663 + $0x20] sm:$0xf]
        %v9536 = vld [vmem:[%s6663 + $0x24] sm:$0xf]
        %v9537 = vld [vmem:[%s6663 + $0x28] sm:$0xf]
        %v9538 = vld [vmem:[%s6663 + $0x2c] sm:$0xf]
        %v9539 = vld [vmem:[%s6663 + $0x30] sm:$0xf]
        %v9540 = vld [vmem:[%s6663 + $0x34] sm:$0xf]
        %v9541 = vld [vmem:[%s6663 + $0x38] sm:$0xf]
        %v9542 = vld [vmem:[%s6663 + $0x3c] sm:$0xf]
        %v9543 = vunpack.c.l.b16 %v9348
        %v9544 = vunpack.c.l.b16 %v9358
        %v9545 = vunpack.c.l.b16 %v9372
        %v9546 = vunpack.c.l.b16 %v9382
        %v9547 = vunpack.c.l.b16 %v9396
        %v9548 = vunpack.c.l.b16 %v9406
        %v9549 = vunpack.c.l.b16 %v9420
        %v9550 = vunpack.c.l.b16 %v9430
        %v9551 = vunpack.c.l.b16 %v9444
        %v9552 = vunpack.c.l.b16 %v9454
        %v9553 = vunpack.c.l.b16 %v9468
        %v9554 = vunpack.c.l.b16 %v9478
        %v9555 = vunpack.c.l.b16 %v9492
        %v9556 = vunpack.c.l.b16 %v9502
        %v9557 = vunpack.c.l.b16 %v9516
        %v9558 = vunpack.c.l.b16 %v9526
        %v9559 = vpack.c.b16 %v9544, %v9543
        %v9560 = vpack.c.b16 %v9546, %v9545
        %v9561 = vpack.c.b16 %v9548, %v9547
        %v9562 = vpack.c.b16 %v9550, %v9549
        %v9563 = vpack.c.b16 %v9552, %v9551
        %v9564 = vpack.c.b16 %v9554, %v9553
        %v9565 = vpack.c.b16 %v9556, %v9555
        %v9566 = vpack.c.b16 %v9558, %v9557
        %v9591 = vunpack.c.l.b16 %v9527
        %v9592 = vunpack.c.l.b16 %v9528
        %v9593 = vunpack.c.l.b16 %v9529
        %v9594 = vunpack.c.l.b16 %v9530
        %v9595 = vunpack.c.l.b16 %v9531
        %v9596 = vunpack.c.l.b16 %v9532
        %v9597 = vunpack.c.l.b16 %v9533
        %v9598 = vunpack.c.l.b16 %v9534
        %v9599 = vunpack.c.l.b16 %v9535
        %v9600 = vunpack.c.l.b16 %v9536
        %v9601 = vunpack.c.l.b16 %v9537
        %v9602 = vunpack.c.l.b16 %v9538
        %v9603 = vunpack.c.l.b16 %v9539
        %v9604 = vunpack.c.l.b16 %v9540
        %v9605 = vunpack.c.l.b16 %v9541
        %v9606 = vunpack.c.l.b16 %v9542
        %v9607 = vpack.c.b16 %v9592, %v9591
        %v9608 = vpack.c.b16 %v9594, %v9593
        %v9609 = vpack.c.b16 %v9596, %v9595
        %v9610 = vpack.c.b16 %v9598, %v9597
        %v9611 = vpack.c.b16 %v9600, %v9599
        %v9612 = vpack.c.b16 %v9602, %v9601
        %v9613 = vpack.c.b16 %v9604, %v9603
        %v9614 = vpack.c.b16 %v9606, %v9605
        %9623 = vmatpush.bf16.msra.mxu0 %v9614
        %9624 = vmatpush.bf16.msra.mxu0 %v9613
        %9625 = vmatpush.bf16.msra.mxu0 %v9612
        %9626 = vmatpush.bf16.msra.mxu0 %v9611
        %9627 = vmatpush.bf16.msra.mxu0 %v9610
        %9628 = vmatpush.bf16.msra.mxu0 %v9609
        %9629 = vmatpush.bf16.msra.mxu0 %v9608
        %9630 = vmatpush.bf16.msra.mxu0 %v9607
        %9631 = vmatmul.bf16.gmra.mxu0 %v9559
        %v9632 = vpop.f32.mrf.mxu0
        %v9633 = vadd.f32 0.0, %v9632
        %v9634 = vpop.f32.mrf.mxu0
        %v9635 = vadd.f32 0.0, %v9634
        %9636 = vmatmul.bf16.gmra.mxu0 %v9560
        %v9637 = vpop.f32.mrf.mxu0
        %v9638 = vadd.f32 0.0, %v9637
        %v9639 = vpop.f32.mrf.mxu0
        %v9640 = vadd.f32 0.0, %v9639
        %9641 = vmatmul.bf16.gmra.mxu0 %v9561
        %v9642 = vpop.f32.mrf.mxu0
        %v9643 = vadd.f32 0.0, %v9642
        %v9644 = vpop.f32.mrf.mxu0
        %v9645 = vadd.f32 0.0, %v9644
        %9646 = vmatmul.bf16.gmra.mxu0 %v9562
        %v9647 = vpop.f32.mrf.mxu0
        %v9648 = vadd.f32 0.0, %v9647
        %v9649 = vpop.f32.mrf.mxu0
        %v9650 = vadd.f32 0.0, %v9649
        %9651 = vmatmul.bf16.gmra.mxu0 %v9563
        %v9652 = vpop.f32.mrf.mxu0
        %v9653 = vadd.f32 0.0, %v9652
        %v9654 = vpop.f32.mrf.mxu0
        %v9655 = vadd.f32 0.0, %v9654
        %9656 = vmatmul.bf16.gmra.mxu0 %v9564
        %v9657 = vpop.f32.mrf.mxu0
        %v9658 = vadd.f32 0.0, %v9657
        %v9659 = vpop.f32.mrf.mxu0
        %v9660 = vadd.f32 0.0, %v9659
        %9661 = vmatmul.bf16.gmra.mxu0 %v9565
        %v9662 = vpop.f32.mrf.mxu0
        %v9663 = vadd.f32 0.0, %v9662
        %v9664 = vpop.f32.mrf.mxu0
        %v9665 = vadd.f32 0.0, %v9664
        %9666 = vmatmul.bf16.gmra.mxu0 %v9566
        %v9667 = vpop.f32.mrf.mxu0
        %v9668 = vadd.f32 0.0, %v9667
        %v9669 = vpop.f32.mrf.mxu0
        %v9670 = vadd.f32 0.0, %v9669
        %9671 = vdwg.mxu0
        %v9688 = vunpack.c.l.b16 %v9295
        %v9689 = vunpack.c.l.b16 %v9296
        %v9690 = vunpack.c.l.b16 %v9297
        %v9691 = vunpack.c.l.b16 %v9298
        %v9692 = vunpack.c.l.b16 %v9299
        %v9693 = vunpack.c.l.b16 %v9300
        %v9694 = vunpack.c.l.b16 %v9301
        %v9695 = vunpack.c.l.b16 %v9302
        %v9696 = vunpack.c.l.b16 %v9303
        %v9697 = vunpack.c.l.b16 %v9304
        %v9698 = vunpack.c.l.b16 %v9305
        %v9699 = vunpack.c.l.b16 %v9306
        %v9700 = vunpack.c.l.b16 %v9307
        %v9701 = vunpack.c.l.b16 %v9308
        %v9702 = vunpack.c.l.b16 %v9309
        %v9703 = vunpack.c.l.b16 %v9310
        %v9704 = vpack.c.b16 %v9689, %v9688
        %v9705 = vpack.c.b16 %v9691, %v9690
        %v9706 = vpack.c.b16 %v9693, %v9692
        %v9707 = vpack.c.b16 %v9695, %v9694
        %v9708 = vpack.c.b16 %v9697, %v9696
        %v9709 = vpack.c.b16 %v9699, %v9698
        %v9710 = vpack.c.b16 %v9701, %v9700
        %v9711 = vpack.c.b16 %v9703, %v9702
        %v9736 = vunpack.c.l.b16 %v9311
        %v9737 = vunpack.c.l.b16 %v9312
        %v9738 = vunpack.c.l.b16 %v9313
        %v9739 = vunpack.c.l.b16 %v9314
        %v9740 = vunpack.c.l.b16 %v9315
        %v9741 = vunpack.c.l.b16 %v9316
        %v9742 = vunpack.c.l.b16 %v9317
        %v9743 = vunpack.c.l.b16 %v9318
        %v9744 = vunpack.c.l.b16 %v9319
        %v9745 = vunpack.c.l.b16 %v9320
        %v9746 = vunpack.c.l.b16 %v9321
        %v9747 = vunpack.c.l.b16 %v9322
        %v9748 = vunpack.c.l.b16 %v9323
        %v9749 = vunpack.c.l.b16 %v9324
        %v9750 = vunpack.c.l.b16 %v9325
        %v9751 = vunpack.c.l.b16 %v9326
        %v9752 = vpack.c.b16 %v9737, %v9736
        %v9753 = vpack.c.b16 %v9739, %v9738
        %v9754 = vpack.c.b16 %v9741, %v9740
        %v9755 = vpack.c.b16 %v9743, %v9742
        %v9756 = vpack.c.b16 %v9745, %v9744
        %v9757 = vpack.c.b16 %v9747, %v9746
        %v9758 = vpack.c.b16 %v9749, %v9748
        %v9759 = vpack.c.b16 %v9751, %v9750
        %9768 = vmatpush.bf16.msra.mxu0 %v9759
        %9769 = vmatpush.bf16.msra.mxu0 %v9758
        %9770 = vmatpush.bf16.msra.mxu0 %v9757
        %9771 = vmatpush.bf16.msra.mxu0 %v9756
        %9772 = vmatpush.bf16.msra.mxu0 %v9755
        %9773 = vmatpush.bf16.msra.mxu0 %v9754
        %9774 = vmatpush.bf16.msra.mxu0 %v9753
        %9775 = vmatpush.bf16.msra.mxu0 %v9752
        %9776 = vmatmul.bf16.gmra.mxu0 %v9704
        %v9777 = vpop.f32.mrf.mxu0
        %v9778 = vadd.f32 %v9633, %v9777
        %v9779 = vpop.f32.mrf.mxu0
        %v9780 = vadd.f32 %v9635, %v9779
        %9781 = vmatmul.bf16.gmra.mxu0 %v9705
        %v9782 = vpop.f32.mrf.mxu0
        %v9783 = vadd.f32 %v9638, %v9782
        %v9784 = vpop.f32.mrf.mxu0
        %v9785 = vadd.f32 %v9640, %v9784
        %9786 = vmatmul.bf16.gmra.mxu0 %v9706
        %v9787 = vpop.f32.mrf.mxu0
        %v9788 = vadd.f32 %v9643, %v9787
        %v9789 = vpop.f32.mrf.mxu0
        %v9790 = vadd.f32 %v9645, %v9789
        %9791 = vmatmul.bf16.gmra.mxu0 %v9707
        %v9792 = vpop.f32.mrf.mxu0
        %v9793 = vadd.f32 %v9648, %v9792
        %v9794 = vpop.f32.mrf.mxu0
        %v9795 = vadd.f32 %v9650, %v9794
        %9796 = vmatmul.bf16.gmra.mxu0 %v9708
        %v9797 = vpop.f32.mrf.mxu0
        %v9798 = vadd.f32 %v9653, %v9797
        %v9799 = vpop.f32.mrf.mxu0
        %v9800 = vadd.f32 %v9655, %v9799
        %9801 = vmatmul.bf16.gmra.mxu0 %v9709
        %v9802 = vpop.f32.mrf.mxu0
        %v9803 = vadd.f32 %v9658, %v9802
        %v9804 = vpop.f32.mrf.mxu0
        %v9805 = vadd.f32 %v9660, %v9804
        %9806 = vmatmul.bf16.gmra.mxu0 %v9710
        %v9807 = vpop.f32.mrf.mxu0
        %v9808 = vadd.f32 %v9663, %v9807
        %v9809 = vpop.f32.mrf.mxu0
        %v9810 = vadd.f32 %v9665, %v9809
        %9811 = vmatmul.bf16.gmra.mxu0 %v9711
        %v9812 = vpop.f32.mrf.mxu0
        %v9813 = vadd.f32 %v9668, %v9812
        %v9814 = vpop.f32.mrf.mxu0
        %v9815 = vadd.f32 %v9670, %v9814
        %9816 = vdwg.mxu0
        %v9817 = vld [vmem:[%s9294] sm:$0xe]
        %v9818 = vld [vmem:[%s9294 + $0xc] sm:$0xe]
        %v9819 = vld [vmem:[%s9294 + $0x18] sm:$0xe]
        %v9820 = vld [vmem:[%s9294 + $0x24] sm:$0xe]
        %v9821 = vld [vmem:[%s9294 + $0x30] sm:$0xe]
        %v9822 = vld [vmem:[%s9294 + $0x3c] sm:$0xe]
        %v9823 = vld [vmem:[%s9294 + $0x48] sm:$0xe]
        %v9824 = vld [vmem:[%s9294 + $0x54] sm:$0xe]
        %v9841 = vrot.slane %v9817, 5
        %v9842 = vrot.slane %v9841, 4
        %v9843 = vrot.slane %v9296, 5
        %v9844 = vsel %vm1611, %v9842, %v9843
        %v9845 = vrot.slane %v9843, 4
        %v9846 = vrot.slane %v9327, 5
        %v9847 = vsel %vm1611, %v9845, %v9846
        %v9848 = vrot.slane %v9818, 5
        %v9849 = vrot.slane %v9848, 4
        %v9850 = vrot.slane %v9298, 5
        %v9851 = vsel %vm1611, %v9849, %v9850
        %v9852 = vrot.slane %v9850, 4
        %v9853 = vrot.slane %v9328, 5
        %v9854 = vsel %vm1611, %v9852, %v9853
        %v9855 = vrot.slane %v9819, 5
        %v9856 = vrot.slane %v9855, 4
        %v9857 = vrot.slane %v9300, 5
        %v9858 = vsel %vm1611, %v9856, %v9857
        %v9859 = vrot.slane %v9857, 4
        %v9860 = vrot.slane %v9329, 5
        %v9861 = vsel %vm1611, %v9859, %v9860
        %v9862 = vrot.slane %v9820, 5
        %v9863 = vrot.slane %v9862, 4
        %v9864 = vrot.slane %v9302, 5
        %v9865 = vsel %vm1611, %v9863, %v9864
        %v9866 = vrot.slane %v9864, 4
        %v9867 = vrot.slane %v9330, 5
        %v9868 = vsel %vm1611, %v9866, %v9867
        %v9869 = vrot.slane %v9821, 5
        %v9870 = vrot.slane %v9869, 4
        %v9871 = vrot.slane %v9304, 5
        %v9872 = vsel %vm1611, %v9870, %v9871
        %v9873 = vrot.slane %v9871, 4
        %v9874 = vrot.slane %v9331, 5
        %v9875 = vsel %vm1611, %v9873, %v9874
        %v9876 = vrot.slane %v9822, 5
        %v9877 = vrot.slane %v9876, 4
        %v9878 = vrot.slane %v9306, 5
        %v9879 = vsel %vm1611, %v9877, %v9878
        %v9880 = vrot.slane %v9878, 4
        %v9881 = vrot.slane %v9332, 5
        %v9882 = vsel %vm1611, %v9880, %v9881
        %v9883 = vrot.slane %v9823, 5
        %v9884 = vrot.slane %v9883, 4
        %v9885 = vrot.slane %v9308, 5
        %v9886 = vsel %vm1611, %v9884, %v9885
        %v9887 = vrot.slane %v9885, 4
        %v9888 = vrot.slane %v9333, 5
        %v9889 = vsel %vm1611, %v9887, %v9888
        %v9890 = vrot.slane %v9824, 5
        %v9891 = vrot.slane %v9890, 4
        %v9892 = vrot.slane %v9310, 5
        %v9893 = vsel %vm1611, %v9891, %v9892
        %v9894 = vrot.slane %v9892, 4
        %v9895 = vrot.slane %v9334, 5
        %v9896 = vsel %vm1611, %v9894, %v9895
        %v9897 = vld [vmem:[%s7034] sm:$0xf]
        %v9898 = vld [vmem:[%s7034 + $0x4] sm:$0xf]
        %v9899 = vld [vmem:[%s7034 + $0x8] sm:$0xf]
        %v9900 = vld [vmem:[%s7034 + $0xc] sm:$0xf]
        %v9901 = vld [vmem:[%s7034 + $0x10] sm:$0xf]
        %v9902 = vld [vmem:[%s7034 + $0x14] sm:$0xf]
        %v9903 = vld [vmem:[%s7034 + $0x18] sm:$0xf]
        %v9904 = vld [vmem:[%s7034 + $0x1c] sm:$0xf]
        %v9905 = vld [vmem:[%s7034 + $0x20] sm:$0xf]
        %v9906 = vld [vmem:[%s7034 + $0x24] sm:$0xf]
        %v9907 = vld [vmem:[%s7034 + $0x28] sm:$0xf]
        %v9908 = vld [vmem:[%s7034 + $0x2c] sm:$0xf]
        %v9909 = vld [vmem:[%s7034 + $0x30] sm:$0xf]
        %v9910 = vld [vmem:[%s7034 + $0x34] sm:$0xf]
        %v9911 = vld [vmem:[%s7034 + $0x38] sm:$0xf]
        %v9912 = vld [vmem:[%s7034 + $0x3c] sm:$0xf]
        %v9913 = vunpack.c.l.b16 %v9844
        %v9914 = vunpack.c.l.b16 %v9847
        %v9915 = vunpack.c.l.b16 %v9851
        %v9916 = vunpack.c.l.b16 %v9854
        %v9917 = vunpack.c.l.b16 %v9858
        %v9918 = vunpack.c.l.b16 %v9861
        %v9919 = vunpack.c.l.b16 %v9865
        %v9920 = vunpack.c.l.b16 %v9868
        %v9921 = vunpack.c.l.b16 %v9872
        %v9922 = vunpack.c.l.b16 %v9875
        %v9923 = vunpack.c.l.b16 %v9879
        %v9924 = vunpack.c.l.b16 %v9882
        %v9925 = vunpack.c.l.b16 %v9886
        %v9926 = vunpack.c.l.b16 %v9889
        %v9927 = vunpack.c.l.b16 %v9893
        %v9928 = vunpack.c.l.b16 %v9896
        %v9929 = vpack.c.b16 %v9914, %v9913
        %v9930 = vpack.c.b16 %v9916, %v9915
        %v9931 = vpack.c.b16 %v9918, %v9917
        %v9932 = vpack.c.b16 %v9920, %v9919
        %v9933 = vpack.c.b16 %v9922, %v9921
        %v9934 = vpack.c.b16 %v9924, %v9923
        %v9935 = vpack.c.b16 %v9926, %v9925
        %v9936 = vpack.c.b16 %v9928, %v9927
        %v9961 = vunpack.c.l.b16 %v9897
        %v9962 = vunpack.c.l.b16 %v9898
        %v9963 = vunpack.c.l.b16 %v9899
        %v9964 = vunpack.c.l.b16 %v9900
        %v9965 = vunpack.c.l.b16 %v9901
        %v9966 = vunpack.c.l.b16 %v9902
        %v9967 = vunpack.c.l.b16 %v9903
        %v9968 = vunpack.c.l.b16 %v9904
        %v9969 = vunpack.c.l.b16 %v9905
        %v9970 = vunpack.c.l.b16 %v9906
        %v9971 = vunpack.c.l.b16 %v9907
        %v9972 = vunpack.c.l.b16 %v9908
        %v9973 = vunpack.c.l.b16 %v9909
        %v9974 = vunpack.c.l.b16 %v9910
        %v9975 = vunpack.c.l.b16 %v9911
        %v9976 = vunpack.c.l.b16 %v9912
        %v9977 = vpack.c.b16 %v9962, %v9961
        %v9978 = vpack.c.b16 %v9964, %v9963
        %v9979 = vpack.c.b16 %v9966, %v9965
        %v9980 = vpack.c.b16 %v9968, %v9967
        %v9981 = vpack.c.b16 %v9970, %v9969
        %v9982 = vpack.c.b16 %v9972, %v9971
        %v9983 = vpack.c.b16 %v9974, %v9973
        %v9984 = vpack.c.b16 %v9976, %v9975
        %9993 = vmatpush.bf16.msra.mxu0 %v9984
        %9994 = vmatpush.bf16.msra.mxu0 %v9983
        %9995 = vmatpush.bf16.msra.mxu0 %v9982
        %9996 = vmatpush.bf16.msra.mxu0 %v9981
        %9997 = vmatpush.bf16.msra.mxu0 %v9980
        %9998 = vmatpush.bf16.msra.mxu0 %v9979
        %9999 = vmatpush.bf16.msra.mxu0 %v9978
        %10000 = vmatpush.bf16.msra.mxu0 %v9977
        %10001 = vmatmul.bf16.gmra.mxu0 %v9929
        %v10002 = vpop.f32.mrf.mxu0
        %v10003 = vadd.f32 0.0, %v10002
        %v10004 = vpop.f32.mrf.mxu0
        %v10005 = vadd.f32 0.0, %v10004
        %10006 = vmatmul.bf16.gmra.mxu0 %v9930
        %v10007 = vpop.f32.mrf.mxu0
        %v10008 = vadd.f32 0.0, %v10007
        %v10009 = vpop.f32.mrf.mxu0
        %v10010 = vadd.f32 0.0, %v10009
        %10011 = vmatmul.bf16.gmra.mxu0 %v9931
        %v10012 = vpop.f32.mrf.mxu0
        %v10013 = vadd.f32 0.0, %v10012
        %v10014 = vpop.f32.mrf.mxu0
        %v10015 = vadd.f32 0.0, %v10014
        %10016 = vmatmul.bf16.gmra.mxu0 %v9932
        %v10017 = vpop.f32.mrf.mxu0
        %v10018 = vadd.f32 0.0, %v10017
        %v10019 = vpop.f32.mrf.mxu0
        %v10020 = vadd.f32 0.0, %v10019
        %10021 = vmatmul.bf16.gmra.mxu0 %v9933
        %v10022 = vpop.f32.mrf.mxu0
        %v10023 = vadd.f32 0.0, %v10022
        %v10024 = vpop.f32.mrf.mxu0
        %v10025 = vadd.f32 0.0, %v10024
        %10026 = vmatmul.bf16.gmra.mxu0 %v9934
        %v10027 = vpop.f32.mrf.mxu0
        %v10028 = vadd.f32 0.0, %v10027
        %v10029 = vpop.f32.mrf.mxu0
        %v10030 = vadd.f32 0.0, %v10029
        %10031 = vmatmul.bf16.gmra.mxu0 %v9935
        %v10032 = vpop.f32.mrf.mxu0
        %v10033 = vadd.f32 0.0, %v10032
        %v10034 = vpop.f32.mrf.mxu0
        %v10035 = vadd.f32 0.0, %v10034
        %10036 = vmatmul.bf16.gmra.mxu0 %v9936
        %v10037 = vpop.f32.mrf.mxu0
        %v10038 = vadd.f32 0.0, %v10037
        %v10039 = vpop.f32.mrf.mxu0
        %v10040 = vadd.f32 0.0, %v10039
        %10041 = vdwg.mxu0
        %v10042 = vadd.f32 %v9778, %v10003
        %v10043 = vadd.f32 %v9780, %v10005
        %v10044 = vadd.f32 %v9783, %v10008
        %v10045 = vadd.f32 %v9785, %v10010
        %v10046 = vadd.f32 %v9788, %v10013
        %v10047 = vadd.f32 %v9790, %v10015
        %v10048 = vadd.f32 %v9793, %v10018
        %v10049 = vadd.f32 %v9795, %v10020
        %v10050 = vadd.f32 %v9798, %v10023
        %v10051 = vadd.f32 %v9800, %v10025
        %v10052 = vadd.f32 %v9803, %v10028
        %v10053 = vadd.f32 %v9805, %v10030
        %v10054 = vadd.f32 %v9808, %v10033
        %v10055 = vadd.f32 %v9810, %v10035
        %v10056 = vadd.f32 %v9813, %v10038
        %v10057 = vadd.f32 %v9815, %v10040
        %v10058 = vld [vmem:[%s6372] sm:$0xf]
        %v10059 = vld [vmem:[%s6372 + $0x4] sm:$0xf]
        %v10060 = vld [vmem:[%s6372 + $0xc] sm:$0xf]
        %v10061 = vld [vmem:[%s6372 + $0x10] sm:$0xf]
        %v10062 = vld [vmem:[%s6372 + $0x18] sm:$0xf]
        %v10063 = vld [vmem:[%s6372 + $0x1c] sm:$0xf]
        %v10064 = vld [vmem:[%s6372 + $0x24] sm:$0xf]
        %v10065 = vld [vmem:[%s6372 + $0x28] sm:$0xf]
        %v10066 = vld [vmem:[%s6372 + $0x30] sm:$0xf]
        %v10067 = vld [vmem:[%s6372 + $0x34] sm:$0xf]
        %v10068 = vld [vmem:[%s6372 + $0x3c] sm:$0xf]
        %v10069 = vld [vmem:[%s6372 + $0x40] sm:$0xf]
        %v10070 = vld [vmem:[%s6372 + $0x48] sm:$0xf]
        %v10071 = vld [vmem:[%s6372 + $0x4c] sm:$0xf]
        %v10072 = vld [vmem:[%s6372 + $0x54] sm:$0xf]
        %v10073 = vld [vmem:[%s6372 + $0x58] sm:$0xf]
        %v10074 = vld [vmem:[%s7212] sm:$0xf]
        %v10075 = vld [vmem:[%s7212 + $0x4] sm:$0xf]
        %v10076 = vld [vmem:[%s7212 + $0x8] sm:$0xf]
        %v10077 = vld [vmem:[%s7212 + $0xc] sm:$0xf]
        %v10078 = vld [vmem:[%s7212 + $0x10] sm:$0xf]
        %v10079 = vld [vmem:[%s7212 + $0x14] sm:$0xf]
        %v10080 = vld [vmem:[%s7212 + $0x18] sm:$0xf]
        %v10081 = vld [vmem:[%s7212 + $0x1c] sm:$0xf]
        %v10082 = vld [vmem:[%s7212 + $0x20] sm:$0xf]
        %v10083 = vld [vmem:[%s7212 + $0x24] sm:$0xf]
        %v10084 = vld [vmem:[%s7212 + $0x28] sm:$0xf]
        %v10085 = vld [vmem:[%s7212 + $0x2c] sm:$0xf]
        %v10086 = vld [vmem:[%s7212 + $0x30] sm:$0xf]
        %v10087 = vld [vmem:[%s7212 + $0x34] sm:$0xf]
        %v10088 = vld [vmem:[%s7212 + $0x38] sm:$0xf]
        %v10089 = vld [vmem:[%s7212 + $0x3c] sm:$0xf]
        %v10106 = vunpack.c.l.b16 %v10058
        %v10107 = vunpack.c.l.b16 %v10059
        %v10108 = vunpack.c.l.b16 %v10060
        %v10109 = vunpack.c.l.b16 %v10061
        %v10110 = vunpack.c.l.b16 %v10062
        %v10111 = vunpack.c.l.b16 %v10063
        %v10112 = vunpack.c.l.b16 %v10064
        %v10113 = vunpack.c.l.b16 %v10065
        %v10114 = vunpack.c.l.b16 %v10066
        %v10115 = vunpack.c.l.b16 %v10067
        %v10116 = vunpack.c.l.b16 %v10068
        %v10117 = vunpack.c.l.b16 %v10069
        %v10118 = vunpack.c.l.b16 %v10070
        %v10119 = vunpack.c.l.b16 %v10071
        %v10120 = vunpack.c.l.b16 %v10072
        %v10121 = vunpack.c.l.b16 %v10073
        %v10122 = vpack.c.b16 %v10107, %v10106
        %v10123 = vpack.c.b16 %v10109, %v10108
        %v10124 = vpack.c.b16 %v10111, %v10110
        %v10125 = vpack.c.b16 %v10113, %v10112
        %v10126 = vpack.c.b16 %v10115, %v10114
        %v10127 = vpack.c.b16 %v10117, %v10116
        %v10128 = vpack.c.b16 %v10119, %v10118
        %v10129 = vpack.c.b16 %v10121, %v10120
        %v10154 = vunpack.c.l.b16 %v10074
        %v10155 = vunpack.c.l.b16 %v10075
        %v10156 = vunpack.c.l.b16 %v10076
        %v10157 = vunpack.c.l.b16 %v10077
        %v10158 = vunpack.c.l.b16 %v10078
        %v10159 = vunpack.c.l.b16 %v10079
        %v10160 = vunpack.c.l.b16 %v10080
        %v10161 = vunpack.c.l.b16 %v10081
        %v10162 = vunpack.c.l.b16 %v10082
        %v10163 = vunpack.c.l.b16 %v10083
        %v10164 = vunpack.c.l.b16 %v10084
        %v10165 = vunpack.c.l.b16 %v10085
        %v10166 = vunpack.c.l.b16 %v10086
        %v10167 = vunpack.c.l.b16 %v10087
        %v10168 = vunpack.c.l.b16 %v10088
        %v10169 = vunpack.c.l.b16 %v10089
        %v10170 = vpack.c.b16 %v10155, %v10154
        %v10171 = vpack.c.b16 %v10157, %v10156
        %v10172 = vpack.c.b16 %v10159, %v10158
        %v10173 = vpack.c.b16 %v10161, %v10160
        %v10174 = vpack.c.b16 %v10163, %v10162
        %v10175 = vpack.c.b16 %v10165, %v10164
        %v10176 = vpack.c.b16 %v10167, %v10166
        %v10177 = vpack.c.b16 %v10169, %v10168
        %10186 = vmatpush.bf16.msra.mxu0 %v10177
        %10187 = vmatpush.bf16.msra.mxu0 %v10176
        %10188 = vmatpush.bf16.msra.mxu0 %v10175
        %10189 = vmatpush.bf16.msra.mxu0 %v10174
        %10190 = vmatpush.bf16.msra.mxu0 %v10173
        %10191 = vmatpush.bf16.msra.mxu0 %v10172
        %10192 = vmatpush.bf16.msra.mxu0 %v10171
        %10193 = vmatpush.bf16.msra.mxu0 %v10170
        %10194 = vmatmul.bf16.gmra.mxu0 %v10122
        %v10195 = vpop.f32.mrf.mxu0
        %v10196 = vadd.f32 0.0, %v10195
        %v10197 = vpop.f32.mrf.mxu0
        %v10198 = vadd.f32 0.0, %v10197
        %10199 = vmatmul.bf16.gmra.mxu0 %v10123
        %v10200 = vpop.f32.mrf.mxu0
        %v10201 = vadd.f32 0.0, %v10200
        %v10202 = vpop.f32.mrf.mxu0
        %v10203 = vadd.f32 0.0, %v10202
        %10204 = vmatmul.bf16.gmra.mxu0 %v10124
        %v10205 = vpop.f32.mrf.mxu0
        %v10206 = vadd.f32 0.0, %v10205
        %v10207 = vpop.f32.mrf.mxu0
        %v10208 = vadd.f32 0.0, %v10207
        %10209 = vmatmul.bf16.gmra.mxu0 %v10125
        %v10210 = vpop.f32.mrf.mxu0
        %v10211 = vadd.f32 0.0, %v10210
        %v10212 = vpop.f32.mrf.mxu0
        %v10213 = vadd.f32 0.0, %v10212
        %10214 = vmatmul.bf16.gmra.mxu0 %v10126
        %v10215 = vpop.f32.mrf.mxu0
        %v10216 = vadd.f32 0.0, %v10215
        %v10217 = vpop.f32.mrf.mxu0
        %v10218 = vadd.f32 0.0, %v10217
        %10219 = vmatmul.bf16.gmra.mxu0 %v10127
        %v10220 = vpop.f32.mrf.mxu0
        %v10221 = vadd.f32 0.0, %v10220
        %v10222 = vpop.f32.mrf.mxu0
        %v10223 = vadd.f32 0.0, %v10222
        %10224 = vmatmul.bf16.gmra.mxu0 %v10128
        %v10225 = vpop.f32.mrf.mxu0
        %v10226 = vadd.f32 0.0, %v10225
        %v10227 = vpop.f32.mrf.mxu0
        %v10228 = vadd.f32 0.0, %v10227
        %10229 = vmatmul.bf16.gmra.mxu0 %v10129
        %v10230 = vpop.f32.mrf.mxu0
        %v10231 = vadd.f32 0.0, %v10230
        %v10232 = vpop.f32.mrf.mxu0
        %v10233 = vadd.f32 0.0, %v10232
        %10234 = vdwg.mxu0
        %v10235 = vadd.f32 %v10042, %v10196
        %v10236 = vadd.f32 %v10043, %v10198
        %v10237 = vadd.f32 %v10044, %v10201
        %v10238 = vadd.f32 %v10045, %v10203
        %v10239 = vadd.f32 %v10046, %v10206
        %v10240 = vadd.f32 %v10047, %v10208
        %v10241 = vadd.f32 %v10048, %v10211
        %v10242 = vadd.f32 %v10049, %v10213
        %v10243 = vadd.f32 %v10050, %v10216
        %v10244 = vadd.f32 %v10051, %v10218
        %v10245 = vadd.f32 %v10052, %v10221
        %v10246 = vadd.f32 %v10053, %v10223
        %v10247 = vadd.f32 %v10054, %v10226
        %v10248 = vadd.f32 %v10055, %v10228
        %v10249 = vadd.f32 %v10056, %v10231
        %v10250 = vadd.f32 %v10057, %v10233
        %v10251 = vld [vmem:[%s6372] sm:$0xf]
        %v10252 = vld [vmem:[%s6372 + $0x4] sm:$0xf]
        %v10253 = vld [vmem:[%s6372 + $0x8] sm:$0x1]
        %v10254 = vld [vmem:[%s6372 + $0xc] sm:$0xf]
        %v10255 = vld [vmem:[%s6372 + $0x10] sm:$0xf]
        %v10256 = vld [vmem:[%s6372 + $0x14] sm:$0x1]
        %v10257 = vld [vmem:[%s6372 + $0x18] sm:$0xf]
        %v10258 = vld [vmem:[%s6372 + $0x1c] sm:$0xf]
        %v10259 = vld [vmem:[%s6372 + $0x20] sm:$0x1]
        %v10260 = vld [vmem:[%s6372 + $0x24] sm:$0xf]
        %v10261 = vld [vmem:[%s6372 + $0x28] sm:$0xf]
        %v10262 = vld [vmem:[%s6372 + $0x2c] sm:$0x1]
        %v10263 = vld [vmem:[%s6372 + $0x30] sm:$0xf]
        %v10264 = vld [vmem:[%s6372 + $0x34] sm:$0xf]
        %v10265 = vld [vmem:[%s6372 + $0x38] sm:$0x1]
        %v10266 = vld [vmem:[%s6372 + $0x3c] sm:$0xf]
        %v10267 = vld [vmem:[%s6372 + $0x40] sm:$0xf]
        %v10268 = vld [vmem:[%s6372 + $0x44] sm:$0x1]
        %v10269 = vld [vmem:[%s6372 + $0x48] sm:$0xf]
        %v10270 = vld [vmem:[%s6372 + $0x4c] sm:$0xf]
        %v10271 = vld [vmem:[%s6372 + $0x50] sm:$0x1]
        %v10272 = vld [vmem:[%s6372 + $0x54] sm:$0xf]
        %v10273 = vld [vmem:[%s6372 + $0x58] sm:$0xf]
        %v10274 = vld [vmem:[%s6372 + $0x5c] sm:$0x1]
        %v10276 = vshrl.u32 %v10251, 16
        %v10278 = vrot.slane %v10276, 4
        %v10279 = vshll.u32 %v10251, 16
        %v10281 = vrot.slane %v10279, 5
        %v10282 = vor.u32 %v10278, %v10281
        %v10283 = vrot.slane %v10282, 4
        %v10285 = vshll.u32 %v10252, 16
        %v10287 = vrot.slane %v10285, 5
        %v10288 = vsel %vm1101, %v10283, %v10287
        %v10289 = vshrl.u32 %v10252, 16
        %v10291 = vrot.slane %v10289, 4
        %v10292 = vor.u32 %v10291, %v10287
        %v10293 = vrot.slane %v10292, 4
        %v10295 = vshll.u32 %v10253, 16
        %v10297 = vrot.slane %v10295, 5
        %v10298 = vsel %vm1101, %v10293, %v10297
        %v10300 = vshrl.u32 %v10254, 16
        %v10302 = vrot.slane %v10300, 4
        %v10303 = vshll.u32 %v10254, 16
        %v10305 = vrot.slane %v10303, 5
        %v10306 = vor.u32 %v10302, %v10305
        %v10307 = vrot.slane %v10306, 4
        %v10309 = vshll.u32 %v10255, 16
        %v10311 = vrot.slane %v10309, 5
        %v10312 = vsel %vm1101, %v10307, %v10311
        %v10313 = vshrl.u32 %v10255, 16
        %v10315 = vrot.slane %v10313, 4
        %v10316 = vor.u32 %v10315, %v10311
        %v10317 = vrot.slane %v10316, 4
        %v10319 = vshll.u32 %v10256, 16
        %v10321 = vrot.slane %v10319, 5
        %v10322 = vsel %vm1101, %v10317, %v10321
        %v10324 = vshrl.u32 %v10257, 16
        %v10326 = vrot.slane %v10324, 4
        %v10327 = vshll.u32 %v10257, 16
        %v10329 = vrot.slane %v10327, 5
        %v10330 = vor.u32 %v10326, %v10329
        %v10331 = vrot.slane %v10330, 4
        %v10333 = vshll.u32 %v10258, 16
        %v10335 = vrot.slane %v10333, 5
        %v10336 = vsel %vm1101, %v10331, %v10335
        %v10337 = vshrl.u32 %v10258, 16
        %v10339 = vrot.slane %v10337, 4
        %v10340 = vor.u32 %v10339, %v10335
        %v10341 = vrot.slane %v10340, 4
        %v10343 = vshll.u32 %v10259, 16
        %v10345 = vrot.slane %v10343, 5
        %v10346 = vsel %vm1101, %v10341, %v10345
        %v10348 = vshrl.u32 %v10260, 16
        %v10350 = vrot.slane %v10348, 4
        %v10351 = vshll.u32 %v10260, 16
        %v10353 = vrot.slane %v10351, 5
        %v10354 = vor.u32 %v10350, %v10353
        %v10355 = vrot.slane %v10354, 4
        %v10357 = vshll.u32 %v10261, 16
        %v10359 = vrot.slane %v10357, 5
        %v10360 = vsel %vm1101, %v10355, %v10359
        %v10361 = vshrl.u32 %v10261, 16
        %v10363 = vrot.slane %v10361, 4
        %v10364 = vor.u32 %v10363, %v10359
        %v10365 = vrot.slane %v10364, 4
        %v10367 = vshll.u32 %v10262, 16
        %v10369 = vrot.slane %v10367, 5
        %v10370 = vsel %vm1101, %v10365, %v10369
        %v10372 = vshrl.u32 %v10263, 16
        %v10374 = vrot.slane %v10372, 4
        %v10375 = vshll.u32 %v10263, 16
        %v10377 = vrot.slane %v10375, 5
        %v10378 = vor.u32 %v10374, %v10377
        %v10379 = vrot.slane %v10378, 4
        %v10381 = vshll.u32 %v10264, 16
        %v10383 = vrot.slane %v10381, 5
        %v10384 = vsel %vm1101, %v10379, %v10383
        %v10385 = vshrl.u32 %v10264, 16
        %v10387 = vrot.slane %v10385, 4
        %v10388 = vor.u32 %v10387, %v10383
        %v10389 = vrot.slane %v10388, 4
        %v10391 = vshll.u32 %v10265, 16
        %v10393 = vrot.slane %v10391, 5
        %v10394 = vsel %vm1101, %v10389, %v10393
        %v10396 = vshrl.u32 %v10266, 16
        %v10398 = vrot.slane %v10396, 4
        %v10399 = vshll.u32 %v10266, 16
        %v10401 = vrot.slane %v10399, 5
        %v10402 = vor.u32 %v10398, %v10401
        %v10403 = vrot.slane %v10402, 4
        %v10405 = vshll.u32 %v10267, 16
        %v10407 = vrot.slane %v10405, 5
        %v10408 = vsel %vm1101, %v10403, %v10407
        %v10409 = vshrl.u32 %v10267, 16
        %v10411 = vrot.slane %v10409, 4
        %v10412 = vor.u32 %v10411, %v10407
        %v10413 = vrot.slane %v10412, 4
        %v10415 = vshll.u32 %v10268, 16
        %v10417 = vrot.slane %v10415, 5
        %v10418 = vsel %vm1101, %v10413, %v10417
        %v10420 = vshrl.u32 %v10269, 16
        %v10422 = vrot.slane %v10420, 4
        %v10423 = vshll.u32 %v10269, 16
        %v10425 = vrot.slane %v10423, 5
        %v10426 = vor.u32 %v10422, %v10425
        %v10427 = vrot.slane %v10426, 4
        %v10429 = vshll.u32 %v10270, 16
        %v10431 = vrot.slane %v10429, 5
        %v10432 = vsel %vm1101, %v10427, %v10431
        %v10433 = vshrl.u32 %v10270, 16
        %v10435 = vrot.slane %v10433, 4
        %v10436 = vor.u32 %v10435, %v10431
        %v10437 = vrot.slane %v10436, 4
        %v10439 = vshll.u32 %v10271, 16
        %v10441 = vrot.slane %v10439, 5
        %v10442 = vsel %vm1101, %v10437, %v10441
        %v10444 = vshrl.u32 %v10272, 16
        %v10446 = vrot.slane %v10444, 4
        %v10447 = vshll.u32 %v10272, 16
        %v10449 = vrot.slane %v10447, 5
        %v10450 = vor.u32 %v10446, %v10449
        %v10451 = vrot.slane %v10450, 4
        %v10453 = vshll.u32 %v10273, 16
        %v10455 = vrot.slane %v10453, 5
        %v10456 = vsel %vm1101, %v10451, %v10455
        %v10457 = vshrl.u32 %v10273, 16
        %v10459 = vrot.slane %v10457, 4
        %v10460 = vor.u32 %v10459, %v10455
        %v10461 = vrot.slane %v10460, 4
        %v10463 = vshll.u32 %v10274, 16
        %v10465 = vrot.slane %v10463, 5
        %v10466 = vsel %vm1101, %v10461, %v10465
        %v10467 = vld [vmem:[%s7606] sm:$0xf]
        %v10468 = vld [vmem:[%s7606 + $0x4] sm:$0xf]
        %v10469 = vld [vmem:[%s7606 + $0x8] sm:$0xf]
        %v10470 = vld [vmem:[%s7606 + $0xc] sm:$0xf]
        %v10471 = vld [vmem:[%s7606 + $0x10] sm:$0xf]
        %v10472 = vld [vmem:[%s7606 + $0x14] sm:$0xf]
        %v10473 = vld [vmem:[%s7606 + $0x18] sm:$0xf]
        %v10474 = vld [vmem:[%s7606 + $0x1c] sm:$0xf]
        %v10475 = vld [vmem:[%s7606 + $0x20] sm:$0xf]
        %v10476 = vld [vmem:[%s7606 + $0x24] sm:$0xf]
        %v10477 = vld [vmem:[%s7606 + $0x28] sm:$0xf]
        %v10478 = vld [vmem:[%s7606 + $0x2c] sm:$0xf]
        %v10479 = vld [vmem:[%s7606 + $0x30] sm:$0xf]
        %v10480 = vld [vmem:[%s7606 + $0x34] sm:$0xf]
        %v10481 = vld [vmem:[%s7606 + $0x38] sm:$0xf]
        %v10482 = vld [vmem:[%s7606 + $0x3c] sm:$0xf]
        %v10483 = vunpack.c.l.b16 %v10288
        %v10484 = vunpack.c.l.b16 %v10298
        %v10485 = vunpack.c.l.b16 %v10312
        %v10486 = vunpack.c.l.b16 %v10322
        %v10487 = vunpack.c.l.b16 %v10336
        %v10488 = vunpack.c.l.b16 %v10346
        %v10489 = vunpack.c.l.b16 %v10360
        %v10490 = vunpack.c.l.b16 %v10370
        %v10491 = vunpack.c.l.b16 %v10384
        %v10492 = vunpack.c.l.b16 %v10394
        %v10493 = vunpack.c.l.b16 %v10408
        %v10494 = vunpack.c.l.b16 %v10418
        %v10495 = vunpack.c.l.b16 %v10432
        %v10496 = vunpack.c.l.b16 %v10442
        %v10497 = vunpack.c.l.b16 %v10456
        %v10498 = vunpack.c.l.b16 %v10466
        %v10499 = vpack.c.b16 %v10484, %v10483
        %v10500 = vpack.c.b16 %v10486, %v10485
        %v10501 = vpack.c.b16 %v10488, %v10487
        %v10502 = vpack.c.b16 %v10490, %v10489
        %v10503 = vpack.c.b16 %v10492, %v10491
        %v10504 = vpack.c.b16 %v10494, %v10493
        %v10505 = vpack.c.b16 %v10496, %v10495
        %v10506 = vpack.c.b16 %v10498, %v10497
        %v10531 = vunpack.c.l.b16 %v10467
        %v10532 = vunpack.c.l.b16 %v10468
        %v10533 = vunpack.c.l.b16 %v10469
        %v10534 = vunpack.c.l.b16 %v10470
        %v10535 = vunpack.c.l.b16 %v10471
        %v10536 = vunpack.c.l.b16 %v10472
        %v10537 = vunpack.c.l.b16 %v10473
        %v10538 = vunpack.c.l.b16 %v10474
        %v10539 = vunpack.c.l.b16 %v10475
        %v10540 = vunpack.c.l.b16 %v10476
        %v10541 = vunpack.c.l.b16 %v10477
        %v10542 = vunpack.c.l.b16 %v10478
        %v10543 = vunpack.c.l.b16 %v10479
        %v10544 = vunpack.c.l.b16 %v10480
        %v10545 = vunpack.c.l.b16 %v10481
        %v10546 = vunpack.c.l.b16 %v10482
        %v10547 = vpack.c.b16 %v10532, %v10531
        %v10548 = vpack.c.b16 %v10534, %v10533
        %v10549 = vpack.c.b16 %v10536, %v10535
        %v10550 = vpack.c.b16 %v10538, %v10537
        %v10551 = vpack.c.b16 %v10540, %v10539
        %v10552 = vpack.c.b16 %v10542, %v10541
        %v10553 = vpack.c.b16 %v10544, %v10543
        %v10554 = vpack.c.b16 %v10546, %v10545
        %10563 = vmatpush.bf16.msra.mxu0 %v10554
        %10564 = vmatpush.bf16.msra.mxu0 %v10553
        %10565 = vmatpush.bf16.msra.mxu0 %v10552
        %10566 = vmatpush.bf16.msra.mxu0 %v10551
        %10567 = vmatpush.bf16.msra.mxu0 %v10550
        %10568 = vmatpush.bf16.msra.mxu0 %v10549
        %10569 = vmatpush.bf16.msra.mxu0 %v10548
        %10570 = vmatpush.bf16.msra.mxu0 %v10547
        %10571 = vmatmul.bf16.gmra.mxu0 %v10499
        %v10572 = vpop.f32.mrf.mxu0
        %v10573 = vadd.f32 0.0, %v10572
        %v10574 = vpop.f32.mrf.mxu0
        %v10575 = vadd.f32 0.0, %v10574
        %10576 = vmatmul.bf16.gmra.mxu0 %v10500
        %v10577 = vpop.f32.mrf.mxu0
        %v10578 = vadd.f32 0.0, %v10577
        %v10579 = vpop.f32.mrf.mxu0
        %v10580 = vadd.f32 0.0, %v10579
        %10581 = vmatmul.bf16.gmra.mxu0 %v10501
        %v10582 = vpop.f32.mrf.mxu0
        %v10583 = vadd.f32 0.0, %v10582
        %v10584 = vpop.f32.mrf.mxu0
        %v10585 = vadd.f32 0.0, %v10584
        %10586 = vmatmul.bf16.gmra.mxu0 %v10502
        %v10587 = vpop.f32.mrf.mxu0
        %v10588 = vadd.f32 0.0, %v10587
        %v10589 = vpop.f32.mrf.mxu0
        %v10590 = vadd.f32 0.0, %v10589
        %10591 = vmatmul.bf16.gmra.mxu0 %v10503
        %v10592 = vpop.f32.mrf.mxu0
        %v10593 = vadd.f32 0.0, %v10592
        %v10594 = vpop.f32.mrf.mxu0
        %v10595 = vadd.f32 0.0, %v10594
        %10596 = vmatmul.bf16.gmra.mxu0 %v10504
        %v10597 = vpop.f32.mrf.mxu0
        %v10598 = vadd.f32 0.0, %v10597
        %v10599 = vpop.f32.mrf.mxu0
        %v10600 = vadd.f32 0.0, %v10599
        %10601 = vmatmul.bf16.gmra.mxu0 %v10505
        %v10602 = vpop.f32.mrf.mxu0
        %v10603 = vadd.f32 0.0, %v10602
        %v10604 = vpop.f32.mrf.mxu0
        %v10605 = vadd.f32 0.0, %v10604
        %10606 = vmatmul.bf16.gmra.mxu0 %v10506
        %v10607 = vpop.f32.mrf.mxu0
        %v10608 = vadd.f32 0.0, %v10607
        %v10609 = vpop.f32.mrf.mxu0
        %v10610 = vadd.f32 0.0, %v10609
        %10611 = vdwg.mxu0
        %v10612 = vadd.f32 %v10235, %v10573
        %v10613 = vadd.f32 %v10236, %v10575
        %v10614 = vadd.f32 %v10237, %v10578
        %v10615 = vadd.f32 %v10238, %v10580
        %v10616 = vadd.f32 %v10239, %v10583
        %v10617 = vadd.f32 %v10240, %v10585
        %v10618 = vadd.f32 %v10241, %v10588
        %v10619 = vadd.f32 %v10242, %v10590
        %v10620 = vadd.f32 %v10243, %v10593
        %v10621 = vadd.f32 %v10244, %v10595
        %v10622 = vadd.f32 %v10245, %v10598
        %v10623 = vadd.f32 %v10246, %v10600
        %v10624 = vadd.f32 %v10247, %v10603
        %v10625 = vadd.f32 %v10248, %v10605
        %v10626 = vadd.f32 %v10249, %v10608
        %v10627 = vadd.f32 %v10250, %v10610
        %v10628 = vld [vmem:[%s6372] sm:$0xe]
        %v10629 = vld [vmem:[%s6372 + $0xc] sm:$0xe]
        %v10630 = vld [vmem:[%s6372 + $0x18] sm:$0xe]
        %v10631 = vld [vmem:[%s6372 + $0x24] sm:$0xe]
        %v10632 = vld [vmem:[%s6372 + $0x30] sm:$0xe]
        %v10633 = vld [vmem:[%s6372 + $0x3c] sm:$0xe]
        %v10634 = vld [vmem:[%s6372 + $0x48] sm:$0xe]
        %v10635 = vld [vmem:[%s6372 + $0x54] sm:$0xe]
        %v10660 = vrot.slane %v10628, 5
        %v10661 = vrot.slane %v10660, 4
        %v10662 = vrot.slane %v10252, 5
        %v10663 = vsel %vm1611, %v10661, %v10662
        %v10664 = vrot.slane %v10662, 4
        %v10665 = vrot.slane %v10253, 5
        %v10666 = vsel %vm1611, %v10664, %v10665
        %v10667 = vrot.slane %v10629, 5
        %v10668 = vrot.slane %v10667, 4
        %v10669 = vrot.slane %v10255, 5
        %v10670 = vsel %vm1611, %v10668, %v10669
        %v10671 = vrot.slane %v10669, 4
        %v10672 = vrot.slane %v10256, 5
        %v10673 = vsel %vm1611, %v10671, %v10672
        %v10674 = vrot.slane %v10630, 5
        %v10675 = vrot.slane %v10674, 4
        %v10676 = vrot.slane %v10258, 5
        %v10677 = vsel %vm1611, %v10675, %v10676
        %v10678 = vrot.slane %v10676, 4
        %v10679 = vrot.slane %v10259, 5
        %v10680 = vsel %vm1611, %v10678, %v10679
        %v10681 = vrot.slane %v10631, 5
        %v10682 = vrot.slane %v10681, 4
        %v10683 = vrot.slane %v10261, 5
        %v10684 = vsel %vm1611, %v10682, %v10683
        %v10685 = vrot.slane %v10683, 4
        %v10686 = vrot.slane %v10262, 5
        %v10687 = vsel %vm1611, %v10685, %v10686
        %v10688 = vrot.slane %v10632, 5
        %v10689 = vrot.slane %v10688, 4
        %v10690 = vrot.slane %v10264, 5
        %v10691 = vsel %vm1611, %v10689, %v10690
        %v10692 = vrot.slane %v10690, 4
        %v10693 = vrot.slane %v10265, 5
        %v10694 = vsel %vm1611, %v10692, %v10693
        %v10695 = vrot.slane %v10633, 5
        %v10696 = vrot.slane %v10695, 4
        %v10697 = vrot.slane %v10267, 5
        %v10698 = vsel %vm1611, %v10696, %v10697
        %v10699 = vrot.slane %v10697, 4
        %v10700 = vrot.slane %v10268, 5
        %v10701 = vsel %vm1611, %v10699, %v10700
        %v10702 = vrot.slane %v10634, 5
        %v10703 = vrot.slane %v10702, 4
        %v10704 = vrot.slane %v10270, 5
        %v10705 = vsel %vm1611, %v10703, %v10704
        %v10706 = vrot.slane %v10704, 4
        %v10707 = vrot.slane %v10271, 5
        %v10708 = vsel %vm1611, %v10706, %v10707
        %v10709 = vrot.slane %v10635, 5
        %v10710 = vrot.slane %v10709, 4
        %v10711 = vrot.slane %v10273, 5
        %v10712 = vsel %vm1611, %v10710, %v10711
        %v10713 = vrot.slane %v10711, 4
        %v10714 = vrot.slane %v10274, 5
        %v10715 = vsel %vm1611, %v10713, %v10714
        %v10716 = vld [vmem:[%s7856] sm:$0xf]
        %v10717 = vld [vmem:[%s7856 + $0x4] sm:$0xf]
        %v10718 = vld [vmem:[%s7856 + $0x8] sm:$0xf]
        %v10719 = vld [vmem:[%s7856 + $0xc] sm:$0xf]
        %v10720 = vld [vmem:[%s7856 + $0x10] sm:$0xf]
        %v10721 = vld [vmem:[%s7856 + $0x14] sm:$0xf]
        %v10722 = vld [vmem:[%s7856 + $0x18] sm:$0xf]
        %v10723 = vld [vmem:[%s7856 + $0x1c] sm:$0xf]
        %v10724 = vld [vmem:[%s7856 + $0x20] sm:$0xf]
        %v10725 = vld [vmem:[%s7856 + $0x24] sm:$0xf]
        %v10726 = vld [vmem:[%s7856 + $0x28] sm:$0xf]
        %v10727 = vld [vmem:[%s7856 + $0x2c] sm:$0xf]
        %v10728 = vld [vmem:[%s7856 + $0x30] sm:$0xf]
        %v10729 = vld [vmem:[%s7856 + $0x34] sm:$0xf]
        %v10730 = vld [vmem:[%s7856 + $0x38] sm:$0xf]
        %v10731 = vld [vmem:[%s7856 + $0x3c] sm:$0xf]
        %v10732 = vunpack.c.l.b16 %v10663
        %v10733 = vunpack.c.l.b16 %v10666
        %v10734 = vunpack.c.l.b16 %v10670
        %v10735 = vunpack.c.l.b16 %v10673
        %v10736 = vunpack.c.l.b16 %v10677
        %v10737 = vunpack.c.l.b16 %v10680
        %v10738 = vunpack.c.l.b16 %v10684
        %v10739 = vunpack.c.l.b16 %v10687
        %v10740 = vunpack.c.l.b16 %v10691
        %v10741 = vunpack.c.l.b16 %v10694
        %v10742 = vunpack.c.l.b16 %v10698
        %v10743 = vunpack.c.l.b16 %v10701
        %v10744 = vunpack.c.l.b16 %v10705
        %v10745 = vunpack.c.l.b16 %v10708
        %v10746 = vunpack.c.l.b16 %v10712
        %v10747 = vunpack.c.l.b16 %v10715
        %v10748 = vpack.c.b16 %v10733, %v10732
        %v10749 = vpack.c.b16 %v10735, %v10734
        %v10750 = vpack.c.b16 %v10737, %v10736
        %v10751 = vpack.c.b16 %v10739, %v10738
        %v10752 = vpack.c.b16 %v10741, %v10740
        %v10753 = vpack.c.b16 %v10743, %v10742
        %v10754 = vpack.c.b16 %v10745, %v10744
        %v10755 = vpack.c.b16 %v10747, %v10746
        %v10780 = vunpack.c.l.b16 %v10716
        %v10781 = vunpack.c.l.b16 %v10717
        %v10782 = vunpack.c.l.b16 %v10718
        %v10783 = vunpack.c.l.b16 %v10719
        %v10784 = vunpack.c.l.b16 %v10720
        %v10785 = vunpack.c.l.b16 %v10721
        %v10786 = vunpack.c.l.b16 %v10722
        %v10787 = vunpack.c.l.b16 %v10723
        %v10788 = vunpack.c.l.b16 %v10724
        %v10789 = vunpack.c.l.b16 %v10725
        %v10790 = vunpack.c.l.b16 %v10726
        %v10791 = vunpack.c.l.b16 %v10727
        %v10792 = vunpack.c.l.b16 %v10728
        %v10793 = vunpack.c.l.b16 %v10729
        %v10794 = vunpack.c.l.b16 %v10730
        %v10795 = vunpack.c.l.b16 %v10731
        %v10796 = vpack.c.b16 %v10781, %v10780
        %v10797 = vpack.c.b16 %v10783, %v10782
        %v10798 = vpack.c.b16 %v10785, %v10784
        %v10799 = vpack.c.b16 %v10787, %v10786
        %v10800 = vpack.c.b16 %v10789, %v10788
        %v10801 = vpack.c.b16 %v10791, %v10790
        %v10802 = vpack.c.b16 %v10793, %v10792
        %v10803 = vpack.c.b16 %v10795, %v10794
        %10812 = vmatpush.bf16.msra.mxu0 %v10803
        %10813 = vmatpush.bf16.msra.mxu0 %v10802
        %10814 = vmatpush.bf16.msra.mxu0 %v10801
        %10815 = vmatpush.bf16.msra.mxu0 %v10800
        %10816 = vmatpush.bf16.msra.mxu0 %v10799
        %10817 = vmatpush.bf16.msra.mxu0 %v10798
        %10818 = vmatpush.bf16.msra.mxu0 %v10797
        %10819 = vmatpush.bf16.msra.mxu0 %v10796
        %10820 = vmatmul.bf16.gmra.mxu0 %v10748
        %v10821 = vpop.f32.mrf.mxu0
        %v10822 = vadd.f32 0.0, %v10821
        %v10823 = vpop.f32.mrf.mxu0
        %v10824 = vadd.f32 0.0, %v10823
        %10825 = vmatmul.bf16.gmra.mxu0 %v10749
        %v10826 = vpop.f32.mrf.mxu0
        %v10827 = vadd.f32 0.0, %v10826
        %v10828 = vpop.f32.mrf.mxu0
        %v10829 = vadd.f32 0.0, %v10828
        %10830 = vmatmul.bf16.gmra.mxu0 %v10750
        %v10831 = vpop.f32.mrf.mxu0
        %v10832 = vadd.f32 0.0, %v10831
        %v10833 = vpop.f32.mrf.mxu0
        %v10834 = vadd.f32 0.0, %v10833
        %10835 = vmatmul.bf16.gmra.mxu0 %v10751
        %v10836 = vpop.f32.mrf.mxu0
        %v10837 = vadd.f32 0.0, %v10836
        %v10838 = vpop.f32.mrf.mxu0
        %v10839 = vadd.f32 0.0, %v10838
        %10840 = vmatmul.bf16.gmra.mxu0 %v10752
        %v10841 = vpop.f32.mrf.mxu0
        %v10842 = vadd.f32 0.0, %v10841
        %v10843 = vpop.f32.mrf.mxu0
        %v10844 = vadd.f32 0.0, %v10843
        %10845 = vmatmul.bf16.gmra.mxu0 %v10753
        %v10846 = vpop.f32.mrf.mxu0
        %v10847 = vadd.f32 0.0, %v10846
        %v10848 = vpop.f32.mrf.mxu0
        %v10849 = vadd.f32 0.0, %v10848
        %10850 = vmatmul.bf16.gmra.mxu0 %v10754
        %v10851 = vpop.f32.mrf.mxu0
        %v10852 = vadd.f32 0.0, %v10851
        %v10853 = vpop.f32.mrf.mxu0
        %v10854 = vadd.f32 0.0, %v10853
        %10855 = vmatmul.bf16.gmra.mxu0 %v10755
        %v10856 = vpop.f32.mrf.mxu0
        %v10857 = vadd.f32 0.0, %v10856
        %v10858 = vpop.f32.mrf.mxu0
        %v10859 = vadd.f32 0.0, %v10858
        %10860 = vdwg.mxu0
        %v10861 = vadd.f32 %v10612, %v10822
        %v10862 = vadd.f32 %v10613, %v10824
        %v10863 = vadd.f32 %v10614, %v10827
        %v10864 = vadd.f32 %v10615, %v10829
        %v10865 = vadd.f32 %v10616, %v10832
        %v10866 = vadd.f32 %v10617, %v10834
        %v10867 = vadd.f32 %v10618, %v10837
        %v10868 = vadd.f32 %v10619, %v10839
        %v10869 = vadd.f32 %v10620, %v10842
        %v10870 = vadd.f32 %v10621, %v10844
        %v10871 = vadd.f32 %v10622, %v10847
        %v10872 = vadd.f32 %v10623, %v10849
        %v10873 = vadd.f32 %v10624, %v10852
        %v10874 = vadd.f32 %v10625, %v10854
        %v10875 = vadd.f32 %v10626, %v10857
        %v10876 = vadd.f32 %v10627, %v10859
        %s10877 = smul.addr %s5341, 4
        %s10878 = scalar_lea.vmem [#allocation3], %s10877
        %v10879 = vld [vmem:[%s10878] sm:$0xf]
        %v10880 = vld [vmem:[%s10878 + $0x4] sm:$0xf]
        %v10881 = vld [vmem:[%s10878 + $0xc] sm:$0xf]
        %v10882 = vld [vmem:[%s10878 + $0x10] sm:$0xf]
        %v10883 = vld [vmem:[%s10878 + $0x18] sm:$0xf]
        %v10884 = vld [vmem:[%s10878 + $0x1c] sm:$0xf]
        %v10885 = vld [vmem:[%s10878 + $0x24] sm:$0xf]
        %v10886 = vld [vmem:[%s10878 + $0x28] sm:$0xf]
        %v10887 = vld [vmem:[%s10878 + $0x30] sm:$0xf]
        %v10888 = vld [vmem:[%s10878 + $0x34] sm:$0xf]
        %v10889 = vld [vmem:[%s10878 + $0x3c] sm:$0xf]
        %v10890 = vld [vmem:[%s10878 + $0x40] sm:$0xf]
        %v10891 = vld [vmem:[%s10878 + $0x48] sm:$0xf]
        %v10892 = vld [vmem:[%s10878 + $0x4c] sm:$0xf]
        %v10893 = vld [vmem:[%s10878 + $0x54] sm:$0xf]
        %v10894 = vld [vmem:[%s10878 + $0x58] sm:$0xf]
        %v10895 = vld [vmem:[%s8036] sm:$0xf]
        %v10896 = vld [vmem:[%s8036 + $0x4] sm:$0xf]
        %v10897 = vld [vmem:[%s8036 + $0x8] sm:$0xf]
        %v10898 = vld [vmem:[%s8036 + $0xc] sm:$0xf]
        %v10899 = vld [vmem:[%s8036 + $0x10] sm:$0xf]
        %v10900 = vld [vmem:[%s8036 + $0x14] sm:$0xf]
        %v10901 = vld [vmem:[%s8036 + $0x18] sm:$0xf]
        %v10902 = vld [vmem:[%s8036 + $0x1c] sm:$0xf]
        %v10903 = vld [vmem:[%s8036 + $0x20] sm:$0xf]
        %v10904 = vld [vmem:[%s8036 + $0x24] sm:$0xf]
        %v10905 = vld [vmem:[%s8036 + $0x28] sm:$0xf]
        %v10906 = vld [vmem:[%s8036 + $0x2c] sm:$0xf]
        %v10907 = vld [vmem:[%s8036 + $0x30] sm:$0xf]
        %v10908 = vld [vmem:[%s8036 + $0x34] sm:$0xf]
        %v10909 = vld [vmem:[%s8036 + $0x38] sm:$0xf]
        %v10910 = vld [vmem:[%s8036 + $0x3c] sm:$0xf]
        %v10927 = vunpack.c.l.b16 %v10879
        %v10928 = vunpack.c.l.b16 %v10880
        %v10929 = vunpack.c.l.b16 %v10881
        %v10930 = vunpack.c.l.b16 %v10882
        %v10931 = vunpack.c.l.b16 %v10883
        %v10932 = vunpack.c.l.b16 %v10884
        %v10933 = vunpack.c.l.b16 %v10885
        %v10934 = vunpack.c.l.b16 %v10886
        %v10935 = vunpack.c.l.b16 %v10887
        %v10936 = vunpack.c.l.b16 %v10888
        %v10937 = vunpack.c.l.b16 %v10889
        %v10938 = vunpack.c.l.b16 %v10890
        %v10939 = vunpack.c.l.b16 %v10891
        %v10940 = vunpack.c.l.b16 %v10892
        %v10941 = vunpack.c.l.b16 %v10893
        %v10942 = vunpack.c.l.b16 %v10894
        %v10943 = vpack.c.b16 %v10928, %v10927
        %v10944 = vpack.c.b16 %v10930, %v10929
        %v10945 = vpack.c.b16 %v10932, %v10931
        %v10946 = vpack.c.b16 %v10934, %v10933
        %v10947 = vpack.c.b16 %v10936, %v10935
        %v10948 = vpack.c.b16 %v10938, %v10937
        %v10949 = vpack.c.b16 %v10940, %v10939
        %v10950 = vpack.c.b16 %v10942, %v10941
        %v10975 = vunpack.c.l.b16 %v10895
        %v10976 = vunpack.c.l.b16 %v10896
        %v10977 = vunpack.c.l.b16 %v10897
        %v10978 = vunpack.c.l.b16 %v10898
        %v10979 = vunpack.c.l.b16 %v10899
        %v10980 = vunpack.c.l.b16 %v10900
        %v10981 = vunpack.c.l.b16 %v10901
        %v10982 = vunpack.c.l.b16 %v10902
        %v10983 = vunpack.c.l.b16 %v10903
        %v10984 = vunpack.c.l.b16 %v10904
        %v10985 = vunpack.c.l.b16 %v10905
        %v10986 = vunpack.c.l.b16 %v10906
        %v10987 = vunpack.c.l.b16 %v10907
        %v10988 = vunpack.c.l.b16 %v10908
        %v10989 = vunpack.c.l.b16 %v10909
        %v10990 = vunpack.c.l.b16 %v10910
        %v10991 = vpack.c.b16 %v10976, %v10975
        %v10992 = vpack.c.b16 %v10978, %v10977
        %v10993 = vpack.c.b16 %v10980, %v10979
        %v10994 = vpack.c.b16 %v10982, %v10981
        %v10995 = vpack.c.b16 %v10984, %v10983
        %v10996 = vpack.c.b16 %v10986, %v10985
        %v10997 = vpack.c.b16 %v10988, %v10987
        %v10998 = vpack.c.b16 %v10990, %v10989
        %11007 = vmatpush.bf16.msra.mxu0 %v10998
        %11008 = vmatpush.bf16.msra.mxu0 %v10997
        %11009 = vmatpush.bf16.msra.mxu0 %v10996
        %11010 = vmatpush.bf16.msra.mxu0 %v10995
        %11011 = vmatpush.bf16.msra.mxu0 %v10994
        %11012 = vmatpush.bf16.msra.mxu0 %v10993
        %11013 = vmatpush.bf16.msra.mxu0 %v10992
        %11014 = vmatpush.bf16.msra.mxu0 %v10991
        %11015 = vmatmul.bf16.gmra.mxu0 %v10943
        %v11016 = vpop.f32.mrf.mxu0
        %v11017 = vadd.f32 0.0, %v11016
        %v11018 = vpop.f32.mrf.mxu0
        %v11019 = vadd.f32 0.0, %v11018
        %11020 = vmatmul.bf16.gmra.mxu0 %v10944
        %v11021 = vpop.f32.mrf.mxu0
        %v11022 = vadd.f32 0.0, %v11021
        %v11023 = vpop.f32.mrf.mxu0
        %v11024 = vadd.f32 0.0, %v11023
        %11025 = vmatmul.bf16.gmra.mxu0 %v10945
        %v11026 = vpop.f32.mrf.mxu0
        %v11027 = vadd.f32 0.0, %v11026
        %v11028 = vpop.f32.mrf.mxu0
        %v11029 = vadd.f32 0.0, %v11028
        %11030 = vmatmul.bf16.gmra.mxu0 %v10946
        %v11031 = vpop.f32.mrf.mxu0
        %v11032 = vadd.f32 0.0, %v11031
        %v11033 = vpop.f32.mrf.mxu0
        %v11034 = vadd.f32 0.0, %v11033
        %11035 = vmatmul.bf16.gmra.mxu0 %v10947
        %v11036 = vpop.f32.mrf.mxu0
        %v11037 = vadd.f32 0.0, %v11036
        %v11038 = vpop.f32.mrf.mxu0
        %v11039 = vadd.f32 0.0, %v11038
        %11040 = vmatmul.bf16.gmra.mxu0 %v10948
        %v11041 = vpop.f32.mrf.mxu0
        %v11042 = vadd.f32 0.0, %v11041
        %v11043 = vpop.f32.mrf.mxu0
        %v11044 = vadd.f32 0.0, %v11043
        %11045 = vmatmul.bf16.gmra.mxu0 %v10949
        %v11046 = vpop.f32.mrf.mxu0
        %v11047 = vadd.f32 0.0, %v11046
        %v11048 = vpop.f32.mrf.mxu0
        %v11049 = vadd.f32 0.0, %v11048
        %11050 = vmatmul.bf16.gmra.mxu0 %v10950
        %v11051 = vpop.f32.mrf.mxu0
        %v11052 = vadd.f32 0.0, %v11051
        %v11053 = vpop.f32.mrf.mxu0
        %v11054 = vadd.f32 0.0, %v11053
        %11055 = vdwg.mxu0
        %v11056 = vadd.f32 %v10861, %v11017
        %v11057 = vadd.f32 %v10862, %v11019
        %v11058 = vadd.f32 %v10863, %v11022
        %v11059 = vadd.f32 %v10864, %v11024
        %v11060 = vadd.f32 %v10865, %v11027
        %v11061 = vadd.f32 %v10866, %v11029
        %v11062 = vadd.f32 %v10867, %v11032
        %v11063 = vadd.f32 %v10868, %v11034
        %v11064 = vadd.f32 %v10869, %v11037
        %v11065 = vadd.f32 %v10870, %v11039
        %v11066 = vadd.f32 %v10871, %v11042
        %v11067 = vadd.f32 %v10872, %v11044
        %v11068 = vadd.f32 %v10873, %v11047
        %v11069 = vadd.f32 %v10874, %v11049
        %v11070 = vadd.f32 %v10875, %v11052
        %v11071 = vadd.f32 %v10876, %v11054
        %v11072 = vld [vmem:[%s10878] sm:$0xf]
        %v11073 = vld [vmem:[%s10878 + $0x4] sm:$0xf]
        %v11074 = vld [vmem:[%s10878 + $0x8] sm:$0x1]
        %v11075 = vld [vmem:[%s10878 + $0xc] sm:$0xf]
        %v11076 = vld [vmem:[%s10878 + $0x10] sm:$0xf]
        %v11077 = vld [vmem:[%s10878 + $0x14] sm:$0x1]
        %v11078 = vld [vmem:[%s10878 + $0x18] sm:$0xf]
        %v11079 = vld [vmem:[%s10878 + $0x1c] sm:$0xf]
        %v11080 = vld [vmem:[%s10878 + $0x20] sm:$0x1]
        %v11081 = vld [vmem:[%s10878 + $0x24] sm:$0xf]
        %v11082 = vld [vmem:[%s10878 + $0x28] sm:$0xf]
        %v11083 = vld [vmem:[%s10878 + $0x2c] sm:$0x1]
        %v11084 = vld [vmem:[%s10878 + $0x30] sm:$0xf]
        %v11085 = vld [vmem:[%s10878 + $0x34] sm:$0xf]
        %v11086 = vld [vmem:[%s10878 + $0x38] sm:$0x1]
        %v11087 = vld [vmem:[%s10878 + $0x3c] sm:$0xf]
        %v11088 = vld [vmem:[%s10878 + $0x40] sm:$0xf]
        %v11089 = vld [vmem:[%s10878 + $0x44] sm:$0x1]
        %v11090 = vld [vmem:[%s10878 + $0x48] sm:$0xf]
        %v11091 = vld [vmem:[%s10878 + $0x4c] sm:$0xf]
        %v11092 = vld [vmem:[%s10878 + $0x50] sm:$0x1]
        %v11093 = vld [vmem:[%s10878 + $0x54] sm:$0xf]
        %v11094 = vld [vmem:[%s10878 + $0x58] sm:$0xf]
        %v11095 = vld [vmem:[%s10878 + $0x5c] sm:$0x1]
        %v11097 = vshrl.u32 %v11072, 16
        %v11099 = vrot.slane %v11097, 4
        %v11100 = vshll.u32 %v11072, 16
        %v11102 = vrot.slane %v11100, 5
        %v11103 = vor.u32 %v11099, %v11102
        %v11104 = vrot.slane %v11103, 4
        %v11106 = vshll.u32 %v11073, 16
        %v11108 = vrot.slane %v11106, 5
        %v11109 = vsel %vm1101, %v11104, %v11108
        %v11110 = vshrl.u32 %v11073, 16
        %v11112 = vrot.slane %v11110, 4
        %v11113 = vor.u32 %v11112, %v11108
        %v11114 = vrot.slane %v11113, 4
        %v11116 = vshll.u32 %v11074, 16
        %v11118 = vrot.slane %v11116, 5
        %v11119 = vsel %vm1101, %v11114, %v11118
        %v11121 = vshrl.u32 %v11075, 16
        %v11123 = vrot.slane %v11121, 4
        %v11124 = vshll.u32 %v11075, 16
        %v11126 = vrot.slane %v11124, 5
        %v11127 = vor.u32 %v11123, %v11126
        %v11128 = vrot.slane %v11127, 4
        %v11130 = vshll.u32 %v11076, 16
        %v11132 = vrot.slane %v11130, 5
        %v11133 = vsel %vm1101, %v11128, %v11132
        %v11134 = vshrl.u32 %v11076, 16
        %v11136 = vrot.slane %v11134, 4
        %v11137 = vor.u32 %v11136, %v11132
        %v11138 = vrot.slane %v11137, 4
        %v11140 = vshll.u32 %v11077, 16
        %v11142 = vrot.slane %v11140, 5
        %v11143 = vsel %vm1101, %v11138, %v11142
        %v11145 = vshrl.u32 %v11078, 16
        %v11147 = vrot.slane %v11145, 4
        %v11148 = vshll.u32 %v11078, 16
        %v11150 = vrot.slane %v11148, 5
        %v11151 = vor.u32 %v11147, %v11150
        %v11152 = vrot.slane %v11151, 4
        %v11154 = vshll.u32 %v11079, 16
        %v11156 = vrot.slane %v11154, 5
        %v11157 = vsel %vm1101, %v11152, %v11156
        %v11158 = vshrl.u32 %v11079, 16
        %v11160 = vrot.slane %v11158, 4
        %v11161 = vor.u32 %v11160, %v11156
        %v11162 = vrot.slane %v11161, 4
        %v11164 = vshll.u32 %v11080, 16
        %v11166 = vrot.slane %v11164, 5
        %v11167 = vsel %vm1101, %v11162, %v11166
        %v11169 = vshrl.u32 %v11081, 16
        %v11171 = vrot.slane %v11169, 4
        %v11172 = vshll.u32 %v11081, 16
        %v11174 = vrot.slane %v11172, 5
        %v11175 = vor.u32 %v11171, %v11174
        %v11176 = vrot.slane %v11175, 4
        %v11178 = vshll.u32 %v11082, 16
        %v11180 = vrot.slane %v11178, 5
        %v11181 = vsel %vm1101, %v11176, %v11180
        %v11182 = vshrl.u32 %v11082, 16
        %v11184 = vrot.slane %v11182, 4
        %v11185 = vor.u32 %v11184, %v11180
        %v11186 = vrot.slane %v11185, 4
        %v11188 = vshll.u32 %v11083, 16
        %v11190 = vrot.slane %v11188, 5
        %v11191 = vsel %vm1101, %v11186, %v11190
        %v11193 = vshrl.u32 %v11084, 16
        %v11195 = vrot.slane %v11193, 4
        %v11196 = vshll.u32 %v11084, 16
        %v11198 = vrot.slane %v11196, 5
        %v11199 = vor.u32 %v11195, %v11198
        %v11200 = vrot.slane %v11199, 4
        %v11202 = vshll.u32 %v11085, 16
        %v11204 = vrot.slane %v11202, 5
        %v11205 = vsel %vm1101, %v11200, %v11204
        %v11206 = vshrl.u32 %v11085, 16
        %v11208 = vrot.slane %v11206, 4
        %v11209 = vor.u32 %v11208, %v11204
        %v11210 = vrot.slane %v11209, 4
        %v11212 = vshll.u32 %v11086, 16
        %v11214 = vrot.slane %v11212, 5
        %v11215 = vsel %vm1101, %v11210, %v11214
        %v11217 = vshrl.u32 %v11087, 16
        %v11219 = vrot.slane %v11217, 4
        %v11220 = vshll.u32 %v11087, 16
        %v11222 = vrot.slane %v11220, 5
        %v11223 = vor.u32 %v11219, %v11222
        %v11224 = vrot.slane %v11223, 4
        %v11226 = vshll.u32 %v11088, 16
        %v11228 = vrot.slane %v11226, 5
        %v11229 = vsel %vm1101, %v11224, %v11228
        %v11230 = vshrl.u32 %v11088, 16
        %v11232 = vrot.slane %v11230, 4
        %v11233 = vor.u32 %v11232, %v11228
        %v11234 = vrot.slane %v11233, 4
        %v11236 = vshll.u32 %v11089, 16
        %v11238 = vrot.slane %v11236, 5
        %v11239 = vsel %vm1101, %v11234, %v11238
        %v11241 = vshrl.u32 %v11090, 16
        %v11243 = vrot.slane %v11241, 4
        %v11244 = vshll.u32 %v11090, 16
        %v11246 = vrot.slane %v11244, 5
        %v11247 = vor.u32 %v11243, %v11246
        %v11248 = vrot.slane %v11247, 4
        %v11250 = vshll.u32 %v11091, 16
        %v11252 = vrot.slane %v11250, 5
        %v11253 = vsel %vm1101, %v11248, %v11252
        %v11254 = vshrl.u32 %v11091, 16
        %v11256 = vrot.slane %v11254, 4
        %v11257 = vor.u32 %v11256, %v11252
        %v11258 = vrot.slane %v11257, 4
        %v11260 = vshll.u32 %v11092, 16
        %v11262 = vrot.slane %v11260, 5
        %v11263 = vsel %vm1101, %v11258, %v11262
        %v11265 = vshrl.u32 %v11093, 16
        %v11267 = vrot.slane %v11265, 4
        %v11268 = vshll.u32 %v11093, 16
        %v11270 = vrot.slane %v11268, 5
        %v11271 = vor.u32 %v11267, %v11270
        %v11272 = vrot.slane %v11271, 4
        %v11274 = vshll.u32 %v11094, 16
        %v11276 = vrot.slane %v11274, 5
        %v11277 = vsel %vm1101, %v11272, %v11276
        %v11278 = vshrl.u32 %v11094, 16
        %v11280 = vrot.slane %v11278, 4
        %v11281 = vor.u32 %v11280, %v11276
        %v11282 = vrot.slane %v11281, 4
        %v11284 = vshll.u32 %v11095, 16
        %v11286 = vrot.slane %v11284, 5
        %v11287 = vsel %vm1101, %v11282, %v11286
        %v11288 = vld [vmem:[%s8430] sm:$0xf]
        %v11289 = vld [vmem:[%s8430 + $0x4] sm:$0xf]
        %v11290 = vld [vmem:[%s8430 + $0x8] sm:$0xf]
        %v11291 = vld [vmem:[%s8430 + $0xc] sm:$0xf]
        %v11292 = vld [vmem:[%s8430 + $0x10] sm:$0xf]
        %v11293 = vld [vmem:[%s8430 + $0x14] sm:$0xf]
        %v11294 = vld [vmem:[%s8430 + $0x18] sm:$0xf]
        %v11295 = vld [vmem:[%s8430 + $0x1c] sm:$0xf]
        %v11296 = vld [vmem:[%s8430 + $0x20] sm:$0xf]
        %v11297 = vld [vmem:[%s8430 + $0x24] sm:$0xf]
        %v11298 = vld [vmem:[%s8430 + $0x28] sm:$0xf]
        %v11299 = vld [vmem:[%s8430 + $0x2c] sm:$0xf]
        %v11300 = vld [vmem:[%s8430 + $0x30] sm:$0xf]
        %v11301 = vld [vmem:[%s8430 + $0x34] sm:$0xf]
        %v11302 = vld [vmem:[%s8430 + $0x38] sm:$0xf]
        %v11303 = vld [vmem:[%s8430 + $0x3c] sm:$0xf]
        %v11304 = vunpack.c.l.b16 %v11109
        %v11305 = vunpack.c.l.b16 %v11119
        %v11306 = vunpack.c.l.b16 %v11133
        %v11307 = vunpack.c.l.b16 %v11143
        %v11308 = vunpack.c.l.b16 %v11157
        %v11309 = vunpack.c.l.b16 %v11167
        %v11310 = vunpack.c.l.b16 %v11181
        %v11311 = vunpack.c.l.b16 %v11191
        %v11312 = vunpack.c.l.b16 %v11205
        %v11313 = vunpack.c.l.b16 %v11215
        %v11314 = vunpack.c.l.b16 %v11229
        %v11315 = vunpack.c.l.b16 %v11239
        %v11316 = vunpack.c.l.b16 %v11253
        %v11317 = vunpack.c.l.b16 %v11263
        %v11318 = vunpack.c.l.b16 %v11277
        %v11319 = vunpack.c.l.b16 %v11287
        %v11320 = vpack.c.b16 %v11305, %v11304
        %v11321 = vpack.c.b16 %v11307, %v11306
        %v11322 = vpack.c.b16 %v11309, %v11308
        %v11323 = vpack.c.b16 %v11311, %v11310
        %v11324 = vpack.c.b16 %v11313, %v11312
        %v11325 = vpack.c.b16 %v11315, %v11314
        %v11326 = vpack.c.b16 %v11317, %v11316
        %v11327 = vpack.c.b16 %v11319, %v11318
        %v11352 = vunpack.c.l.b16 %v11288
        %v11353 = vunpack.c.l.b16 %v11289
        %v11354 = vunpack.c.l.b16 %v11290
        %v11355 = vunpack.c.l.b16 %v11291
        %v11356 = vunpack.c.l.b16 %v11292
        %v11357 = vunpack.c.l.b16 %v11293
        %v11358 = vunpack.c.l.b16 %v11294
        %v11359 = vunpack.c.l.b16 %v11295
        %v11360 = vunpack.c.l.b16 %v11296
        %v11361 = vunpack.c.l.b16 %v11297
        %v11362 = vunpack.c.l.b16 %v11298
        %v11363 = vunpack.c.l.b16 %v11299
        %v11364 = vunpack.c.l.b16 %v11300
        %v11365 = vunpack.c.l.b16 %v11301
        %v11366 = vunpack.c.l.b16 %v11302
        %v11367 = vunpack.c.l.b16 %v11303
        %v11368 = vpack.c.b16 %v11353, %v11352
        %v11369 = vpack.c.b16 %v11355, %v11354
        %v11370 = vpack.c.b16 %v11357, %v11356
        %v11371 = vpack.c.b16 %v11359, %v11358
        %v11372 = vpack.c.b16 %v11361, %v11360
        %v11373 = vpack.c.b16 %v11363, %v11362
        %v11374 = vpack.c.b16 %v11365, %v11364
        %v11375 = vpack.c.b16 %v11367, %v11366
        %11384 = vmatpush.bf16.msra.mxu0 %v11375
        %11385 = vmatpush.bf16.msra.mxu0 %v11374
        %11386 = vmatpush.bf16.msra.mxu0 %v11373
        %11387 = vmatpush.bf16.msra.mxu0 %v11372
        %11388 = vmatpush.bf16.msra.mxu0 %v11371
        %11389 = vmatpush.bf16.msra.mxu0 %v11370
        %11390 = vmatpush.bf16.msra.mxu0 %v11369
        %11391 = vmatpush.bf16.msra.mxu0 %v11368
        %11392 = vmatmul.bf16.gmra.mxu0 %v11320
        %v11393 = vpop.f32.mrf.mxu0
        %v11394 = vadd.f32 0.0, %v11393
        %v11395 = vpop.f32.mrf.mxu0
        %v11396 = vadd.f32 0.0, %v11395
        %11397 = vmatmul.bf16.gmra.mxu0 %v11321
        %v11398 = vpop.f32.mrf.mxu0
        %v11399 = vadd.f32 0.0, %v11398
        %v11400 = vpop.f32.mrf.mxu0
        %v11401 = vadd.f32 0.0, %v11400
        %11402 = vmatmul.bf16.gmra.mxu0 %v11322
        %v11403 = vpop.f32.mrf.mxu0
        %v11404 = vadd.f32 0.0, %v11403
        %v11405 = vpop.f32.mrf.mxu0
        %v11406 = vadd.f32 0.0, %v11405
        %11407 = vmatmul.bf16.gmra.mxu0 %v11323
        %v11408 = vpop.f32.mrf.mxu0
        %v11409 = vadd.f32 0.0, %v11408
        %v11410 = vpop.f32.mrf.mxu0
        %v11411 = vadd.f32 0.0, %v11410
        %11412 = vmatmul.bf16.gmra.mxu0 %v11324
        %v11413 = vpop.f32.mrf.mxu0
        %v11414 = vadd.f32 0.0, %v11413
        %v11415 = vpop.f32.mrf.mxu0
        %v11416 = vadd.f32 0.0, %v11415
        %11417 = vmatmul.bf16.gmra.mxu0 %v11325
        %v11418 = vpop.f32.mrf.mxu0
        %v11419 = vadd.f32 0.0, %v11418
        %v11420 = vpop.f32.mrf.mxu0
        %v11421 = vadd.f32 0.0, %v11420
        %11422 = vmatmul.bf16.gmra.mxu0 %v11326
        %v11423 = vpop.f32.mrf.mxu0
        %v11424 = vadd.f32 0.0, %v11423
        %v11425 = vpop.f32.mrf.mxu0
        %v11426 = vadd.f32 0.0, %v11425
        %11427 = vmatmul.bf16.gmra.mxu0 %v11327
        %v11428 = vpop.f32.mrf.mxu0
        %v11429 = vadd.f32 0.0, %v11428
        %v11430 = vpop.f32.mrf.mxu0
        %v11431 = vadd.f32 0.0, %v11430
        %11432 = vdwg.mxu0
        %v11433 = vadd.f32 %v11056, %v11394
        %v11434 = vadd.f32 %v11057, %v11396
        %v11435 = vadd.f32 %v11058, %v11399
        %v11436 = vadd.f32 %v11059, %v11401
        %v11437 = vadd.f32 %v11060, %v11404
        %v11438 = vadd.f32 %v11061, %v11406
        %v11439 = vadd.f32 %v11062, %v11409
        %v11440 = vadd.f32 %v11063, %v11411
        %v11441 = vadd.f32 %v11064, %v11414
        %v11442 = vadd.f32 %v11065, %v11416
        %v11443 = vadd.f32 %v11066, %v11419
        %v11444 = vadd.f32 %v11067, %v11421
        %v11445 = vadd.f32 %v11068, %v11424
        %v11446 = vadd.f32 %v11069, %v11426
        %v11447 = vadd.f32 %v11070, %v11429
        %v11448 = vadd.f32 %v11071, %v11431
        %v11449 = vld [vmem:[%s10878] sm:$0xe]
        %v11450 = vld [vmem:[%s10878 + $0xc] sm:$0xe]
        %v11451 = vld [vmem:[%s10878 + $0x18] sm:$0xe]
        %v11452 = vld [vmem:[%s10878 + $0x24] sm:$0xe]
        %v11453 = vld [vmem:[%s10878 + $0x30] sm:$0xe]
        %v11454 = vld [vmem:[%s10878 + $0x3c] sm:$0xe]
        %v11455 = vld [vmem:[%s10878 + $0x48] sm:$0xe]
        %v11456 = vld [vmem:[%s10878 + $0x54] sm:$0xe]
        %v11481 = vrot.slane %v11449, 5
        %v11482 = vrot.slane %v11481, 4
        %v11483 = vrot.slane %v11073, 5
        %v11484 = vsel %vm1611, %v11482, %v11483
        %v11485 = vrot.slane %v11483, 4
        %v11486 = vrot.slane %v11074, 5
        %v11487 = vsel %vm1611, %v11485, %v11486
        %v11488 = vrot.slane %v11450, 5
        %v11489 = vrot.slane %v11488, 4
        %v11490 = vrot.slane %v11076, 5
        %v11491 = vsel %vm1611, %v11489, %v11490
        %v11492 = vrot.slane %v11490, 4
        %v11493 = vrot.slane %v11077, 5
        %v11494 = vsel %vm1611, %v11492, %v11493
        %v11495 = vrot.slane %v11451, 5
        %v11496 = vrot.slane %v11495, 4
        %v11497 = vrot.slane %v11079, 5
        %v11498 = vsel %vm1611, %v11496, %v11497
        %v11499 = vrot.slane %v11497, 4
        %v11500 = vrot.slane %v11080, 5
        %v11501 = vsel %vm1611, %v11499, %v11500
        %v11502 = vrot.slane %v11452, 5
        %v11503 = vrot.slane %v11502, 4
        %v11504 = vrot.slane %v11082, 5
        %v11505 = vsel %vm1611, %v11503, %v11504
        %v11506 = vrot.slane %v11504, 4
        %v11507 = vrot.slane %v11083, 5
        %v11508 = vsel %vm1611, %v11506, %v11507
        %v11509 = vrot.slane %v11453, 5
        %v11510 = vrot.slane %v11509, 4
        %v11511 = vrot.slane %v11085, 5
        %v11512 = vsel %vm1611, %v11510, %v11511
        %v11513 = vrot.slane %v11511, 4
        %v11514 = vrot.slane %v11086, 5
        %v11515 = vsel %vm1611, %v11513, %v11514
        %v11516 = vrot.slane %v11454, 5
        %v11517 = vrot.slane %v11516, 4
        %v11518 = vrot.slane %v11088, 5
        %v11519 = vsel %vm1611, %v11517, %v11518
        %v11520 = vrot.slane %v11518, 4
        %v11521 = vrot.slane %v11089, 5
        %v11522 = vsel %vm1611, %v11520, %v11521
        %v11523 = vrot.slane %v11455, 5
        %v11524 = vrot.slane %v11523, 4
        %v11525 = vrot.slane %v11091, 5
        %v11526 = vsel %vm1611, %v11524, %v11525
        %v11527 = vrot.slane %v11525, 4
        %v11528 = vrot.slane %v11092, 5
        %v11529 = vsel %vm1611, %v11527, %v11528
        %v11530 = vrot.slane %v11456, 5
        %v11531 = vrot.slane %v11530, 4
        %v11532 = vrot.slane %v11094, 5
        %v11533 = vsel %vm1611, %v11531, %v11532
        %v11534 = vrot.slane %v11532, 4
        %v11535 = vrot.slane %v11095, 5
        %v11536 = vsel %vm1611, %v11534, %v11535
        %v11537 = vld [vmem:[%s8680] sm:$0xf]
        %v11538 = vld [vmem:[%s8680 + $0x4] sm:$0xf]
        %v11539 = vld [vmem:[%s8680 + $0x8] sm:$0xf]
        %v11540 = vld [vmem:[%s8680 + $0xc] sm:$0xf]
        %v11541 = vld [vmem:[%s8680 + $0x10] sm:$0xf]
        %v11542 = vld [vmem:[%s8680 + $0x14] sm:$0xf]
        %v11543 = vld [vmem:[%s8680 + $0x18] sm:$0xf]
        %v11544 = vld [vmem:[%s8680 + $0x1c] sm:$0xf]
        %v11545 = vld [vmem:[%s8680 + $0x20] sm:$0xf]
        %v11546 = vld [vmem:[%s8680 + $0x24] sm:$0xf]
        %v11547 = vld [vmem:[%s8680 + $0x28] sm:$0xf]
        %v11548 = vld [vmem:[%s8680 + $0x2c] sm:$0xf]
        %v11549 = vld [vmem:[%s8680 + $0x30] sm:$0xf]
        %v11550 = vld [vmem:[%s8680 + $0x34] sm:$0xf]
        %v11551 = vld [vmem:[%s8680 + $0x38] sm:$0xf]
        %v11552 = vld [vmem:[%s8680 + $0x3c] sm:$0xf]
        %v11553 = vunpack.c.l.b16 %v11484
        %v11554 = vunpack.c.l.b16 %v11487
        %v11555 = vunpack.c.l.b16 %v11491
        %v11556 = vunpack.c.l.b16 %v11494
        %v11557 = vunpack.c.l.b16 %v11498
        %v11558 = vunpack.c.l.b16 %v11501
        %v11559 = vunpack.c.l.b16 %v11505
        %v11560 = vunpack.c.l.b16 %v11508
        %v11561 = vunpack.c.l.b16 %v11512
        %v11562 = vunpack.c.l.b16 %v11515
        %v11563 = vunpack.c.l.b16 %v11519
        %v11564 = vunpack.c.l.b16 %v11522
        %v11565 = vunpack.c.l.b16 %v11526
        %v11566 = vunpack.c.l.b16 %v11529
        %v11567 = vunpack.c.l.b16 %v11533
        %v11568 = vunpack.c.l.b16 %v11536
        %v11569 = vpack.c.b16 %v11554, %v11553
        %v11570 = vpack.c.b16 %v11556, %v11555
        %v11571 = vpack.c.b16 %v11558, %v11557
        %v11572 = vpack.c.b16 %v11560, %v11559
        %v11573 = vpack.c.b16 %v11562, %v11561
        %v11574 = vpack.c.b16 %v11564, %v11563
        %v11575 = vpack.c.b16 %v11566, %v11565
        %v11576 = vpack.c.b16 %v11568, %v11567
        %v11601 = vunpack.c.l.b16 %v11537
        %v11602 = vunpack.c.l.b16 %v11538
        %v11603 = vunpack.c.l.b16 %v11539
        %v11604 = vunpack.c.l.b16 %v11540
        %v11605 = vunpack.c.l.b16 %v11541
        %v11606 = vunpack.c.l.b16 %v11542
        %v11607 = vunpack.c.l.b16 %v11543
        %v11608 = vunpack.c.l.b16 %v11544
        %v11609 = vunpack.c.l.b16 %v11545
        %v11610 = vunpack.c.l.b16 %v11546
        %v11611 = vunpack.c.l.b16 %v11547
        %v11612 = vunpack.c.l.b16 %v11548
        %v11613 = vunpack.c.l.b16 %v11549
        %v11614 = vunpack.c.l.b16 %v11550
        %v11615 = vunpack.c.l.b16 %v11551
        %v11616 = vunpack.c.l.b16 %v11552
        %v11617 = vpack.c.b16 %v11602, %v11601
        %v11618 = vpack.c.b16 %v11604, %v11603
        %v11619 = vpack.c.b16 %v11606, %v11605
        %v11620 = vpack.c.b16 %v11608, %v11607
        %v11621 = vpack.c.b16 %v11610, %v11609
        %v11622 = vpack.c.b16 %v11612, %v11611
        %v11623 = vpack.c.b16 %v11614, %v11613
        %v11624 = vpack.c.b16 %v11616, %v11615
        %11633 = vmatpush.bf16.msra.mxu0 %v11624
        %11634 = vmatpush.bf16.msra.mxu0 %v11623
        %11635 = vmatpush.bf16.msra.mxu0 %v11622
        %11636 = vmatpush.bf16.msra.mxu0 %v11621
        %11637 = vmatpush.bf16.msra.mxu0 %v11620
        %11638 = vmatpush.bf16.msra.mxu0 %v11619
        %11639 = vmatpush.bf16.msra.mxu0 %v11618
        %11640 = vmatpush.bf16.msra.mxu0 %v11617
        %11641 = vmatmul.bf16.gmra.mxu0 %v11569
        %v11642 = vpop.f32.mrf.mxu0
        %v11643 = vadd.f32 0.0, %v11642
        %v11644 = vpop.f32.mrf.mxu0
        %v11645 = vadd.f32 0.0, %v11644
        %11646 = vmatmul.bf16.gmra.mxu0 %v11570
        %v11647 = vpop.f32.mrf.mxu0
        %v11648 = vadd.f32 0.0, %v11647
        %v11649 = vpop.f32.mrf.mxu0
        %v11650 = vadd.f32 0.0, %v11649
        %11651 = vmatmul.bf16.gmra.mxu0 %v11571
        %v11652 = vpop.f32.mrf.mxu0
        %v11653 = vadd.f32 0.0, %v11652
        %v11654 = vpop.f32.mrf.mxu0
        %v11655 = vadd.f32 0.0, %v11654
        %11656 = vmatmul.bf16.gmra.mxu0 %v11572
        %v11657 = vpop.f32.mrf.mxu0
        %v11658 = vadd.f32 0.0, %v11657
        %v11659 = vpop.f32.mrf.mxu0
        %v11660 = vadd.f32 0.0, %v11659
        %11661 = vmatmul.bf16.gmra.mxu0 %v11573
        %v11662 = vpop.f32.mrf.mxu0
        %v11663 = vadd.f32 0.0, %v11662
        %v11664 = vpop.f32.mrf.mxu0
        %v11665 = vadd.f32 0.0, %v11664
        %11666 = vmatmul.bf16.gmra.mxu0 %v11574
        %v11667 = vpop.f32.mrf.mxu0
        %v11668 = vadd.f32 0.0, %v11667
        %v11669 = vpop.f32.mrf.mxu0
        %v11670 = vadd.f32 0.0, %v11669
        %11671 = vmatmul.bf16.gmra.mxu0 %v11575
        %v11672 = vpop.f32.mrf.mxu0
        %v11673 = vadd.f32 0.0, %v11672
        %v11674 = vpop.f32.mrf.mxu0
        %v11675 = vadd.f32 0.0, %v11674
        %11676 = vmatmul.bf16.gmra.mxu0 %v11576
        %v11677 = vpop.f32.mrf.mxu0
        %v11678 = vadd.f32 0.0, %v11677
        %v11679 = vpop.f32.mrf.mxu0
        %v11680 = vadd.f32 0.0, %v11679
        %11681 = vdwg.mxu0
        %v11682 = vadd.f32 %v11433, %v11643
        %v11683 = vadd.f32 %v11434, %v11645
        %v11684 = vadd.f32 %v11435, %v11648
        %v11685 = vadd.f32 %v11436, %v11650
        %v11686 = vadd.f32 %v11437, %v11653
        %v11687 = vadd.f32 %v11438, %v11655
        %v11688 = vadd.f32 %v11439, %v11658
        %v11689 = vadd.f32 %v11440, %v11660
        %v11690 = vadd.f32 %v11441, %v11663
        %v11691 = vadd.f32 %v11442, %v11665
        %v11692 = vadd.f32 %v11443, %v11668
        %v11693 = vadd.f32 %v11444, %v11670
        %v11694 = vadd.f32 %v11445, %v11673
        %v11695 = vadd.f32 %v11446, %v11675
        %v11696 = vadd.f32 %v11447, %v11678
        %v11697 = vadd.f32 %v11448, %v11680
        %v11698 = vadd.f32 %v11682, %v8843
        %v11699 = vadd.f32 %v11683, %v8843
        %v11700 = vadd.f32 %v11684, %v8843
        %v11701 = vadd.f32 %v11685, %v8843
        %v11702 = vadd.f32 %v11686, %v8843
        %v11703 = vadd.f32 %v11687, %v8843
        %v11704 = vadd.f32 %v11688, %v8843
        %v11705 = vadd.f32 %v11689, %v8843
        %v11706 = vadd.f32 %v11690, %v8843
        %v11707 = vadd.f32 %v11691, %v8843
        %v11708 = vadd.f32 %v11692, %v8843
        %v11709 = vadd.f32 %v11693, %v8843
        %v11710 = vadd.f32 %v11694, %v8843
        %v11711 = vadd.f32 %v11695, %v8843
        %v11712 = vadd.f32 %v11696, %v8843
        %v11713 = vadd.f32 %v11697, %v8843
        %v11714 = vld [vmem:[%s4520] sm:$0xf]
        %v11715 = vld [vmem:[%s4520 + $0x4] sm:$0xf]
        %v11716 = vld [vmem:[%s4520 + $0x8] sm:$0x1]
        %v11717 = vld [vmem:[%s4520 + $0xc] sm:$0xf]
        %v11718 = vld [vmem:[%s4520 + $0x10] sm:$0xf]
        %v11719 = vld [vmem:[%s4520 + $0x14] sm:$0x1]
        %v11720 = vld [vmem:[%s4520 + $0x18] sm:$0xf]
        %v11721 = vld [vmem:[%s4520 + $0x1c] sm:$0xf]
        %v11722 = vld [vmem:[%s4520 + $0x20] sm:$0x1]
        %v11723 = vld [vmem:[%s4520 + $0x24] sm:$0xf]
        %v11724 = vld [vmem:[%s4520 + $0x28] sm:$0xf]
        %v11725 = vld [vmem:[%s4520 + $0x2c] sm:$0x1]
        %v11726 = vld [vmem:[%s4520 + $0x30] sm:$0xf]
        %v11727 = vld [vmem:[%s4520 + $0x34] sm:$0xf]
        %v11728 = vld [vmem:[%s4520 + $0x38] sm:$0x1]
        %v11729 = vld [vmem:[%s4520 + $0x3c] sm:$0xf]
        %v11730 = vld [vmem:[%s4520 + $0x40] sm:$0xf]
        %v11731 = vld [vmem:[%s4520 + $0x44] sm:$0x1]
        %v11732 = vld [vmem:[%s4520 + $0x48] sm:$0xf]
        %v11733 = vld [vmem:[%s4520 + $0x4c] sm:$0xf]
        %v11734 = vld [vmem:[%s4520 + $0x50] sm:$0x1]
        %v11735 = vld [vmem:[%s4520 + $0x54] sm:$0xf]
        %v11736 = vld [vmem:[%s4520 + $0x58] sm:$0xf]
        %v11737 = vld [vmem:[%s4520 + $0x5c] sm:$0x1]
        %v11739 = vshrl.u32 %v11714, 16
        %v11741 = vrot.slane %v11739, 4
        %v11742 = vshll.u32 %v11714, 16
        %v11744 = vrot.slane %v11742, 5
        %v11745 = vor.u32 %v11741, %v11744
        %v11746 = vrot.slane %v11745, 4
        %v11748 = vshll.u32 %v11715, 16
        %v11750 = vrot.slane %v11748, 5
        %v11751 = vsel %vm1101, %v11746, %v11750
        %v11752 = vshrl.u32 %v11715, 16
        %v11754 = vrot.slane %v11752, 4
        %v11755 = vor.u32 %v11754, %v11750
        %v11756 = vrot.slane %v11755, 4
        %v11758 = vshll.u32 %v11716, 16
        %v11760 = vrot.slane %v11758, 5
        %v11761 = vsel %vm1101, %v11756, %v11760
        %v11763 = vshrl.u32 %v11717, 16
        %v11765 = vrot.slane %v11763, 4
        %v11766 = vshll.u32 %v11717, 16
        %v11768 = vrot.slane %v11766, 5
        %v11769 = vor.u32 %v11765, %v11768
        %v11770 = vrot.slane %v11769, 4
        %v11772 = vshll.u32 %v11718, 16
        %v11774 = vrot.slane %v11772, 5
        %v11775 = vsel %vm1101, %v11770, %v11774
        %v11776 = vshrl.u32 %v11718, 16
        %v11778 = vrot.slane %v11776, 4
        %v11779 = vor.u32 %v11778, %v11774
        %v11780 = vrot.slane %v11779, 4
        %v11782 = vshll.u32 %v11719, 16
        %v11784 = vrot.slane %v11782, 5
        %v11785 = vsel %vm1101, %v11780, %v11784
        %v11787 = vshrl.u32 %v11720, 16
        %v11789 = vrot.slane %v11787, 4
        %v11790 = vshll.u32 %v11720, 16
        %v11792 = vrot.slane %v11790, 5
        %v11793 = vor.u32 %v11789, %v11792
        %v11794 = vrot.slane %v11793, 4
        %v11796 = vshll.u32 %v11721, 16
        %v11798 = vrot.slane %v11796, 5
        %v11799 = vsel %vm1101, %v11794, %v11798
        %v11800 = vshrl.u32 %v11721, 16
        %v11802 = vrot.slane %v11800, 4
        %v11803 = vor.u32 %v11802, %v11798
        %v11804 = vrot.slane %v11803, 4
        %v11806 = vshll.u32 %v11722, 16
        %v11808 = vrot.slane %v11806, 5
        %v11809 = vsel %vm1101, %v11804, %v11808
        %v11811 = vshrl.u32 %v11723, 16
        %v11813 = vrot.slane %v11811, 4
        %v11814 = vshll.u32 %v11723, 16
        %v11816 = vrot.slane %v11814, 5
        %v11817 = vor.u32 %v11813, %v11816
        %v11818 = vrot.slane %v11817, 4
        %v11820 = vshll.u32 %v11724, 16
        %v11822 = vrot.slane %v11820, 5
        %v11823 = vsel %vm1101, %v11818, %v11822
        %v11824 = vshrl.u32 %v11724, 16
        %v11826 = vrot.slane %v11824, 4
        %v11827 = vor.u32 %v11826, %v11822
        %v11828 = vrot.slane %v11827, 4
        %v11830 = vshll.u32 %v11725, 16
        %v11832 = vrot.slane %v11830, 5
        %v11833 = vsel %vm1101, %v11828, %v11832
        %v11835 = vshrl.u32 %v11726, 16
        %v11837 = vrot.slane %v11835, 4
        %v11838 = vshll.u32 %v11726, 16
        %v11840 = vrot.slane %v11838, 5
        %v11841 = vor.u32 %v11837, %v11840
        %v11842 = vrot.slane %v11841, 4
        %v11844 = vshll.u32 %v11727, 16
        %v11846 = vrot.slane %v11844, 5
        %v11847 = vsel %vm1101, %v11842, %v11846
        %v11848 = vshrl.u32 %v11727, 16
        %v11850 = vrot.slane %v11848, 4
        %v11851 = vor.u32 %v11850, %v11846
        %v11852 = vrot.slane %v11851, 4
        %v11854 = vshll.u32 %v11728, 16
        %v11856 = vrot.slane %v11854, 5
        %v11857 = vsel %vm1101, %v11852, %v11856
        %v11859 = vshrl.u32 %v11729, 16
        %v11861 = vrot.slane %v11859, 4
        %v11862 = vshll.u32 %v11729, 16
        %v11864 = vrot.slane %v11862, 5
        %v11865 = vor.u32 %v11861, %v11864
        %v11866 = vrot.slane %v11865, 4
        %v11868 = vshll.u32 %v11730, 16
        %v11870 = vrot.slane %v11868, 5
        %v11871 = vsel %vm1101, %v11866, %v11870
        %v11872 = vshrl.u32 %v11730, 16
        %v11874 = vrot.slane %v11872, 4
        %v11875 = vor.u32 %v11874, %v11870
        %v11876 = vrot.slane %v11875, 4
        %v11878 = vshll.u32 %v11731, 16
        %v11880 = vrot.slane %v11878, 5
        %v11881 = vsel %vm1101, %v11876, %v11880
        %v11883 = vshrl.u32 %v11732, 16
        %v11885 = vrot.slane %v11883, 4
        %v11886 = vshll.u32 %v11732, 16
        %v11888 = vrot.slane %v11886, 5
        %v11889 = vor.u32 %v11885, %v11888
        %v11890 = vrot.slane %v11889, 4
        %v11892 = vshll.u32 %v11733, 16
        %v11894 = vrot.slane %v11892, 5
        %v11895 = vsel %vm1101, %v11890, %v11894
        %v11896 = vshrl.u32 %v11733, 16
        %v11898 = vrot.slane %v11896, 4
        %v11899 = vor.u32 %v11898, %v11894
        %v11900 = vrot.slane %v11899, 4
        %v11902 = vshll.u32 %v11734, 16
        %v11904 = vrot.slane %v11902, 5
        %v11905 = vsel %vm1101, %v11900, %v11904
        %v11907 = vshrl.u32 %v11735, 16
        %v11909 = vrot.slane %v11907, 4
        %v11910 = vshll.u32 %v11735, 16
        %v11912 = vrot.slane %v11910, 5
        %v11913 = vor.u32 %v11909, %v11912
        %v11914 = vrot.slane %v11913, 4
        %v11916 = vshll.u32 %v11736, 16
        %v11918 = vrot.slane %v11916, 5
        %v11919 = vsel %vm1101, %v11914, %v11918
        %v11920 = vshrl.u32 %v11736, 16
        %v11922 = vrot.slane %v11920, 4
        %v11923 = vor.u32 %v11922, %v11918
        %v11924 = vrot.slane %v11923, 4
        %v11926 = vshll.u32 %v11737, 16
        %v11928 = vrot.slane %v11926, 5
        %v11929 = vsel %vm1101, %v11924, %v11928
        %v11930 = vld [vmem:[#allocation10] sm:$0xf]
        %v11931 = vld [vmem:[#allocation10 + $0x4] sm:$0xf]
        %v11932 = vld [vmem:[#allocation10 + $0x8] sm:$0xf]
        %v11933 = vld [vmem:[#allocation10 + $0xc] sm:$0xf]
        %v11934 = vld [vmem:[#allocation10 + $0x10] sm:$0xf]
        %v11935 = vld [vmem:[#allocation10 + $0x14] sm:$0xf]
        %v11936 = vld [vmem:[#allocation10 + $0x18] sm:$0xf]
        %v11937 = vld [vmem:[#allocation10 + $0x1c] sm:$0xf]
        %v11938 = vld [vmem:[#allocation10 + $0x20] sm:$0xf]
        %v11939 = vld [vmem:[#allocation10 + $0x24] sm:$0xf]
        %v11940 = vld [vmem:[#allocation10 + $0x28] sm:$0xf]
        %v11941 = vld [vmem:[#allocation10 + $0x2c] sm:$0xf]
        %v11942 = vld [vmem:[#allocation10 + $0x30] sm:$0xf]
        %v11943 = vld [vmem:[#allocation10 + $0x34] sm:$0xf]
        %v11944 = vld [vmem:[#allocation10 + $0x38] sm:$0xf]
        %v11945 = vld [vmem:[#allocation10 + $0x3c] sm:$0xf]
        %v11946 = vld [vmem:[%s6] sm:$0x1]
        %v11948 = vperm.slane %v11946, 0
        %v11950 = vunpack.c.l.b16 %v11751
        %v11951 = vunpack.c.l.b16 %v11761
        %v11952 = vunpack.c.l.b16 %v11775
        %v11953 = vunpack.c.l.b16 %v11785
        %v11954 = vunpack.c.l.b16 %v11799
        %v11955 = vunpack.c.l.b16 %v11809
        %v11956 = vunpack.c.l.b16 %v11823
        %v11957 = vunpack.c.l.b16 %v11833
        %v11958 = vunpack.c.l.b16 %v11847
        %v11959 = vunpack.c.l.b16 %v11857
        %v11960 = vunpack.c.l.b16 %v11871
        %v11961 = vunpack.c.l.b16 %v11881
        %v11962 = vunpack.c.l.b16 %v11895
        %v11963 = vunpack.c.l.b16 %v11905
        %v11964 = vunpack.c.l.b16 %v11919
        %v11965 = vunpack.c.l.b16 %v11929
        %v11966 = vpack.c.b16 %v11951, %v11950
        %v11967 = vpack.c.b16 %v11953, %v11952
        %v11968 = vpack.c.b16 %v11955, %v11954
        %v11969 = vpack.c.b16 %v11957, %v11956
        %v11970 = vpack.c.b16 %v11959, %v11958
        %v11971 = vpack.c.b16 %v11961, %v11960
        %v11972 = vpack.c.b16 %v11963, %v11962
        %v11973 = vpack.c.b16 %v11965, %v11964
        %v11998 = vunpack.c.l.b16 %v11930
        %v11999 = vunpack.c.l.b16 %v11931
        %v12000 = vunpack.c.l.b16 %v11932
        %v12001 = vunpack.c.l.b16 %v11933
        %v12002 = vunpack.c.l.b16 %v11934
        %v12003 = vunpack.c.l.b16 %v11935
        %v12004 = vunpack.c.l.b16 %v11936
        %v12005 = vunpack.c.l.b16 %v11937
        %v12006 = vunpack.c.l.b16 %v11938
        %v12007 = vunpack.c.l.b16 %v11939
        %v12008 = vunpack.c.l.b16 %v11940
        %v12009 = vunpack.c.l.b16 %v11941
        %v12010 = vunpack.c.l.b16 %v11942
        %v12011 = vunpack.c.l.b16 %v11943
        %v12012 = vunpack.c.l.b16 %v11944
        %v12013 = vunpack.c.l.b16 %v11945
        %v12014 = vpack.c.b16 %v11999, %v11998
        %v12015 = vpack.c.b16 %v12001, %v12000
        %v12016 = vpack.c.b16 %v12003, %v12002
        %v12017 = vpack.c.b16 %v12005, %v12004
        %v12018 = vpack.c.b16 %v12007, %v12006
        %v12019 = vpack.c.b16 %v12009, %v12008
        %v12020 = vpack.c.b16 %v12011, %v12010
        %v12021 = vpack.c.b16 %v12013, %v12012
        %12030 = vmatpush.bf16.msra.mxu0 %v12021
        %12031 = vmatpush.bf16.msra.mxu0 %v12020
        %12032 = vmatpush.bf16.msra.mxu0 %v12019
        %12033 = vmatpush.bf16.msra.mxu0 %v12018
        %12034 = vmatpush.bf16.msra.mxu0 %v12017
        %12035 = vmatpush.bf16.msra.mxu0 %v12016
        %12036 = vmatpush.bf16.msra.mxu0 %v12015
        %12037 = vmatpush.bf16.msra.mxu0 %v12014
        %12038 = vmatmul.bf16.gmra.mxu0 %v11966
        %v12039 = vpop.f32.mrf.mxu0
        %v12040 = vadd.f32 %v11948, %v12039
        %v12041 = vpop.f32.mrf.mxu0
        %v12042 = vadd.f32 %v11948, %v12041
        %12043 = vmatmul.bf16.gmra.mxu0 %v11967
        %v12044 = vpop.f32.mrf.mxu0
        %v12045 = vadd.f32 %v11948, %v12044
        %v12046 = vpop.f32.mrf.mxu0
        %v12047 = vadd.f32 %v11948, %v12046
        %12048 = vmatmul.bf16.gmra.mxu0 %v11968
        %v12049 = vpop.f32.mrf.mxu0
        %v12050 = vadd.f32 %v11948, %v12049
        %v12051 = vpop.f32.mrf.mxu0
        %v12052 = vadd.f32 %v11948, %v12051
        %12053 = vmatmul.bf16.gmra.mxu0 %v11969
        %v12054 = vpop.f32.mrf.mxu0
        %v12055 = vadd.f32 %v11948, %v12054
        %v12056 = vpop.f32.mrf.mxu0
        %v12057 = vadd.f32 %v11948, %v12056
        %12058 = vmatmul.bf16.gmra.mxu0 %v11970
        %v12059 = vpop.f32.mrf.mxu0
        %v12060 = vadd.f32 %v11948, %v12059
        %v12061 = vpop.f32.mrf.mxu0
        %v12062 = vadd.f32 %v11948, %v12061
        %12063 = vmatmul.bf16.gmra.mxu0 %v11971
        %v12064 = vpop.f32.mrf.mxu0
        %v12065 = vadd.f32 %v11948, %v12064
        %v12066 = vpop.f32.mrf.mxu0
        %v12067 = vadd.f32 %v11948, %v12066
        %12068 = vmatmul.bf16.gmra.mxu0 %v11972
        %v12069 = vpop.f32.mrf.mxu0
        %v12070 = vadd.f32 %v11948, %v12069
        %v12071 = vpop.f32.mrf.mxu0
        %v12072 = vadd.f32 %v11948, %v12071
        %12073 = vmatmul.bf16.gmra.mxu0 %v11973
        %v12074 = vpop.f32.mrf.mxu0
        %v12075 = vadd.f32 %v11948, %v12074
        %v12076 = vpop.f32.mrf.mxu0
        %v12077 = vadd.f32 %v11948, %v12076
        %12078 = vdwg.mxu0
        %v12079 = vadd.f32 %v11698, %v12040
        %v12080 = vadd.f32 %v11699, %v12042
        %v12081 = vadd.f32 %v11700, %v12045
        %v12082 = vadd.f32 %v11701, %v12047
        %v12083 = vadd.f32 %v11702, %v12050
        %v12084 = vadd.f32 %v11703, %v12052
        %v12085 = vadd.f32 %v11704, %v12055
        %v12086 = vadd.f32 %v11705, %v12057
        %v12087 = vadd.f32 %v11706, %v12060
        %v12088 = vadd.f32 %v11707, %v12062
        %v12089 = vadd.f32 %v11708, %v12065
        %v12090 = vadd.f32 %v11709, %v12067
        %v12091 = vadd.f32 %v11710, %v12070
        %v12092 = vadd.f32 %v11711, %v12072
        %v12093 = vadd.f32 %v11712, %v12075
        %v12094 = vadd.f32 %v11713, %v12077
        %v12095 = vmax.f32 %v12079, 0.0
        %v12096 = vmax.f32 %v12080, 0.0
        %v12097 = vmax.f32 %v12081, 0.0
        %v12098 = vmax.f32 %v12082, 0.0
        %v12099 = vmax.f32 %v12083, 0.0
        %v12100 = vmax.f32 %v12084, 0.0
        %v12101 = vmax.f32 %v12085, 0.0
        %v12102 = vmax.f32 %v12086, 0.0
        %v12103 = vmax.f32 %v12087, 0.0
        %v12104 = vmax.f32 %v12088, 0.0
        %v12105 = vmax.f32 %v12089, 0.0
        %v12106 = vmax.f32 %v12090, 0.0
        %v12107 = vmax.f32 %v12091, 0.0
        %v12108 = vmax.f32 %v12092, 0.0
        %v12109 = vmax.f32 %v12093, 0.0
        %v12110 = vmax.f32 %v12094, 0.0
        %v12111 = vpack.c.bf16 %v12095, %v12095
        %v12112 = vpack.c.bf16 %v12096, %v12096
        %v12113 = vpack.c.bf16 %v12097, %v12097
        %v12114 = vpack.c.bf16 %v12098, %v12098
        %v12115 = vpack.c.bf16 %v12099, %v12099
        %v12116 = vpack.c.bf16 %v12100, %v12100
        %v12117 = vpack.c.bf16 %v12101, %v12101
        %v12118 = vpack.c.bf16 %v12102, %v12102
        %v12119 = vpack.c.bf16 %v12103, %v12103
        %v12120 = vpack.c.bf16 %v12104, %v12104
        %v12121 = vpack.c.bf16 %v12105, %v12105
        %v12122 = vpack.c.bf16 %v12106, %v12106
        %v12123 = vpack.c.bf16 %v12107, %v12107
        %v12124 = vpack.c.bf16 %v12108, %v12108
        %v12125 = vpack.c.bf16 %v12109, %v12109
        %v12126 = vpack.c.bf16 %v12110, %v12110
        %s12127 = smul.u32 8, 2
        %s12128 = smul.addr %s12127, 4
        %s12129 = scalar_lea.vmem %s348, %s12128 [#allocation12]
        %12130 = vst [vmem:[%s12129] sm:$0xf] %v12111
        %12131 = vst [vmem:[%s12129 + $0x4] sm:$0xf] %v12112
        %12132 = vst [vmem:[%s12129 + $0x8] sm:$0xf] %v12113
        %12133 = vst [vmem:[%s12129 + $0xc] sm:$0xf] %v12114
        %12134 = vst [vmem:[%s12129 + $0x10] sm:$0xf] %v12115
        %12135 = vst [vmem:[%s12129 + $0x14] sm:$0xf] %v12116
        %12136 = vst [vmem:[%s12129 + $0x18] sm:$0xf] %v12117
        %12137 = vst [vmem:[%s12129 + $0x1c] sm:$0xf] %v12118
        %12138 = vst [vmem:[%s12129 + $0x20] sm:$0xf] %v12119
        %12139 = vst [vmem:[%s12129 + $0x24] sm:$0xf] %v12120
        %12140 = vst [vmem:[%s12129 + $0x28] sm:$0xf] %v12121
        %12141 = vst [vmem:[%s12129 + $0x2c] sm:$0xf] %v12122
        %12142 = vst [vmem:[%s12129 + $0x30] sm:$0xf] %v12123
        %12143 = vst [vmem:[%s12129 + $0x34] sm:$0xf] %v12124
        %12144 = vst [vmem:[%s12129 + $0x38] sm:$0xf] %v12125
        %12145 = vst [vmem:[%s12129 + $0x3c] sm:$0xf] %v12126
        %s12146 = sand.u32 %s186, 1
        %s12147 = scalar_lea.sflag [#allocation6], %s12146
        %s12148 = sand.u32 %s186, 1
        %s12149 = smul.addr %s12148, 128
        %s12150 = scalar_lea.vmem [#allocation12], %s12149
        // Predicated region
        $region65: #{tpu_custom_call.1} parent=47 // pred_check
          %p12151 = pneg %p196
        $region66: #{tpu_custom_call.1} parent=47 // pred_check_branch
          %12153 = sbr.rel (%p12151) target = $region68
        $region67: #{tpu_custom_call.1} parent=47 // pred_region
          %12155 = vsyncadd %s12147, 0
          %s12156 = smul.addr %s26, 32
          %s12157 = smul.addr %s12156, 4
          %s12158 = scalar_lea.hbm %s7, %s12157
          %s12159 = sshll.u32 %s12150, 4
          %s12160 = int_to_ptr.vmem [resolvable:$true] %s12159
          %s12161 = sshll.u32 %s12158, 4
          %s12162 = int_to_ptr.hbm [resolvable:$true] %s12161
          %12167 = dma.vmem_to_hbm [thread:$0]  %s12160, 2048, %s12162, %s12147, 64, 64, 4
        $region68: #{tpu_custom_call.1} parent=47 // pred_fallthru
          _
      $region48: #{tpu_custom_call.1} parent=5 // pred_fallthru
        _
      %p12168 = scmp.le.s32.totalorder 2, %s21
      // Predicated region
      $region69: #{tpu_custom_call.1} parent=5 // pred_check
        %p12169 = pneg %p12168
      $region70: #{tpu_custom_call.1} parent=5 // pred_check_branch
        %12171 = sbr.rel (%p12169) target = $region72
      $region71: #{tpu_custom_call.1} parent=5 // pred_region
        %s12172 = ssub.s32 %s21, 2
        // Predicated region
        $region73: #{tpu_custom_call.1} parent=71 // pred_check
          %p12173 = pneg %p202
        $region74: #{tpu_custom_call.1} parent=71 // pred_check_branch
          %12175 = sbr.rel (%p12173) target = $region76
        $region75: #{tpu_custom_call.1} parent=71 // pred_region
          %s12176 = sand.u32 %s187, 1
          %s12177 = scalar_lea.sflag [#allocation6], %s12176
          %s12178 = sand.u32 %s187, 1
          %s12179 = smul.addr %s12178, 128
          %s12180 = scalar_lea.vmem [#allocation12], %s12179
          %12182 = dma.done %s12177, 2048
        $region76: #{tpu_custom_call.1} parent=71 // pred_fallthru
          _
      $region72: #{tpu_custom_call.1} parent=5 // pred_fallthru
        _
    $region6: #{tpu_custom_call.1} parent=1 // loop_footer
      %s25 = sadd.s32 1, %s21
    $region7: #{tpu_custom_call.1} parent=1 // loop_footer_branch
      %20 = sbr.rel target = $region3
    $region8: #{tpu_custom_call.1} parent=1 // loop_exit
      _
    %12183 = vsyncpa [#allocation5], 1
    %s12184 = scalar_lea.sflag [#allocation5], 1
    %12185 = vsyncpa %s12184, 1
    %12186 = vsyncpa [#allocation8], 1
    %12187 = vsyncpa [#allocation11], 1
    %12188 = vsyncpa [#allocation6], 1
    %s12189 = scalar_lea.sflag [#allocation6], 1
    %12190 = vsyncpa %s12189, 1

</llo_original>
